<compile_context>
chip_gen: v7x
topology: tpu7x:2x2x1
jax: 0.10.0
libtpu: 0.0.40
codegen_flags: <defaults>
</compile_context>

<pallas_src>
import jax
import jax.numpy as jnp
from jax.experimental import pallas as pl
from jax.experimental.pallas import tpu as pltpu

C1, C2 = 16, 32            # conv1 / conv2 output channels
H1, H2, H3 = 28, 14, 7     # spatial sizes: input, after pool1, after pool2
B = 8                      # images per grid step (batch block)
VMEM_LIMIT = 32 * 1024 * 1024


# -----------------------------------------------------------------------------
# Fused kernel: conv1+ReLU+AvgPool + conv2+ReLU+MaxPool + fc1/fc2/out (B imgs)
# -----------------------------------------------------------------------------
def _convnet_kernel(x_ref, hs1_ref, e_ref, b1_ref, r_ref, cm_ref,
                    hs2_ref, g_ref, b2_ref, s_ref, t_ref,
                    w1_ref, fb1_ref, w2_ref, fb2_ref, w3_ref, fb3_ref,
                    o_ref):
    f32, bf16 = jnp.float32, jnp.bfloat16
    x = x_ref[...]                                             # (B*28, 28) f32

    # conv1 (3x3, pad 1) + bias + ReLU; activation layout (b*28+h, w*C1+c).
    a1 = None
    for kh in range(3):                                        # 3 kw-folded taps
        xs = jnp.dot(hs1_ref[kh], x, preferred_element_type=f32).astype(bf16)
        d = jnp.dot(xs, e_ref[kh], preferred_element_type=f32)
        a1 = d if a1 is None else a1 + d
    a1 = jnp.maximum(a1 + b1_ref[...], 0.0)                    # (B*28, 448)

    # 2x2 average pool (exact 0.5 * 0.5 weights) -> (B*14, 14*C1)
    p1 = jnp.dot(jnp.dot(r_ref[...], a1, preferred_element_type=f32),
                 cm_ref[...], preferred_element_type=f32)      # (B*14, 224)

    # conv2 (3x3, pad 1) + bias + ReLU; activation layout (b*14+h, w*C2+c).
    a2 = None
    for kh in range(3):
        ps = jnp.dot(hs2_ref[kh], p1, preferred_element_type=f32).astype(bf16)
        d = jnp.dot(ps, g_ref[kh], preferred_element_type=f32)
        a2 = d if a2 is None else a2 + d
    a2 = jnp.maximum(a2 + b2_ref[...], 0.0)                    # (B*14, 448)

    # 2x2 max pool via exact 0/1 selection matmuls; rows come out r-major
    # (row index = pooled_row * B + image), so fc1 below uses static slices.
    rm = jnp.maximum(jnp.dot(s_ref[0], a2, preferred_element_type=f32),
                     jnp.dot(s_ref[1], a2, preferred_element_type=f32))  # (7B,448)
    o = jnp.maximum(jnp.dot(rm, t_ref[0], preferred_element_type=f32),
                    jnp.dot(rm, t_ref[1], preferred_element_type=f32))   # (7B,224)
    o = o.astype(bf16)

    # fc1 + ReLU: contract the 7 pooled rows as 7 contiguous row-slab matmuls.
    h = None
    for r in range(H3):
        d = jnp.dot(o[r * B:(r + 1) * B, :], w1_ref[r],
                    preferred_element_type=f32)
        h = d if h is None else h + d
    h = jnp.maximum(h + fb1_ref[...], 0.0).astype(bf16)        # (B, 128)

    # fc2 + ReLU, out (lane-padded to 128; zero padding keeps logits clean).
    h = jnp.maximum(jnp.dot(h, w2_ref[...], preferred_element_type=f32)
                    + fb2_ref[...], 0.0).astype(bf16)
    o_ref[...] = (jnp.dot(h, w3_ref[...], preferred_element_type=f32)
                  + fb3_ref[...])                              # (B, 128) f32


def _batch_dim_semantics(grid_size):
    """CORE_PARALLEL on multi-TensorCore chips (v7x), else 'parallel'."""
    try:
        info = pltpu.get_tpu_info()
        n_cores = 1
        for name in ("num_cores", "tensorcore_count", "num_tensorcores"):
            v = getattr(info, name, None)
            if isinstance(v, int) and v > n_cores:
                n_cores = v
        if n_cores == 2 and grid_size > 1 and grid_size % n_cores == 0:
            return (pltpu.CORE_PARALLEL,)
    except Exception:
        pass
    return ("parallel",)


def convnet_forward(prep, x):
    """x: (N, 1, 28, 28) -> logits (N, 10)."""
    N = x.shape[0]
    x = x.reshape(N, H1, H1).astype(jnp.float32)
    npad = ((N + B - 1) // B) * B
    if npad != N:                               # pad at most B-1 tiny images
        x = jnp.concatenate(
            [x, jnp.zeros((npad - N, H1, H1), jnp.float32)], axis=0)
    xr = x.reshape(npad * H1, H1)               # images stacked along sublanes
    grid = (npad // B,)

    in_specs = [
        pl.BlockSpec((B * H1, H1), lambda i: (i, 0)),               # images
        pl.BlockSpec((3, B * H1, B * H1), lambda i: (0, 0, 0)),     # hs1 blkdiag
        pl.BlockSpec((3, H1, H1 * C1), lambda i: (0, 0, 0)),        # E (kw-folded)
        pl.BlockSpec((1, H1 * C1), lambda i: (0, 0)),               # b1L
        pl.BlockSpec((B * H2, B * H1), lambda i: (0, 0)),           # R blkdiag
        pl.BlockSpec((H1 * C1, H2 * C1), lambda i: (0, 0)),         # Cm
        pl.BlockSpec((3, B * H2, B * H2), lambda i: (0, 0, 0)),     # hs2 blkdiag
        pl.BlockSpec((3, H2 * C1, H2 * C2), lambda i: (0, 0, 0)),   # G (kw-folded)
        pl.BlockSpec((1, H2 * C2), lambda i: (0, 0)),               # b2L
        pl.BlockSpec((2, H3 * B, H2 * B), lambda i: (0, 0, 0)),     # S row select
        pl.BlockSpec((2, H2 * C2, H3 * C2), lambda i: (0, 0, 0)),   # T col select
        pl.BlockSpec((H3, H3 * C2, 128), lambda i: (0, 0, 0)),      # fc1_w
        pl.BlockSpec((1, 128), lambda i: (0, 0)),                   # fc1_b
        pl.BlockSpec((128, 128), lambda i: (0, 0)),                 # fc2_w
        pl.BlockSpec((1, 128), lambda i: (0, 0)),                   # fc2_b
        pl.BlockSpec((128, 128), lambda i: (0, 0)),                 # out_w
        pl.BlockSpec((1, 128), lambda i: (0, 0)),                   # out_b
    ]
    logits = pl.pallas_call(
        _convnet_kernel,
        out_shape=jax.ShapeDtypeStruct((npad, 128), jnp.float32),
        grid=grid,
        in_specs=in_specs,
        out_specs=pl.BlockSpec((B, 128), lambda i: (i, 0)),
        compiler_params=pltpu.CompilerParams(
            dimension_semantics=_batch_dim_semantics(grid[0]),
            vmem_limit_bytes=VMEM_LIMIT),
    )(xr, prep["hs1"], prep["E"], prep["b1L"], prep["R"], prep["Cm"],
      prep["hs2"], prep["G"], prep["b2L"], prep["S"], prep["T"],
      prep["fc1_w"], prep["fc1_b"], prep["fc2_w"], prep["fc2_b"],
      prep["out_w"], prep["out_b"])
    return logits[:N, :10]


# -----------------------------------------------------------------------------
# One-time weight / constant re-layout (outside jit)
# -----------------------------------------------------------------------------
def _shift(n, k):
    """S[a, b] = 1.0 iff b == a + k (rows falling off the edge are all-zero)."""
    r = jnp.arange(n)
    return (r[None, :] == r[:, None] + k).astype(jnp.float32)


def _block_diag(m, reps):
    """kron(I_reps, m): per-image block-diagonal batching of a constant."""
    return jnp.kron(jnp.eye(reps, dtype=m.dtype), m)


def prepare_params(p):
    f32, bf16 = jnp.float32, jnp.bfloat16

    # Column-shift matrices: wsh[kw][w', w] = 1 iff w' == w + kw - 1.
    wsh1 = [_shift(H1, kw - 1).T for kw in range(3)]
    wsh2 = [_shift(H2, kw - 1).T for kw in range(3)]

    # conv1 tap matrices with the 3 kw taps folded in (exact; at most one kw
    # contributes per (w', w)).  E[kh][w', w*C1 + c] = [w'==w+kw-1]*w1[c,kh,kw].
    w1 = p["conv1_w"][:, 0]                                       # (C1, 3, 3)
    E = jnp.stack([
        sum(wsh1[kw][:, :, None] * w1[None, None, :, kh, kw] for kw in range(3))
        .reshape(H1, H1 * C1)
        for kh in range(3)]).astype(bf16)                         # (3, 28, 448)

    # conv2 tap matrices, kw-folded.  G[kh][w'*C1+ci, w*C2+co].
    w2 = jnp.transpose(p["conv2_w"], (2, 3, 1, 0))                # (kh,kw,ci,co)
    G = jnp.stack([
        sum(wsh2[kw][:, None, :, None] * w2[kh, kw][None, :, None, :]
            for kw in range(3)).reshape(H2 * C1, H2 * C2)
        for kh in range(3)]).astype(bf16)                         # (3, 224, 448)

    b1L = jnp.tile(p["conv1_b"], H1).reshape(1, H1 * C1).astype(f32)
    b2L = jnp.tile(p["conv2_b"], H2).reshape(1, H2 * C2).astype(f32)

    # Block-diagonal row shifts (no cross-image leakage when batching).
    hs1 = jnp.stack([_block_diag(_shift(H1, kh - 1), B) for kh in range(3)])
    hs2 = jnp.stack([_block_diag(_shift(H2, kh - 1), B) for kh in range(3)])

    # 2x2 avg pool: rows (block-diag) then cols+channels (lane axis, shared).
    R1 = 0.5 * (jnp.arange(H1)[None, :] // 2 == jnp.arange(H2)[:, None]).astype(f32)
    R = _block_diag(R1, B)                                        # (B*14, B*28)
    Pw = (jnp.arange(H1)[:, None] // 2 == jnp.arange(H2)[None, :]).astype(f32)
    Cm = 0.5 * jnp.kron(Pw, jnp.eye(C1, dtype=f32))               # (448, 224)

    # 2x2 max pool row selection with r-major output ordering:
    # out row ro*B + b picks a2 row b*14 + 2*ro + r.
    rows = jnp.arange(H3 * B)
    ro, rb = rows // B, rows % B
    cols = jnp.arange(H2 * B)
    cb, ch = cols // H2, cols % H2
    S = jnp.stack([((cb[None, :] == rb[:, None]) &
                    (ch[None, :] == 2 * ro[:, None] + r)).astype(f32)
                   for r in (0, 1)])                              # (2, 7B, 14B)
    T = jnp.stack([jnp.kron((jnp.arange(H2)[:, None] ==
                             2 * jnp.arange(H3)[None, :] + s).astype(f32),
                            jnp.eye(C2, dtype=f32))
                   for s in (0, 1)])                              # (2, 448, 224)

    # FC head: permute fc1 rows from torch's CHW flatten to the kernel's HWC
    # flatten, reshape to (7, 224, 128); lane-pad fc2/out to 128 columns.
    g = jnp.arange(C2 * H3 * H3)
    oh, rem = g // (H3 * C2), g % (H3 * C2)
    ow, co = rem // C2, rem % C2
    chw = co * (H3 * H3) + oh * H3 + ow
    fc1_w = p["fc1_w"][chw, :].reshape(H3, H3 * C2, 128).astype(bf16)
    fc1_b = p["fc1_b"].reshape(1, 128).astype(f32)
    fc2_w = jnp.zeros((128, 128), f32).at[:, :64].set(p["fc2_w"]).astype(bf16)
    fc2_b = jnp.zeros((1, 128), f32).at[0, :64].set(p["fc2_b"])
    out_w = jnp.zeros((128, 128), f32).at[:64, :10].set(p["out_w"]).astype(bf16)
    out_b = jnp.zeros((1, 128), f32).at[0, :10].set(p["out_b"])

    return dict(hs1=hs1, E=E, b1L=b1L, R=R, Cm=Cm, hs2=hs2, G=G, b2L=b2L,
                S=S, T=T, fc1_w=fc1_w, fc1_b=fc1_b, fc2_w=fc2_w, fc2_b=fc2_b,
                out_w=out_w, out_b=out_b)


# -----------------------------------------------------------------------------
# Model params + pure-XLA reference
# -----------------------------------------------------------------------------
def init_params(key):
    ks = jax.random.split(key, 10)

    def u(k, shape, fan_in):
        bound = 1.0 / jnp.sqrt(jnp.float32(fan_in))
        return jax.random.uniform(k, shape, jnp.float32, -bound, bound)

    return {
        "conv1_w": u(ks[0], (16, 1, 3, 3), 1 * 9),
        "conv1_b": u(ks[1], (16,), 1 * 9),
        "conv2_w": u(ks[2], (32, 16, 3, 3), 16 * 9),
        "conv2_b": u(ks[3], (32,), 16 * 9),
        "fc1_w": u(ks[4], (32 * 7 * 7, 128), 32 * 7 * 7),  # (in,out), CHW rows
        "fc1_b": u(ks[5], (128,), 32 * 7 * 7),
        "fc2_w": u(ks[6], (128, 64), 128),
        "fc2_b": u(ks[7], (64,), 128),
        "out_w": u(ks[8], (64, 10), 64),
        "out_b": u(ks[9], (10,), 64),
    }


def reference_forward(params, x):
    """Pure-XLA reference (f32) used only as a sanity check."""
    dn = ("NCHW", "OIHW", "NCHW")
    y = jax.lax.conv_general_dilated(x, params["conv1_w"], (1, 1),
                                     ((1, 1), (1, 1)), dimension_numbers=dn)
    y = jax.nn.relu(y + params["conv1_b"][None, :, None, None])
    y = jax.lax.reduce_window(y, 0.0, jax.lax.add, (1, 1, 2, 2), (1, 1, 2, 2),
                              "VALID") / 4.0
    y = jax.lax.conv_general_dilated(y, params["conv2_w"], (1, 1),
                                     ((1, 1), (1, 1)), dimension_numbers=dn)
    y = jax.nn.relu(y + params["conv2_b"][None, :, None, None])
    y = jax.lax.reduce_window(y, -jnp.inf, jax.lax.max, (1, 1, 2, 2),
                              (1, 1, 2, 2), "VALID")
    y = y.reshape(y.shape[0], -1)
    y = jax.nn.relu(y @ params["fc1_w"] + params["fc1_b"])
    y = jax.nn.relu(y @ params["fc2_w"] + params["fc2_b"])
    return y @ params["out_w"] + params["out_b"]


if __name__ == "__main__":
    key = jax.random.PRNGKey(0)
    pkey, xkey = jax.random.split(key)
    params = init_params(pkey)
    prep = prepare_params(params)                 # one-time weight re-layout
    x = jax.random.normal(xkey, (2, 1, 28, 28), dtype=jnp.float32)

    fwd = jax.jit(convnet_forward)
    out = jax.block_until_ready(fwd(prep, x))
    assert out.shape == (2, 10), out.shape

    ref = jax.block_until_ready(reference_forward(params, x))
    err = float(jnp.max(jnp.abs(out - ref)))
    assert err < 5e-2, f"max abs err vs reference = {err}"
    print("KERNEL_OK")
</pallas_src>

<mosaic_0001>
module attributes {stable_mosaic.version = 11 : i64} {
  func.func @_convnet_kernel(%arg0: i32, %arg1: memref<224x28xf32, #tpu.memory_space<vmem>>, %arg2: memref<3x224x224xf32, #tpu.memory_space<vmem>>, %arg3: memref<3x28x448xbf16, #tpu.memory_space<vmem>>, %arg4: memref<1x448xf32, #tpu.memory_space<vmem>>, %arg5: memref<112x224xf32, #tpu.memory_space<vmem>>, %arg6: memref<448x224xf32, #tpu.memory_space<vmem>>, %arg7: memref<3x112x112xf32, #tpu.memory_space<vmem>>, %arg8: memref<3x224x448xbf16, #tpu.memory_space<vmem>>, %arg9: memref<1x448xf32, #tpu.memory_space<vmem>>, %arg10: memref<2x56x112xf32, #tpu.memory_space<vmem>>, %arg11: memref<2x448x224xf32, #tpu.memory_space<vmem>>, %arg12: memref<7x224x128xbf16, #tpu.memory_space<vmem>>, %arg13: memref<1x128xf32, #tpu.memory_space<vmem>>, %arg14: memref<128x128xbf16, #tpu.memory_space<vmem>>, %arg15: memref<1x128xf32, #tpu.memory_space<vmem>>, %arg16: memref<128x128xbf16, #tpu.memory_space<vmem>>, %arg17: memref<1x128xf32, #tpu.memory_space<vmem>>, %arg18: memref<8x128xf32, #tpu.memory_space<vmem>>) attributes {dimension_semantics = [#tpu.dimension_semantics<parallel>], iteration_bounds = array<i64: 1>, scalar_prefetch = 0 : i64, scratch_operands = 0 : i64, tpu.core_type = #tpu.core_type<tc>, window_params = [{transform_indices = @transform_0, window_bounds = array<i64: 224, 28>}, {pipeline_mode = #tpu.pipeline_mode<synchronous>, transform_indices = @transform_1, window_bounds = array<i64: 3, 224, 224>}, {pipeline_mode = #tpu.pipeline_mode<synchronous>, transform_indices = @transform_2, window_bounds = array<i64: 3, 28, 448>}, {pipeline_mode = #tpu.pipeline_mode<synchronous>, transform_indices = @transform_3, window_bounds = array<i64: 1, 448>}, {pipeline_mode = #tpu.pipeline_mode<synchronous>, transform_indices = @transform_4, window_bounds = array<i64: 112, 224>}, {pipeline_mode = #tpu.pipeline_mode<synchronous>, transform_indices = @transform_5, window_bounds = array<i64: 448, 224>}, {pipeline_mode = #tpu.pipeline_mode<synchronous>, transform_indices = @transform_6, window_bounds = array<i64: 3, 112, 112>}, {pipeline_mode = #tpu.pipeline_mode<synchronous>, transform_indices = @transform_7, window_bounds = array<i64: 3, 224, 448>}, {pipeline_mode = #tpu.pipeline_mode<synchronous>, transform_indices = @transform_8, window_bounds = array<i64: 1, 448>}, {pipeline_mode = #tpu.pipeline_mode<synchronous>, transform_indices = @transform_9, window_bounds = array<i64: 2, 56, 112>}, {pipeline_mode = #tpu.pipeline_mode<synchronous>, transform_indices = @transform_10, window_bounds = array<i64: 2, 448, 224>}, {pipeline_mode = #tpu.pipeline_mode<synchronous>, transform_indices = @transform_11, window_bounds = array<i64: 7, 224, 128>}, {pipeline_mode = #tpu.pipeline_mode<synchronous>, transform_indices = @transform_12, window_bounds = array<i64: 1, 128>}, {pipeline_mode = #tpu.pipeline_mode<synchronous>, transform_indices = @transform_13, window_bounds = array<i64: 128, 128>}, {pipeline_mode = #tpu.pipeline_mode<synchronous>, transform_indices = @transform_14, window_bounds = array<i64: 1, 128>}, {pipeline_mode = #tpu.pipeline_mode<synchronous>, transform_indices = @transform_15, window_bounds = array<i64: 128, 128>}, {pipeline_mode = #tpu.pipeline_mode<synchronous>, transform_indices = @transform_16, window_bounds = array<i64: 1, 128>}, {transform_indices = @transform_17, window_bounds = array<i64: 8, 128>}]} {
    %c0 = arith.constant 0 : index
    %c0_0 = arith.constant 0 : index
    %0 = vector.load %arg1[%c0, %c0_0] : memref<224x28xf32, #tpu.memory_space<vmem>>, vector<224x28xf32>
    %c0_1 = arith.constant 0 : index
    %c0_2 = arith.constant 0 : index
    %c0_3 = arith.constant 0 : index
    %1 = vector.load %arg2[%c0_1, %c0_2, %c0_3] : memref<3x224x224xf32, #tpu.memory_space<vmem>>, vector<1x224x224xf32>
    %2 = vector.shape_cast %1 : vector<1x224x224xf32> to vector<224x224xf32>
    %cst = arith.constant dense<0.000000e+00> : vector<224x28xf32>
    %3 = tpu.matmul %2, %0, %cst {dimension_numbers = #tpu.dot_dimension_numbers<[1], [0], [0], [1], [0, 0, 1, 1], [], []>} : vector<224x224xf32>, vector<224x28xf32>, vector<224x28xf32> -> vector<224x28xf32>
    %4 = arith.truncf %3 : vector<224x28xf32> to vector<224x28xbf16>
    %c0_4 = arith.constant 0 : index
    %c0_5 = arith.constant 0 : index
    %c0_6 = arith.constant 0 : index
    %5 = vector.load %arg3[%c0_4, %c0_5, %c0_6] : memref<3x28x448xbf16, #tpu.memory_space<vmem>>, vector<1x28x448xbf16>
    %6 = vector.shape_cast %5 : vector<1x28x448xbf16> to vector<28x448xbf16>
    %cst_7 = arith.constant dense<0.000000e+00> : vector<224x448xf32>
    %7 = tpu.matmul %4, %6, %cst_7 {dimension_numbers = #tpu.dot_dimension_numbers<[1], [0], [0], [1], [0, 0, 1, 1], [], []>} : vector<224x28xbf16>, vector<28x448xbf16>, vector<224x448xf32> -> vector<224x448xf32>
    %c1 = arith.constant 1 : index
    %c0_8 = arith.constant 0 : index
    %c0_9 = arith.constant 0 : index
    %8 = vector.load %arg2[%c1, %c0_8, %c0_9] : memref<3x224x224xf32, #tpu.memory_space<vmem>>, vector<1x224x224xf32>
    %9 = vector.shape_cast %8 : vector<1x224x224xf32> to vector<224x224xf32>
    %cst_10 = arith.constant dense<0.000000e+00> : vector<224x28xf32>
    %10 = tpu.matmul %9, %0, %cst_10 {dimension_numbers = #tpu.dot_dimension_numbers<[1], [0], [0], [1], [0, 0, 1, 1], [], []>} : vector<224x224xf32>, vector<224x28xf32>, vector<224x28xf32> -> vector<224x28xf32>
    %11 = arith.truncf %10 : vector<224x28xf32> to vector<224x28xbf16>
    %c1_11 = arith.constant 1 : index
    %c0_12 = arith.constant 0 : index
    %c0_13 = arith.constant 0 : index
    %12 = vector.load %arg3[%c1_11, %c0_12, %c0_13] : memref<3x28x448xbf16, #tpu.memory_space<vmem>>, vector<1x28x448xbf16>
    %13 = vector.shape_cast %12 : vector<1x28x448xbf16> to vector<28x448xbf16>
    %cst_14 = arith.constant dense<0.000000e+00> : vector<224x448xf32>
    %14 = tpu.matmul %11, %13, %cst_14 {dimension_numbers = #tpu.dot_dimension_numbers<[1], [0], [0], [1], [0, 0, 1, 1], [], []>} : vector<224x28xbf16>, vector<28x448xbf16>, vector<224x448xf32> -> vector<224x448xf32>
    %15 = arith.addf %7, %14 : vector<224x448xf32>
    %c2 = arith.constant 2 : index
    %c0_15 = arith.constant 0 : index
    %c0_16 = arith.constant 0 : index
    %16 = vector.load %arg2[%c2, %c0_15, %c0_16] : memref<3x224x224xf32, #tpu.memory_space<vmem>>, vector<1x224x224xf32>
    %17 = vector.shape_cast %16 : vector<1x224x224xf32> to vector<224x224xf32>
    %cst_17 = arith.constant dense<0.000000e+00> : vector<224x28xf32>
    %18 = tpu.matmul %17, %0, %cst_17 {dimension_numbers = #tpu.dot_dimension_numbers<[1], [0], [0], [1], [0, 0, 1, 1], [], []>} : vector<224x224xf32>, vector<224x28xf32>, vector<224x28xf32> -> vector<224x28xf32>
    %19 = arith.truncf %18 : vector<224x28xf32> to vector<224x28xbf16>
    %c2_18 = arith.constant 2 : index
    %c0_19 = arith.constant 0 : index
    %c0_20 = arith.constant 0 : index
    %20 = vector.load %arg3[%c2_18, %c0_19, %c0_20] : memref<3x28x448xbf16, #tpu.memory_space<vmem>>, vector<1x28x448xbf16>
    %21 = vector.shape_cast %20 : vector<1x28x448xbf16> to vector<28x448xbf16>
    %cst_21 = arith.constant dense<0.000000e+00> : vector<224x448xf32>
    %22 = tpu.matmul %19, %21, %cst_21 {dimension_numbers = #tpu.dot_dimension_numbers<[1], [0], [0], [1], [0, 0, 1, 1], [], []>} : vector<224x28xbf16>, vector<28x448xbf16>, vector<224x448xf32> -> vector<224x448xf32>
    %23 = arith.addf %15, %22 : vector<224x448xf32>
    %c0_22 = arith.constant 0 : index
    %c0_23 = arith.constant 0 : index
    %24 = vector.load %arg4[%c0_22, %c0_23] : memref<1x448xf32, #tpu.memory_space<vmem>>, vector<1x448xf32>
    %25 = vector.broadcast %24 : vector<1x448xf32> to vector<224x448xf32>
    %26 = arith.addf %23, %25 : vector<224x448xf32>
    %cst_24 = arith.constant 0.000000e+00 : f32
    %27 = vector.broadcast %cst_24 : f32 to vector<224x448xf32>
    %28 = arith.maximumf %26, %27 : vector<224x448xf32>
    %c0_25 = arith.constant 0 : index
    %c0_26 = arith.constant 0 : index
    %29 = vector.load %arg5[%c0_25, %c0_26] : memref<112x224xf32, #tpu.memory_space<vmem>>, vector<112x224xf32>
    %cst_27 = arith.constant dense<0.000000e+00> : vector<112x448xf32>
    %30 = tpu.matmul %29, %28, %cst_27 {dimension_numbers = #tpu.dot_dimension_numbers<[1], [0], [0], [1], [0, 0, 1, 1], [], []>} : vector<112x224xf32>, vector<224x448xf32>, vector<112x448xf32> -> vector<112x448xf32>
    %c0_28 = arith.constant 0 : index
    %c0_29 = arith.constant 0 : index
    %31 = vector.load %arg6[%c0_28, %c0_29] : memref<448x224xf32, #tpu.memory_space<vmem>>, vector<448x224xf32>
    %cst_30 = arith.constant dense<0.000000e+00> : vector<112x224xf32>
    %32 = tpu.matmul %30, %31, %cst_30 {dimension_numbers = #tpu.dot_dimension_numbers<[1], [0], [0], [1], [0, 0, 1, 1], [], []>} : vector<112x448xf32>, vector<448x224xf32>, vector<112x224xf32> -> vector<112x224xf32>
    %c0_31 = arith.constant 0 : index
    %c0_32 = arith.constant 0 : index
    %c0_33 = arith.constant 0 : index
    %33 = vector.load %arg7[%c0_31, %c0_32, %c0_33] : memref<3x112x112xf32, #tpu.memory_space<vmem>>, vector<1x112x112xf32>
    %34 = vector.shape_cast %33 : vector<1x112x112xf32> to vector<112x112xf32>
    %cst_34 = arith.constant dense<0.000000e+00> : vector<112x224xf32>
    %35 = tpu.matmul %34, %32, %cst_34 {dimension_numbers = #tpu.dot_dimension_numbers<[1], [0], [0], [1], [0, 0, 1, 1], [], []>} : vector<112x112xf32>, vector<112x224xf32>, vector<112x224xf32> -> vector<112x224xf32>
    %36 = arith.truncf %35 : vector<112x224xf32> to vector<112x224xbf16>
    %c0_35 = arith.constant 0 : index
    %c0_36 = arith.constant 0 : index
    %c0_37 = arith.constant 0 : index
    %37 = vector.load %arg8[%c0_35, %c0_36, %c0_37] : memref<3x224x448xbf16, #tpu.memory_space<vmem>>, vector<1x224x448xbf16>
    %38 = vector.shape_cast %37 : vector<1x224x448xbf16> to vector<224x448xbf16>
    %cst_38 = arith.constant dense<0.000000e+00> : vector<112x448xf32>
    %39 = tpu.matmul %36, %38, %cst_38 {dimension_numbers = #tpu.dot_dimension_numbers<[1], [0], [0], [1], [0, 0, 1, 1], [], []>} : vector<112x224xbf16>, vector<224x448xbf16>, vector<112x448xf32> -> vector<112x448xf32>
    %c1_39 = arith.constant 1 : index
    %c0_40 = arith.constant 0 : index
    %c0_41 = arith.constant 0 : index
    %40 = vector.load %arg7[%c1_39, %c0_40, %c0_41] : memref<3x112x112xf32, #tpu.memory_space<vmem>>, vector<1x112x112xf32>
    %41 = vector.shape_cast %40 : vector<1x112x112xf32> to vector<112x112xf32>
    %cst_42 = arith.constant dense<0.000000e+00> : vector<112x224xf32>
    %42 = tpu.matmul %41, %32, %cst_42 {dimension_numbers = #tpu.dot_dimension_numbers<[1], [0], [0], [1], [0, 0, 1, 1], [], []>} : vector<112x112xf32>, vector<112x224xf32>, vector<112x224xf32> -> vector<112x224xf32>
    %43 = arith.truncf %42 : vector<112x224xf32> to vector<112x224xbf16>
    %c1_43 = arith.constant 1 : index
    %c0_44 = arith.constant 0 : index
    %c0_45 = arith.constant 0 : index
    %44 = vector.load %arg8[%c1_43, %c0_44, %c0_45] : memref<3x224x448xbf16, #tpu.memory_space<vmem>>, vector<1x224x448xbf16>
    %45 = vector.shape_cast %44 : vector<1x224x448xbf16> to vector<224x448xbf16>
    %cst_46 = arith.constant dense<0.000000e+00> : vector<112x448xf32>
    %46 = tpu.matmul %43, %45, %cst_46 {dimension_numbers = #tpu.dot_dimension_numbers<[1], [0], [0], [1], [0, 0, 1, 1], [], []>} : vector<112x224xbf16>, vector<224x448xbf16>, vector<112x448xf32> -> vector<112x448xf32>
    %47 = arith.addf %39, %46 : vector<112x448xf32>
    %c2_47 = arith.constant 2 : index
    %c0_48 = arith.constant 0 : index
    %c0_49 = arith.constant 0 : index
    %48 = vector.load %arg7[%c2_47, %c0_48, %c0_49] : memref<3x112x112xf32, #tpu.memory_space<vmem>>, vector<1x112x112xf32>
    %49 = vector.shape_cast %48 : vector<1x112x112xf32> to vector<112x112xf32>
    %cst_50 = arith.constant dense<0.000000e+00> : vector<112x224xf32>
    %50 = tpu.matmul %49, %32, %cst_50 {dimension_numbers = #tpu.dot_dimension_numbers<[1], [0], [0], [1], [0, 0, 1, 1], [], []>} : vector<112x112xf32>, vector<112x224xf32>, vector<112x224xf32> -> vector<112x224xf32>
    %51 = arith.truncf %50 : vector<112x224xf32> to vector<112x224xbf16>
    %c2_51 = arith.constant 2 : index
    %c0_52 = arith.constant 0 : index
    %c0_53 = arith.constant 0 : index
    %52 = vector.load %arg8[%c2_51, %c0_52, %c0_53] : memref<3x224x448xbf16, #tpu.memory_space<vmem>>, vector<1x224x448xbf16>
    %53 = vector.shape_cast %52 : vector<1x224x448xbf16> to vector<224x448xbf16>
    %cst_54 = arith.constant dense<0.000000e+00> : vector<112x448xf32>
    %54 = tpu.matmul %51, %53, %cst_54 {dimension_numbers = #tpu.dot_dimension_numbers<[1], [0], [0], [1], [0, 0, 1, 1], [], []>} : vector<112x224xbf16>, vector<224x448xbf16>, vector<112x448xf32> -> vector<112x448xf32>
    %55 = arith.addf %47, %54 : vector<112x448xf32>
    %c0_55 = arith.constant 0 : index
    %c0_56 = arith.constant 0 : index
    %56 = vector.load %arg9[%c0_55, %c0_56] : memref<1x448xf32, #tpu.memory_space<vmem>>, vector<1x448xf32>
    %57 = vector.broadcast %56 : vector<1x448xf32> to vector<112x448xf32>
    %58 = arith.addf %55, %57 : vector<112x448xf32>
    %cst_57 = arith.constant 0.000000e+00 : f32
    %59 = vector.broadcast %cst_57 : f32 to vector<112x448xf32>
    %60 = arith.maximumf %58, %59 : vector<112x448xf32>
    %c0_58 = arith.constant 0 : index
    %c0_59 = arith.constant 0 : index
    %c0_60 = arith.constant 0 : index
    %61 = vector.load %arg10[%c0_58, %c0_59, %c0_60] : memref<2x56x112xf32, #tpu.memory_space<vmem>>, vector<1x56x112xf32>
    %62 = vector.shape_cast %61 : vector<1x56x112xf32> to vector<56x112xf32>
    %cst_61 = arith.constant dense<0.000000e+00> : vector<56x448xf32>
    %63 = tpu.matmul %62, %60, %cst_61 {dimension_numbers = #tpu.dot_dimension_numbers<[1], [0], [0], [1], [0, 0, 1, 1], [], []>} : vector<56x112xf32>, vector<112x448xf32>, vector<56x448xf32> -> vector<56x448xf32>
    %c1_62 = arith.constant 1 : index
    %c0_63 = arith.constant 0 : index
    %c0_64 = arith.constant 0 : index
    %64 = vector.load %arg10[%c1_62, %c0_63, %c0_64] : memref<2x56x112xf32, #tpu.memory_space<vmem>>, vector<1x56x112xf32>
    %65 = vector.shape_cast %64 : vector<1x56x112xf32> to vector<56x112xf32>
    %cst_65 = arith.constant dense<0.000000e+00> : vector<56x448xf32>
    %66 = tpu.matmul %65, %60, %cst_65 {dimension_numbers = #tpu.dot_dimension_numbers<[1], [0], [0], [1], [0, 0, 1, 1], [], []>} : vector<56x112xf32>, vector<112x448xf32>, vector<56x448xf32> -> vector<56x448xf32>
    %67 = arith.maximumf %63, %66 : vector<56x448xf32>
    %c0_66 = arith.constant 0 : index
    %c0_67 = arith.constant 0 : index
    %c0_68 = arith.constant 0 : index
    %68 = vector.load %arg11[%c0_66, %c0_67, %c0_68] : memref<2x448x224xf32, #tpu.memory_space<vmem>>, vector<1x448x224xf32>
    %69 = vector.shape_cast %68 : vector<1x448x224xf32> to vector<448x224xf32>
    %cst_69 = arith.constant dense<0.000000e+00> : vector<56x224xf32>
    %70 = tpu.matmul %67, %69, %cst_69 {dimension_numbers = #tpu.dot_dimension_numbers<[1], [0], [0], [1], [0, 0, 1, 1], [], []>} : vector<56x448xf32>, vector<448x224xf32>, vector<56x224xf32> -> vector<56x224xf32>
    %c1_70 = arith.constant 1 : index
    %c0_71 = arith.constant 0 : index
    %c0_72 = arith.constant 0 : index
    %71 = vector.load %arg11[%c1_70, %c0_71, %c0_72] : memref<2x448x224xf32, #tpu.memory_space<vmem>>, vector<1x448x224xf32>
    %72 = vector.shape_cast %71 : vector<1x448x224xf32> to vector<448x224xf32>
    %cst_73 = arith.constant dense<0.000000e+00> : vector<56x224xf32>
    %73 = tpu.matmul %67, %72, %cst_73 {dimension_numbers = #tpu.dot_dimension_numbers<[1], [0], [0], [1], [0, 0, 1, 1], [], []>} : vector<56x448xf32>, vector<448x224xf32>, vector<56x224xf32> -> vector<56x224xf32>
    %74 = arith.maximumf %70, %73 : vector<56x224xf32>
    %75 = arith.truncf %74 : vector<56x224xf32> to vector<56x224xbf16>
    %76 = vector.extract_strided_slice %75 {offsets = [0, 0], sizes = [8, 224], strides = [1, 1]} : vector<56x224xbf16> to vector<8x224xbf16>
    %c0_74 = arith.constant 0 : index
    %c0_75 = arith.constant 0 : index
    %c0_76 = arith.constant 0 : index
    %77 = vector.load %arg12[%c0_74, %c0_75, %c0_76] : memref<7x224x128xbf16, #tpu.memory_space<vmem>>, vector<1x224x128xbf16>
    %78 = vector.shape_cast %77 : vector<1x224x128xbf16> to vector<224x128xbf16>
    %cst_77 = arith.constant dense<0.000000e+00> : vector<8x128xf32>
    %79 = tpu.matmul %76, %78, %cst_77 {dimension_numbers = #tpu.dot_dimension_numbers<[1], [0], [0], [1], [0, 0, 1, 1], [], []>} : vector<8x224xbf16>, vector<224x128xbf16>, vector<8x128xf32> -> vector<8x128xf32>
    %80 = vector.extract_strided_slice %75 {offsets = [8, 0], sizes = [8, 224], strides = [1, 1]} : vector<56x224xbf16> to vector<8x224xbf16>
    %c1_78 = arith.constant 1 : index
    %c0_79 = arith.constant 0 : index
    %c0_80 = arith.constant 0 : index
    %81 = vector.load %arg12[%c1_78, %c0_79, %c0_80] : memref<7x224x128xbf16, #tpu.memory_space<vmem>>, vector<1x224x128xbf16>
    %82 = vector.shape_cast %81 : vector<1x224x128xbf16> to vector<224x128xbf16>
    %cst_81 = arith.constant dense<0.000000e+00> : vector<8x128xf32>
    %83 = tpu.matmul %80, %82, %cst_81 {dimension_numbers = #tpu.dot_dimension_numbers<[1], [0], [0], [1], [0, 0, 1, 1], [], []>} : vector<8x224xbf16>, vector<224x128xbf16>, vector<8x128xf32> -> vector<8x128xf32>
    %84 = arith.addf %79, %83 : vector<8x128xf32>
    %85 = vector.extract_strided_slice %75 {offsets = [16, 0], sizes = [8, 224], strides = [1, 1]} : vector<56x224xbf16> to vector<8x224xbf16>
    %c2_82 = arith.constant 2 : index
    %c0_83 = arith.constant 0 : index
    %c0_84 = arith.constant 0 : index
    %86 = vector.load %arg12[%c2_82, %c0_83, %c0_84] : memref<7x224x128xbf16, #tpu.memory_space<vmem>>, vector<1x224x128xbf16>
    %87 = vector.shape_cast %86 : vector<1x224x128xbf16> to vector<224x128xbf16>
    %cst_85 = arith.constant dense<0.000000e+00> : vector<8x128xf32>
    %88 = tpu.matmul %85, %87, %cst_85 {dimension_numbers = #tpu.dot_dimension_numbers<[1], [0], [0], [1], [0, 0, 1, 1], [], []>} : vector<8x224xbf16>, vector<224x128xbf16>, vector<8x128xf32> -> vector<8x128xf32>
    %89 = arith.addf %84, %88 : vector<8x128xf32>
    %90 = vector.extract_strided_slice %75 {offsets = [24, 0], sizes = [8, 224], strides = [1, 1]} : vector<56x224xbf16> to vector<8x224xbf16>
    %c3 = arith.constant 3 : index
    %c0_86 = arith.constant 0 : index
    %c0_87 = arith.constant 0 : index
    %91 = vector.load %arg12[%c3, %c0_86, %c0_87] : memref<7x224x128xbf16, #tpu.memory_space<vmem>>, vector<1x224x128xbf16>
    %92 = vector.shape_cast %91 : vector<1x224x128xbf16> to vector<224x128xbf16>
    %cst_88 = arith.constant dense<0.000000e+00> : vector<8x128xf32>
    %93 = tpu.matmul %90, %92, %cst_88 {dimension_numbers = #tpu.dot_dimension_numbers<[1], [0], [0], [1], [0, 0, 1, 1], [], []>} : vector<8x224xbf16>, vector<224x128xbf16>, vector<8x128xf32> -> vector<8x128xf32>
    %94 = arith.addf %89, %93 : vector<8x128xf32>
    %95 = vector.extract_strided_slice %75 {offsets = [32, 0], sizes = [8, 224], strides = [1, 1]} : vector<56x224xbf16> to vector<8x224xbf16>
    %c4 = arith.constant 4 : index
    %c0_89 = arith.constant 0 : index
    %c0_90 = arith.constant 0 : index
    %96 = vector.load %arg12[%c4, %c0_89, %c0_90] : memref<7x224x128xbf16, #tpu.memory_space<vmem>>, vector<1x224x128xbf16>
    %97 = vector.shape_cast %96 : vector<1x224x128xbf16> to vector<224x128xbf16>
    %cst_91 = arith.constant dense<0.000000e+00> : vector<8x128xf32>
    %98 = tpu.matmul %95, %97, %cst_91 {dimension_numbers = #tpu.dot_dimension_numbers<[1], [0], [0], [1], [0, 0, 1, 1], [], []>} : vector<8x224xbf16>, vector<224x128xbf16>, vector<8x128xf32> -> vector<8x128xf32>
    %99 = arith.addf %94, %98 : vector<8x128xf32>
    %100 = vector.extract_strided_slice %75 {offsets = [40, 0], sizes = [8, 224], strides = [1, 1]} : vector<56x224xbf16> to vector<8x224xbf16>
    %c5 = arith.constant 5 : index
    %c0_92 = arith.constant 0 : index
    %c0_93 = arith.constant 0 : index
    %101 = vector.load %arg12[%c5, %c0_92, %c0_93] : memref<7x224x128xbf16, #tpu.memory_space<vmem>>, vector<1x224x128xbf16>
    %102 = vector.shape_cast %101 : vector<1x224x128xbf16> to vector<224x128xbf16>
    %cst_94 = arith.constant dense<0.000000e+00> : vector<8x128xf32>
    %103 = tpu.matmul %100, %102, %cst_94 {dimension_numbers = #tpu.dot_dimension_numbers<[1], [0], [0], [1], [0, 0, 1, 1], [], []>} : vector<8x224xbf16>, vector<224x128xbf16>, vector<8x128xf32> -> vector<8x128xf32>
    %104 = arith.addf %99, %103 : vector<8x128xf32>
    %105 = vector.extract_strided_slice %75 {offsets = [48, 0], sizes = [8, 224], strides = [1, 1]} : vector<56x224xbf16> to vector<8x224xbf16>
    %c6 = arith.constant 6 : index
    %c0_95 = arith.constant 0 : index
    %c0_96 = arith.constant 0 : index
    %106 = vector.load %arg12[%c6, %c0_95, %c0_96] : memref<7x224x128xbf16, #tpu.memory_space<vmem>>, vector<1x224x128xbf16>
    %107 = vector.shape_cast %106 : vector<1x224x128xbf16> to vector<224x128xbf16>
    %cst_97 = arith.constant dense<0.000000e+00> : vector<8x128xf32>
    %108 = tpu.matmul %105, %107, %cst_97 {dimension_numbers = #tpu.dot_dimension_numbers<[1], [0], [0], [1], [0, 0, 1, 1], [], []>} : vector<8x224xbf16>, vector<224x128xbf16>, vector<8x128xf32> -> vector<8x128xf32>
    %109 = arith.addf %104, %108 : vector<8x128xf32>
    %c0_98 = arith.constant 0 : index
    %c0_99 = arith.constant 0 : index
    %110 = vector.load %arg13[%c0_98, %c0_99] : memref<1x128xf32, #tpu.memory_space<vmem>>, vector<1x128xf32>
    %111 = vector.broadcast %110 : vector<1x128xf32> to vector<8x128xf32>
    %112 = arith.addf %109, %111 : vector<8x128xf32>
    %cst_100 = arith.constant 0.000000e+00 : f32
    %113 = vector.broadcast %cst_100 : f32 to vector<8x128xf32>
    %114 = arith.maximumf %112, %113 : vector<8x128xf32>
    %115 = arith.truncf %114 : vector<8x128xf32> to vector<8x128xbf16>
    %c0_101 = arith.constant 0 : index
    %c0_102 = arith.constant 0 : index
    %116 = vector.load %arg14[%c0_101, %c0_102] : memref<128x128xbf16, #tpu.memory_space<vmem>>, vector<128x128xbf16>
    %cst_103 = arith.constant dense<0.000000e+00> : vector<8x128xf32>
    %117 = tpu.matmul %115, %116, %cst_103 {dimension_numbers = #tpu.dot_dimension_numbers<[1], [0], [0], [1], [0, 0, 1, 1], [], []>} : vector<8x128xbf16>, vector<128x128xbf16>, vector<8x128xf32> -> vector<8x128xf32>
    %c0_104 = arith.constant 0 : index
    %c0_105 = arith.constant 0 : index
    %118 = vector.load %arg15[%c0_104, %c0_105] : memref<1x128xf32, #tpu.memory_space<vmem>>, vector<1x128xf32>
    %119 = vector.broadcast %118 : vector<1x128xf32> to vector<8x128xf32>
    %120 = arith.addf %117, %119 : vector<8x128xf32>
    %cst_106 = arith.constant 0.000000e+00 : f32
    %121 = vector.broadcast %cst_106 : f32 to vector<8x128xf32>
    %122 = arith.maximumf %120, %121 : vector<8x128xf32>
    %123 = arith.truncf %122 : vector<8x128xf32> to vector<8x128xbf16>
    %c0_107 = arith.constant 0 : index
    %c0_108 = arith.constant 0 : index
    %124 = vector.load %arg16[%c0_107, %c0_108] : memref<128x128xbf16, #tpu.memory_space<vmem>>, vector<128x128xbf16>
    %cst_109 = arith.constant dense<0.000000e+00> : vector<8x128xf32>
    %125 = tpu.matmul %123, %124, %cst_109 {dimension_numbers = #tpu.dot_dimension_numbers<[1], [0], [0], [1], [0, 0, 1, 1], [], []>} : vector<8x128xbf16>, vector<128x128xbf16>, vector<8x128xf32> -> vector<8x128xf32>
    %c0_110 = arith.constant 0 : index
    %c0_111 = arith.constant 0 : index
    %126 = vector.load %arg17[%c0_110, %c0_111] : memref<1x128xf32, #tpu.memory_space<vmem>>, vector<1x128xf32>
    %127 = vector.broadcast %126 : vector<1x128xf32> to vector<8x128xf32>
    %128 = arith.addf %125, %127 : vector<8x128xf32>
    %c0_112 = arith.constant 0 : index
    %c0_113 = arith.constant 0 : index
    %129 = vector.load %arg18[%c0_112, %c0_113] : memref<8x128xf32, #tpu.memory_space<vmem>>, vector<8x128xf32>
    tpu.vector_store %arg18[%c0_112, %c0_113], %128 {strides = array<i32>} : memref<8x128xf32, #tpu.memory_space<vmem>>, vector<8x128xf32>,
    return
  }
  func.func @transform_0(%arg0: i32) -> (i32, i32) {
    %c0_i32 = arith.constant 0 : i32
    %c0_i32_0 = arith.constant 0 : i32
    return %arg0, %c0_i32 : i32, i32
  }
  func.func @transform_1(%arg0: i32) -> (i32, i32, i32) {
    %c0_i32 = arith.constant 0 : i32
    %c0_i32_0 = arith.constant 0 : i32
    %c0_i32_1 = arith.constant 0 : i32
    %c0_i32_2 = arith.constant 0 : i32
    return %c0_i32, %c0_i32_0, %c0_i32_1 : i32, i32, i32
  }
  func.func @transform_2(%arg0: i32) -> (i32, i32, i32) {
    %c0_i32 = arith.constant 0 : i32
    %c0_i32_0 = arith.constant 0 : i32
    %c0_i32_1 = arith.constant 0 : i32
    %c0_i32_2 = arith.constant 0 : i32
    return %c0_i32, %c0_i32_0, %c0_i32_1 : i32, i32, i32
  }
  func.func @transform_3(%arg0: i32) -> (i32, i32) {
    %c0_i32 = arith.constant 0 : i32
    %c0_i32_0 = arith.constant 0 : i32
    %c0_i32_1 = arith.constant 0 : i32
    return %c0_i32, %c0_i32_0 : i32, i32
  }
  func.func @transform_4(%arg0: i32) -> (i32, i32) {
    %c0_i32 = arith.constant 0 : i32
    %c0_i32_0 = arith.constant 0 : i32
    %c0_i32_1 = arith.constant 0 : i32
    return %c0_i32, %c0_i32_0 : i32, i32
  }
  func.func @transform_5(%arg0: i32) -> (i32, i32) {
    %c0_i32 = arith.constant 0 : i32
    %c0_i32_0 = arith.constant 0 : i32
    %c0_i32_1 = arith.constant 0 : i32
    return %c0_i32, %c0_i32_0 : i32, i32
  }
  func.func @transform_6(%arg0: i32) -> (i32, i32, i32) {
    %c0_i32 = arith.constant 0 : i32
    %c0_i32_0 = arith.constant 0 : i32
    %c0_i32_1 = arith.constant 0 : i32
    %c0_i32_2 = arith.constant 0 : i32
    return %c0_i32, %c0_i32_0, %c0_i32_1 : i32, i32, i32
  }
  func.func @transform_7(%arg0: i32) -> (i32, i32, i32) {
    %c0_i32 = arith.constant 0 : i32
    %c0_i32_0 = arith.constant 0 : i32
    %c0_i32_1 = arith.constant 0 : i32
    %c0_i32_2 = arith.constant 0 : i32
    return %c0_i32, %c0_i32_0, %c0_i32_1 : i32, i32, i32
  }
  func.func @transform_8(%arg0: i32) -> (i32, i32) {
    %c0_i32 = arith.constant 0 : i32
    %c0_i32_0 = arith.constant 0 : i32
    %c0_i32_1 = arith.constant 0 : i32
    return %c0_i32, %c0_i32_0 : i32, i32
  }
  func.func @transform_9(%arg0: i32) -> (i32, i32, i32) {
    %c0_i32 = arith.constant 0 : i32
    %c0_i32_0 = arith.constant 0 : i32
    %c0_i32_1 = arith.constant 0 : i32
    %c0_i32_2 = arith.constant 0 : i32
    return %c0_i32, %c0_i32_0, %c0_i32_1 : i32, i32, i32
  }
  func.func @transform_10(%arg0: i32) -> (i32, i32, i32) {
    %c0_i32 = arith.constant 0 : i32
    %c0_i32_0 = arith.constant 0 : i32
    %c0_i32_1 = arith.constant 0 : i32
    %c0_i32_2 = arith.constant 0 : i32
    return %c0_i32, %c0_i32_0, %c0_i32_1 : i32, i32, i32
  }
  func.func @transform_11(%arg0: i32) -> (i32, i32, i32) {
    %c0_i32 = arith.constant 0 : i32
    %c0_i32_0 = arith.constant 0 : i32
    %c0_i32_1 = arith.constant 0 : i32
    %c0_i32_2 = arith.constant 0 : i32
    return %c0_i32, %c0_i32_0, %c0_i32_1 : i32, i32, i32
  }
  func.func @transform_12(%arg0: i32) -> (i32, i32) {
    %c0_i32 = arith.constant 0 : i32
    %c0_i32_0 = arith.constant 0 : i32
    %c0_i32_1 = arith.constant 0 : i32
    return %c0_i32, %c0_i32_0 : i32, i32
  }
  func.func @transform_13(%arg0: i32) -> (i32, i32) {
    %c0_i32 = arith.constant 0 : i32
    %c0_i32_0 = arith.constant 0 : i32
    %c0_i32_1 = arith.constant 0 : i32
    return %c0_i32, %c0_i32_0 : i32, i32
  }
  func.func @transform_14(%arg0: i32) -> (i32, i32) {
    %c0_i32 = arith.constant 0 : i32
    %c0_i32_0 = arith.constant 0 : i32
    %c0_i32_1 = arith.constant 0 : i32
    return %c0_i32, %c0_i32_0 : i32, i32
  }
  func.func @transform_15(%arg0: i32) -> (i32, i32) {
    %c0_i32 = arith.constant 0 : i32
    %c0_i32_0 = arith.constant 0 : i32
    %c0_i32_1 = arith.constant 0 : i32
    return %c0_i32, %c0_i32_0 : i32, i32
  }
  func.func @transform_16(%arg0: i32) -> (i32, i32) {
    %c0_i32 = arith.constant 0 : i32
    %c0_i32_0 = arith.constant 0 : i32
    %c0_i32_1 = arith.constant 0 : i32
    return %c0_i32, %c0_i32_0 : i32, i32
  }
  func.func @transform_17(%arg0: i32) -> (i32, i32) {
    %c0_i32 = arith.constant 0 : i32
    %c0_i32_0 = arith.constant 0 : i32
    return %arg0, %c0_i32 : i32, i32
  }
}

</mosaic_0001>

<llo_original>
// kernel: convnet_forward.1
$region0: #{convnet_forward.1}
  #allocation0 [shape = 'u32[]', space=smem, size = 0x4, offset = 0x4, fixed_abs, tag = 'smem constant byte address 0x4 - core index']
  #allocation1 [shape = 'u32[144,128]{1,0:T(1,128)}', space=vmem, size = 0x12000, scoped, tag = 'internal scratch']
  %s0 = inlined_call_operand.vmem [shape: f32[224,28], index: 0, kind: input, shape index: {}]
  %s1 = inlined_call_operand.hbm [shape: f32[3,224,224], index: 1, kind: input, shape index: {}]
  %s2 = inlined_call_operand.hbm [shape: bf16[3,28,448], index: 2, kind: input, shape index: {}]
  %s3 = inlined_call_operand.vmem [shape: f32[1,448], index: 3, kind: input, shape index: {}]
  %s4 = inlined_call_operand.hbm [shape: f32[112,224], index: 4, kind: input, shape index: {}]
  %s5 = inlined_call_operand.vmem [shape: f32[448,224], index: 5, kind: input, shape index: {}]
  %s6 = inlined_call_operand.hbm [shape: f32[3,112,112], index: 6, kind: input, shape index: {}]
  %s7 = inlined_call_operand.hbm [shape: bf16[3,224,448], index: 7, kind: input, shape index: {}]
  %s8 = inlined_call_operand.hbm [shape: f32[1,448], index: 8, kind: input, shape index: {}]
  %s9 = inlined_call_operand.vmem [shape: f32[2,56,112], index: 9, kind: input, shape index: {}]
  %s10 = inlined_call_operand.hbm [shape: f32[2,448,224], index: 10, kind: input, shape index: {}]
  %s11 = inlined_call_operand.hbm [shape: bf16[7,224,128], index: 11, kind: input, shape index: {}]
  %s12 = inlined_call_operand.vmem [shape: f32[1,128], index: 12, kind: input, shape index: {}]
  %s13 = inlined_call_operand.hbm [shape: bf16[128,128], index: 13, kind: input, shape index: {}]
  %s14 = inlined_call_operand.vmem [shape: f32[1,128], index: 14, kind: input, shape index: {}]
  %s15 = inlined_call_operand.vmem [shape: bf16[128,128], index: 15, kind: input, shape index: {}]
  %s16 = inlined_call_operand.hbm [shape: f32[1,128], index: 16, kind: input, shape index: {}]
  %s17 = inlined_call_operand.vmem [shape: f32[8,128], index: 17, kind: output, shape index: {}]
  %s18 = sld [smem:[#allocation0]]
  $region118: #{convnet_forward.1} parent=0
    _
  %s20 = ssub.s32 1, %s18
  %s21 = scalar_select 0, %s20, %s18
  $region1: #{convnet_forward.1} parent=0
    #allocation2 [shape = 'u8[688128]{0}', space=vmem, size = 0xa8000, scoped, tag = 'input window, operand 1, single buffered']
    #allocation3 [shape = 's32[1]{0}', space=sflag, size = 0x4, scoped, tag = 'scoped memory for convnet_forward.1']
    #allocation4 [shape = 'u8[98304]{0}', space=vmem, size = 0x18000, scoped, tag = 'input window, operand 2, single buffered']
    #allocation5 [shape = 's32[1]{0}', space=sflag, size = 0x4, scoped, tag = 'scoped memory for convnet_forward.1']
    #allocation6 [shape = 'u8[114688]{0}', space=vmem, size = 0x1c000, scoped, tag = 'input window, operand 4, single buffered']
    #allocation7 [shape = 'u8[172032]{0}', space=vmem, size = 0x2a000, scoped, tag = 'input window, operand 6, single buffered']
    #allocation8 [shape = 's32[1]{0}', space=sflag, size = 0x4, scoped, tag = 'scoped memory for convnet_forward.1']
    #allocation9 [shape = 'u8[688128]{0}', space=vmem, size = 0xa8000, scoped, tag = 'input window, operand 7, single buffered']
    #allocation10 [shape = 'u8[2048]{0}', space=vmem, size = 0x800, scoped, tag = 'input window, operand 8, single buffered']
    #allocation11 [shape = 's32[1]{0}', space=sflag, size = 0x4, scoped, tag = 'scoped memory for convnet_forward.1']
    #allocation12 [shape = 'u8[917504]{0}', space=vmem, size = 0xe0000, scoped, tag = 'input window, operand 10, single buffered']
    #allocation13 [shape = 'u8[401408]{0}', space=vmem, size = 0x62000, scoped, tag = 'input window, operand 11, single buffered']
    #allocation14 [shape = 's32[1]{0}', space=sflag, size = 0x4, scoped, tag = 'scoped memory for convnet_forward.1']
    #allocation15 [shape = 'u8[32768]{0}', space=vmem, size = 0x8000, scoped, tag = 'input window, operand 13, single buffered']
    #allocation16 [shape = 'u8[512]{0}', space=vmem, size = 0x400, scoped, tag = 'input window, operand 16, single buffered']
    #allocation17 [shape = 's32[1]{0}', space=sflag, size = 0x4, scoped, tag = 'scoped memory for convnet_forward.1']
    %22 = vsyncpa [#allocation3], 0
    %23 = vsyncpa [#allocation5], 0
    %24 = vsyncpa [#allocation8], 0
    %25 = vsyncpa [#allocation11], 0
    %26 = vsyncpa [#allocation14], 0
    %27 = vsyncpa [#allocation17], 0
    // Predicated region
    $region2: #{convnet_forward.1} parent=1 // pred_check
      _
    $region3: #{convnet_forward.1} parent=1 // pred_check_branch
      %29 = sbr.rel (0) target = $region5
    $region4: #{convnet_forward.1} parent=1 // pred_region
      _
    $region5: #{convnet_forward.1} parent=1 // pred_fallthru
      _
    // Predicated region
    $region6: #{convnet_forward.1} parent=1 // pred_check
      _
    $region7: #{convnet_forward.1} parent=1 // pred_check_branch
      %31 = sbr.rel (0) target = $region9
    $region8: #{convnet_forward.1} parent=1 // pred_region
      %s33 = ssub.s32 21504, 21504
      %34 = vsyncadd [#allocation3], %s33
      %s35 = sshll.u32 [#allocation2], 4
      %s36 = int_to_ptr.vmem [resolvable:$true] %s35
      %41 = dma.hbm_to_vmem [thread:$0]  %s1, 21504, %s36, [#allocation3], 256, 256, 16
    $region9: #{convnet_forward.1} parent=1 // pred_fallthru
      _
    // Predicated region
    $region10: #{convnet_forward.1} parent=1 // pred_check
      _
    $region11: #{convnet_forward.1} parent=1 // pred_check_branch
      %43 = sbr.rel (0) target = $region13
    $region12: #{convnet_forward.1} parent=1 // pred_region
      %s45 = ssub.s32 3072, 3072
      %46 = vsyncadd [#allocation5], %s45
      %s47 = sshll.u32 [#allocation4], 4
      %s48 = int_to_ptr.vmem [resolvable:$true] %s47
      %53 = dma.hbm_to_vmem [thread:$0]  %s2, 3072, %s48, [#allocation5], 256, 256, 16
    $region13: #{convnet_forward.1} parent=1 // pred_fallthru
      _
    // Predicated region
    $region14: #{convnet_forward.1} parent=1 // pred_check
      _
    $region15: #{convnet_forward.1} parent=1 // pred_check_branch
      %55 = sbr.rel (0) target = $region17
    $region16: #{convnet_forward.1} parent=1 // pred_region
      _
    $region17: #{convnet_forward.1} parent=1 // pred_fallthru
      _
    // Predicated region
    $region18: #{convnet_forward.1} parent=1 // pred_check
      _
    $region19: #{convnet_forward.1} parent=1 // pred_check_branch
      %57 = sbr.rel (0) target = $region21
    $region20: #{convnet_forward.1} parent=1 // pred_region
      %s59 = ssub.s32 3584, 3584
      %60 = vsyncadd [#allocation5], %s59
      %s61 = sshll.u32 [#allocation6], 4
      %s62 = int_to_ptr.vmem [resolvable:$true] %s61
      %67 = dma.hbm_to_vmem [thread:$0]  %s4, 3584, %s62, [#allocation5], 256, 256, 16
    $region21: #{convnet_forward.1} parent=1 // pred_fallthru
      _
    // Predicated region
    $region22: #{convnet_forward.1} parent=1 // pred_check
      _
    $region23: #{convnet_forward.1} parent=1 // pred_check_branch
      %69 = sbr.rel (0) target = $region25
    $region24: #{convnet_forward.1} parent=1 // pred_region
      _
    $region25: #{convnet_forward.1} parent=1 // pred_fallthru
      _
    // Predicated region
    $region26: #{convnet_forward.1} parent=1 // pred_check
      _
    $region27: #{convnet_forward.1} parent=1 // pred_check_branch
      %71 = sbr.rel (0) target = $region29
    $region28: #{convnet_forward.1} parent=1 // pred_region
      %s73 = ssub.s32 5376, 5376
      %74 = vsyncadd [#allocation8], %s73
      %s75 = sshll.u32 [#allocation7], 4
      %s76 = int_to_ptr.vmem [resolvable:$true] %s75
      %81 = dma.hbm_to_vmem [thread:$0]  %s6, 5376, %s76, [#allocation8], 128, 128, 8
    $region29: #{convnet_forward.1} parent=1 // pred_fallthru
      _
    // Predicated region
    $region30: #{convnet_forward.1} parent=1 // pred_check
      _
    $region31: #{convnet_forward.1} parent=1 // pred_check_branch
      %83 = sbr.rel (0) target = $region33
    $region32: #{convnet_forward.1} parent=1 // pred_region
      %s85 = ssub.s32 21504, 21504
      %86 = vsyncadd [#allocation8], %s85
      %s87 = sshll.u32 [#allocation9], 4
      %s88 = int_to_ptr.vmem [resolvable:$true] %s87
      %93 = dma.hbm_to_vmem [thread:$0]  %s7, 21504, %s88, [#allocation8], 256, 256, 16
    $region33: #{convnet_forward.1} parent=1 // pred_fallthru
      _
    // Predicated region
    $region34: #{convnet_forward.1} parent=1 // pred_check
      _
    $region35: #{convnet_forward.1} parent=1 // pred_check_branch
      %95 = sbr.rel (0) target = $region37
    $region36: #{convnet_forward.1} parent=1 // pred_region
      %s97 = ssub.s32 64, 64
      %98 = vsyncadd [#allocation11], %s97
      %s100 = sshll.u32 [#allocation10], 4
      %s101 = int_to_ptr.vmem [resolvable:$true] %s100
      %103 = dma.hbm_to_vmem [thread:$0]  %s8, 64, %s101, [#allocation11]
    $region37: #{convnet_forward.1} parent=1 // pred_fallthru
      _
    // Predicated region
    $region38: #{convnet_forward.1} parent=1 // pred_check
      _
    $region39: #{convnet_forward.1} parent=1 // pred_check_branch
      %105 = sbr.rel (0) target = $region41
    $region40: #{convnet_forward.1} parent=1 // pred_region
      _
    $region41: #{convnet_forward.1} parent=1 // pred_fallthru
      _
    // Predicated region
    $region42: #{convnet_forward.1} parent=1 // pred_check
      _
    $region43: #{convnet_forward.1} parent=1 // pred_check_branch
      %107 = sbr.rel (0) target = $region45
    $region44: #{convnet_forward.1} parent=1 // pred_region
      %s109 = ssub.s32 28672, 28672
      %110 = vsyncadd [#allocation11], %s109
      %s111 = sshll.u32 [#allocation12], 4
      %s112 = int_to_ptr.vmem [resolvable:$true] %s111
      %117 = dma.hbm_to_vmem [thread:$0]  %s10, 28672, %s112, [#allocation11], 256, 256, 16
    $region45: #{convnet_forward.1} parent=1 // pred_fallthru
      _
    // Predicated region
    $region46: #{convnet_forward.1} parent=1 // pred_check
      _
    $region47: #{convnet_forward.1} parent=1 // pred_check_branch
      %119 = sbr.rel (0) target = $region49
    $region48: #{convnet_forward.1} parent=1 // pred_region
      %s121 = ssub.s32 12544, 12544
      %122 = vsyncadd [#allocation14], %s121
      %s123 = sshll.u32 [#allocation13], 4
      %s124 = int_to_ptr.vmem [resolvable:$true] %s123
      %129 = dma.hbm_to_vmem [thread:$0]  %s11, 12544, %s124, [#allocation14], 64, 64, 4
    $region49: #{convnet_forward.1} parent=1 // pred_fallthru
      _
    // Predicated region
    $region50: #{convnet_forward.1} parent=1 // pred_check
      _
    $region51: #{convnet_forward.1} parent=1 // pred_check_branch
      %131 = sbr.rel (0) target = $region53
    $region52: #{convnet_forward.1} parent=1 // pred_region
      _
    $region53: #{convnet_forward.1} parent=1 // pred_fallthru
      _
    // Predicated region
    $region54: #{convnet_forward.1} parent=1 // pred_check
      _
    $region55: #{convnet_forward.1} parent=1 // pred_check_branch
      %133 = sbr.rel (0) target = $region57
    $region56: #{convnet_forward.1} parent=1 // pred_region
      %s135 = ssub.s32 1024, 1024
      %136 = vsyncadd [#allocation14], %s135
      %s137 = sshll.u32 [#allocation15], 4
      %s138 = int_to_ptr.vmem [resolvable:$true] %s137
      %143 = dma.hbm_to_vmem [thread:$0]  %s13, 1024, %s138, [#allocation14], 64, 64, 4
    $region57: #{convnet_forward.1} parent=1 // pred_fallthru
      _
    // Predicated region
    $region58: #{convnet_forward.1} parent=1 // pred_check
      _
    $region59: #{convnet_forward.1} parent=1 // pred_check_branch
      %145 = sbr.rel (0) target = $region61
    $region60: #{convnet_forward.1} parent=1 // pred_region
      _
    $region61: #{convnet_forward.1} parent=1 // pred_fallthru
      _
    // Predicated region
    $region62: #{convnet_forward.1} parent=1 // pred_check
      _
    $region63: #{convnet_forward.1} parent=1 // pred_check_branch
      %147 = sbr.rel (0) target = $region65
    $region64: #{convnet_forward.1} parent=1 // pred_region
      _
    $region65: #{convnet_forward.1} parent=1 // pred_fallthru
      _
    // Predicated region
    $region66: #{convnet_forward.1} parent=1 // pred_check
      _
    $region67: #{convnet_forward.1} parent=1 // pred_check_branch
      %149 = sbr.rel (0) target = $region69
    $region68: #{convnet_forward.1} parent=1 // pred_region
      %s151 = ssub.s32 16, 16
      %152 = vsyncadd [#allocation17], %s151
      %s154 = sshll.u32 [#allocation16], 4
      %s155 = int_to_ptr.vmem [resolvable:$true] %s154
      %157 = dma.hbm_to_vmem [thread:$0]  %s16, 16, %s155, [#allocation17]
    $region69: #{convnet_forward.1} parent=1 // pred_fallthru
      _
    // Predicated region
    $region70: #{convnet_forward.1} parent=1 // pred_check
      _
    $region71: #{convnet_forward.1} parent=1 // pred_check_branch
      %159 = sbr.rel (0) target = $region73
    $region72: #{convnet_forward.1} parent=1 // pred_region
      %160 = dma.done [#allocation3], 21504
    $region73: #{convnet_forward.1} parent=1 // pred_fallthru
      _
    // Predicated region
    $region74: #{convnet_forward.1} parent=1 // pred_check
      _
    $region75: #{convnet_forward.1} parent=1 // pred_check_branch
      %162 = sbr.rel (0) target = $region77
    $region76: #{convnet_forward.1} parent=1 // pred_region
      %163 = dma.done [#allocation5], 3072
    $region77: #{convnet_forward.1} parent=1 // pred_fallthru
      _
    // Predicated region
    $region78: #{convnet_forward.1} parent=1 // pred_check
      _
    $region79: #{convnet_forward.1} parent=1 // pred_check_branch
      %165 = sbr.rel (0) target = $region81
    $region80: #{convnet_forward.1} parent=1 // pred_region
      %166 = dma.done [#allocation5], 3584
    $region81: #{convnet_forward.1} parent=1 // pred_fallthru
      _
    // Predicated region
    $region82: #{convnet_forward.1} parent=1 // pred_check
      _
    $region83: #{convnet_forward.1} parent=1 // pred_check_branch
      %168 = sbr.rel (0) target = $region85
    $region84: #{convnet_forward.1} parent=1 // pred_region
      %169 = dma.done [#allocation8], 5376
    $region85: #{convnet_forward.1} parent=1 // pred_fallthru
      _
    // Predicated region
    $region86: #{convnet_forward.1} parent=1 // pred_check
      _
    $region87: #{convnet_forward.1} parent=1 // pred_check_branch
      %171 = sbr.rel (0) target = $region89
    $region88: #{convnet_forward.1} parent=1 // pred_region
      %172 = dma.done [#allocation8], 21504
    $region89: #{convnet_forward.1} parent=1 // pred_fallthru
      _
    // Predicated region
    $region90: #{convnet_forward.1} parent=1 // pred_check
      _
    $region91: #{convnet_forward.1} parent=1 // pred_check_branch
      %174 = sbr.rel (0) target = $region93
    $region92: #{convnet_forward.1} parent=1 // pred_region
      %175 = dma.done [#allocation11], 64
    $region93: #{convnet_forward.1} parent=1 // pred_fallthru
      _
    // Predicated region
    $region94: #{convnet_forward.1} parent=1 // pred_check
      _
    $region95: #{convnet_forward.1} parent=1 // pred_check_branch
      %177 = sbr.rel (0) target = $region97
    $region96: #{convnet_forward.1} parent=1 // pred_region
      %178 = dma.done [#allocation11], 28672
    $region97: #{convnet_forward.1} parent=1 // pred_fallthru
      _
    // Predicated region
    $region98: #{convnet_forward.1} parent=1 // pred_check
      _
    $region99: #{convnet_forward.1} parent=1 // pred_check_branch
      %180 = sbr.rel (0) target = $region101
    $region100: #{convnet_forward.1} parent=1 // pred_region
      %181 = dma.done [#allocation14], 12544
    $region101: #{convnet_forward.1} parent=1 // pred_fallthru
      _
    // Predicated region
    $region102: #{convnet_forward.1} parent=1 // pred_check
      _
    $region103: #{convnet_forward.1} parent=1 // pred_check_branch
      %183 = sbr.rel (0) target = $region105
    $region104: #{convnet_forward.1} parent=1 // pred_region
      %184 = dma.done [#allocation14], 1024
    $region105: #{convnet_forward.1} parent=1 // pred_fallthru
      _
    // Predicated region
    $region106: #{convnet_forward.1} parent=1 // pred_check
      _
    $region107: #{convnet_forward.1} parent=1 // pred_check_branch
      %186 = sbr.rel (0) target = $region109
    $region108: #{convnet_forward.1} parent=1 // pred_region
      %187 = dma.done [#allocation17], 16
    $region109: #{convnet_forward.1} parent=1 // pred_fallthru
      _
    %v189 = vld [vmem:[%s0] sm:$0xff]
    %v190 = vld [vmem:[%s0 + $0x8] sm:$0xff]
    %v191 = vld [vmem:[%s0 + $0x10] sm:$0xff]
    %v192 = vld [vmem:[%s0 + $0x18] sm:$0xff]
    %v193 = vld [vmem:[%s0 + $0x20] sm:$0xff]
    %v194 = vld [vmem:[%s0 + $0x28] sm:$0xff]
    %v195 = vld [vmem:[%s0 + $0x30] sm:$0xff]
    %v196 = vld [vmem:[%s0 + $0x38] sm:$0xff]
    %v197 = vld [vmem:[%s0 + $0x40] sm:$0xff]
    %v198 = vld [vmem:[%s0 + $0x48] sm:$0xff]
    %v199 = vld [vmem:[%s0 + $0x50] sm:$0xff]
    %v200 = vld [vmem:[%s0 + $0x58] sm:$0xff]
    %v201 = vld [vmem:[%s0 + $0x60] sm:$0xff]
    %v202 = vld [vmem:[%s0 + $0x68] sm:$0xff]
    %v203 = vld [vmem:[%s0 + $0x70] sm:$0xff]
    %v204 = vld [vmem:[%s0 + $0x78] sm:$0xff]
    %v205 = vld [vmem:[%s0 + $0x80] sm:$0xff]
    %v206 = vld [vmem:[%s0 + $0x88] sm:$0xff]
    %v207 = vld [vmem:[%s0 + $0x90] sm:$0xff]
    %v208 = vld [vmem:[%s0 + $0x98] sm:$0xff]
    %v209 = vld [vmem:[%s0 + $0xa0] sm:$0xff]
    %v210 = vld [vmem:[%s0 + $0xa8] sm:$0xff]
    %v211 = vld [vmem:[%s0 + $0xb0] sm:$0xff]
    %v212 = vld [vmem:[%s0 + $0xb8] sm:$0xff]
    %v213 = vld [vmem:[%s0 + $0xc0] sm:$0xff]
    %v214 = vld [vmem:[%s0 + $0xc8] sm:$0xff]
    %v215 = vld [vmem:[%s0 + $0xd0] sm:$0xff]
    %v216 = vld [vmem:[%s0 + $0xd8] sm:$0xff]
    %v217 = vld [vmem:[#allocation2] sm:$0xff]
    %v218 = vld [vmem:[#allocation2 + $0x8] sm:$0xff]
    %v219 = vld [vmem:[#allocation2 + $0x10] sm:$0xff]
    %v220 = vld [vmem:[#allocation2 + $0x18] sm:$0xff]
    %v221 = vld [vmem:[#allocation2 + $0x20] sm:$0xff]
    %v222 = vld [vmem:[#allocation2 + $0x28] sm:$0xff]
    %v223 = vld [vmem:[#allocation2 + $0x30] sm:$0xff]
    %v224 = vld [vmem:[#allocation2 + $0x38] sm:$0xff]
    %v225 = vld [vmem:[#allocation2 + $0x40] sm:$0xff]
    %v226 = vld [vmem:[#allocation2 + $0x48] sm:$0xff]
    %v227 = vld [vmem:[#allocation2 + $0x50] sm:$0xff]
    %v228 = vld [vmem:[#allocation2 + $0x58] sm:$0xff]
    %v229 = vld [vmem:[#allocation2 + $0x60] sm:$0xff]
    %v230 = vld [vmem:[#allocation2 + $0x68] sm:$0xff]
    %v231 = vld [vmem:[#allocation2 + $0x70] sm:$0xff]
    %v232 = vld [vmem:[#allocation2 + $0x78] sm:$0xff]
    %v233 = vld [vmem:[#allocation2 + $0x80] sm:$0xff]
    %v234 = vld [vmem:[#allocation2 + $0x88] sm:$0xff]
    %v235 = vld [vmem:[#allocation2 + $0x90] sm:$0xff]
    %v236 = vld [vmem:[#allocation2 + $0x98] sm:$0xff]
    %v237 = vld [vmem:[#allocation2 + $0xa0] sm:$0xff]
    %v238 = vld [vmem:[#allocation2 + $0xa8] sm:$0xff]
    %v239 = vld [vmem:[#allocation2 + $0xb0] sm:$0xff]
    %v240 = vld [vmem:[#allocation2 + $0xb8] sm:$0xff]
    %v241 = vld [vmem:[#allocation2 + $0xc0] sm:$0xff]
    %v242 = vld [vmem:[#allocation2 + $0xc8] sm:$0xff]
    %v243 = vld [vmem:[#allocation2 + $0xd0] sm:$0xff]
    %v244 = vld [vmem:[#allocation2 + $0xd8] sm:$0xff]
    %v245 = vld [vmem:[#allocation2 + $0xe0] sm:$0xff]
    %v246 = vld [vmem:[#allocation2 + $0xe8] sm:$0xff]
    %v247 = vld [vmem:[#allocation2 + $0xf0] sm:$0xff]
    %v248 = vld [vmem:[#allocation2 + $0xf8] sm:$0xff]
    %v249 = vld [vmem:[#allocation2 + $0x100] sm:$0xff]
    %v250 = vld [vmem:[#allocation2 + $0x108] sm:$0xff]
    %v251 = vld [vmem:[#allocation2 + $0x110] sm:$0xff]
    %v252 = vld [vmem:[#allocation2 + $0x118] sm:$0xff]
    %v253 = vld [vmem:[#allocation2 + $0x120] sm:$0xff]
    %v254 = vld [vmem:[#allocation2 + $0x128] sm:$0xff]
    %v255 = vld [vmem:[#allocation2 + $0x130] sm:$0xff]
    %v256 = vld [vmem:[#allocation2 + $0x138] sm:$0xff]
    %v257 = vld [vmem:[#allocation2 + $0x140] sm:$0xff]
    %v258 = vld [vmem:[#allocation2 + $0x148] sm:$0xff]
    %v259 = vld [vmem:[#allocation2 + $0x150] sm:$0xff]
    %v260 = vld [vmem:[#allocation2 + $0x158] sm:$0xff]
    %v261 = vld [vmem:[#allocation2 + $0x160] sm:$0xff]
    %v262 = vld [vmem:[#allocation2 + $0x168] sm:$0xff]
    %v263 = vld [vmem:[#allocation2 + $0x170] sm:$0xff]
    %v264 = vld [vmem:[#allocation2 + $0x178] sm:$0xff]
    %v265 = vld [vmem:[#allocation2 + $0x180] sm:$0xff]
    %v266 = vld [vmem:[#allocation2 + $0x188] sm:$0xff]
    %v267 = vld [vmem:[#allocation2 + $0x190] sm:$0xff]
    %v268 = vld [vmem:[#allocation2 + $0x198] sm:$0xff]
    %v269 = vld [vmem:[#allocation2 + $0x1a0] sm:$0xff]
    %v270 = vld [vmem:[#allocation2 + $0x1a8] sm:$0xff]
    %v271 = vld [vmem:[#allocation2 + $0x1b0] sm:$0xff]
    %v272 = vld [vmem:[#allocation2 + $0x1b8] sm:$0xff]
    %vm273 = vcmask 785408
    %v275 = vsel %vm273, %v218, 0
    %v278 = vsel %vm273, %v220, 0
    %v281 = vsel %vm273, %v222, 0
    %v284 = vsel %vm273, %v224, 0
    %v287 = vsel %vm273, %v226, 0
    %v290 = vsel %vm273, %v228, 0
    %v293 = vsel %vm273, %v230, 0
    %v296 = vsel %vm273, %v232, 0
    %v299 = vsel %vm273, %v234, 0
    %v302 = vsel %vm273, %v236, 0
    %v305 = vsel %vm273, %v238, 0
    %v308 = vsel %vm273, %v240, 0
    %v311 = vsel %vm273, %v242, 0
    %v314 = vsel %vm273, %v244, 0
    %v317 = vsel %vm273, %v246, 0
    %v320 = vsel %vm273, %v248, 0
    %v323 = vsel %vm273, %v250, 0
    %v326 = vsel %vm273, %v252, 0
    %v329 = vsel %vm273, %v254, 0
    %v332 = vsel %vm273, %v256, 0
    %v335 = vsel %vm273, %v258, 0
    %v338 = vsel %vm273, %v260, 0
    %v341 = vsel %vm273, %v262, 0
    %v344 = vsel %vm273, %v264, 0
    %v347 = vsel %vm273, %v266, 0
    %v350 = vsel %vm273, %v268, 0
    %v353 = vsel %vm273, %v270, 0
    %v356 = vsel %vm273, %v272, 0
    %358 = vmatprep.subr.mxu0 0.0
    %359 = vmatpush1.msra.mxu0 %v189
    %360 = vmatprep.subr.mxu0 0.0
    %361 = vmatpush1.msra.mxu0 %v190
    %362 = vmatprep.subr.mxu0 0.0
    %363 = vmatpush1.msra.mxu0 %v191
    %364 = vmatprep.subr.mxu0 0.0
    %365 = vmatpush1.msra.mxu0 %v192
    %366 = vmatprep.subr.mxu0 0.0
    %367 = vmatpush1.msra.mxu0 %v193
    %368 = vmatprep.subr.mxu0 0.0
    %369 = vmatpush1.msra.mxu0 %v194
    %370 = vmatprep.subr.mxu0 0.0
    %371 = vmatpush1.msra.mxu0 %v195
    %372 = vmatprep.subr.mxu0 0.0
    %373 = vmatpush1.msra.mxu0 %v196
    %374 = vmatprep.subr.mxu0 0.0
    %375 = vmatpush1.msra.mxu0 %v197
    %376 = vmatprep.subr.mxu0 0.0
    %377 = vmatpush1.msra.mxu0 %v198
    %378 = vmatprep.subr.mxu0 0.0
    %379 = vmatpush1.msra.mxu0 %v199
    %380 = vmatprep.subr.mxu0 0.0
    %381 = vmatpush1.msra.mxu0 %v200
    %382 = vmatprep.subr.mxu0 0.0
    %383 = vmatpush1.msra.mxu0 %v201
    %384 = vmatprep.subr.mxu0 0.0
    %385 = vmatpush1.msra.mxu0 %v202
    %386 = vmatprep.subr.mxu0 0.0
    %387 = vmatpush1.msra.mxu0 %v203
    %388 = vmatprep.subr.mxu0 0.0
    %389 = vmatpush1.msra.mxu0 %v204
    %390 = vmatprep.subr.mxu0 0.0
    %391 = vmatpush1.msra.mxu0 %v205
    %392 = vmatprep.subr.mxu0 0.0
    %393 = vmatpush1.msra.mxu0 %v206
    %394 = vmatprep.subr.mxu0 0.0
    %395 = vmatpush1.msra.mxu0 %v207
    %396 = vmatprep.subr.mxu0 0.0
    %397 = vmatpush1.msra.mxu0 %v208
    %398 = vmatprep.subr.mxu0 0.0
    %399 = vmatpush1.msra.mxu0 %v209
    %400 = vmatprep.subr.mxu0 0.0
    %401 = vmatpush1.msra.mxu0 %v210
    %402 = vmatprep.subr.mxu0 0.0
    %403 = vmatpush1.msra.mxu0 %v211
    %404 = vmatprep.subr.mxu0 0.0
    %405 = vmatpush1.msra.mxu0 %v212
    %406 = vmatprep.subr.mxu0 0.0
    %407 = vmatpush1.msra.mxu0 %v213
    %408 = vmatprep.subr.mxu0 0.0
    %409 = vmatpush1.msra.mxu0 %v214
    %410 = vmatprep.subr.mxu0 0.0
    %411 = vmatpush1.msra.mxu0 %v215
    %412 = vmatprep.subr.mxu0 0.0
    %413 = vmatpush1.msra.mxu0 %v216
    %414 = vmatprep.subr.mxu0 0.0
    %415 = vmatpush1.msra.mxu0 0.0
    %416 = vmatprep.subr.mxu0 0.0
    %417 = vmatpush1.msra.mxu0 0.0
    %418 = vmatprep.subr.mxu0 0.0
    %419 = vmatpush1.msra.mxu0 0.0
    %420 = vmatprep.subr.mxu0 0.0
    %421 = vmatpush1.msra.mxu0 0.0
    %422 = vmatprep.mubr.f32.mxu0 %v275
    %423 = vmatmul.mubr.f32.gmra.mrb[0].mxu0 %v217
    %v424 = vpop.f32.mrb[0].mxu0
    %v425 = vadd.f32 0.0, %v424
    %v426 = vpop.f32.mrb[0].mxu0
    %427 = vmatprep.mubr.f32.mxu0 %v278
    %428 = vmatmul.mubr.f32.gmra.mrb[0].mxu0 %v219
    %v429 = vpop.f32.mrb[0].mxu0
    %v430 = vadd.f32 0.0, %v429
    %v431 = vpop.f32.mrb[0].mxu0
    %432 = vmatprep.mubr.f32.mxu0 %v281
    %433 = vmatmul.mubr.f32.gmra.mrb[0].mxu0 %v221
    %v434 = vpop.f32.mrb[0].mxu0
    %v435 = vadd.f32 0.0, %v434
    %v436 = vpop.f32.mrb[0].mxu0
    %437 = vmatprep.mubr.f32.mxu0 %v284
    %438 = vmatmul.mubr.f32.gmra.mrb[0].mxu0 %v223
    %v439 = vpop.f32.mrb[0].mxu0
    %v440 = vadd.f32 0.0, %v439
    %v441 = vpop.f32.mrb[0].mxu0
    %442 = vmatprep.mubr.f32.mxu0 %v287
    %443 = vmatmul.mubr.f32.gmra.mrb[0].mxu0 %v225
    %v444 = vpop.f32.mrb[0].mxu0
    %v445 = vadd.f32 0.0, %v444
    %v446 = vpop.f32.mrb[0].mxu0
    %447 = vmatprep.mubr.f32.mxu0 %v290
    %448 = vmatmul.mubr.f32.gmra.mrb[0].mxu0 %v227
    %v449 = vpop.f32.mrb[0].mxu0
    %v450 = vadd.f32 0.0, %v449
    %v451 = vpop.f32.mrb[0].mxu0
    %452 = vmatprep.mubr.f32.mxu0 %v293
    %453 = vmatmul.mubr.f32.gmra.mrb[0].mxu0 %v229
    %v454 = vpop.f32.mrb[0].mxu0
    %v455 = vadd.f32 0.0, %v454
    %v456 = vpop.f32.mrb[0].mxu0
    %457 = vmatprep.mubr.f32.mxu0 %v296
    %458 = vmatmul.mubr.f32.gmra.mrb[0].mxu0 %v231
    %v459 = vpop.f32.mrb[0].mxu0
    %v460 = vadd.f32 0.0, %v459
    %v461 = vpop.f32.mrb[0].mxu0
    %462 = vmatprep.mubr.f32.mxu0 %v299
    %463 = vmatmul.mubr.f32.gmra.mrb[0].mxu0 %v233
    %v464 = vpop.f32.mrb[0].mxu0
    %v465 = vadd.f32 0.0, %v464
    %v466 = vpop.f32.mrb[0].mxu0
    %467 = vmatprep.mubr.f32.mxu0 %v302
    %468 = vmatmul.mubr.f32.gmra.mrb[0].mxu0 %v235
    %v469 = vpop.f32.mrb[0].mxu0
    %v470 = vadd.f32 0.0, %v469
    %v471 = vpop.f32.mrb[0].mxu0
    %472 = vmatprep.mubr.f32.mxu0 %v305
    %473 = vmatmul.mubr.f32.gmra.mrb[0].mxu0 %v237
    %v474 = vpop.f32.mrb[0].mxu0
    %v475 = vadd.f32 0.0, %v474
    %v476 = vpop.f32.mrb[0].mxu0
    %477 = vmatprep.mubr.f32.mxu0 %v308
    %478 = vmatmul.mubr.f32.gmra.mrb[0].mxu0 %v239
    %v479 = vpop.f32.mrb[0].mxu0
    %v480 = vadd.f32 0.0, %v479
    %v481 = vpop.f32.mrb[0].mxu0
    %482 = vmatprep.mubr.f32.mxu0 %v311
    %483 = vmatmul.mubr.f32.gmra.mrb[0].mxu0 %v241
    %v484 = vpop.f32.mrb[0].mxu0
    %v485 = vadd.f32 0.0, %v484
    %v486 = vpop.f32.mrb[0].mxu0
    %487 = vmatprep.mubr.f32.mxu0 %v314
    %488 = vmatmul.mubr.f32.gmra.mrb[0].mxu0 %v243
    %v489 = vpop.f32.mrb[0].mxu0
    %v490 = vadd.f32 0.0, %v489
    %v491 = vpop.f32.mrb[0].mxu0
    %492 = vmatprep.mubr.f32.mxu0 %v317
    %493 = vmatmul.mubr.f32.gmra.mrb[0].mxu0 %v245
    %v494 = vpop.f32.mrb[0].mxu0
    %v495 = vadd.f32 0.0, %v494
    %v496 = vpop.f32.mrb[0].mxu0
    %497 = vmatprep.mubr.f32.mxu0 %v320
    %498 = vmatmul.mubr.f32.gmra.mrb[0].mxu0 %v247
    %v499 = vpop.f32.mrb[0].mxu0
    %v500 = vadd.f32 0.0, %v499
    %v501 = vpop.f32.mrb[0].mxu0
    %502 = vmatprep.mubr.f32.mxu0 %v323
    %503 = vmatmul.mubr.f32.gmra.mrb[0].mxu0 %v249
    %v504 = vpop.f32.mrb[0].mxu0
    %v505 = vadd.f32 0.0, %v504
    %v506 = vpop.f32.mrb[0].mxu0
    %507 = vmatprep.mubr.f32.mxu0 %v326
    %508 = vmatmul.mubr.f32.gmra.mrb[0].mxu0 %v251
    %v509 = vpop.f32.mrb[0].mxu0
    %v510 = vadd.f32 0.0, %v509
    %v511 = vpop.f32.mrb[0].mxu0
    %512 = vmatprep.mubr.f32.mxu0 %v329
    %513 = vmatmul.mubr.f32.gmra.mrb[0].mxu0 %v253
    %v514 = vpop.f32.mrb[0].mxu0
    %v515 = vadd.f32 0.0, %v514
    %v516 = vpop.f32.mrb[0].mxu0
    %517 = vmatprep.mubr.f32.mxu0 %v332
    %518 = vmatmul.mubr.f32.gmra.mrb[0].mxu0 %v255
    %v519 = vpop.f32.mrb[0].mxu0
    %v520 = vadd.f32 0.0, %v519
    %v521 = vpop.f32.mrb[0].mxu0
    %522 = vmatprep.mubr.f32.mxu0 %v335
    %523 = vmatmul.mubr.f32.gmra.mrb[0].mxu0 %v257
    %v524 = vpop.f32.mrb[0].mxu0
    %v525 = vadd.f32 0.0, %v524
    %v526 = vpop.f32.mrb[0].mxu0
    %527 = vmatprep.mubr.f32.mxu0 %v338
    %528 = vmatmul.mubr.f32.gmra.mrb[0].mxu0 %v259
    %v529 = vpop.f32.mrb[0].mxu0
    %v530 = vadd.f32 0.0, %v529
    %v531 = vpop.f32.mrb[0].mxu0
    %532 = vmatprep.mubr.f32.mxu0 %v341
    %533 = vmatmul.mubr.f32.gmra.mrb[0].mxu0 %v261
    %v534 = vpop.f32.mrb[0].mxu0
    %v535 = vadd.f32 0.0, %v534
    %v536 = vpop.f32.mrb[0].mxu0
    %537 = vmatprep.mubr.f32.mxu0 %v344
    %538 = vmatmul.mubr.f32.gmra.mrb[0].mxu0 %v263
    %v539 = vpop.f32.mrb[0].mxu0
    %v540 = vadd.f32 0.0, %v539
    %v541 = vpop.f32.mrb[0].mxu0
    %542 = vmatprep.mubr.f32.mxu0 %v347
    %543 = vmatmul.mubr.f32.gmra.mrb[0].mxu0 %v265
    %v544 = vpop.f32.mrb[0].mxu0
    %v545 = vadd.f32 0.0, %v544
    %v546 = vpop.f32.mrb[0].mxu0
    %547 = vmatprep.mubr.f32.mxu0 %v350
    %548 = vmatmul.mubr.f32.gmra.mrb[0].mxu0 %v267
    %v549 = vpop.f32.mrb[0].mxu0
    %v550 = vadd.f32 0.0, %v549
    %v551 = vpop.f32.mrb[0].mxu0
    %552 = vmatprep.mubr.f32.mxu0 %v353
    %553 = vmatmul.mubr.f32.gmra.mrb[0].mxu0 %v269
    %v554 = vpop.f32.mrb[0].mxu0
    %v555 = vadd.f32 0.0, %v554
    %v556 = vpop.f32.mrb[0].mxu0
    %557 = vmatprep.mubr.f32.mxu0 %v356
    %558 = vmatmul.mubr.f32.gmra.mrb[0].mxu0 %v271
    %v559 = vpop.f32.mrb[0].mxu0
    %v560 = vadd.f32 0.0, %v559
    %v561 = vpop.f32.mrb[0].mxu0
    %562 = vdwg.mxu0
    %v563 = vpack.c.bf16 %v430, %v425
    %v564 = vpack.c.bf16 %v440, %v435
    %v565 = vpack.c.bf16 %v450, %v445
    %v566 = vpack.c.bf16 %v460, %v455
    %v567 = vpack.c.bf16 %v470, %v465
    %v568 = vpack.c.bf16 %v480, %v475
    %v569 = vpack.c.bf16 %v490, %v485
    %v570 = vpack.c.bf16 %v500, %v495
    %v571 = vpack.c.bf16 %v510, %v505
    %v572 = vpack.c.bf16 %v520, %v515
    %v573 = vpack.c.bf16 %v530, %v525
    %v574 = vpack.c.bf16 %v540, %v535
    %v575 = vpack.c.bf16 %v550, %v545
    %v576 = vpack.c.bf16 %v560, %v555
    %v577 = vld [vmem:[#allocation4] sm:$0xff]
    %v578 = vld [vmem:[#allocation4 + $0x8] sm:$0xff]
    %v579 = vld [vmem:[#allocation4 + $0x10] sm:$0xff]
    %v580 = vld [vmem:[#allocation4 + $0x18] sm:$0xff]
    %v581 = vld [vmem:[#allocation4 + $0x20] sm:$0xff]
    %v582 = vld [vmem:[#allocation4 + $0x28] sm:$0xff]
    %v583 = vld [vmem:[#allocation4 + $0x30] sm:$0x33]
    %v584 = vld [vmem:[#allocation4 + $0x38] sm:$0x33]
    %s585 = scalar_lea.vmem [#allocation2], 448
    %v586 = vld [vmem:[%s585] sm:$0xff]
    %v587 = vld [vmem:[%s585 + $0x8] sm:$0xff]
    %v588 = vld [vmem:[%s585 + $0x10] sm:$0xff]
    %v589 = vld [vmem:[%s585 + $0x18] sm:$0xff]
    %v590 = vld [vmem:[%s585 + $0x20] sm:$0xff]
    %v591 = vld [vmem:[%s585 + $0x28] sm:$0xff]
    %v592 = vld [vmem:[%s585 + $0x30] sm:$0xff]
    %v593 = vld [vmem:[%s585 + $0x38] sm:$0xff]
    %v594 = vld [vmem:[%s585 + $0x40] sm:$0xff]
    %v595 = vld [vmem:[%s585 + $0x48] sm:$0xff]
    %v596 = vld [vmem:[%s585 + $0x50] sm:$0xff]
    %v597 = vld [vmem:[%s585 + $0x58] sm:$0xff]
    %v598 = vld [vmem:[%s585 + $0x60] sm:$0xff]
    %v599 = vld [vmem:[%s585 + $0x68] sm:$0xff]
    %v600 = vld [vmem:[%s585 + $0x70] sm:$0xff]
    %v601 = vld [vmem:[%s585 + $0x78] sm:$0xff]
    %v602 = vld [vmem:[%s585 + $0x80] sm:$0xff]
    %v603 = vld [vmem:[%s585 + $0x88] sm:$0xff]
    %v604 = vld [vmem:[%s585 + $0x90] sm:$0xff]
    %v605 = vld [vmem:[%s585 + $0x98] sm:$0xff]
    %v606 = vld [vmem:[%s585 + $0xa0] sm:$0xff]
    %v607 = vld [vmem:[%s585 + $0xa8] sm:$0xff]
    %v608 = vld [vmem:[%s585 + $0xb0] sm:$0xff]
    %v609 = vld [vmem:[%s585 + $0xb8] sm:$0xff]
    %v610 = vld [vmem:[%s585 + $0xc0] sm:$0xff]
    %v611 = vld [vmem:[%s585 + $0xc8] sm:$0xff]
    %v612 = vld [vmem:[%s585 + $0xd0] sm:$0xff]
    %v613 = vld [vmem:[%s585 + $0xd8] sm:$0xff]
    %v614 = vld [vmem:[%s585 + $0xe0] sm:$0xff]
    %v615 = vld [vmem:[%s585 + $0xe8] sm:$0xff]
    %v616 = vld [vmem:[%s585 + $0xf0] sm:$0xff]
    %v617 = vld [vmem:[%s585 + $0xf8] sm:$0xff]
    %v618 = vld [vmem:[%s585 + $0x100] sm:$0xff]
    %v619 = vld [vmem:[%s585 + $0x108] sm:$0xff]
    %v620 = vld [vmem:[%s585 + $0x110] sm:$0xff]
    %v621 = vld [vmem:[%s585 + $0x118] sm:$0xff]
    %v622 = vld [vmem:[%s585 + $0x120] sm:$0xff]
    %v623 = vld [vmem:[%s585 + $0x128] sm:$0xff]
    %v624 = vld [vmem:[%s585 + $0x130] sm:$0xff]
    %v625 = vld [vmem:[%s585 + $0x138] sm:$0xff]
    %v626 = vld [vmem:[%s585 + $0x140] sm:$0xff]
    %v627 = vld [vmem:[%s585 + $0x148] sm:$0xff]
    %v628 = vld [vmem:[%s585 + $0x150] sm:$0xff]
    %v629 = vld [vmem:[%s585 + $0x158] sm:$0xff]
    %v630 = vld [vmem:[%s585 + $0x160] sm:$0xff]
    %v631 = vld [vmem:[%s585 + $0x168] sm:$0xff]
    %v632 = vld [vmem:[%s585 + $0x170] sm:$0xff]
    %v633 = vld [vmem:[%s585 + $0x178] sm:$0xff]
    %v634 = vld [vmem:[%s585 + $0x180] sm:$0xff]
    %v635 = vld [vmem:[%s585 + $0x188] sm:$0xff]
    %v636 = vld [vmem:[%s585 + $0x190] sm:$0xff]
    %v637 = vld [vmem:[%s585 + $0x198] sm:$0xff]
    %v638 = vld [vmem:[%s585 + $0x1a0] sm:$0xff]
    %v639 = vld [vmem:[%s585 + $0x1a8] sm:$0xff]
    %v640 = vld [vmem:[%s585 + $0x1b0] sm:$0xff]
    %v641 = vld [vmem:[%s585 + $0x1b8] sm:$0xff]
    %v643 = vsel %vm273, %v587, 0
    %v646 = vsel %vm273, %v589, 0
    %v649 = vsel %vm273, %v591, 0
    %v652 = vsel %vm273, %v593, 0
    %v655 = vsel %vm273, %v595, 0
    %v658 = vsel %vm273, %v597, 0
    %v661 = vsel %vm273, %v599, 0
    %v664 = vsel %vm273, %v601, 0
    %v667 = vsel %vm273, %v603, 0
    %v670 = vsel %vm273, %v605, 0
    %v673 = vsel %vm273, %v607, 0
    %v676 = vsel %vm273, %v609, 0
    %v679 = vsel %vm273, %v611, 0
    %v682 = vsel %vm273, %v613, 0
    %v685 = vsel %vm273, %v615, 0
    %v688 = vsel %vm273, %v617, 0
    %v691 = vsel %vm273, %v619, 0
    %v694 = vsel %vm273, %v621, 0
    %v697 = vsel %vm273, %v623, 0
    %v700 = vsel %vm273, %v625, 0
    %v703 = vsel %vm273, %v627, 0
    %v706 = vsel %vm273, %v629, 0
    %v709 = vsel %vm273, %v631, 0
    %v712 = vsel %vm273, %v633, 0
    %v715 = vsel %vm273, %v635, 0
    %v718 = vsel %vm273, %v637, 0
    %v721 = vsel %vm273, %v639, 0
    %v724 = vsel %vm273, %v641, 0
    %726 = vmatprep.subr.mxu0 0.0
    %727 = vmatpush1.msra.mxu0 %v189
    %728 = vmatprep.subr.mxu0 0.0
    %729 = vmatpush1.msra.mxu0 %v190
    %730 = vmatprep.subr.mxu0 0.0
    %731 = vmatpush1.msra.mxu0 %v191
    %732 = vmatprep.subr.mxu0 0.0
    %733 = vmatpush1.msra.mxu0 %v192
    %734 = vmatprep.subr.mxu0 0.0
    %735 = vmatpush1.msra.mxu0 %v193
    %736 = vmatprep.subr.mxu0 0.0
    %737 = vmatpush1.msra.mxu0 %v194
    %738 = vmatprep.subr.mxu0 0.0
    %739 = vmatpush1.msra.mxu0 %v195
    %740 = vmatprep.subr.mxu0 0.0
    %741 = vmatpush1.msra.mxu0 %v196
    %742 = vmatprep.subr.mxu0 0.0
    %743 = vmatpush1.msra.mxu0 %v197
    %744 = vmatprep.subr.mxu0 0.0
    %745 = vmatpush1.msra.mxu0 %v198
    %746 = vmatprep.subr.mxu0 0.0
    %747 = vmatpush1.msra.mxu0 %v199
    %748 = vmatprep.subr.mxu0 0.0
    %749 = vmatpush1.msra.mxu0 %v200
    %750 = vmatprep.subr.mxu0 0.0
    %751 = vmatpush1.msra.mxu0 %v201
    %752 = vmatprep.subr.mxu0 0.0
    %753 = vmatpush1.msra.mxu0 %v202
    %754 = vmatprep.subr.mxu0 0.0
    %755 = vmatpush1.msra.mxu0 %v203
    %756 = vmatprep.subr.mxu0 0.0
    %757 = vmatpush1.msra.mxu0 %v204
    %758 = vmatprep.subr.mxu0 0.0
    %759 = vmatpush1.msra.mxu0 %v205
    %760 = vmatprep.subr.mxu0 0.0
    %761 = vmatpush1.msra.mxu0 %v206
    %762 = vmatprep.subr.mxu0 0.0
    %763 = vmatpush1.msra.mxu0 %v207
    %764 = vmatprep.subr.mxu0 0.0
    %765 = vmatpush1.msra.mxu0 %v208
    %766 = vmatprep.subr.mxu0 0.0
    %767 = vmatpush1.msra.mxu0 %v209
    %768 = vmatprep.subr.mxu0 0.0
    %769 = vmatpush1.msra.mxu0 %v210
    %770 = vmatprep.subr.mxu0 0.0
    %771 = vmatpush1.msra.mxu0 %v211
    %772 = vmatprep.subr.mxu0 0.0
    %773 = vmatpush1.msra.mxu0 %v212
    %774 = vmatprep.subr.mxu0 0.0
    %775 = vmatpush1.msra.mxu0 %v213
    %776 = vmatprep.subr.mxu0 0.0
    %777 = vmatpush1.msra.mxu0 %v214
    %778 = vmatprep.subr.mxu0 0.0
    %779 = vmatpush1.msra.mxu0 %v215
    %780 = vmatprep.subr.mxu0 0.0
    %781 = vmatpush1.msra.mxu0 %v216
    %782 = vmatprep.subr.mxu0 0.0
    %783 = vmatpush1.msra.mxu0 0.0
    %784 = vmatprep.subr.mxu0 0.0
    %785 = vmatpush1.msra.mxu0 0.0
    %786 = vmatprep.subr.mxu0 0.0
    %787 = vmatpush1.msra.mxu0 0.0
    %788 = vmatprep.subr.mxu0 0.0
    %789 = vmatpush1.msra.mxu0 0.0
    %790 = vmatprep.mubr.f32.mxu0 %v643
    %791 = vmatmul.mubr.f32.gmra.mrb[0].mxu0 %v586
    %v792 = vpop.f32.mrb[0].mxu0
    %v793 = vadd.f32 0.0, %v792
    %v794 = vpop.f32.mrb[0].mxu0
    %795 = vmatprep.mubr.f32.mxu0 %v646
    %796 = vmatmul.mubr.f32.gmra.mrb[0].mxu0 %v588
    %v797 = vpop.f32.mrb[0].mxu0
    %v798 = vadd.f32 0.0, %v797
    %v799 = vpop.f32.mrb[0].mxu0
    %800 = vmatprep.mubr.f32.mxu0 %v649
    %801 = vmatmul.mubr.f32.gmra.mrb[0].mxu0 %v590
    %v802 = vpop.f32.mrb[0].mxu0
    %v803 = vadd.f32 0.0, %v802
    %v804 = vpop.f32.mrb[0].mxu0
    %805 = vmatprep.mubr.f32.mxu0 %v652
    %806 = vmatmul.mubr.f32.gmra.mrb[0].mxu0 %v592
    %v807 = vpop.f32.mrb[0].mxu0
    %v808 = vadd.f32 0.0, %v807
    %v809 = vpop.f32.mrb[0].mxu0
    %810 = vmatprep.mubr.f32.mxu0 %v655
    %811 = vmatmul.mubr.f32.gmra.mrb[0].mxu0 %v594
    %v812 = vpop.f32.mrb[0].mxu0
    %v813 = vadd.f32 0.0, %v812
    %v814 = vpop.f32.mrb[0].mxu0
    %815 = vmatprep.mubr.f32.mxu0 %v658
    %816 = vmatmul.mubr.f32.gmra.mrb[0].mxu0 %v596
    %v817 = vpop.f32.mrb[0].mxu0
    %v818 = vadd.f32 0.0, %v817
    %v819 = vpop.f32.mrb[0].mxu0
    %820 = vmatprep.mubr.f32.mxu0 %v661
    %821 = vmatmul.mubr.f32.gmra.mrb[0].mxu0 %v598
    %v822 = vpop.f32.mrb[0].mxu0
    %v823 = vadd.f32 0.0, %v822
    %v824 = vpop.f32.mrb[0].mxu0
    %825 = vmatprep.mubr.f32.mxu0 %v664
    %826 = vmatmul.mubr.f32.gmra.mrb[0].mxu0 %v600
    %v827 = vpop.f32.mrb[0].mxu0
    %v828 = vadd.f32 0.0, %v827
    %v829 = vpop.f32.mrb[0].mxu0
    %830 = vmatprep.mubr.f32.mxu0 %v667
    %831 = vmatmul.mubr.f32.gmra.mrb[0].mxu0 %v602
    %v832 = vpop.f32.mrb[0].mxu0
    %v833 = vadd.f32 0.0, %v832
    %v834 = vpop.f32.mrb[0].mxu0
    %835 = vmatprep.mubr.f32.mxu0 %v670
    %836 = vmatmul.mubr.f32.gmra.mrb[0].mxu0 %v604
    %v837 = vpop.f32.mrb[0].mxu0
    %v838 = vadd.f32 0.0, %v837
    %v839 = vpop.f32.mrb[0].mxu0
    %840 = vmatprep.mubr.f32.mxu0 %v673
    %841 = vmatmul.mubr.f32.gmra.mrb[0].mxu0 %v606
    %v842 = vpop.f32.mrb[0].mxu0
    %v843 = vadd.f32 0.0, %v842
    %v844 = vpop.f32.mrb[0].mxu0
    %845 = vmatprep.mubr.f32.mxu0 %v676
    %846 = vmatmul.mubr.f32.gmra.mrb[0].mxu0 %v608
    %v847 = vpop.f32.mrb[0].mxu0
    %v848 = vadd.f32 0.0, %v847
    %v849 = vpop.f32.mrb[0].mxu0
    %850 = vmatprep.mubr.f32.mxu0 %v679
    %851 = vmatmul.mubr.f32.gmra.mrb[0].mxu0 %v610
    %v852 = vpop.f32.mrb[0].mxu0
    %v853 = vadd.f32 0.0, %v852
    %v854 = vpop.f32.mrb[0].mxu0
    %855 = vmatprep.mubr.f32.mxu0 %v682
    %856 = vmatmul.mubr.f32.gmra.mrb[0].mxu0 %v612
    %v857 = vpop.f32.mrb[0].mxu0
    %v858 = vadd.f32 0.0, %v857
    %v859 = vpop.f32.mrb[0].mxu0
    %860 = vmatprep.mubr.f32.mxu0 %v685
    %861 = vmatmul.mubr.f32.gmra.mrb[0].mxu0 %v614
    %v862 = vpop.f32.mrb[0].mxu0
    %v863 = vadd.f32 0.0, %v862
    %v864 = vpop.f32.mrb[0].mxu0
    %865 = vmatprep.mubr.f32.mxu0 %v688
    %866 = vmatmul.mubr.f32.gmra.mrb[0].mxu0 %v616
    %v867 = vpop.f32.mrb[0].mxu0
    %v868 = vadd.f32 0.0, %v867
    %v869 = vpop.f32.mrb[0].mxu0
    %870 = vmatprep.mubr.f32.mxu0 %v691
    %871 = vmatmul.mubr.f32.gmra.mrb[0].mxu0 %v618
    %v872 = vpop.f32.mrb[0].mxu0
    %v873 = vadd.f32 0.0, %v872
    %v874 = vpop.f32.mrb[0].mxu0
    %875 = vmatprep.mubr.f32.mxu0 %v694
    %876 = vmatmul.mubr.f32.gmra.mrb[0].mxu0 %v620
    %v877 = vpop.f32.mrb[0].mxu0
    %v878 = vadd.f32 0.0, %v877
    %v879 = vpop.f32.mrb[0].mxu0
    %880 = vmatprep.mubr.f32.mxu0 %v697
    %881 = vmatmul.mubr.f32.gmra.mrb[0].mxu0 %v622
    %v882 = vpop.f32.mrb[0].mxu0
    %v883 = vadd.f32 0.0, %v882
    %v884 = vpop.f32.mrb[0].mxu0
    %885 = vmatprep.mubr.f32.mxu0 %v700
    %886 = vmatmul.mubr.f32.gmra.mrb[0].mxu0 %v624
    %v887 = vpop.f32.mrb[0].mxu0
    %v888 = vadd.f32 0.0, %v887
    %v889 = vpop.f32.mrb[0].mxu0
    %890 = vmatprep.mubr.f32.mxu0 %v703
    %891 = vmatmul.mubr.f32.gmra.mrb[0].mxu0 %v626
    %v892 = vpop.f32.mrb[0].mxu0
    %v893 = vadd.f32 0.0, %v892
    %v894 = vpop.f32.mrb[0].mxu0
    %895 = vmatprep.mubr.f32.mxu0 %v706
    %896 = vmatmul.mubr.f32.gmra.mrb[0].mxu0 %v628
    %v897 = vpop.f32.mrb[0].mxu0
    %v898 = vadd.f32 0.0, %v897
    %v899 = vpop.f32.mrb[0].mxu0
    %900 = vmatprep.mubr.f32.mxu0 %v709
    %901 = vmatmul.mubr.f32.gmra.mrb[0].mxu0 %v630
    %v902 = vpop.f32.mrb[0].mxu0
    %v903 = vadd.f32 0.0, %v902
    %v904 = vpop.f32.mrb[0].mxu0
    %905 = vmatprep.mubr.f32.mxu0 %v712
    %906 = vmatmul.mubr.f32.gmra.mrb[0].mxu0 %v632
    %v907 = vpop.f32.mrb[0].mxu0
    %v908 = vadd.f32 0.0, %v907
    %v909 = vpop.f32.mrb[0].mxu0
    %910 = vmatprep.mubr.f32.mxu0 %v715
    %911 = vmatmul.mubr.f32.gmra.mrb[0].mxu0 %v634
    %v912 = vpop.f32.mrb[0].mxu0
    %v913 = vadd.f32 0.0, %v912
    %v914 = vpop.f32.mrb[0].mxu0
    %915 = vmatprep.mubr.f32.mxu0 %v718
    %916 = vmatmul.mubr.f32.gmra.mrb[0].mxu0 %v636
    %v917 = vpop.f32.mrb[0].mxu0
    %v918 = vadd.f32 0.0, %v917
    %v919 = vpop.f32.mrb[0].mxu0
    %920 = vmatprep.mubr.f32.mxu0 %v721
    %921 = vmatmul.mubr.f32.gmra.mrb[0].mxu0 %v638
    %v922 = vpop.f32.mrb[0].mxu0
    %v923 = vadd.f32 0.0, %v922
    %v924 = vpop.f32.mrb[0].mxu0
    %925 = vmatprep.mubr.f32.mxu0 %v724
    %926 = vmatmul.mubr.f32.gmra.mrb[0].mxu0 %v640
    %v927 = vpop.f32.mrb[0].mxu0
    %v928 = vadd.f32 0.0, %v927
    %v929 = vpop.f32.mrb[0].mxu0
    %930 = vdwg.mxu0
    %v931 = vpack.c.bf16 %v798, %v793
    %v932 = vpack.c.bf16 %v808, %v803
    %v933 = vpack.c.bf16 %v818, %v813
    %v934 = vpack.c.bf16 %v828, %v823
    %v935 = vpack.c.bf16 %v838, %v833
    %v936 = vpack.c.bf16 %v848, %v843
    %v937 = vpack.c.bf16 %v858, %v853
    %v938 = vpack.c.bf16 %v868, %v863
    %v939 = vpack.c.bf16 %v878, %v873
    %v940 = vpack.c.bf16 %v888, %v883
    %v941 = vpack.c.bf16 %v898, %v893
    %v942 = vpack.c.bf16 %v908, %v903
    %v943 = vpack.c.bf16 %v918, %v913
    %v944 = vpack.c.bf16 %v928, %v923
    %s945 = scalar_lea.vmem [#allocation4], 64
    %v946 = vld [vmem:[%s945] sm:$0xff]
    %v947 = vld [vmem:[%s945 + $0x8] sm:$0xff]
    %v948 = vld [vmem:[%s945 + $0x10] sm:$0xff]
    %v949 = vld [vmem:[%s945 + $0x18] sm:$0xff]
    %v950 = vld [vmem:[%s945 + $0x20] sm:$0xff]
    %v951 = vld [vmem:[%s945 + $0x28] sm:$0xff]
    %v952 = vld [vmem:[%s945 + $0x30] sm:$0x33]
    %v953 = vld [vmem:[%s945 + $0x38] sm:$0x33]
    %v962 = vunpack.c.l.b16 %v946
    %v963 = vunpack.c.h.b16 %v946
    %v964 = vunpack.c.l.b16 %v947
    %v965 = vunpack.c.h.b16 %v947
    %v966 = vunpack.c.l.b16 %v948
    %v967 = vunpack.c.h.b16 %v948
    %v968 = vunpack.c.l.b16 %v949
    %v969 = vunpack.c.h.b16 %v949
    %v970 = vunpack.c.l.b16 %v950
    %v971 = vunpack.c.h.b16 %v950
    %v972 = vunpack.c.l.b16 %v951
    %v973 = vunpack.c.h.b16 %v951
    %v974 = vunpack.c.l.b16 %v952
    %v975 = vunpack.c.h.b16 %v952
    %v976 = vunpack.c.l.b16 %v953
    %v977 = vunpack.c.h.b16 %v953
    %v978 = vpack.c.b16 %v966, %v962
    %v979 = vpack.c.b16 %v967, %v963
    %v980 = vpack.c.b16 %v968, %v964
    %v981 = vpack.c.b16 %v969, %v965
    %v982 = vpack.c.b16 %v974, %v970
    %v983 = vpack.c.b16 %v975, %v971
    %v984 = vpack.c.b16 %v976, %v972
    %v985 = vpack.c.b16 %v977, %v973
    %vm990 = vcmask 228352
    %v992 = vsel %vm990, %v931, 0
    %v995 = vsel %vm990, %v932, 0
    %v998 = vsel %vm990, %v933, 0
    %v1001 = vsel %vm990, %v934, 0
    %v1004 = vsel %vm990, %v935, 0
    %v1007 = vsel %vm990, %v936, 0
    %v1010 = vsel %vm990, %v937, 0
    %v1013 = vsel %vm990, %v938, 0
    %v1016 = vsel %vm990, %v939, 0
    %v1019 = vsel %vm990, %v940, 0
    %v1022 = vsel %vm990, %v941, 0
    %v1025 = vsel %vm990, %v942, 0
    %v1028 = vsel %vm990, %v943, 0
    %v1031 = vsel %vm990, %v944, 0
    %vm1033 = vcmask 1045504
    %v1035 = vsel %vm1033, %v982, 0
    %v1038 = vsel %vm1033, %v983, 0
    %v1041 = vsel %vm1033, %v984, 0
    %v1044 = vsel %vm1033, %v985, 0
    %1046 = vmatprep.subr.bf16.mxu0 %v979
    %1047 = vmatpush1.bf16.msra.mxu0 %v978
    %1048 = vmatprep.subr.bf16.mxu0 %v1038
    %1049 = vmatpush1.bf16.msra.mxu0 %v1035
    %1050 = vmatprep.subr.bf16.mxu0 0
    %1051 = vmatpush1.bf16.msra.mxu0 0
    %1052 = vmatprep.subr.bf16.mxu0 0
    %1053 = vmatpush1.bf16.msra.mxu0 0
    %1054 = vmatprep.subr.bf16.mxu0 0
    %1055 = vmatpush1.bf16.msra.mxu0 0
    %1056 = vmatprep.subr.bf16.mxu0 0
    %1057 = vmatpush1.bf16.msra.mxu0 0
    %1058 = vmatprep.subr.bf16.mxu0 0
    %1059 = vmatpush1.bf16.msra.mxu0 0
    %1060 = vmatprep.subr.bf16.mxu0 0
    %1061 = vmatpush1.bf16.msra.mxu0 0
    %1062 = vmatprep.subr.bf16.mxu0 0
    %1063 = vmatpush1.bf16.msra.mxu0 0
    %1064 = vmatprep.subr.bf16.mxu0 0
    %1065 = vmatpush1.bf16.msra.mxu0 0
    %1066 = vmatprep.subr.bf16.mxu0 0
    %1067 = vmatpush1.bf16.msra.mxu0 0
    %1068 = vmatprep.subr.bf16.mxu0 0
    %1069 = vmatpush1.bf16.msra.mxu0 0
    %1070 = vmatprep.subr.bf16.mxu0 0
    %1071 = vmatpush1.bf16.msra.mxu0 0
    %1072 = vmatprep.subr.bf16.mxu0 0
    %1073 = vmatpush1.bf16.msra.mxu0 0
    %1074 = vmatprep.subr.bf16.mxu0 0
    %1075 = vmatpush1.bf16.msra.mxu0 0
    %1076 = vmatprep.subr.bf16.mxu0 0
    %1077 = vmatpush1.bf16.msra.mxu0 0
    %1078 = vmatprep.mubr.bf16.mxu0 0
    %1079 = vmatmul.mubr.bf16.gmra.mrb[0].mxu0 %v992
    %v1080 = vpop.f32.mrb[0].mxu0
    %v1081 = vadd.f32 0.0, %v1080
    %v1082 = vpop.f32.mrb[0].mxu0
    %v1083 = vadd.f32 0.0, %v1082
    %v1084 = vpop.f32.mrb[0].mxu0
    %v1085 = vadd.f32 0.0, %v1084
    %v1086 = vpop.f32.mrb[0].mxu0
    %v1087 = vadd.f32 0.0, %v1086
    %1088 = vmatprep.mubr.bf16.mxu0 0
    %1089 = vmatmul.mubr.bf16.gmra.mrb[0].mxu0 %v995
    %v1090 = vpop.f32.mrb[0].mxu0
    %v1091 = vadd.f32 0.0, %v1090
    %v1092 = vpop.f32.mrb[0].mxu0
    %v1093 = vadd.f32 0.0, %v1092
    %v1094 = vpop.f32.mrb[0].mxu0
    %v1095 = vadd.f32 0.0, %v1094
    %v1096 = vpop.f32.mrb[0].mxu0
    %v1097 = vadd.f32 0.0, %v1096
    %1098 = vmatprep.mubr.bf16.mxu0 0
    %1099 = vmatmul.mubr.bf16.gmra.mrb[0].mxu0 %v998
    %v1100 = vpop.f32.mrb[0].mxu0
    %v1101 = vadd.f32 0.0, %v1100
    %v1102 = vpop.f32.mrb[0].mxu0
    %v1103 = vadd.f32 0.0, %v1102
    %v1104 = vpop.f32.mrb[0].mxu0
    %v1105 = vadd.f32 0.0, %v1104
    %v1106 = vpop.f32.mrb[0].mxu0
    %v1107 = vadd.f32 0.0, %v1106
    %1108 = vmatprep.mubr.bf16.mxu0 0
    %1109 = vmatmul.mubr.bf16.gmra.mrb[0].mxu0 %v1001
    %v1110 = vpop.f32.mrb[0].mxu0
    %v1111 = vadd.f32 0.0, %v1110
    %v1112 = vpop.f32.mrb[0].mxu0
    %v1113 = vadd.f32 0.0, %v1112
    %v1114 = vpop.f32.mrb[0].mxu0
    %v1115 = vadd.f32 0.0, %v1114
    %v1116 = vpop.f32.mrb[0].mxu0
    %v1117 = vadd.f32 0.0, %v1116
    %1118 = vmatprep.mubr.bf16.mxu0 0
    %1119 = vmatmul.mubr.bf16.gmra.mrb[0].mxu0 %v1004
    %v1120 = vpop.f32.mrb[0].mxu0
    %v1121 = vadd.f32 0.0, %v1120
    %v1122 = vpop.f32.mrb[0].mxu0
    %v1123 = vadd.f32 0.0, %v1122
    %v1124 = vpop.f32.mrb[0].mxu0
    %v1125 = vadd.f32 0.0, %v1124
    %v1126 = vpop.f32.mrb[0].mxu0
    %v1127 = vadd.f32 0.0, %v1126
    %1128 = vmatprep.mubr.bf16.mxu0 0
    %1129 = vmatmul.mubr.bf16.gmra.mrb[0].mxu0 %v1007
    %v1130 = vpop.f32.mrb[0].mxu0
    %v1131 = vadd.f32 0.0, %v1130
    %v1132 = vpop.f32.mrb[0].mxu0
    %v1133 = vadd.f32 0.0, %v1132
    %v1134 = vpop.f32.mrb[0].mxu0
    %v1135 = vadd.f32 0.0, %v1134
    %v1136 = vpop.f32.mrb[0].mxu0
    %v1137 = vadd.f32 0.0, %v1136
    %1138 = vmatprep.mubr.bf16.mxu0 0
    %1139 = vmatmul.mubr.bf16.gmra.mrb[0].mxu0 %v1010
    %v1140 = vpop.f32.mrb[0].mxu0
    %v1141 = vadd.f32 0.0, %v1140
    %v1142 = vpop.f32.mrb[0].mxu0
    %v1143 = vadd.f32 0.0, %v1142
    %v1144 = vpop.f32.mrb[0].mxu0
    %v1145 = vadd.f32 0.0, %v1144
    %v1146 = vpop.f32.mrb[0].mxu0
    %v1147 = vadd.f32 0.0, %v1146
    %1148 = vmatprep.mubr.bf16.mxu0 0
    %1149 = vmatmul.mubr.bf16.gmra.mrb[0].mxu0 %v1013
    %v1150 = vpop.f32.mrb[0].mxu0
    %v1151 = vadd.f32 0.0, %v1150
    %v1152 = vpop.f32.mrb[0].mxu0
    %v1153 = vadd.f32 0.0, %v1152
    %v1154 = vpop.f32.mrb[0].mxu0
    %v1155 = vadd.f32 0.0, %v1154
    %v1156 = vpop.f32.mrb[0].mxu0
    %v1157 = vadd.f32 0.0, %v1156
    %1158 = vmatprep.mubr.bf16.mxu0 0
    %1159 = vmatmul.mubr.bf16.gmra.mrb[0].mxu0 %v1016
    %v1160 = vpop.f32.mrb[0].mxu0
    %v1161 = vadd.f32 0.0, %v1160
    %v1162 = vpop.f32.mrb[0].mxu0
    %v1163 = vadd.f32 0.0, %v1162
    %v1164 = vpop.f32.mrb[0].mxu0
    %v1165 = vadd.f32 0.0, %v1164
    %v1166 = vpop.f32.mrb[0].mxu0
    %v1167 = vadd.f32 0.0, %v1166
    %1168 = vmatprep.mubr.bf16.mxu0 0
    %1169 = vmatmul.mubr.bf16.gmra.mrb[0].mxu0 %v1019
    %v1170 = vpop.f32.mrb[0].mxu0
    %v1171 = vadd.f32 0.0, %v1170
    %v1172 = vpop.f32.mrb[0].mxu0
    %v1173 = vadd.f32 0.0, %v1172
    %v1174 = vpop.f32.mrb[0].mxu0
    %v1175 = vadd.f32 0.0, %v1174
    %v1176 = vpop.f32.mrb[0].mxu0
    %v1177 = vadd.f32 0.0, %v1176
    %1178 = vmatprep.mubr.bf16.mxu0 0
    %1179 = vmatmul.mubr.bf16.gmra.mrb[0].mxu0 %v1022
    %v1180 = vpop.f32.mrb[0].mxu0
    %v1181 = vadd.f32 0.0, %v1180
    %v1182 = vpop.f32.mrb[0].mxu0
    %v1183 = vadd.f32 0.0, %v1182
    %v1184 = vpop.f32.mrb[0].mxu0
    %v1185 = vadd.f32 0.0, %v1184
    %v1186 = vpop.f32.mrb[0].mxu0
    %v1187 = vadd.f32 0.0, %v1186
    %1188 = vmatprep.mubr.bf16.mxu0 0
    %1189 = vmatmul.mubr.bf16.gmra.mrb[0].mxu0 %v1025
    %v1190 = vpop.f32.mrb[0].mxu0
    %v1191 = vadd.f32 0.0, %v1190
    %v1192 = vpop.f32.mrb[0].mxu0
    %v1193 = vadd.f32 0.0, %v1192
    %v1194 = vpop.f32.mrb[0].mxu0
    %v1195 = vadd.f32 0.0, %v1194
    %v1196 = vpop.f32.mrb[0].mxu0
    %v1197 = vadd.f32 0.0, %v1196
    %1198 = vmatprep.mubr.bf16.mxu0 0
    %1199 = vmatmul.mubr.bf16.gmra.mrb[0].mxu0 %v1028
    %v1200 = vpop.f32.mrb[0].mxu0
    %v1201 = vadd.f32 0.0, %v1200
    %v1202 = vpop.f32.mrb[0].mxu0
    %v1203 = vadd.f32 0.0, %v1202
    %v1204 = vpop.f32.mrb[0].mxu0
    %v1205 = vadd.f32 0.0, %v1204
    %v1206 = vpop.f32.mrb[0].mxu0
    %v1207 = vadd.f32 0.0, %v1206
    %1208 = vmatprep.mubr.bf16.mxu0 0
    %1209 = vmatmul.mubr.bf16.gmra.mrb[0].mxu0 %v1031
    %v1210 = vpop.f32.mrb[0].mxu0
    %v1211 = vadd.f32 0.0, %v1210
    %v1212 = vpop.f32.mrb[0].mxu0
    %v1213 = vadd.f32 0.0, %v1212
    %v1214 = vpop.f32.mrb[0].mxu0
    %v1215 = vadd.f32 0.0, %v1214
    %v1216 = vpop.f32.mrb[0].mxu0
    %v1217 = vadd.f32 0.0, %v1216
    %1218 = vdwg.mxu0
    %1219 = vmatprep.subr.bf16.mxu0 %v981
    %1220 = vmatpush1.bf16.msra.mxu0 %v980
    %1221 = vmatprep.subr.bf16.mxu0 %v1044
    %1222 = vmatpush1.bf16.msra.mxu0 %v1041
    %1223 = vmatprep.subr.bf16.mxu0 0
    %1224 = vmatpush1.bf16.msra.mxu0 0
    %1225 = vmatprep.subr.bf16.mxu0 0
    %1226 = vmatpush1.bf16.msra.mxu0 0
    %1227 = vmatprep.subr.bf16.mxu0 0
    %1228 = vmatpush1.bf16.msra.mxu0 0
    %1229 = vmatprep.subr.bf16.mxu0 0
    %1230 = vmatpush1.bf16.msra.mxu0 0
    %1231 = vmatprep.subr.bf16.mxu0 0
    %1232 = vmatpush1.bf16.msra.mxu0 0
    %1233 = vmatprep.subr.bf16.mxu0 0
    %1234 = vmatpush1.bf16.msra.mxu0 0
    %1235 = vmatprep.subr.bf16.mxu0 0
    %1236 = vmatpush1.bf16.msra.mxu0 0
    %1237 = vmatprep.subr.bf16.mxu0 0
    %1238 = vmatpush1.bf16.msra.mxu0 0
    %1239 = vmatprep.subr.bf16.mxu0 0
    %1240 = vmatpush1.bf16.msra.mxu0 0
    %1241 = vmatprep.subr.bf16.mxu0 0
    %1242 = vmatpush1.bf16.msra.mxu0 0
    %1243 = vmatprep.subr.bf16.mxu0 0
    %1244 = vmatpush1.bf16.msra.mxu0 0
    %1245 = vmatprep.subr.bf16.mxu0 0
    %1246 = vmatpush1.bf16.msra.mxu0 0
    %1247 = vmatprep.subr.bf16.mxu0 0
    %1248 = vmatpush1.bf16.msra.mxu0 0
    %1249 = vmatprep.subr.bf16.mxu0 0
    %1250 = vmatpush1.bf16.msra.mxu0 0
    %1251 = vmatprep.mubr.bf16.mxu0 0
    %1252 = vmatmul.mubr.bf16.gmra.mrb[0].mxu0 %v992
    %v1253 = vpop.f32.mrb[0].mxu0
    %v1254 = vadd.f32 0.0, %v1253
    %v1255 = vpop.f32.mrb[0].mxu0
    %v1256 = vadd.f32 0.0, %v1255
    %v1257 = vpop.f32.mrb[0].mxu0
    %v1258 = vadd.f32 0.0, %v1257
    %v1259 = vpop.f32.mrb[0].mxu0
    %v1260 = vadd.f32 0.0, %v1259
    %1261 = vmatprep.mubr.bf16.mxu0 0
    %1262 = vmatmul.mubr.bf16.gmra.mrb[0].mxu0 %v995
    %v1263 = vpop.f32.mrb[0].mxu0
    %v1264 = vadd.f32 0.0, %v1263
    %v1265 = vpop.f32.mrb[0].mxu0
    %v1266 = vadd.f32 0.0, %v1265
    %v1267 = vpop.f32.mrb[0].mxu0
    %v1268 = vadd.f32 0.0, %v1267
    %v1269 = vpop.f32.mrb[0].mxu0
    %v1270 = vadd.f32 0.0, %v1269
    %1271 = vmatprep.mubr.bf16.mxu0 0
    %1272 = vmatmul.mubr.bf16.gmra.mrb[0].mxu0 %v998
    %v1273 = vpop.f32.mrb[0].mxu0
    %v1274 = vadd.f32 0.0, %v1273
    %v1275 = vpop.f32.mrb[0].mxu0
    %v1276 = vadd.f32 0.0, %v1275
    %v1277 = vpop.f32.mrb[0].mxu0
    %v1278 = vadd.f32 0.0, %v1277
    %v1279 = vpop.f32.mrb[0].mxu0
    %v1280 = vadd.f32 0.0, %v1279
    %1281 = vmatprep.mubr.bf16.mxu0 0
    %1282 = vmatmul.mubr.bf16.gmra.mrb[0].mxu0 %v1001
    %v1283 = vpop.f32.mrb[0].mxu0
    %v1284 = vadd.f32 0.0, %v1283
    %v1285 = vpop.f32.mrb[0].mxu0
    %v1286 = vadd.f32 0.0, %v1285
    %v1287 = vpop.f32.mrb[0].mxu0
    %v1288 = vadd.f32 0.0, %v1287
    %v1289 = vpop.f32.mrb[0].mxu0
    %v1290 = vadd.f32 0.0, %v1289
    %1291 = vmatprep.mubr.bf16.mxu0 0
    %1292 = vmatmul.mubr.bf16.gmra.mrb[0].mxu0 %v1004
    %v1293 = vpop.f32.mrb[0].mxu0
    %v1294 = vadd.f32 0.0, %v1293
    %v1295 = vpop.f32.mrb[0].mxu0
    %v1296 = vadd.f32 0.0, %v1295
    %v1297 = vpop.f32.mrb[0].mxu0
    %v1298 = vadd.f32 0.0, %v1297
    %v1299 = vpop.f32.mrb[0].mxu0
    %v1300 = vadd.f32 0.0, %v1299
    %1301 = vmatprep.mubr.bf16.mxu0 0
    %1302 = vmatmul.mubr.bf16.gmra.mrb[0].mxu0 %v1007
    %v1303 = vpop.f32.mrb[0].mxu0
    %v1304 = vadd.f32 0.0, %v1303
    %v1305 = vpop.f32.mrb[0].mxu0
    %v1306 = vadd.f32 0.0, %v1305
    %v1307 = vpop.f32.mrb[0].mxu0
    %v1308 = vadd.f32 0.0, %v1307
    %v1309 = vpop.f32.mrb[0].mxu0
    %v1310 = vadd.f32 0.0, %v1309
    %1311 = vmatprep.mubr.bf16.mxu0 0
    %1312 = vmatmul.mubr.bf16.gmra.mrb[0].mxu0 %v1010
    %v1313 = vpop.f32.mrb[0].mxu0
    %v1314 = vadd.f32 0.0, %v1313
    %v1315 = vpop.f32.mrb[0].mxu0
    %v1316 = vadd.f32 0.0, %v1315
    %v1317 = vpop.f32.mrb[0].mxu0
    %v1318 = vadd.f32 0.0, %v1317
    %v1319 = vpop.f32.mrb[0].mxu0
    %v1320 = vadd.f32 0.0, %v1319
    %1321 = vmatprep.mubr.bf16.mxu0 0
    %1322 = vmatmul.mubr.bf16.gmra.mrb[0].mxu0 %v1013
    %v1323 = vpop.f32.mrb[0].mxu0
    %v1324 = vadd.f32 0.0, %v1323
    %v1325 = vpop.f32.mrb[0].mxu0
    %v1326 = vadd.f32 0.0, %v1325
    %v1327 = vpop.f32.mrb[0].mxu0
    %v1328 = vadd.f32 0.0, %v1327
    %v1329 = vpop.f32.mrb[0].mxu0
    %v1330 = vadd.f32 0.0, %v1329
    %1331 = vmatprep.mubr.bf16.mxu0 0
    %1332 = vmatmul.mubr.bf16.gmra.mrb[0].mxu0 %v1016
    %v1333 = vpop.f32.mrb[0].mxu0
    %v1334 = vadd.f32 0.0, %v1333
    %v1335 = vpop.f32.mrb[0].mxu0
    %v1336 = vadd.f32 0.0, %v1335
    %v1337 = vpop.f32.mrb[0].mxu0
    %v1338 = vadd.f32 0.0, %v1337
    %v1339 = vpop.f32.mrb[0].mxu0
    %v1340 = vadd.f32 0.0, %v1339
    %1341 = vmatprep.mubr.bf16.mxu0 0
    %1342 = vmatmul.mubr.bf16.gmra.mrb[0].mxu0 %v1019
    %v1343 = vpop.f32.mrb[0].mxu0
    %v1344 = vadd.f32 0.0, %v1343
    %v1345 = vpop.f32.mrb[0].mxu0
    %v1346 = vadd.f32 0.0, %v1345
    %v1347 = vpop.f32.mrb[0].mxu0
    %v1348 = vadd.f32 0.0, %v1347
    %v1349 = vpop.f32.mrb[0].mxu0
    %v1350 = vadd.f32 0.0, %v1349
    %1351 = vmatprep.mubr.bf16.mxu0 0
    %1352 = vmatmul.mubr.bf16.gmra.mrb[0].mxu0 %v1022
    %v1353 = vpop.f32.mrb[0].mxu0
    %v1354 = vadd.f32 0.0, %v1353
    %v1355 = vpop.f32.mrb[0].mxu0
    %v1356 = vadd.f32 0.0, %v1355
    %v1357 = vpop.f32.mrb[0].mxu0
    %v1358 = vadd.f32 0.0, %v1357
    %v1359 = vpop.f32.mrb[0].mxu0
    %v1360 = vadd.f32 0.0, %v1359
    %1361 = vmatprep.mubr.bf16.mxu0 0
    %1362 = vmatmul.mubr.bf16.gmra.mrb[0].mxu0 %v1025
    %v1363 = vpop.f32.mrb[0].mxu0
    %v1364 = vadd.f32 0.0, %v1363
    %v1365 = vpop.f32.mrb[0].mxu0
    %v1366 = vadd.f32 0.0, %v1365
    %v1367 = vpop.f32.mrb[0].mxu0
    %v1368 = vadd.f32 0.0, %v1367
    %v1369 = vpop.f32.mrb[0].mxu0
    %v1370 = vadd.f32 0.0, %v1369
    %1371 = vmatprep.mubr.bf16.mxu0 0
    %1372 = vmatmul.mubr.bf16.gmra.mrb[0].mxu0 %v1028
    %v1373 = vpop.f32.mrb[0].mxu0
    %v1374 = vadd.f32 0.0, %v1373
    %v1375 = vpop.f32.mrb[0].mxu0
    %v1376 = vadd.f32 0.0, %v1375
    %v1377 = vpop.f32.mrb[0].mxu0
    %v1378 = vadd.f32 0.0, %v1377
    %v1379 = vpop.f32.mrb[0].mxu0
    %v1380 = vadd.f32 0.0, %v1379
    %1381 = vmatprep.mubr.bf16.mxu0 0
    %1382 = vmatmul.mubr.bf16.gmra.mrb[0].mxu0 %v1031
    %v1383 = vpop.f32.mrb[0].mxu0
    %v1384 = vadd.f32 0.0, %v1383
    %v1385 = vpop.f32.mrb[0].mxu0
    %v1386 = vadd.f32 0.0, %v1385
    %v1387 = vpop.f32.mrb[0].mxu0
    %v1388 = vadd.f32 0.0, %v1387
    %v1389 = vpop.f32.mrb[0].mxu0
    %v1390 = vadd.f32 0.0, %v1389
    %1391 = vdwg.mxu0
    %v1400 = vunpack.c.l.b16 %v577
    %v1401 = vunpack.c.h.b16 %v577
    %v1402 = vunpack.c.l.b16 %v578
    %v1403 = vunpack.c.h.b16 %v578
    %v1404 = vunpack.c.l.b16 %v579
    %v1405 = vunpack.c.h.b16 %v579
    %v1406 = vunpack.c.l.b16 %v580
    %v1407 = vunpack.c.h.b16 %v580
    %v1408 = vunpack.c.l.b16 %v581
    %v1409 = vunpack.c.h.b16 %v581
    %v1410 = vunpack.c.l.b16 %v582
    %v1411 = vunpack.c.h.b16 %v582
    %v1412 = vunpack.c.l.b16 %v583
    %v1413 = vunpack.c.h.b16 %v583
    %v1414 = vunpack.c.l.b16 %v584
    %v1415 = vunpack.c.h.b16 %v584
    %v1416 = vpack.c.b16 %v1404, %v1400
    %v1417 = vpack.c.b16 %v1405, %v1401
    %v1418 = vpack.c.b16 %v1406, %v1402
    %v1419 = vpack.c.b16 %v1407, %v1403
    %v1420 = vpack.c.b16 %v1412, %v1408
    %v1421 = vpack.c.b16 %v1413, %v1409
    %v1422 = vpack.c.b16 %v1414, %v1410
    %v1423 = vpack.c.b16 %v1415, %v1411
    %v1429 = vsel %vm990, %v563, 0
    %v1432 = vsel %vm990, %v564, 0
    %v1435 = vsel %vm990, %v565, 0
    %v1438 = vsel %vm990, %v566, 0
    %v1441 = vsel %vm990, %v567, 0
    %v1444 = vsel %vm990, %v568, 0
    %v1447 = vsel %vm990, %v569, 0
    %v1450 = vsel %vm990, %v570, 0
    %v1453 = vsel %vm990, %v571, 0
    %v1456 = vsel %vm990, %v572, 0
    %v1459 = vsel %vm990, %v573, 0
    %v1462 = vsel %vm990, %v574, 0
    %v1465 = vsel %vm990, %v575, 0
    %v1468 = vsel %vm990, %v576, 0
    %v1471 = vsel %vm1033, %v1420, 0
    %v1474 = vsel %vm1033, %v1421, 0
    %v1477 = vsel %vm1033, %v1422, 0
    %v1480 = vsel %vm1033, %v1423, 0
    %1482 = vmatprep.subr.bf16.mxu0 %v1417
    %1483 = vmatpush1.bf16.msra.mxu0 %v1416
    %1484 = vmatprep.subr.bf16.mxu0 %v1474
    %1485 = vmatpush1.bf16.msra.mxu0 %v1471
    %1486 = vmatprep.subr.bf16.mxu0 0
    %1487 = vmatpush1.bf16.msra.mxu0 0
    %1488 = vmatprep.subr.bf16.mxu0 0
    %1489 = vmatpush1.bf16.msra.mxu0 0
    %1490 = vmatprep.subr.bf16.mxu0 0
    %1491 = vmatpush1.bf16.msra.mxu0 0
    %1492 = vmatprep.subr.bf16.mxu0 0
    %1493 = vmatpush1.bf16.msra.mxu0 0
    %1494 = vmatprep.subr.bf16.mxu0 0
    %1495 = vmatpush1.bf16.msra.mxu0 0
    %1496 = vmatprep.subr.bf16.mxu0 0
    %1497 = vmatpush1.bf16.msra.mxu0 0
    %1498 = vmatprep.subr.bf16.mxu0 0
    %1499 = vmatpush1.bf16.msra.mxu0 0
    %1500 = vmatprep.subr.bf16.mxu0 0
    %1501 = vmatpush1.bf16.msra.mxu0 0
    %1502 = vmatprep.subr.bf16.mxu0 0
    %1503 = vmatpush1.bf16.msra.mxu0 0
    %1504 = vmatprep.subr.bf16.mxu0 0
    %1505 = vmatpush1.bf16.msra.mxu0 0
    %1506 = vmatprep.subr.bf16.mxu0 0
    %1507 = vmatpush1.bf16.msra.mxu0 0
    %1508 = vmatprep.subr.bf16.mxu0 0
    %1509 = vmatpush1.bf16.msra.mxu0 0
    %1510 = vmatprep.subr.bf16.mxu0 0
    %1511 = vmatpush1.bf16.msra.mxu0 0
    %1512 = vmatprep.subr.bf16.mxu0 0
    %1513 = vmatpush1.bf16.msra.mxu0 0
    %1514 = vmatprep.mubr.bf16.mxu0 0
    %1515 = vmatmul.mubr.bf16.gmra.mrb[0].mxu0 %v1429
    %v1516 = vpop.f32.mrb[0].mxu0
    %v1517 = vadd.f32 %v1081, %v1516
    %v1518 = vpop.f32.mrb[0].mxu0
    %v1519 = vadd.f32 %v1083, %v1518
    %v1520 = vpop.f32.mrb[0].mxu0
    %v1521 = vadd.f32 %v1085, %v1520
    %v1522 = vpop.f32.mrb[0].mxu0
    %v1523 = vadd.f32 %v1087, %v1522
    %1524 = vmatprep.mubr.bf16.mxu0 0
    %1525 = vmatmul.mubr.bf16.gmra.mrb[0].mxu0 %v1432
    %v1526 = vpop.f32.mrb[0].mxu0
    %v1527 = vadd.f32 %v1091, %v1526
    %v1528 = vpop.f32.mrb[0].mxu0
    %v1529 = vadd.f32 %v1093, %v1528
    %v1530 = vpop.f32.mrb[0].mxu0
    %v1531 = vadd.f32 %v1095, %v1530
    %v1532 = vpop.f32.mrb[0].mxu0
    %v1533 = vadd.f32 %v1097, %v1532
    %1534 = vmatprep.mubr.bf16.mxu0 0
    %1535 = vmatmul.mubr.bf16.gmra.mrb[0].mxu0 %v1435
    %v1536 = vpop.f32.mrb[0].mxu0
    %v1537 = vadd.f32 %v1101, %v1536
    %v1538 = vpop.f32.mrb[0].mxu0
    %v1539 = vadd.f32 %v1103, %v1538
    %v1540 = vpop.f32.mrb[0].mxu0
    %v1541 = vadd.f32 %v1105, %v1540
    %v1542 = vpop.f32.mrb[0].mxu0
    %v1543 = vadd.f32 %v1107, %v1542
    %1544 = vmatprep.mubr.bf16.mxu0 0
    %1545 = vmatmul.mubr.bf16.gmra.mrb[0].mxu0 %v1438
    %v1546 = vpop.f32.mrb[0].mxu0
    %v1547 = vadd.f32 %v1111, %v1546
    %v1548 = vpop.f32.mrb[0].mxu0
    %v1549 = vadd.f32 %v1113, %v1548
    %v1550 = vpop.f32.mrb[0].mxu0
    %v1551 = vadd.f32 %v1115, %v1550
    %v1552 = vpop.f32.mrb[0].mxu0
    %v1553 = vadd.f32 %v1117, %v1552
    %1554 = vmatprep.mubr.bf16.mxu0 0
    %1555 = vmatmul.mubr.bf16.gmra.mrb[0].mxu0 %v1441
    %v1556 = vpop.f32.mrb[0].mxu0
    %v1557 = vadd.f32 %v1121, %v1556
    %v1558 = vpop.f32.mrb[0].mxu0
    %v1559 = vadd.f32 %v1123, %v1558
    %v1560 = vpop.f32.mrb[0].mxu0
    %v1561 = vadd.f32 %v1125, %v1560
    %v1562 = vpop.f32.mrb[0].mxu0
    %v1563 = vadd.f32 %v1127, %v1562
    %1564 = vmatprep.mubr.bf16.mxu0 0
    %1565 = vmatmul.mubr.bf16.gmra.mrb[0].mxu0 %v1444
    %v1566 = vpop.f32.mrb[0].mxu0
    %v1567 = vadd.f32 %v1131, %v1566
    %v1568 = vpop.f32.mrb[0].mxu0
    %v1569 = vadd.f32 %v1133, %v1568
    %v1570 = vpop.f32.mrb[0].mxu0
    %v1571 = vadd.f32 %v1135, %v1570
    %v1572 = vpop.f32.mrb[0].mxu0
    %v1573 = vadd.f32 %v1137, %v1572
    %1574 = vmatprep.mubr.bf16.mxu0 0
    %1575 = vmatmul.mubr.bf16.gmra.mrb[0].mxu0 %v1447
    %v1576 = vpop.f32.mrb[0].mxu0
    %v1577 = vadd.f32 %v1141, %v1576
    %v1578 = vpop.f32.mrb[0].mxu0
    %v1579 = vadd.f32 %v1143, %v1578
    %v1580 = vpop.f32.mrb[0].mxu0
    %v1581 = vadd.f32 %v1145, %v1580
    %v1582 = vpop.f32.mrb[0].mxu0
    %v1583 = vadd.f32 %v1147, %v1582
    %1584 = vmatprep.mubr.bf16.mxu0 0
    %1585 = vmatmul.mubr.bf16.gmra.mrb[0].mxu0 %v1450
    %v1586 = vpop.f32.mrb[0].mxu0
    %v1587 = vadd.f32 %v1151, %v1586
    %v1588 = vpop.f32.mrb[0].mxu0
    %v1589 = vadd.f32 %v1153, %v1588
    %v1590 = vpop.f32.mrb[0].mxu0
    %v1591 = vadd.f32 %v1155, %v1590
    %v1592 = vpop.f32.mrb[0].mxu0
    %v1593 = vadd.f32 %v1157, %v1592
    %1594 = vmatprep.mubr.bf16.mxu0 0
    %1595 = vmatmul.mubr.bf16.gmra.mrb[0].mxu0 %v1453
    %v1596 = vpop.f32.mrb[0].mxu0
    %v1597 = vadd.f32 %v1161, %v1596
    %v1598 = vpop.f32.mrb[0].mxu0
    %v1599 = vadd.f32 %v1163, %v1598
    %v1600 = vpop.f32.mrb[0].mxu0
    %v1601 = vadd.f32 %v1165, %v1600
    %v1602 = vpop.f32.mrb[0].mxu0
    %v1603 = vadd.f32 %v1167, %v1602
    %1604 = vmatprep.mubr.bf16.mxu0 0
    %1605 = vmatmul.mubr.bf16.gmra.mrb[0].mxu0 %v1456
    %v1606 = vpop.f32.mrb[0].mxu0
    %v1607 = vadd.f32 %v1171, %v1606
    %v1608 = vpop.f32.mrb[0].mxu0
    %v1609 = vadd.f32 %v1173, %v1608
    %v1610 = vpop.f32.mrb[0].mxu0
    %v1611 = vadd.f32 %v1175, %v1610
    %v1612 = vpop.f32.mrb[0].mxu0
    %v1613 = vadd.f32 %v1177, %v1612
    %1614 = vmatprep.mubr.bf16.mxu0 0
    %1615 = vmatmul.mubr.bf16.gmra.mrb[0].mxu0 %v1459
    %v1616 = vpop.f32.mrb[0].mxu0
    %v1617 = vadd.f32 %v1181, %v1616
    %v1618 = vpop.f32.mrb[0].mxu0
    %v1619 = vadd.f32 %v1183, %v1618
    %v1620 = vpop.f32.mrb[0].mxu0
    %v1621 = vadd.f32 %v1185, %v1620
    %v1622 = vpop.f32.mrb[0].mxu0
    %v1623 = vadd.f32 %v1187, %v1622
    %1624 = vmatprep.mubr.bf16.mxu0 0
    %1625 = vmatmul.mubr.bf16.gmra.mrb[0].mxu0 %v1462
    %v1626 = vpop.f32.mrb[0].mxu0
    %v1627 = vadd.f32 %v1191, %v1626
    %v1628 = vpop.f32.mrb[0].mxu0
    %v1629 = vadd.f32 %v1193, %v1628
    %v1630 = vpop.f32.mrb[0].mxu0
    %v1631 = vadd.f32 %v1195, %v1630
    %v1632 = vpop.f32.mrb[0].mxu0
    %v1633 = vadd.f32 %v1197, %v1632
    %1634 = vmatprep.mubr.bf16.mxu0 0
    %1635 = vmatmul.mubr.bf16.gmra.mrb[0].mxu0 %v1465
    %v1636 = vpop.f32.mrb[0].mxu0
    %v1637 = vadd.f32 %v1201, %v1636
    %v1638 = vpop.f32.mrb[0].mxu0
    %v1639 = vadd.f32 %v1203, %v1638
    %v1640 = vpop.f32.mrb[0].mxu0
    %v1641 = vadd.f32 %v1205, %v1640
    %v1642 = vpop.f32.mrb[0].mxu0
    %v1643 = vadd.f32 %v1207, %v1642
    %1644 = vmatprep.mubr.bf16.mxu0 0
    %1645 = vmatmul.mubr.bf16.gmra.mrb[0].mxu0 %v1468
    %v1646 = vpop.f32.mrb[0].mxu0
    %v1647 = vadd.f32 %v1211, %v1646
    %v1648 = vpop.f32.mrb[0].mxu0
    %v1649 = vadd.f32 %v1213, %v1648
    %v1650 = vpop.f32.mrb[0].mxu0
    %v1651 = vadd.f32 %v1215, %v1650
    %v1652 = vpop.f32.mrb[0].mxu0
    %v1653 = vadd.f32 %v1217, %v1652
    %1654 = vdwg.mxu0
    %1655 = vmatprep.subr.bf16.mxu0 %v1419
    %1656 = vmatpush1.bf16.msra.mxu0 %v1418
    %1657 = vmatprep.subr.bf16.mxu0 %v1480
    %1658 = vmatpush1.bf16.msra.mxu0 %v1477
    %1659 = vmatprep.subr.bf16.mxu0 0
    %1660 = vmatpush1.bf16.msra.mxu0 0
    %1661 = vmatprep.subr.bf16.mxu0 0
    %1662 = vmatpush1.bf16.msra.mxu0 0
    %1663 = vmatprep.subr.bf16.mxu0 0
    %1664 = vmatpush1.bf16.msra.mxu0 0
    %1665 = vmatprep.subr.bf16.mxu0 0
    %1666 = vmatpush1.bf16.msra.mxu0 0
    %1667 = vmatprep.subr.bf16.mxu0 0
    %1668 = vmatpush1.bf16.msra.mxu0 0
    %1669 = vmatprep.subr.bf16.mxu0 0
    %1670 = vmatpush1.bf16.msra.mxu0 0
    %1671 = vmatprep.subr.bf16.mxu0 0
    %1672 = vmatpush1.bf16.msra.mxu0 0
    %1673 = vmatprep.subr.bf16.mxu0 0
    %1674 = vmatpush1.bf16.msra.mxu0 0
    %1675 = vmatprep.subr.bf16.mxu0 0
    %1676 = vmatpush1.bf16.msra.mxu0 0
    %1677 = vmatprep.subr.bf16.mxu0 0
    %1678 = vmatpush1.bf16.msra.mxu0 0
    %1679 = vmatprep.subr.bf16.mxu0 0
    %1680 = vmatpush1.bf16.msra.mxu0 0
    %1681 = vmatprep.subr.bf16.mxu0 0
    %1682 = vmatpush1.bf16.msra.mxu0 0
    %1683 = vmatprep.subr.bf16.mxu0 0
    %1684 = vmatpush1.bf16.msra.mxu0 0
    %1685 = vmatprep.subr.bf16.mxu0 0
    %1686 = vmatpush1.bf16.msra.mxu0 0
    %1687 = vmatprep.mubr.bf16.mxu0 0
    %1688 = vmatmul.mubr.bf16.gmra.mrb[0].mxu0 %v1429
    %v1689 = vpop.f32.mrb[0].mxu0
    %v1690 = vadd.f32 %v1254, %v1689
    %v1691 = vpop.f32.mrb[0].mxu0
    %v1692 = vadd.f32 %v1256, %v1691
    %v1693 = vpop.f32.mrb[0].mxu0
    %v1694 = vadd.f32 %v1258, %v1693
    %v1695 = vpop.f32.mrb[0].mxu0
    %v1696 = vadd.f32 %v1260, %v1695
    %1697 = vmatprep.mubr.bf16.mxu0 0
    %1698 = vmatmul.mubr.bf16.gmra.mrb[0].mxu0 %v1432
    %v1699 = vpop.f32.mrb[0].mxu0
    %v1700 = vadd.f32 %v1264, %v1699
    %v1701 = vpop.f32.mrb[0].mxu0
    %v1702 = vadd.f32 %v1266, %v1701
    %v1703 = vpop.f32.mrb[0].mxu0
    %v1704 = vadd.f32 %v1268, %v1703
    %v1705 = vpop.f32.mrb[0].mxu0
    %v1706 = vadd.f32 %v1270, %v1705
    %1707 = vmatprep.mubr.bf16.mxu0 0
    %1708 = vmatmul.mubr.bf16.gmra.mrb[0].mxu0 %v1435
    %v1709 = vpop.f32.mrb[0].mxu0
    %v1710 = vadd.f32 %v1274, %v1709
    %v1711 = vpop.f32.mrb[0].mxu0
    %v1712 = vadd.f32 %v1276, %v1711
    %v1713 = vpop.f32.mrb[0].mxu0
    %v1714 = vadd.f32 %v1278, %v1713
    %v1715 = vpop.f32.mrb[0].mxu0
    %v1716 = vadd.f32 %v1280, %v1715
    %1717 = vmatprep.mubr.bf16.mxu0 0
    %1718 = vmatmul.mubr.bf16.gmra.mrb[0].mxu0 %v1438
    %v1719 = vpop.f32.mrb[0].mxu0
    %v1720 = vadd.f32 %v1284, %v1719
    %v1721 = vpop.f32.mrb[0].mxu0
    %v1722 = vadd.f32 %v1286, %v1721
    %v1723 = vpop.f32.mrb[0].mxu0
    %v1724 = vadd.f32 %v1288, %v1723
    %v1725 = vpop.f32.mrb[0].mxu0
    %v1726 = vadd.f32 %v1290, %v1725
    %1727 = vmatprep.mubr.bf16.mxu0 0
    %1728 = vmatmul.mubr.bf16.gmra.mrb[0].mxu0 %v1441
    %v1729 = vpop.f32.mrb[0].mxu0
    %v1730 = vadd.f32 %v1294, %v1729
    %v1731 = vpop.f32.mrb[0].mxu0
    %v1732 = vadd.f32 %v1296, %v1731
    %v1733 = vpop.f32.mrb[0].mxu0
    %v1734 = vadd.f32 %v1298, %v1733
    %v1735 = vpop.f32.mrb[0].mxu0
    %v1736 = vadd.f32 %v1300, %v1735
    %1737 = vmatprep.mubr.bf16.mxu0 0
    %1738 = vmatmul.mubr.bf16.gmra.mrb[0].mxu0 %v1444
    %v1739 = vpop.f32.mrb[0].mxu0
    %v1740 = vadd.f32 %v1304, %v1739
    %v1741 = vpop.f32.mrb[0].mxu0
    %v1742 = vadd.f32 %v1306, %v1741
    %v1743 = vpop.f32.mrb[0].mxu0
    %v1744 = vadd.f32 %v1308, %v1743
    %v1745 = vpop.f32.mrb[0].mxu0
    %v1746 = vadd.f32 %v1310, %v1745
    %1747 = vmatprep.mubr.bf16.mxu0 0
    %1748 = vmatmul.mubr.bf16.gmra.mrb[0].mxu0 %v1447
    %v1749 = vpop.f32.mrb[0].mxu0
    %v1750 = vadd.f32 %v1314, %v1749
    %v1751 = vpop.f32.mrb[0].mxu0
    %v1752 = vadd.f32 %v1316, %v1751
    %v1753 = vpop.f32.mrb[0].mxu0
    %v1754 = vadd.f32 %v1318, %v1753
    %v1755 = vpop.f32.mrb[0].mxu0
    %v1756 = vadd.f32 %v1320, %v1755
    %1757 = vmatprep.mubr.bf16.mxu0 0
    %1758 = vmatmul.mubr.bf16.gmra.mrb[0].mxu0 %v1450
    %v1759 = vpop.f32.mrb[0].mxu0
    %v1760 = vadd.f32 %v1324, %v1759
    %v1761 = vpop.f32.mrb[0].mxu0
    %v1762 = vadd.f32 %v1326, %v1761
    %v1763 = vpop.f32.mrb[0].mxu0
    %v1764 = vadd.f32 %v1328, %v1763
    %v1765 = vpop.f32.mrb[0].mxu0
    %v1766 = vadd.f32 %v1330, %v1765
    %1767 = vmatprep.mubr.bf16.mxu0 0
    %1768 = vmatmul.mubr.bf16.gmra.mrb[0].mxu0 %v1453
    %v1769 = vpop.f32.mrb[0].mxu0
    %v1770 = vadd.f32 %v1334, %v1769
    %v1771 = vpop.f32.mrb[0].mxu0
    %v1772 = vadd.f32 %v1336, %v1771
    %v1773 = vpop.f32.mrb[0].mxu0
    %v1774 = vadd.f32 %v1338, %v1773
    %v1775 = vpop.f32.mrb[0].mxu0
    %v1776 = vadd.f32 %v1340, %v1775
    %1777 = vmatprep.mubr.bf16.mxu0 0
    %1778 = vmatmul.mubr.bf16.gmra.mrb[0].mxu0 %v1456
    %v1779 = vpop.f32.mrb[0].mxu0
    %v1780 = vadd.f32 %v1344, %v1779
    %v1781 = vpop.f32.mrb[0].mxu0
    %v1782 = vadd.f32 %v1346, %v1781
    %v1783 = vpop.f32.mrb[0].mxu0
    %v1784 = vadd.f32 %v1348, %v1783
    %v1785 = vpop.f32.mrb[0].mxu0
    %v1786 = vadd.f32 %v1350, %v1785
    %1787 = vmatprep.mubr.bf16.mxu0 0
    %1788 = vmatmul.mubr.bf16.gmra.mrb[0].mxu0 %v1459
    %v1789 = vpop.f32.mrb[0].mxu0
    %v1790 = vadd.f32 %v1354, %v1789
    %v1791 = vpop.f32.mrb[0].mxu0
    %v1792 = vadd.f32 %v1356, %v1791
    %v1793 = vpop.f32.mrb[0].mxu0
    %v1794 = vadd.f32 %v1358, %v1793
    %v1795 = vpop.f32.mrb[0].mxu0
    %v1796 = vadd.f32 %v1360, %v1795
    %1797 = vmatprep.mubr.bf16.mxu0 0
    %1798 = vmatmul.mubr.bf16.gmra.mrb[0].mxu0 %v1462
    %v1799 = vpop.f32.mrb[0].mxu0
    %v1800 = vadd.f32 %v1364, %v1799
    %v1801 = vpop.f32.mrb[0].mxu0
    %v1802 = vadd.f32 %v1366, %v1801
    %v1803 = vpop.f32.mrb[0].mxu0
    %v1804 = vadd.f32 %v1368, %v1803
    %v1805 = vpop.f32.mrb[0].mxu0
    %v1806 = vadd.f32 %v1370, %v1805
    %1807 = vmatprep.mubr.bf16.mxu0 0
    %1808 = vmatmul.mubr.bf16.gmra.mrb[0].mxu0 %v1465
    %v1809 = vpop.f32.mrb[0].mxu0
    %v1810 = vadd.f32 %v1374, %v1809
    %v1811 = vpop.f32.mrb[0].mxu0
    %v1812 = vadd.f32 %v1376, %v1811
    %v1813 = vpop.f32.mrb[0].mxu0
    %v1814 = vadd.f32 %v1378, %v1813
    %v1815 = vpop.f32.mrb[0].mxu0
    %v1816 = vadd.f32 %v1380, %v1815
    %1817 = vmatprep.mubr.bf16.mxu0 0
    %1818 = vmatmul.mubr.bf16.gmra.mrb[0].mxu0 %v1468
    %v1819 = vpop.f32.mrb[0].mxu0
    %v1820 = vadd.f32 %v1384, %v1819
    %v1821 = vpop.f32.mrb[0].mxu0
    %v1822 = vadd.f32 %v1386, %v1821
    %v1823 = vpop.f32.mrb[0].mxu0
    %v1824 = vadd.f32 %v1388, %v1823
    %v1825 = vpop.f32.mrb[0].mxu0
    %v1826 = vadd.f32 %v1390, %v1825
    %1827 = vdwg.mxu0
    %s1828 = scalar_lea.vmem [#allocation2], 896
    %v1829 = vld [vmem:[%s1828] sm:$0xff]
    %v1830 = vld [vmem:[%s1828 + $0x8] sm:$0xff]
    %v1831 = vld [vmem:[%s1828 + $0x10] sm:$0xff]
    %v1832 = vld [vmem:[%s1828 + $0x18] sm:$0xff]
    %v1833 = vld [vmem:[%s1828 + $0x20] sm:$0xff]
    %v1834 = vld [vmem:[%s1828 + $0x28] sm:$0xff]
    %v1835 = vld [vmem:[%s1828 + $0x30] sm:$0xff]
    %v1836 = vld [vmem:[%s1828 + $0x38] sm:$0xff]
    %v1837 = vld [vmem:[%s1828 + $0x40] sm:$0xff]
    %v1838 = vld [vmem:[%s1828 + $0x48] sm:$0xff]
    %v1839 = vld [vmem:[%s1828 + $0x50] sm:$0xff]
    %v1840 = vld [vmem:[%s1828 + $0x58] sm:$0xff]
    %v1841 = vld [vmem:[%s1828 + $0x60] sm:$0xff]
    %v1842 = vld [vmem:[%s1828 + $0x68] sm:$0xff]
    %v1843 = vld [vmem:[%s1828 + $0x70] sm:$0xff]
    %v1844 = vld [vmem:[%s1828 + $0x78] sm:$0xff]
    %v1845 = vld [vmem:[%s1828 + $0x80] sm:$0xff]
    %v1846 = vld [vmem:[%s1828 + $0x88] sm:$0xff]
    %v1847 = vld [vmem:[%s1828 + $0x90] sm:$0xff]
    %v1848 = vld [vmem:[%s1828 + $0x98] sm:$0xff]
    %v1849 = vld [vmem:[%s1828 + $0xa0] sm:$0xff]
    %v1850 = vld [vmem:[%s1828 + $0xa8] sm:$0xff]
    %v1851 = vld [vmem:[%s1828 + $0xb0] sm:$0xff]
    %v1852 = vld [vmem:[%s1828 + $0xb8] sm:$0xff]
    %v1853 = vld [vmem:[%s1828 + $0xc0] sm:$0xff]
    %v1854 = vld [vmem:[%s1828 + $0xc8] sm:$0xff]
    %v1855 = vld [vmem:[%s1828 + $0xd0] sm:$0xff]
    %v1856 = vld [vmem:[%s1828 + $0xd8] sm:$0xff]
    %v1857 = vld [vmem:[%s1828 + $0xe0] sm:$0xff]
    %v1858 = vld [vmem:[%s1828 + $0xe8] sm:$0xff]
    %v1859 = vld [vmem:[%s1828 + $0xf0] sm:$0xff]
    %v1860 = vld [vmem:[%s1828 + $0xf8] sm:$0xff]
    %v1861 = vld [vmem:[%s1828 + $0x100] sm:$0xff]
    %v1862 = vld [vmem:[%s1828 + $0x108] sm:$0xff]
    %v1863 = vld [vmem:[%s1828 + $0x110] sm:$0xff]
    %v1864 = vld [vmem:[%s1828 + $0x118] sm:$0xff]
    %v1865 = vld [vmem:[%s1828 + $0x120] sm:$0xff]
    %v1866 = vld [vmem:[%s1828 + $0x128] sm:$0xff]
    %v1867 = vld [vmem:[%s1828 + $0x130] sm:$0xff]
    %v1868 = vld [vmem:[%s1828 + $0x138] sm:$0xff]
    %v1869 = vld [vmem:[%s1828 + $0x140] sm:$0xff]
    %v1870 = vld [vmem:[%s1828 + $0x148] sm:$0xff]
    %v1871 = vld [vmem:[%s1828 + $0x150] sm:$0xff]
    %v1872 = vld [vmem:[%s1828 + $0x158] sm:$0xff]
    %v1873 = vld [vmem:[%s1828 + $0x160] sm:$0xff]
    %v1874 = vld [vmem:[%s1828 + $0x168] sm:$0xff]
    %v1875 = vld [vmem:[%s1828 + $0x170] sm:$0xff]
    %v1876 = vld [vmem:[%s1828 + $0x178] sm:$0xff]
    %v1877 = vld [vmem:[%s1828 + $0x180] sm:$0xff]
    %v1878 = vld [vmem:[%s1828 + $0x188] sm:$0xff]
    %v1879 = vld [vmem:[%s1828 + $0x190] sm:$0xff]
    %v1880 = vld [vmem:[%s1828 + $0x198] sm:$0xff]
    %v1881 = vld [vmem:[%s1828 + $0x1a0] sm:$0xff]
    %v1882 = vld [vmem:[%s1828 + $0x1a8] sm:$0xff]
    %v1883 = vld [vmem:[%s1828 + $0x1b0] sm:$0xff]
    %v1884 = vld [vmem:[%s1828 + $0x1b8] sm:$0xff]
    %v1886 = vsel %vm273, %v1830, 0
    %v1889 = vsel %vm273, %v1832, 0
    %v1892 = vsel %vm273, %v1834, 0
    %v1895 = vsel %vm273, %v1836, 0
    %v1898 = vsel %vm273, %v1838, 0
    %v1901 = vsel %vm273, %v1840, 0
    %v1904 = vsel %vm273, %v1842, 0
    %v1907 = vsel %vm273, %v1844, 0
    %v1910 = vsel %vm273, %v1846, 0
    %v1913 = vsel %vm273, %v1848, 0
    %v1916 = vsel %vm273, %v1850, 0
    %v1919 = vsel %vm273, %v1852, 0
    %v1922 = vsel %vm273, %v1854, 0
    %v1925 = vsel %vm273, %v1856, 0
    %v1928 = vsel %vm273, %v1858, 0
    %v1931 = vsel %vm273, %v1860, 0
    %v1934 = vsel %vm273, %v1862, 0
    %v1937 = vsel %vm273, %v1864, 0
    %v1940 = vsel %vm273, %v1866, 0
    %v1943 = vsel %vm273, %v1868, 0
    %v1946 = vsel %vm273, %v1870, 0
    %v1949 = vsel %vm273, %v1872, 0
    %v1952 = vsel %vm273, %v1874, 0
    %v1955 = vsel %vm273, %v1876, 0
    %v1958 = vsel %vm273, %v1878, 0
    %v1961 = vsel %vm273, %v1880, 0
    %v1964 = vsel %vm273, %v1882, 0
    %v1967 = vsel %vm273, %v1884, 0
    %1969 = vmatprep.subr.mxu0 0.0
    %1970 = vmatpush1.msra.mxu0 %v189
    %1971 = vmatprep.subr.mxu0 0.0
    %1972 = vmatpush1.msra.mxu0 %v190
    %1973 = vmatprep.subr.mxu0 0.0
    %1974 = vmatpush1.msra.mxu0 %v191
    %1975 = vmatprep.subr.mxu0 0.0
    %1976 = vmatpush1.msra.mxu0 %v192
    %1977 = vmatprep.subr.mxu0 0.0
    %1978 = vmatpush1.msra.mxu0 %v193
    %1979 = vmatprep.subr.mxu0 0.0
    %1980 = vmatpush1.msra.mxu0 %v194
    %1981 = vmatprep.subr.mxu0 0.0
    %1982 = vmatpush1.msra.mxu0 %v195
    %1983 = vmatprep.subr.mxu0 0.0
    %1984 = vmatpush1.msra.mxu0 %v196
    %1985 = vmatprep.subr.mxu0 0.0
    %1986 = vmatpush1.msra.mxu0 %v197
    %1987 = vmatprep.subr.mxu0 0.0
    %1988 = vmatpush1.msra.mxu0 %v198
    %1989 = vmatprep.subr.mxu0 0.0
    %1990 = vmatpush1.msra.mxu0 %v199
    %1991 = vmatprep.subr.mxu0 0.0
    %1992 = vmatpush1.msra.mxu0 %v200
    %1993 = vmatprep.subr.mxu0 0.0
    %1994 = vmatpush1.msra.mxu0 %v201
    %1995 = vmatprep.subr.mxu0 0.0
    %1996 = vmatpush1.msra.mxu0 %v202
    %1997 = vmatprep.subr.mxu0 0.0
    %1998 = vmatpush1.msra.mxu0 %v203
    %1999 = vmatprep.subr.mxu0 0.0
    %2000 = vmatpush1.msra.mxu0 %v204
    %2001 = vmatprep.subr.mxu0 0.0
    %2002 = vmatpush1.msra.mxu0 %v205
    %2003 = vmatprep.subr.mxu0 0.0
    %2004 = vmatpush1.msra.mxu0 %v206
    %2005 = vmatprep.subr.mxu0 0.0
    %2006 = vmatpush1.msra.mxu0 %v207
    %2007 = vmatprep.subr.mxu0 0.0
    %2008 = vmatpush1.msra.mxu0 %v208
    %2009 = vmatprep.subr.mxu0 0.0
    %2010 = vmatpush1.msra.mxu0 %v209
    %2011 = vmatprep.subr.mxu0 0.0
    %2012 = vmatpush1.msra.mxu0 %v210
    %2013 = vmatprep.subr.mxu0 0.0
    %2014 = vmatpush1.msra.mxu0 %v211
    %2015 = vmatprep.subr.mxu0 0.0
    %2016 = vmatpush1.msra.mxu0 %v212
    %2017 = vmatprep.subr.mxu0 0.0
    %2018 = vmatpush1.msra.mxu0 %v213
    %2019 = vmatprep.subr.mxu0 0.0
    %2020 = vmatpush1.msra.mxu0 %v214
    %2021 = vmatprep.subr.mxu0 0.0
    %2022 = vmatpush1.msra.mxu0 %v215
    %2023 = vmatprep.subr.mxu0 0.0
    %2024 = vmatpush1.msra.mxu0 %v216
    %2025 = vmatprep.subr.mxu0 0.0
    %2026 = vmatpush1.msra.mxu0 0.0
    %2027 = vmatprep.subr.mxu0 0.0
    %2028 = vmatpush1.msra.mxu0 0.0
    %2029 = vmatprep.subr.mxu0 0.0
    %2030 = vmatpush1.msra.mxu0 0.0
    %2031 = vmatprep.subr.mxu0 0.0
    %2032 = vmatpush1.msra.mxu0 0.0
    %2033 = vmatprep.mubr.f32.mxu0 %v1886
    %2034 = vmatmul.mubr.f32.gmra.mrb[0].mxu0 %v1829
    %v2035 = vpop.f32.mrb[0].mxu0
    %v2036 = vadd.f32 0.0, %v2035
    %v2037 = vpop.f32.mrb[0].mxu0
    %2038 = vmatprep.mubr.f32.mxu0 %v1889
    %2039 = vmatmul.mubr.f32.gmra.mrb[0].mxu0 %v1831
    %v2040 = vpop.f32.mrb[0].mxu0
    %v2041 = vadd.f32 0.0, %v2040
    %v2042 = vpop.f32.mrb[0].mxu0
    %2043 = vmatprep.mubr.f32.mxu0 %v1892
    %2044 = vmatmul.mubr.f32.gmra.mrb[0].mxu0 %v1833
    %v2045 = vpop.f32.mrb[0].mxu0
    %v2046 = vadd.f32 0.0, %v2045
    %v2047 = vpop.f32.mrb[0].mxu0
    %2048 = vmatprep.mubr.f32.mxu0 %v1895
    %2049 = vmatmul.mubr.f32.gmra.mrb[0].mxu0 %v1835
    %v2050 = vpop.f32.mrb[0].mxu0
    %v2051 = vadd.f32 0.0, %v2050
    %v2052 = vpop.f32.mrb[0].mxu0
    %2053 = vmatprep.mubr.f32.mxu0 %v1898
    %2054 = vmatmul.mubr.f32.gmra.mrb[0].mxu0 %v1837
    %v2055 = vpop.f32.mrb[0].mxu0
    %v2056 = vadd.f32 0.0, %v2055
    %v2057 = vpop.f32.mrb[0].mxu0
    %2058 = vmatprep.mubr.f32.mxu0 %v1901
    %2059 = vmatmul.mubr.f32.gmra.mrb[0].mxu0 %v1839
    %v2060 = vpop.f32.mrb[0].mxu0
    %v2061 = vadd.f32 0.0, %v2060
    %v2062 = vpop.f32.mrb[0].mxu0
    %2063 = vmatprep.mubr.f32.mxu0 %v1904
    %2064 = vmatmul.mubr.f32.gmra.mrb[0].mxu0 %v1841
    %v2065 = vpop.f32.mrb[0].mxu0
    %v2066 = vadd.f32 0.0, %v2065
    %v2067 = vpop.f32.mrb[0].mxu0
    %2068 = vmatprep.mubr.f32.mxu0 %v1907
    %2069 = vmatmul.mubr.f32.gmra.mrb[0].mxu0 %v1843
    %v2070 = vpop.f32.mrb[0].mxu0
    %v2071 = vadd.f32 0.0, %v2070
    %v2072 = vpop.f32.mrb[0].mxu0
    %2073 = vmatprep.mubr.f32.mxu0 %v1910
    %2074 = vmatmul.mubr.f32.gmra.mrb[0].mxu0 %v1845
    %v2075 = vpop.f32.mrb[0].mxu0
    %v2076 = vadd.f32 0.0, %v2075
    %v2077 = vpop.f32.mrb[0].mxu0
    %2078 = vmatprep.mubr.f32.mxu0 %v1913
    %2079 = vmatmul.mubr.f32.gmra.mrb[0].mxu0 %v1847
    %v2080 = vpop.f32.mrb[0].mxu0
    %v2081 = vadd.f32 0.0, %v2080
    %v2082 = vpop.f32.mrb[0].mxu0
    %2083 = vmatprep.mubr.f32.mxu0 %v1916
    %2084 = vmatmul.mubr.f32.gmra.mrb[0].mxu0 %v1849
    %v2085 = vpop.f32.mrb[0].mxu0
    %v2086 = vadd.f32 0.0, %v2085
    %v2087 = vpop.f32.mrb[0].mxu0
    %2088 = vmatprep.mubr.f32.mxu0 %v1919
    %2089 = vmatmul.mubr.f32.gmra.mrb[0].mxu0 %v1851
    %v2090 = vpop.f32.mrb[0].mxu0
    %v2091 = vadd.f32 0.0, %v2090
    %v2092 = vpop.f32.mrb[0].mxu0
    %2093 = vmatprep.mubr.f32.mxu0 %v1922
    %2094 = vmatmul.mubr.f32.gmra.mrb[0].mxu0 %v1853
    %v2095 = vpop.f32.mrb[0].mxu0
    %v2096 = vadd.f32 0.0, %v2095
    %v2097 = vpop.f32.mrb[0].mxu0
    %2098 = vmatprep.mubr.f32.mxu0 %v1925
    %2099 = vmatmul.mubr.f32.gmra.mrb[0].mxu0 %v1855
    %v2100 = vpop.f32.mrb[0].mxu0
    %v2101 = vadd.f32 0.0, %v2100
    %v2102 = vpop.f32.mrb[0].mxu0
    %2103 = vmatprep.mubr.f32.mxu0 %v1928
    %2104 = vmatmul.mubr.f32.gmra.mrb[0].mxu0 %v1857
    %v2105 = vpop.f32.mrb[0].mxu0
    %v2106 = vadd.f32 0.0, %v2105
    %v2107 = vpop.f32.mrb[0].mxu0
    %2108 = vmatprep.mubr.f32.mxu0 %v1931
    %2109 = vmatmul.mubr.f32.gmra.mrb[0].mxu0 %v1859
    %v2110 = vpop.f32.mrb[0].mxu0
    %v2111 = vadd.f32 0.0, %v2110
    %v2112 = vpop.f32.mrb[0].mxu0
    %2113 = vmatprep.mubr.f32.mxu0 %v1934
    %2114 = vmatmul.mubr.f32.gmra.mrb[0].mxu0 %v1861
    %v2115 = vpop.f32.mrb[0].mxu0
    %v2116 = vadd.f32 0.0, %v2115
    %v2117 = vpop.f32.mrb[0].mxu0
    %2118 = vmatprep.mubr.f32.mxu0 %v1937
    %2119 = vmatmul.mubr.f32.gmra.mrb[0].mxu0 %v1863
    %v2120 = vpop.f32.mrb[0].mxu0
    %v2121 = vadd.f32 0.0, %v2120
    %v2122 = vpop.f32.mrb[0].mxu0
    %2123 = vmatprep.mubr.f32.mxu0 %v1940
    %2124 = vmatmul.mubr.f32.gmra.mrb[0].mxu0 %v1865
    %v2125 = vpop.f32.mrb[0].mxu0
    %v2126 = vadd.f32 0.0, %v2125
    %v2127 = vpop.f32.mrb[0].mxu0
    %2128 = vmatprep.mubr.f32.mxu0 %v1943
    %2129 = vmatmul.mubr.f32.gmra.mrb[0].mxu0 %v1867
    %v2130 = vpop.f32.mrb[0].mxu0
    %v2131 = vadd.f32 0.0, %v2130
    %v2132 = vpop.f32.mrb[0].mxu0
    %2133 = vmatprep.mubr.f32.mxu0 %v1946
    %2134 = vmatmul.mubr.f32.gmra.mrb[0].mxu0 %v1869
    %v2135 = vpop.f32.mrb[0].mxu0
    %v2136 = vadd.f32 0.0, %v2135
    %v2137 = vpop.f32.mrb[0].mxu0
    %2138 = vmatprep.mubr.f32.mxu0 %v1949
    %2139 = vmatmul.mubr.f32.gmra.mrb[0].mxu0 %v1871
    %v2140 = vpop.f32.mrb[0].mxu0
    %v2141 = vadd.f32 0.0, %v2140
    %v2142 = vpop.f32.mrb[0].mxu0
    %2143 = vmatprep.mubr.f32.mxu0 %v1952
    %2144 = vmatmul.mubr.f32.gmra.mrb[0].mxu0 %v1873
    %v2145 = vpop.f32.mrb[0].mxu0
    %v2146 = vadd.f32 0.0, %v2145
    %v2147 = vpop.f32.mrb[0].mxu0
    %2148 = vmatprep.mubr.f32.mxu0 %v1955
    %2149 = vmatmul.mubr.f32.gmra.mrb[0].mxu0 %v1875
    %v2150 = vpop.f32.mrb[0].mxu0
    %v2151 = vadd.f32 0.0, %v2150
    %v2152 = vpop.f32.mrb[0].mxu0
    %2153 = vmatprep.mubr.f32.mxu0 %v1958
    %2154 = vmatmul.mubr.f32.gmra.mrb[0].mxu0 %v1877
    %v2155 = vpop.f32.mrb[0].mxu0
    %v2156 = vadd.f32 0.0, %v2155
    %v2157 = vpop.f32.mrb[0].mxu0
    %2158 = vmatprep.mubr.f32.mxu0 %v1961
    %2159 = vmatmul.mubr.f32.gmra.mrb[0].mxu0 %v1879
    %v2160 = vpop.f32.mrb[0].mxu0
    %v2161 = vadd.f32 0.0, %v2160
    %v2162 = vpop.f32.mrb[0].mxu0
    %2163 = vmatprep.mubr.f32.mxu0 %v1964
    %2164 = vmatmul.mubr.f32.gmra.mrb[0].mxu0 %v1881
    %v2165 = vpop.f32.mrb[0].mxu0
    %v2166 = vadd.f32 0.0, %v2165
    %v2167 = vpop.f32.mrb[0].mxu0
    %2168 = vmatprep.mubr.f32.mxu0 %v1967
    %2169 = vmatmul.mubr.f32.gmra.mrb[0].mxu0 %v1883
    %v2170 = vpop.f32.mrb[0].mxu0
    %v2171 = vadd.f32 0.0, %v2170
    %v2172 = vpop.f32.mrb[0].mxu0
    %2173 = vdwg.mxu0
    %v2174 = vpack.c.bf16 %v2041, %v2036
    %v2175 = vpack.c.bf16 %v2051, %v2046
    %v2176 = vpack.c.bf16 %v2061, %v2056
    %v2177 = vpack.c.bf16 %v2071, %v2066
    %v2178 = vpack.c.bf16 %v2081, %v2076
    %v2179 = vpack.c.bf16 %v2091, %v2086
    %v2180 = vpack.c.bf16 %v2101, %v2096
    %v2181 = vpack.c.bf16 %v2111, %v2106
    %v2182 = vpack.c.bf16 %v2121, %v2116
    %v2183 = vpack.c.bf16 %v2131, %v2126
    %v2184 = vpack.c.bf16 %v2141, %v2136
    %v2185 = vpack.c.bf16 %v2151, %v2146
    %v2186 = vpack.c.bf16 %v2161, %v2156
    %v2187 = vpack.c.bf16 %v2171, %v2166
    %s2188 = scalar_lea.vmem [#allocation4], 128
    %v2189 = vld [vmem:[%s2188] sm:$0xff]
    %v2190 = vld [vmem:[%s2188 + $0x8] sm:$0xff]
    %v2191 = vld [vmem:[%s2188 + $0x10] sm:$0xff]
    %v2192 = vld [vmem:[%s2188 + $0x18] sm:$0xff]
    %v2193 = vld [vmem:[%s2188 + $0x20] sm:$0xff]
    %v2194 = vld [vmem:[%s2188 + $0x28] sm:$0xff]
    %v2195 = vld [vmem:[%s2188 + $0x30] sm:$0x33]
    %v2196 = vld [vmem:[%s2188 + $0x38] sm:$0x33]
    %v2205 = vunpack.c.l.b16 %v2189
    %v2206 = vunpack.c.h.b16 %v2189
    %v2207 = vunpack.c.l.b16 %v2190
    %v2208 = vunpack.c.h.b16 %v2190
    %v2209 = vunpack.c.l.b16 %v2191
    %v2210 = vunpack.c.h.b16 %v2191
    %v2211 = vunpack.c.l.b16 %v2192
    %v2212 = vunpack.c.h.b16 %v2192
    %v2213 = vunpack.c.l.b16 %v2193
    %v2214 = vunpack.c.h.b16 %v2193
    %v2215 = vunpack.c.l.b16 %v2194
    %v2216 = vunpack.c.h.b16 %v2194
    %v2217 = vunpack.c.l.b16 %v2195
    %v2218 = vunpack.c.h.b16 %v2195
    %v2219 = vunpack.c.l.b16 %v2196
    %v2220 = vunpack.c.h.b16 %v2196
    %v2221 = vpack.c.b16 %v2209, %v2205
    %v2222 = vpack.c.b16 %v2210, %v2206
    %v2223 = vpack.c.b16 %v2211, %v2207
    %v2224 = vpack.c.b16 %v2212, %v2208
    %v2225 = vpack.c.b16 %v2217, %v2213
    %v2226 = vpack.c.b16 %v2218, %v2214
    %v2227 = vpack.c.b16 %v2219, %v2215
    %v2228 = vpack.c.b16 %v2220, %v2216
    %v2234 = vsel %vm990, %v2174, 0
    %v2237 = vsel %vm990, %v2175, 0
    %v2240 = vsel %vm990, %v2176, 0
    %v2243 = vsel %vm990, %v2177, 0
    %v2246 = vsel %vm990, %v2178, 0
    %v2249 = vsel %vm990, %v2179, 0
    %v2252 = vsel %vm990, %v2180, 0
    %v2255 = vsel %vm990, %v2181, 0
    %v2258 = vsel %vm990, %v2182, 0
    %v2261 = vsel %vm990, %v2183, 0
    %v2264 = vsel %vm990, %v2184, 0
    %v2267 = vsel %vm990, %v2185, 0
    %v2270 = vsel %vm990, %v2186, 0
    %v2273 = vsel %vm990, %v2187, 0
    %v2276 = vsel %vm1033, %v2225, 0
    %v2279 = vsel %vm1033, %v2226, 0
    %v2282 = vsel %vm1033, %v2227, 0
    %v2285 = vsel %vm1033, %v2228, 0
    %2287 = vmatprep.subr.bf16.mxu0 %v2222
    %2288 = vmatpush1.bf16.msra.mxu0 %v2221
    %2289 = vmatprep.subr.bf16.mxu0 %v2279
    %2290 = vmatpush1.bf16.msra.mxu0 %v2276
    %2291 = vmatprep.subr.bf16.mxu0 0
    %2292 = vmatpush1.bf16.msra.mxu0 0
    %2293 = vmatprep.subr.bf16.mxu0 0
    %2294 = vmatpush1.bf16.msra.mxu0 0
    %2295 = vmatprep.subr.bf16.mxu0 0
    %2296 = vmatpush1.bf16.msra.mxu0 0
    %2297 = vmatprep.subr.bf16.mxu0 0
    %2298 = vmatpush1.bf16.msra.mxu0 0
    %2299 = vmatprep.subr.bf16.mxu0 0
    %2300 = vmatpush1.bf16.msra.mxu0 0
    %2301 = vmatprep.subr.bf16.mxu0 0
    %2302 = vmatpush1.bf16.msra.mxu0 0
    %2303 = vmatprep.subr.bf16.mxu0 0
    %2304 = vmatpush1.bf16.msra.mxu0 0
    %2305 = vmatprep.subr.bf16.mxu0 0
    %2306 = vmatpush1.bf16.msra.mxu0 0
    %2307 = vmatprep.subr.bf16.mxu0 0
    %2308 = vmatpush1.bf16.msra.mxu0 0
    %2309 = vmatprep.subr.bf16.mxu0 0
    %2310 = vmatpush1.bf16.msra.mxu0 0
    %2311 = vmatprep.subr.bf16.mxu0 0
    %2312 = vmatpush1.bf16.msra.mxu0 0
    %2313 = vmatprep.subr.bf16.mxu0 0
    %2314 = vmatpush1.bf16.msra.mxu0 0
    %2315 = vmatprep.subr.bf16.mxu0 0
    %2316 = vmatpush1.bf16.msra.mxu0 0
    %2317 = vmatprep.subr.bf16.mxu0 0
    %2318 = vmatpush1.bf16.msra.mxu0 0
    %2319 = vmatprep.mubr.bf16.mxu0 0
    %2320 = vmatmul.mubr.bf16.gmra.mrb[0].mxu0 %v2234
    %v2321 = vpop.f32.mrb[0].mxu0
    %v2322 = vadd.f32 0.0, %v2321
    %v2323 = vpop.f32.mrb[0].mxu0
    %v2324 = vadd.f32 0.0, %v2323
    %v2325 = vpop.f32.mrb[0].mxu0
    %v2326 = vadd.f32 0.0, %v2325
    %v2327 = vpop.f32.mrb[0].mxu0
    %v2328 = vadd.f32 0.0, %v2327
    %2329 = vmatprep.mubr.bf16.mxu0 0
    %2330 = vmatmul.mubr.bf16.gmra.mrb[0].mxu0 %v2237
    %v2331 = vpop.f32.mrb[0].mxu0
    %v2332 = vadd.f32 0.0, %v2331
    %v2333 = vpop.f32.mrb[0].mxu0
    %v2334 = vadd.f32 0.0, %v2333
    %v2335 = vpop.f32.mrb[0].mxu0
    %v2336 = vadd.f32 0.0, %v2335
    %v2337 = vpop.f32.mrb[0].mxu0
    %v2338 = vadd.f32 0.0, %v2337
    %2339 = vmatprep.mubr.bf16.mxu0 0
    %2340 = vmatmul.mubr.bf16.gmra.mrb[0].mxu0 %v2240
    %v2341 = vpop.f32.mrb[0].mxu0
    %v2342 = vadd.f32 0.0, %v2341
    %v2343 = vpop.f32.mrb[0].mxu0
    %v2344 = vadd.f32 0.0, %v2343
    %v2345 = vpop.f32.mrb[0].mxu0
    %v2346 = vadd.f32 0.0, %v2345
    %v2347 = vpop.f32.mrb[0].mxu0
    %v2348 = vadd.f32 0.0, %v2347
    %2349 = vmatprep.mubr.bf16.mxu0 0
    %2350 = vmatmul.mubr.bf16.gmra.mrb[0].mxu0 %v2243
    %v2351 = vpop.f32.mrb[0].mxu0
    %v2352 = vadd.f32 0.0, %v2351
    %v2353 = vpop.f32.mrb[0].mxu0
    %v2354 = vadd.f32 0.0, %v2353
    %v2355 = vpop.f32.mrb[0].mxu0
    %v2356 = vadd.f32 0.0, %v2355
    %v2357 = vpop.f32.mrb[0].mxu0
    %v2358 = vadd.f32 0.0, %v2357
    %2359 = vmatprep.mubr.bf16.mxu0 0
    %2360 = vmatmul.mubr.bf16.gmra.mrb[0].mxu0 %v2246
    %v2361 = vpop.f32.mrb[0].mxu0
    %v2362 = vadd.f32 0.0, %v2361
    %v2363 = vpop.f32.mrb[0].mxu0
    %v2364 = vadd.f32 0.0, %v2363
    %v2365 = vpop.f32.mrb[0].mxu0
    %v2366 = vadd.f32 0.0, %v2365
    %v2367 = vpop.f32.mrb[0].mxu0
    %v2368 = vadd.f32 0.0, %v2367
    %2369 = vmatprep.mubr.bf16.mxu0 0
    %2370 = vmatmul.mubr.bf16.gmra.mrb[0].mxu0 %v2249
    %v2371 = vpop.f32.mrb[0].mxu0
    %v2372 = vadd.f32 0.0, %v2371
    %v2373 = vpop.f32.mrb[0].mxu0
    %v2374 = vadd.f32 0.0, %v2373
    %v2375 = vpop.f32.mrb[0].mxu0
    %v2376 = vadd.f32 0.0, %v2375
    %v2377 = vpop.f32.mrb[0].mxu0
    %v2378 = vadd.f32 0.0, %v2377
    %2379 = vmatprep.mubr.bf16.mxu0 0
    %2380 = vmatmul.mubr.bf16.gmra.mrb[0].mxu0 %v2252
    %v2381 = vpop.f32.mrb[0].mxu0
    %v2382 = vadd.f32 0.0, %v2381
    %v2383 = vpop.f32.mrb[0].mxu0
    %v2384 = vadd.f32 0.0, %v2383
    %v2385 = vpop.f32.mrb[0].mxu0
    %v2386 = vadd.f32 0.0, %v2385
    %v2387 = vpop.f32.mrb[0].mxu0
    %v2388 = vadd.f32 0.0, %v2387
    %2389 = vmatprep.mubr.bf16.mxu0 0
    %2390 = vmatmul.mubr.bf16.gmra.mrb[0].mxu0 %v2255
    %v2391 = vpop.f32.mrb[0].mxu0
    %v2392 = vadd.f32 0.0, %v2391
    %v2393 = vpop.f32.mrb[0].mxu0
    %v2394 = vadd.f32 0.0, %v2393
    %v2395 = vpop.f32.mrb[0].mxu0
    %v2396 = vadd.f32 0.0, %v2395
    %v2397 = vpop.f32.mrb[0].mxu0
    %v2398 = vadd.f32 0.0, %v2397
    %2399 = vmatprep.mubr.bf16.mxu0 0
    %2400 = vmatmul.mubr.bf16.gmra.mrb[0].mxu0 %v2258
    %v2401 = vpop.f32.mrb[0].mxu0
    %v2402 = vadd.f32 0.0, %v2401
    %v2403 = vpop.f32.mrb[0].mxu0
    %v2404 = vadd.f32 0.0, %v2403
    %v2405 = vpop.f32.mrb[0].mxu0
    %v2406 = vadd.f32 0.0, %v2405
    %v2407 = vpop.f32.mrb[0].mxu0
    %v2408 = vadd.f32 0.0, %v2407
    %2409 = vmatprep.mubr.bf16.mxu0 0
    %2410 = vmatmul.mubr.bf16.gmra.mrb[0].mxu0 %v2261
    %v2411 = vpop.f32.mrb[0].mxu0
    %v2412 = vadd.f32 0.0, %v2411
    %v2413 = vpop.f32.mrb[0].mxu0
    %v2414 = vadd.f32 0.0, %v2413
    %v2415 = vpop.f32.mrb[0].mxu0
    %v2416 = vadd.f32 0.0, %v2415
    %v2417 = vpop.f32.mrb[0].mxu0
    %v2418 = vadd.f32 0.0, %v2417
    %2419 = vmatprep.mubr.bf16.mxu0 0
    %2420 = vmatmul.mubr.bf16.gmra.mrb[0].mxu0 %v2264
    %v2421 = vpop.f32.mrb[0].mxu0
    %v2422 = vadd.f32 0.0, %v2421
    %v2423 = vpop.f32.mrb[0].mxu0
    %v2424 = vadd.f32 0.0, %v2423
    %v2425 = vpop.f32.mrb[0].mxu0
    %v2426 = vadd.f32 0.0, %v2425
    %v2427 = vpop.f32.mrb[0].mxu0
    %v2428 = vadd.f32 0.0, %v2427
    %2429 = vmatprep.mubr.bf16.mxu0 0
    %2430 = vmatmul.mubr.bf16.gmra.mrb[0].mxu0 %v2267
    %v2431 = vpop.f32.mrb[0].mxu0
    %v2432 = vadd.f32 0.0, %v2431
    %v2433 = vpop.f32.mrb[0].mxu0
    %v2434 = vadd.f32 0.0, %v2433
    %v2435 = vpop.f32.mrb[0].mxu0
    %v2436 = vadd.f32 0.0, %v2435
    %v2437 = vpop.f32.mrb[0].mxu0
    %v2438 = vadd.f32 0.0, %v2437
    %2439 = vmatprep.mubr.bf16.mxu0 0
    %2440 = vmatmul.mubr.bf16.gmra.mrb[0].mxu0 %v2270
    %v2441 = vpop.f32.mrb[0].mxu0
    %v2442 = vadd.f32 0.0, %v2441
    %v2443 = vpop.f32.mrb[0].mxu0
    %v2444 = vadd.f32 0.0, %v2443
    %v2445 = vpop.f32.mrb[0].mxu0
    %v2446 = vadd.f32 0.0, %v2445
    %v2447 = vpop.f32.mrb[0].mxu0
    %v2448 = vadd.f32 0.0, %v2447
    %2449 = vmatprep.mubr.bf16.mxu0 0
    %2450 = vmatmul.mubr.bf16.gmra.mrb[0].mxu0 %v2273
    %v2451 = vpop.f32.mrb[0].mxu0
    %v2452 = vadd.f32 0.0, %v2451
    %v2453 = vpop.f32.mrb[0].mxu0
    %v2454 = vadd.f32 0.0, %v2453
    %v2455 = vpop.f32.mrb[0].mxu0
    %v2456 = vadd.f32 0.0, %v2455
    %v2457 = vpop.f32.mrb[0].mxu0
    %v2458 = vadd.f32 0.0, %v2457
    %2459 = vdwg.mxu0
    %2460 = vmatprep.subr.bf16.mxu0 %v2224
    %2461 = vmatpush1.bf16.msra.mxu0 %v2223
    %2462 = vmatprep.subr.bf16.mxu0 %v2285
    %2463 = vmatpush1.bf16.msra.mxu0 %v2282
    %2464 = vmatprep.subr.bf16.mxu0 0
    %2465 = vmatpush1.bf16.msra.mxu0 0
    %2466 = vmatprep.subr.bf16.mxu0 0
    %2467 = vmatpush1.bf16.msra.mxu0 0
    %2468 = vmatprep.subr.bf16.mxu0 0
    %2469 = vmatpush1.bf16.msra.mxu0 0
    %2470 = vmatprep.subr.bf16.mxu0 0
    %2471 = vmatpush1.bf16.msra.mxu0 0
    %2472 = vmatprep.subr.bf16.mxu0 0
    %2473 = vmatpush1.bf16.msra.mxu0 0
    %2474 = vmatprep.subr.bf16.mxu0 0
    %2475 = vmatpush1.bf16.msra.mxu0 0
    %2476 = vmatprep.subr.bf16.mxu0 0
    %2477 = vmatpush1.bf16.msra.mxu0 0
    %2478 = vmatprep.subr.bf16.mxu0 0
    %2479 = vmatpush1.bf16.msra.mxu0 0
    %2480 = vmatprep.subr.bf16.mxu0 0
    %2481 = vmatpush1.bf16.msra.mxu0 0
    %2482 = vmatprep.subr.bf16.mxu0 0
    %2483 = vmatpush1.bf16.msra.mxu0 0
    %2484 = vmatprep.subr.bf16.mxu0 0
    %2485 = vmatpush1.bf16.msra.mxu0 0
    %2486 = vmatprep.subr.bf16.mxu0 0
    %2487 = vmatpush1.bf16.msra.mxu0 0
    %2488 = vmatprep.subr.bf16.mxu0 0
    %2489 = vmatpush1.bf16.msra.mxu0 0
    %2490 = vmatprep.subr.bf16.mxu0 0
    %2491 = vmatpush1.bf16.msra.mxu0 0
    %2492 = vmatprep.mubr.bf16.mxu0 0
    %2493 = vmatmul.mubr.bf16.gmra.mrb[0].mxu0 %v2234
    %v2494 = vpop.f32.mrb[0].mxu0
    %v2495 = vadd.f32 0.0, %v2494
    %v2496 = vpop.f32.mrb[0].mxu0
    %v2497 = vadd.f32 0.0, %v2496
    %v2498 = vpop.f32.mrb[0].mxu0
    %v2499 = vadd.f32 0.0, %v2498
    %v2500 = vpop.f32.mrb[0].mxu0
    %v2501 = vadd.f32 0.0, %v2500
    %2502 = vmatprep.mubr.bf16.mxu0 0
    %2503 = vmatmul.mubr.bf16.gmra.mrb[0].mxu0 %v2237
    %v2504 = vpop.f32.mrb[0].mxu0
    %v2505 = vadd.f32 0.0, %v2504
    %v2506 = vpop.f32.mrb[0].mxu0
    %v2507 = vadd.f32 0.0, %v2506
    %v2508 = vpop.f32.mrb[0].mxu0
    %v2509 = vadd.f32 0.0, %v2508
    %v2510 = vpop.f32.mrb[0].mxu0
    %v2511 = vadd.f32 0.0, %v2510
    %2512 = vmatprep.mubr.bf16.mxu0 0
    %2513 = vmatmul.mubr.bf16.gmra.mrb[0].mxu0 %v2240
    %v2514 = vpop.f32.mrb[0].mxu0
    %v2515 = vadd.f32 0.0, %v2514
    %v2516 = vpop.f32.mrb[0].mxu0
    %v2517 = vadd.f32 0.0, %v2516
    %v2518 = vpop.f32.mrb[0].mxu0
    %v2519 = vadd.f32 0.0, %v2518
    %v2520 = vpop.f32.mrb[0].mxu0
    %v2521 = vadd.f32 0.0, %v2520
    %2522 = vmatprep.mubr.bf16.mxu0 0
    %2523 = vmatmul.mubr.bf16.gmra.mrb[0].mxu0 %v2243
    %v2524 = vpop.f32.mrb[0].mxu0
    %v2525 = vadd.f32 0.0, %v2524
    %v2526 = vpop.f32.mrb[0].mxu0
    %v2527 = vadd.f32 0.0, %v2526
    %v2528 = vpop.f32.mrb[0].mxu0
    %v2529 = vadd.f32 0.0, %v2528
    %v2530 = vpop.f32.mrb[0].mxu0
    %v2531 = vadd.f32 0.0, %v2530
    %2532 = vmatprep.mubr.bf16.mxu0 0
    %2533 = vmatmul.mubr.bf16.gmra.mrb[0].mxu0 %v2246
    %v2534 = vpop.f32.mrb[0].mxu0
    %v2535 = vadd.f32 0.0, %v2534
    %v2536 = vpop.f32.mrb[0].mxu0
    %v2537 = vadd.f32 0.0, %v2536
    %v2538 = vpop.f32.mrb[0].mxu0
    %v2539 = vadd.f32 0.0, %v2538
    %v2540 = vpop.f32.mrb[0].mxu0
    %v2541 = vadd.f32 0.0, %v2540
    %2542 = vmatprep.mubr.bf16.mxu0 0
    %2543 = vmatmul.mubr.bf16.gmra.mrb[0].mxu0 %v2249
    %v2544 = vpop.f32.mrb[0].mxu0
    %v2545 = vadd.f32 0.0, %v2544
    %v2546 = vpop.f32.mrb[0].mxu0
    %v2547 = vadd.f32 0.0, %v2546
    %v2548 = vpop.f32.mrb[0].mxu0
    %v2549 = vadd.f32 0.0, %v2548
    %v2550 = vpop.f32.mrb[0].mxu0
    %v2551 = vadd.f32 0.0, %v2550
    %2552 = vmatprep.mubr.bf16.mxu0 0
    %2553 = vmatmul.mubr.bf16.gmra.mrb[0].mxu0 %v2252
    %v2554 = vpop.f32.mrb[0].mxu0
    %v2555 = vadd.f32 0.0, %v2554
    %v2556 = vpop.f32.mrb[0].mxu0
    %v2557 = vadd.f32 0.0, %v2556
    %v2558 = vpop.f32.mrb[0].mxu0
    %v2559 = vadd.f32 0.0, %v2558
    %v2560 = vpop.f32.mrb[0].mxu0
    %v2561 = vadd.f32 0.0, %v2560
    %2562 = vmatprep.mubr.bf16.mxu0 0
    %2563 = vmatmul.mubr.bf16.gmra.mrb[0].mxu0 %v2255
    %v2564 = vpop.f32.mrb[0].mxu0
    %v2565 = vadd.f32 0.0, %v2564
    %v2566 = vpop.f32.mrb[0].mxu0
    %v2567 = vadd.f32 0.0, %v2566
    %v2568 = vpop.f32.mrb[0].mxu0
    %v2569 = vadd.f32 0.0, %v2568
    %v2570 = vpop.f32.mrb[0].mxu0
    %v2571 = vadd.f32 0.0, %v2570
    %2572 = vmatprep.mubr.bf16.mxu0 0
    %2573 = vmatmul.mubr.bf16.gmra.mrb[0].mxu0 %v2258
    %v2574 = vpop.f32.mrb[0].mxu0
    %v2575 = vadd.f32 0.0, %v2574
    %v2576 = vpop.f32.mrb[0].mxu0
    %v2577 = vadd.f32 0.0, %v2576
    %v2578 = vpop.f32.mrb[0].mxu0
    %v2579 = vadd.f32 0.0, %v2578
    %v2580 = vpop.f32.mrb[0].mxu0
    %v2581 = vadd.f32 0.0, %v2580
    %2582 = vmatprep.mubr.bf16.mxu0 0
    %2583 = vmatmul.mubr.bf16.gmra.mrb[0].mxu0 %v2261
    %v2584 = vpop.f32.mrb[0].mxu0
    %v2585 = vadd.f32 0.0, %v2584
    %v2586 = vpop.f32.mrb[0].mxu0
    %v2587 = vadd.f32 0.0, %v2586
    %v2588 = vpop.f32.mrb[0].mxu0
    %v2589 = vadd.f32 0.0, %v2588
    %v2590 = vpop.f32.mrb[0].mxu0
    %v2591 = vadd.f32 0.0, %v2590
    %2592 = vmatprep.mubr.bf16.mxu0 0
    %2593 = vmatmul.mubr.bf16.gmra.mrb[0].mxu0 %v2264
    %v2594 = vpop.f32.mrb[0].mxu0
    %v2595 = vadd.f32 0.0, %v2594
    %v2596 = vpop.f32.mrb[0].mxu0
    %v2597 = vadd.f32 0.0, %v2596
    %v2598 = vpop.f32.mrb[0].mxu0
    %v2599 = vadd.f32 0.0, %v2598
    %v2600 = vpop.f32.mrb[0].mxu0
    %v2601 = vadd.f32 0.0, %v2600
    %2602 = vmatprep.mubr.bf16.mxu0 0
    %2603 = vmatmul.mubr.bf16.gmra.mrb[0].mxu0 %v2267
    %v2604 = vpop.f32.mrb[0].mxu0
    %v2605 = vadd.f32 0.0, %v2604
    %v2606 = vpop.f32.mrb[0].mxu0
    %v2607 = vadd.f32 0.0, %v2606
    %v2608 = vpop.f32.mrb[0].mxu0
    %v2609 = vadd.f32 0.0, %v2608
    %v2610 = vpop.f32.mrb[0].mxu0
    %v2611 = vadd.f32 0.0, %v2610
    %2612 = vmatprep.mubr.bf16.mxu0 0
    %2613 = vmatmul.mubr.bf16.gmra.mrb[0].mxu0 %v2270
    %v2614 = vpop.f32.mrb[0].mxu0
    %v2615 = vadd.f32 0.0, %v2614
    %v2616 = vpop.f32.mrb[0].mxu0
    %v2617 = vadd.f32 0.0, %v2616
    %v2618 = vpop.f32.mrb[0].mxu0
    %v2619 = vadd.f32 0.0, %v2618
    %v2620 = vpop.f32.mrb[0].mxu0
    %v2621 = vadd.f32 0.0, %v2620
    %2622 = vmatprep.mubr.bf16.mxu0 0
    %2623 = vmatmul.mubr.bf16.gmra.mrb[0].mxu0 %v2273
    %v2624 = vpop.f32.mrb[0].mxu0
    %v2625 = vadd.f32 0.0, %v2624
    %v2626 = vpop.f32.mrb[0].mxu0
    %v2627 = vadd.f32 0.0, %v2626
    %v2628 = vpop.f32.mrb[0].mxu0
    %v2629 = vadd.f32 0.0, %v2628
    %v2630 = vpop.f32.mrb[0].mxu0
    %v2631 = vadd.f32 0.0, %v2630
    %2632 = vdwg.mxu0
    %v2633 = vadd.f32 %v1517, %v2322
    %v2634 = vadd.f32 %v1519, %v2324
    %v2635 = vadd.f32 %v1690, %v2495
    %v2636 = vadd.f32 %v1692, %v2497
    %v2637 = vadd.f32 %v1521, %v2326
    %v2638 = vadd.f32 %v1523, %v2328
    %v2639 = vadd.f32 %v1694, %v2499
    %v2640 = vadd.f32 %v1696, %v2501
    %v2641 = vadd.f32 %v1527, %v2332
    %v2642 = vadd.f32 %v1529, %v2334
    %v2643 = vadd.f32 %v1700, %v2505
    %v2644 = vadd.f32 %v1702, %v2507
    %v2645 = vadd.f32 %v1531, %v2336
    %v2646 = vadd.f32 %v1533, %v2338
    %v2647 = vadd.f32 %v1704, %v2509
    %v2648 = vadd.f32 %v1706, %v2511
    %v2649 = vadd.f32 %v1537, %v2342
    %v2650 = vadd.f32 %v1539, %v2344
    %v2651 = vadd.f32 %v1710, %v2515
    %v2652 = vadd.f32 %v1712, %v2517
    %v2653 = vadd.f32 %v1541, %v2346
    %v2654 = vadd.f32 %v1543, %v2348
    %v2655 = vadd.f32 %v1714, %v2519
    %v2656 = vadd.f32 %v1716, %v2521
    %v2657 = vadd.f32 %v1547, %v2352
    %v2658 = vadd.f32 %v1549, %v2354
    %v2659 = vadd.f32 %v1720, %v2525
    %v2660 = vadd.f32 %v1722, %v2527
    %v2661 = vadd.f32 %v1551, %v2356
    %v2662 = vadd.f32 %v1553, %v2358
    %v2663 = vadd.f32 %v1724, %v2529
    %v2664 = vadd.f32 %v1726, %v2531
    %v2665 = vadd.f32 %v1557, %v2362
    %v2666 = vadd.f32 %v1559, %v2364
    %v2667 = vadd.f32 %v1730, %v2535
    %v2668 = vadd.f32 %v1732, %v2537
    %v2669 = vadd.f32 %v1561, %v2366
    %v2670 = vadd.f32 %v1563, %v2368
    %v2671 = vadd.f32 %v1734, %v2539
    %v2672 = vadd.f32 %v1736, %v2541
    %v2673 = vadd.f32 %v1567, %v2372
    %v2674 = vadd.f32 %v1569, %v2374
    %v2675 = vadd.f32 %v1740, %v2545
    %v2676 = vadd.f32 %v1742, %v2547
    %v2677 = vadd.f32 %v1571, %v2376
    %v2678 = vadd.f32 %v1573, %v2378
    %v2679 = vadd.f32 %v1744, %v2549
    %v2680 = vadd.f32 %v1746, %v2551
    %v2681 = vadd.f32 %v1577, %v2382
    %v2682 = vadd.f32 %v1579, %v2384
    %v2683 = vadd.f32 %v1750, %v2555
    %v2684 = vadd.f32 %v1752, %v2557
    %v2685 = vadd.f32 %v1581, %v2386
    %v2686 = vadd.f32 %v1583, %v2388
    %v2687 = vadd.f32 %v1754, %v2559
    %v2688 = vadd.f32 %v1756, %v2561
    %v2689 = vadd.f32 %v1587, %v2392
    %v2690 = vadd.f32 %v1589, %v2394
    %v2691 = vadd.f32 %v1760, %v2565
    %v2692 = vadd.f32 %v1762, %v2567
    %v2693 = vadd.f32 %v1591, %v2396
    %v2694 = vadd.f32 %v1593, %v2398
    %v2695 = vadd.f32 %v1764, %v2569
    %v2696 = vadd.f32 %v1766, %v2571
    %v2697 = vadd.f32 %v1597, %v2402
    %v2698 = vadd.f32 %v1599, %v2404
    %v2699 = vadd.f32 %v1770, %v2575
    %v2700 = vadd.f32 %v1772, %v2577
    %v2701 = vadd.f32 %v1601, %v2406
    %v2702 = vadd.f32 %v1603, %v2408
    %v2703 = vadd.f32 %v1774, %v2579
    %v2704 = vadd.f32 %v1776, %v2581
    %v2705 = vadd.f32 %v1607, %v2412
    %v2706 = vadd.f32 %v1609, %v2414
    %v2707 = vadd.f32 %v1780, %v2585
    %v2708 = vadd.f32 %v1782, %v2587
    %v2709 = vadd.f32 %v1611, %v2416
    %v2710 = vadd.f32 %v1613, %v2418
    %v2711 = vadd.f32 %v1784, %v2589
    %v2712 = vadd.f32 %v1786, %v2591
    %v2713 = vadd.f32 %v1617, %v2422
    %v2714 = vadd.f32 %v1619, %v2424
    %v2715 = vadd.f32 %v1790, %v2595
    %v2716 = vadd.f32 %v1792, %v2597
    %v2717 = vadd.f32 %v1621, %v2426
    %v2718 = vadd.f32 %v1623, %v2428
    %v2719 = vadd.f32 %v1794, %v2599
    %v2720 = vadd.f32 %v1796, %v2601
    %v2721 = vadd.f32 %v1627, %v2432
    %v2722 = vadd.f32 %v1629, %v2434
    %v2723 = vadd.f32 %v1800, %v2605
    %v2724 = vadd.f32 %v1802, %v2607
    %v2725 = vadd.f32 %v1631, %v2436
    %v2726 = vadd.f32 %v1633, %v2438
    %v2727 = vadd.f32 %v1804, %v2609
    %v2728 = vadd.f32 %v1806, %v2611
    %v2729 = vadd.f32 %v1637, %v2442
    %v2730 = vadd.f32 %v1639, %v2444
    %v2731 = vadd.f32 %v1810, %v2615
    %v2732 = vadd.f32 %v1812, %v2617
    %v2733 = vadd.f32 %v1641, %v2446
    %v2734 = vadd.f32 %v1643, %v2448
    %v2735 = vadd.f32 %v1814, %v2619
    %v2736 = vadd.f32 %v1816, %v2621
    %v2737 = vadd.f32 %v1647, %v2452
    %v2738 = vadd.f32 %v1649, %v2454
    %v2739 = vadd.f32 %v1820, %v2625
    %v2740 = vadd.f32 %v1822, %v2627
    %v2741 = vadd.f32 %v1651, %v2456
    %v2742 = vadd.f32 %v1653, %v2458
    %v2743 = vadd.f32 %v1824, %v2629
    %v2744 = vadd.f32 %v1826, %v2631
    %v2745 = vld [vmem:[%s3] sm:$0xf]
    %v2747 = vlaneseq
    %v2748 = vshrl.u32 %v2747, 7
    %v2749 = vsub.s32 0, %v2748
    %v2750 = vrot.slane %v2745, %v2749
    %v2751 = vlaneseq
    %v2752 = vshrl.u32 %v2751, 7
    %v2753 = vsub.s32 1, %v2752
    %v2754 = vrot.slane %v2745, %v2753
    %v2755 = vlaneseq
    %v2756 = vshrl.u32 %v2755, 7
    %v2757 = vsub.s32 2, %v2756
    %v2758 = vrot.slane %v2745, %v2757
    %v2759 = vlaneseq
    %v2760 = vshrl.u32 %v2759, 7
    %v2761 = vsub.s32 3, %v2760
    %v2762 = vrot.slane %v2745, %v2761
    %v2767 = vadd.f32 %v2633, %v2750
    %v2768 = vadd.f32 %v2634, %v2754
    %v2769 = vadd.f32 %v2635, %v2758
    %v2770 = vadd.f32 %v2636, %v2762
    %v2771 = vadd.f32 %v2637, %v2750
    %v2772 = vadd.f32 %v2638, %v2754
    %v2773 = vadd.f32 %v2639, %v2758
    %v2774 = vadd.f32 %v2640, %v2762
    %v2775 = vadd.f32 %v2641, %v2750
    %v2776 = vadd.f32 %v2642, %v2754
    %v2777 = vadd.f32 %v2643, %v2758
    %v2778 = vadd.f32 %v2644, %v2762
    %v2779 = vadd.f32 %v2645, %v2750
    %v2780 = vadd.f32 %v2646, %v2754
    %v2781 = vadd.f32 %v2647, %v2758
    %v2782 = vadd.f32 %v2648, %v2762
    %v2783 = vadd.f32 %v2649, %v2750
    %v2784 = vadd.f32 %v2650, %v2754
    %v2785 = vadd.f32 %v2651, %v2758
    %v2786 = vadd.f32 %v2652, %v2762
    %v2787 = vadd.f32 %v2653, %v2750
    %v2788 = vadd.f32 %v2654, %v2754
    %v2789 = vadd.f32 %v2655, %v2758
    %v2790 = vadd.f32 %v2656, %v2762
    %v2791 = vadd.f32 %v2657, %v2750
    %v2792 = vadd.f32 %v2658, %v2754
    %v2793 = vadd.f32 %v2659, %v2758
    %v2794 = vadd.f32 %v2660, %v2762
    %v2795 = vadd.f32 %v2661, %v2750
    %v2796 = vadd.f32 %v2662, %v2754
    %v2797 = vadd.f32 %v2663, %v2758
    %v2798 = vadd.f32 %v2664, %v2762
    %v2799 = vadd.f32 %v2665, %v2750
    %v2800 = vadd.f32 %v2666, %v2754
    %v2801 = vadd.f32 %v2667, %v2758
    %v2802 = vadd.f32 %v2668, %v2762
    %v2803 = vadd.f32 %v2669, %v2750
    %v2804 = vadd.f32 %v2670, %v2754
    %v2805 = vadd.f32 %v2671, %v2758
    %v2806 = vadd.f32 %v2672, %v2762
    %v2807 = vadd.f32 %v2673, %v2750
    %v2808 = vadd.f32 %v2674, %v2754
    %v2809 = vadd.f32 %v2675, %v2758
    %v2810 = vadd.f32 %v2676, %v2762
    %v2811 = vadd.f32 %v2677, %v2750
    %v2812 = vadd.f32 %v2678, %v2754
    %v2813 = vadd.f32 %v2679, %v2758
    %v2814 = vadd.f32 %v2680, %v2762
    %v2815 = vadd.f32 %v2681, %v2750
    %v2816 = vadd.f32 %v2682, %v2754
    %v2817 = vadd.f32 %v2683, %v2758
    %v2818 = vadd.f32 %v2684, %v2762
    %v2819 = vadd.f32 %v2685, %v2750
    %v2820 = vadd.f32 %v2686, %v2754
    %v2821 = vadd.f32 %v2687, %v2758
    %v2822 = vadd.f32 %v2688, %v2762
    %v2823 = vadd.f32 %v2689, %v2750
    %v2824 = vadd.f32 %v2690, %v2754
    %v2825 = vadd.f32 %v2691, %v2758
    %v2826 = vadd.f32 %v2692, %v2762
    %v2827 = vadd.f32 %v2693, %v2750
    %v2828 = vadd.f32 %v2694, %v2754
    %v2829 = vadd.f32 %v2695, %v2758
    %v2830 = vadd.f32 %v2696, %v2762
    %v2831 = vadd.f32 %v2697, %v2750
    %v2832 = vadd.f32 %v2698, %v2754
    %v2833 = vadd.f32 %v2699, %v2758
    %v2834 = vadd.f32 %v2700, %v2762
    %v2835 = vadd.f32 %v2701, %v2750
    %v2836 = vadd.f32 %v2702, %v2754
    %v2837 = vadd.f32 %v2703, %v2758
    %v2838 = vadd.f32 %v2704, %v2762
    %v2839 = vadd.f32 %v2705, %v2750
    %v2840 = vadd.f32 %v2706, %v2754
    %v2841 = vadd.f32 %v2707, %v2758
    %v2842 = vadd.f32 %v2708, %v2762
    %v2843 = vadd.f32 %v2709, %v2750
    %v2844 = vadd.f32 %v2710, %v2754
    %v2845 = vadd.f32 %v2711, %v2758
    %v2846 = vadd.f32 %v2712, %v2762
    %v2847 = vadd.f32 %v2713, %v2750
    %v2848 = vadd.f32 %v2714, %v2754
    %v2849 = vadd.f32 %v2715, %v2758
    %v2850 = vadd.f32 %v2716, %v2762
    %v2851 = vadd.f32 %v2717, %v2750
    %v2852 = vadd.f32 %v2718, %v2754
    %v2853 = vadd.f32 %v2719, %v2758
    %v2854 = vadd.f32 %v2720, %v2762
    %v2855 = vadd.f32 %v2721, %v2750
    %v2856 = vadd.f32 %v2722, %v2754
    %v2857 = vadd.f32 %v2723, %v2758
    %v2858 = vadd.f32 %v2724, %v2762
    %v2859 = vadd.f32 %v2725, %v2750
    %v2860 = vadd.f32 %v2726, %v2754
    %v2861 = vadd.f32 %v2727, %v2758
    %v2862 = vadd.f32 %v2728, %v2762
    %v2863 = vadd.f32 %v2729, %v2750
    %v2864 = vadd.f32 %v2730, %v2754
    %v2865 = vadd.f32 %v2731, %v2758
    %v2866 = vadd.f32 %v2732, %v2762
    %v2867 = vadd.f32 %v2733, %v2750
    %v2868 = vadd.f32 %v2734, %v2754
    %v2869 = vadd.f32 %v2735, %v2758
    %v2870 = vadd.f32 %v2736, %v2762
    %v2871 = vadd.f32 %v2737, %v2750
    %v2872 = vadd.f32 %v2738, %v2754
    %v2873 = vadd.f32 %v2739, %v2758
    %v2874 = vadd.f32 %v2740, %v2762
    %v2875 = vadd.f32 %v2741, %v2750
    %v2876 = vadd.f32 %v2742, %v2754
    %v2877 = vadd.f32 %v2743, %v2758
    %v2878 = vadd.f32 %v2744, %v2762
    %v2879 = vmax.f32 %v2767, 0.0
    %v2880 = vmax.f32 %v2768, 0.0
    %v2881 = vmax.f32 %v2769, 0.0
    %v2882 = vmax.f32 %v2770, 0.0
    %v2883 = vmax.f32 %v2771, 0.0
    %v2884 = vmax.f32 %v2772, 0.0
    %v2885 = vmax.f32 %v2773, 0.0
    %v2886 = vmax.f32 %v2774, 0.0
    %v2887 = vmax.f32 %v2775, 0.0
    %v2888 = vmax.f32 %v2776, 0.0
    %v2889 = vmax.f32 %v2777, 0.0
    %v2890 = vmax.f32 %v2778, 0.0
    %v2891 = vmax.f32 %v2779, 0.0
    %v2892 = vmax.f32 %v2780, 0.0
    %v2893 = vmax.f32 %v2781, 0.0
    %v2894 = vmax.f32 %v2782, 0.0
    %v2895 = vmax.f32 %v2783, 0.0
    %v2896 = vmax.f32 %v2784, 0.0
    %v2897 = vmax.f32 %v2785, 0.0
    %v2898 = vmax.f32 %v2786, 0.0
    %v2899 = vmax.f32 %v2787, 0.0
    %v2900 = vmax.f32 %v2788, 0.0
    %v2901 = vmax.f32 %v2789, 0.0
    %v2902 = vmax.f32 %v2790, 0.0
    %v2903 = vmax.f32 %v2791, 0.0
    %v2904 = vmax.f32 %v2792, 0.0
    %v2905 = vmax.f32 %v2793, 0.0
    %v2906 = vmax.f32 %v2794, 0.0
    %v2907 = vmax.f32 %v2795, 0.0
    %v2908 = vmax.f32 %v2796, 0.0
    %v2909 = vmax.f32 %v2797, 0.0
    %v2910 = vmax.f32 %v2798, 0.0
    %v2911 = vmax.f32 %v2799, 0.0
    %v2912 = vmax.f32 %v2800, 0.0
    %v2913 = vmax.f32 %v2801, 0.0
    %v2914 = vmax.f32 %v2802, 0.0
    %v2915 = vmax.f32 %v2803, 0.0
    %v2916 = vmax.f32 %v2804, 0.0
    %v2917 = vmax.f32 %v2805, 0.0
    %v2918 = vmax.f32 %v2806, 0.0
    %v2919 = vmax.f32 %v2807, 0.0
    %v2920 = vmax.f32 %v2808, 0.0
    %v2921 = vmax.f32 %v2809, 0.0
    %v2922 = vmax.f32 %v2810, 0.0
    %v2923 = vmax.f32 %v2811, 0.0
    %v2924 = vmax.f32 %v2812, 0.0
    %v2925 = vmax.f32 %v2813, 0.0
    %v2926 = vmax.f32 %v2814, 0.0
    %v2927 = vmax.f32 %v2815, 0.0
    %v2928 = vmax.f32 %v2816, 0.0
    %v2929 = vmax.f32 %v2817, 0.0
    %v2930 = vmax.f32 %v2818, 0.0
    %v2931 = vmax.f32 %v2819, 0.0
    %v2932 = vmax.f32 %v2820, 0.0
    %v2933 = vmax.f32 %v2821, 0.0
    %v2934 = vmax.f32 %v2822, 0.0
    %v2935 = vmax.f32 %v2823, 0.0
    %v2936 = vmax.f32 %v2824, 0.0
    %v2937 = vmax.f32 %v2825, 0.0
    %v2938 = vmax.f32 %v2826, 0.0
    %v2939 = vmax.f32 %v2827, 0.0
    %v2940 = vmax.f32 %v2828, 0.0
    %v2941 = vmax.f32 %v2829, 0.0
    %v2942 = vmax.f32 %v2830, 0.0
    %v2943 = vmax.f32 %v2831, 0.0
    %v2944 = vmax.f32 %v2832, 0.0
    %v2945 = vmax.f32 %v2833, 0.0
    %v2946 = vmax.f32 %v2834, 0.0
    %v2947 = vmax.f32 %v2835, 0.0
    %v2948 = vmax.f32 %v2836, 0.0
    %v2949 = vmax.f32 %v2837, 0.0
    %v2950 = vmax.f32 %v2838, 0.0
    %v2951 = vmax.f32 %v2839, 0.0
    %v2952 = vmax.f32 %v2840, 0.0
    %v2953 = vmax.f32 %v2841, 0.0
    %v2954 = vmax.f32 %v2842, 0.0
    %v2955 = vmax.f32 %v2843, 0.0
    %v2956 = vmax.f32 %v2844, 0.0
    %v2957 = vmax.f32 %v2845, 0.0
    %v2958 = vmax.f32 %v2846, 0.0
    %v2959 = vmax.f32 %v2847, 0.0
    %v2960 = vmax.f32 %v2848, 0.0
    %v2961 = vmax.f32 %v2849, 0.0
    %v2962 = vmax.f32 %v2850, 0.0
    %v2963 = vmax.f32 %v2851, 0.0
    %v2964 = vmax.f32 %v2852, 0.0
    %v2965 = vmax.f32 %v2853, 0.0
    %v2966 = vmax.f32 %v2854, 0.0
    %v2967 = vmax.f32 %v2855, 0.0
    %v2968 = vmax.f32 %v2856, 0.0
    %v2969 = vmax.f32 %v2857, 0.0
    %v2970 = vmax.f32 %v2858, 0.0
    %v2971 = vmax.f32 %v2859, 0.0
    %v2972 = vmax.f32 %v2860, 0.0
    %v2973 = vmax.f32 %v2861, 0.0
    %v2974 = vmax.f32 %v2862, 0.0
    %v2975 = vmax.f32 %v2863, 0.0
    %v2976 = vmax.f32 %v2864, 0.0
    %v2977 = vmax.f32 %v2865, 0.0
    %v2978 = vmax.f32 %v2866, 0.0
    %v2979 = vmax.f32 %v2867, 0.0
    %v2980 = vmax.f32 %v2868, 0.0
    %v2981 = vmax.f32 %v2869, 0.0
    %v2982 = vmax.f32 %v2870, 0.0
    %v2983 = vmax.f32 %v2871, 0.0
    %v2984 = vmax.f32 %v2872, 0.0
    %v2985 = vmax.f32 %v2873, 0.0
    %v2986 = vmax.f32 %v2874, 0.0
    %v2987 = vmax.f32 %v2875, 0.0
    %v2988 = vmax.f32 %v2876, 0.0
    %v2989 = vmax.f32 %v2877, 0.0
    %v2990 = vmax.f32 %v2878, 0.0
    %v2991 = vld [vmem:[#allocation6] sm:$0xff]
    %v2992 = vld [vmem:[#allocation6 + $0x8] sm:$0xff]
    %v2993 = vld [vmem:[#allocation6 + $0x10] sm:$0xff]
    %v2994 = vld [vmem:[#allocation6 + $0x18] sm:$0xff]
    %v2995 = vld [vmem:[#allocation6 + $0x20] sm:$0xff]
    %v2996 = vld [vmem:[#allocation6 + $0x28] sm:$0xff]
    %v2997 = vld [vmem:[#allocation6 + $0x30] sm:$0xff]
    %v2998 = vld [vmem:[#allocation6 + $0x38] sm:$0xff]
    %v2999 = vld [vmem:[#allocation6 + $0x40] sm:$0xff]
    %v3000 = vld [vmem:[#allocation6 + $0x48] sm:$0xff]
    %v3001 = vld [vmem:[#allocation6 + $0x50] sm:$0xff]
    %v3002 = vld [vmem:[#allocation6 + $0x58] sm:$0xff]
    %v3003 = vld [vmem:[#allocation6 + $0x60] sm:$0xff]
    %v3004 = vld [vmem:[#allocation6 + $0x68] sm:$0xff]
    %v3005 = vld [vmem:[#allocation6 + $0x70] sm:$0xff]
    %v3006 = vld [vmem:[#allocation6 + $0x78] sm:$0xff]
    %v3007 = vld [vmem:[#allocation6 + $0x80] sm:$0xff]
    %v3008 = vld [vmem:[#allocation6 + $0x88] sm:$0xff]
    %v3009 = vld [vmem:[#allocation6 + $0x90] sm:$0xff]
    %v3010 = vld [vmem:[#allocation6 + $0x98] sm:$0xff]
    %v3011 = vld [vmem:[#allocation6 + $0xa0] sm:$0xff]
    %v3012 = vld [vmem:[#allocation6 + $0xa8] sm:$0xff]
    %v3013 = vld [vmem:[#allocation6 + $0xb0] sm:$0xff]
    %v3014 = vld [vmem:[#allocation6 + $0xb8] sm:$0xff]
    %v3015 = vld [vmem:[#allocation6 + $0xc0] sm:$0xff]
    %v3016 = vld [vmem:[#allocation6 + $0xc8] sm:$0xff]
    %v3017 = vld [vmem:[#allocation6 + $0xd0] sm:$0xff]
    %v3018 = vld [vmem:[#allocation6 + $0xd8] sm:$0xff]
    %v3020 = vsel %vm273, %v2992, 0
    %v3023 = vsel %vm273, %v2994, 0
    %v3026 = vsel %vm273, %v2996, 0
    %v3029 = vsel %vm273, %v2998, 0
    %v3032 = vsel %vm273, %v3000, 0
    %v3035 = vsel %vm273, %v3002, 0
    %v3038 = vsel %vm273, %v3004, 0
    %v3041 = vsel %vm273, %v3006, 0
    %v3044 = vsel %vm273, %v3008, 0
    %v3047 = vsel %vm273, %v3010, 0
    %v3050 = vsel %vm273, %v3012, 0
    %v3053 = vsel %vm273, %v3014, 0
    %v3056 = vsel %vm273, %v3016, 0
    %v3059 = vsel %vm273, %v3018, 0
    %3061 = vmatprep.subr.mxu0 %v2880
    %3062 = vmatpush1.msra.mxu0 %v2879
    %3063 = vmatprep.subr.mxu0 %v2884
    %3064 = vmatpush1.msra.mxu0 %v2883
    %3065 = vmatprep.subr.mxu0 %v2888
    %3066 = vmatpush1.msra.mxu0 %v2887
    %3067 = vmatprep.subr.mxu0 %v2892
    %3068 = vmatpush1.msra.mxu0 %v2891
    %3069 = vmatprep.subr.mxu0 %v2896
    %3070 = vmatpush1.msra.mxu0 %v2895
    %3071 = vmatprep.subr.mxu0 %v2900
    %3072 = vmatpush1.msra.mxu0 %v2899
    %3073 = vmatprep.subr.mxu0 %v2904
    %3074 = vmatpush1.msra.mxu0 %v2903
    %3075 = vmatprep.subr.mxu0 %v2908
    %3076 = vmatpush1.msra.mxu0 %v2907
    %3077 = vmatprep.subr.mxu0 %v2912
    %3078 = vmatpush1.msra.mxu0 %v2911
    %3079 = vmatprep.subr.mxu0 %v2916
    %3080 = vmatpush1.msra.mxu0 %v2915
    %3081 = vmatprep.subr.mxu0 %v2920
    %3082 = vmatpush1.msra.mxu0 %v2919
    %3083 = vmatprep.subr.mxu0 %v2924
    %3084 = vmatpush1.msra.mxu0 %v2923
    %3085 = vmatprep.subr.mxu0 %v2928
    %3086 = vmatpush1.msra.mxu0 %v2927
    %3087 = vmatprep.subr.mxu0 %v2932
    %3088 = vmatpush1.msra.mxu0 %v2931
    %3089 = vmatprep.subr.mxu0 %v2936
    %3090 = vmatpush1.msra.mxu0 %v2935
    %3091 = vmatprep.subr.mxu0 %v2940
    %3092 = vmatpush1.msra.mxu0 %v2939
    %3093 = vmatprep.subr.mxu0 %v2944
    %3094 = vmatpush1.msra.mxu0 %v2943
    %3095 = vmatprep.subr.mxu0 %v2948
    %3096 = vmatpush1.msra.mxu0 %v2947
    %3097 = vmatprep.subr.mxu0 %v2952
    %3098 = vmatpush1.msra.mxu0 %v2951
    %3099 = vmatprep.subr.mxu0 %v2956
    %3100 = vmatpush1.msra.mxu0 %v2955
    %3101 = vmatprep.subr.mxu0 %v2960
    %3102 = vmatpush1.msra.mxu0 %v2959
    %3103 = vmatprep.subr.mxu0 %v2964
    %3104 = vmatpush1.msra.mxu0 %v2963
    %3105 = vmatprep.subr.mxu0 %v2968
    %3106 = vmatpush1.msra.mxu0 %v2967
    %3107 = vmatprep.subr.mxu0 %v2972
    %3108 = vmatpush1.msra.mxu0 %v2971
    %3109 = vmatprep.subr.mxu0 %v2976
    %3110 = vmatpush1.msra.mxu0 %v2975
    %3111 = vmatprep.subr.mxu0 %v2980
    %3112 = vmatpush1.msra.mxu0 %v2979
    %3113 = vmatprep.subr.mxu0 %v2984
    %3114 = vmatpush1.msra.mxu0 %v2983
    %3115 = vmatprep.subr.mxu0 %v2988
    %3116 = vmatpush1.msra.mxu0 %v2987
    %3117 = vmatprep.subr.mxu0 0.0
    %3118 = vmatpush1.msra.mxu0 0.0
    %3119 = vmatprep.subr.mxu0 0.0
    %3120 = vmatpush1.msra.mxu0 0.0
    %3121 = vmatprep.subr.mxu0 0.0
    %3122 = vmatpush1.msra.mxu0 0.0
    %3123 = vmatprep.subr.mxu0 0.0
    %3124 = vmatpush1.msra.mxu0 0.0
    %3125 = vmatprep.mubr.f32.mxu0 %v3020
    %3126 = vmatmul.mubr.f32.gmra.mrb[0].mxu0 %v2991
    %v3127 = vpop.f32.mrb[0].mxu0
    %v3128 = vadd.f32 0.0, %v3127
    %v3129 = vpop.f32.mrb[0].mxu0
    %v3130 = vadd.f32 0.0, %v3129
    %3131 = vmatprep.mubr.f32.mxu0 %v3023
    %3132 = vmatmul.mubr.f32.gmra.mrb[0].mxu0 %v2993
    %v3133 = vpop.f32.mrb[0].mxu0
    %v3134 = vadd.f32 0.0, %v3133
    %v3135 = vpop.f32.mrb[0].mxu0
    %v3136 = vadd.f32 0.0, %v3135
    %3137 = vmatprep.mubr.f32.mxu0 %v3026
    %3138 = vmatmul.mubr.f32.gmra.mrb[0].mxu0 %v2995
    %v3139 = vpop.f32.mrb[0].mxu0
    %v3140 = vadd.f32 0.0, %v3139
    %v3141 = vpop.f32.mrb[0].mxu0
    %v3142 = vadd.f32 0.0, %v3141
    %3143 = vmatprep.mubr.f32.mxu0 %v3029
    %3144 = vmatmul.mubr.f32.gmra.mrb[0].mxu0 %v2997
    %v3145 = vpop.f32.mrb[0].mxu0
    %v3146 = vadd.f32 0.0, %v3145
    %v3147 = vpop.f32.mrb[0].mxu0
    %v3148 = vadd.f32 0.0, %v3147
    %3149 = vmatprep.mubr.f32.mxu0 %v3032
    %3150 = vmatmul.mubr.f32.gmra.mrb[0].mxu0 %v2999
    %v3151 = vpop.f32.mrb[0].mxu0
    %v3152 = vadd.f32 0.0, %v3151
    %v3153 = vpop.f32.mrb[0].mxu0
    %v3154 = vadd.f32 0.0, %v3153
    %3155 = vmatprep.mubr.f32.mxu0 %v3035
    %3156 = vmatmul.mubr.f32.gmra.mrb[0].mxu0 %v3001
    %v3157 = vpop.f32.mrb[0].mxu0
    %v3158 = vadd.f32 0.0, %v3157
    %v3159 = vpop.f32.mrb[0].mxu0
    %v3160 = vadd.f32 0.0, %v3159
    %3161 = vmatprep.mubr.f32.mxu0 %v3038
    %3162 = vmatmul.mubr.f32.gmra.mrb[0].mxu0 %v3003
    %v3163 = vpop.f32.mrb[0].mxu0
    %v3164 = vadd.f32 0.0, %v3163
    %v3165 = vpop.f32.mrb[0].mxu0
    %v3166 = vadd.f32 0.0, %v3165
    %3167 = vmatprep.mubr.f32.mxu0 %v3041
    %3168 = vmatmul.mubr.f32.gmra.mrb[0].mxu0 %v3005
    %v3169 = vpop.f32.mrb[0].mxu0
    %v3170 = vadd.f32 0.0, %v3169
    %v3171 = vpop.f32.mrb[0].mxu0
    %v3172 = vadd.f32 0.0, %v3171
    %3173 = vmatprep.mubr.f32.mxu0 %v3044
    %3174 = vmatmul.mubr.f32.gmra.mrb[0].mxu0 %v3007
    %v3175 = vpop.f32.mrb[0].mxu0
    %v3176 = vadd.f32 0.0, %v3175
    %v3177 = vpop.f32.mrb[0].mxu0
    %v3178 = vadd.f32 0.0, %v3177
    %3179 = vmatprep.mubr.f32.mxu0 %v3047
    %3180 = vmatmul.mubr.f32.gmra.mrb[0].mxu0 %v3009
    %v3181 = vpop.f32.mrb[0].mxu0
    %v3182 = vadd.f32 0.0, %v3181
    %v3183 = vpop.f32.mrb[0].mxu0
    %v3184 = vadd.f32 0.0, %v3183
    %3185 = vmatprep.mubr.f32.mxu0 %v3050
    %3186 = vmatmul.mubr.f32.gmra.mrb[0].mxu0 %v3011
    %v3187 = vpop.f32.mrb[0].mxu0
    %v3188 = vadd.f32 0.0, %v3187
    %v3189 = vpop.f32.mrb[0].mxu0
    %v3190 = vadd.f32 0.0, %v3189
    %3191 = vmatprep.mubr.f32.mxu0 %v3053
    %3192 = vmatmul.mubr.f32.gmra.mrb[0].mxu0 %v3013
    %v3193 = vpop.f32.mrb[0].mxu0
    %v3194 = vadd.f32 0.0, %v3193
    %v3195 = vpop.f32.mrb[0].mxu0
    %v3196 = vadd.f32 0.0, %v3195
    %3197 = vmatprep.mubr.f32.mxu0 %v3056
    %3198 = vmatmul.mubr.f32.gmra.mrb[0].mxu0 %v3015
    %v3199 = vpop.f32.mrb[0].mxu0
    %v3200 = vadd.f32 0.0, %v3199
    %v3201 = vpop.f32.mrb[0].mxu0
    %v3202 = vadd.f32 0.0, %v3201
    %3203 = vmatprep.mubr.f32.mxu0 %v3059
    %3204 = vmatmul.mubr.f32.gmra.mrb[0].mxu0 %v3017
    %v3205 = vpop.f32.mrb[0].mxu0
    %v3206 = vadd.f32 0.0, %v3205
    %v3207 = vpop.f32.mrb[0].mxu0
    %v3208 = vadd.f32 0.0, %v3207
    %3209 = vdwg.mxu0
    %3210 = vmatprep.subr.mxu0 %v2882
    %3211 = vmatpush1.msra.mxu0 %v2881
    %3212 = vmatprep.subr.mxu0 %v2886
    %3213 = vmatpush1.msra.mxu0 %v2885
    %3214 = vmatprep.subr.mxu0 %v2890
    %3215 = vmatpush1.msra.mxu0 %v2889
    %3216 = vmatprep.subr.mxu0 %v2894
    %3217 = vmatpush1.msra.mxu0 %v2893
    %3218 = vmatprep.subr.mxu0 %v2898
    %3219 = vmatpush1.msra.mxu0 %v2897
    %3220 = vmatprep.subr.mxu0 %v2902
    %3221 = vmatpush1.msra.mxu0 %v2901
    %3222 = vmatprep.subr.mxu0 %v2906
    %3223 = vmatpush1.msra.mxu0 %v2905
    %3224 = vmatprep.subr.mxu0 %v2910
    %3225 = vmatpush1.msra.mxu0 %v2909
    %3226 = vmatprep.subr.mxu0 %v2914
    %3227 = vmatpush1.msra.mxu0 %v2913
    %3228 = vmatprep.subr.mxu0 %v2918
    %3229 = vmatpush1.msra.mxu0 %v2917
    %3230 = vmatprep.subr.mxu0 %v2922
    %3231 = vmatpush1.msra.mxu0 %v2921
    %3232 = vmatprep.subr.mxu0 %v2926
    %3233 = vmatpush1.msra.mxu0 %v2925
    %3234 = vmatprep.subr.mxu0 %v2930
    %3235 = vmatpush1.msra.mxu0 %v2929
    %3236 = vmatprep.subr.mxu0 %v2934
    %3237 = vmatpush1.msra.mxu0 %v2933
    %3238 = vmatprep.subr.mxu0 %v2938
    %3239 = vmatpush1.msra.mxu0 %v2937
    %3240 = vmatprep.subr.mxu0 %v2942
    %3241 = vmatpush1.msra.mxu0 %v2941
    %3242 = vmatprep.subr.mxu0 %v2946
    %3243 = vmatpush1.msra.mxu0 %v2945
    %3244 = vmatprep.subr.mxu0 %v2950
    %3245 = vmatpush1.msra.mxu0 %v2949
    %3246 = vmatprep.subr.mxu0 %v2954
    %3247 = vmatpush1.msra.mxu0 %v2953
    %3248 = vmatprep.subr.mxu0 %v2958
    %3249 = vmatpush1.msra.mxu0 %v2957
    %3250 = vmatprep.subr.mxu0 %v2962
    %3251 = vmatpush1.msra.mxu0 %v2961
    %3252 = vmatprep.subr.mxu0 %v2966
    %3253 = vmatpush1.msra.mxu0 %v2965
    %3254 = vmatprep.subr.mxu0 %v2970
    %3255 = vmatpush1.msra.mxu0 %v2969
    %3256 = vmatprep.subr.mxu0 %v2974
    %3257 = vmatpush1.msra.mxu0 %v2973
    %3258 = vmatprep.subr.mxu0 %v2978
    %3259 = vmatpush1.msra.mxu0 %v2977
    %3260 = vmatprep.subr.mxu0 %v2982
    %3261 = vmatpush1.msra.mxu0 %v2981
    %3262 = vmatprep.subr.mxu0 %v2986
    %3263 = vmatpush1.msra.mxu0 %v2985
    %3264 = vmatprep.subr.mxu0 %v2990
    %3265 = vmatpush1.msra.mxu0 %v2989
    %3266 = vmatprep.subr.mxu0 0.0
    %3267 = vmatpush1.msra.mxu0 0.0
    %3268 = vmatprep.subr.mxu0 0.0
    %3269 = vmatpush1.msra.mxu0 0.0
    %3270 = vmatprep.subr.mxu0 0.0
    %3271 = vmatpush1.msra.mxu0 0.0
    %3272 = vmatprep.subr.mxu0 0.0
    %3273 = vmatpush1.msra.mxu0 0.0
    %3274 = vmatprep.mubr.f32.mxu0 %v3020
    %3275 = vmatmul.mubr.f32.gmra.mrb[0].mxu0 %v2991
    %v3276 = vpop.f32.mrb[0].mxu0
    %v3277 = vadd.f32 0.0, %v3276
    %v3278 = vpop.f32.mrb[0].mxu0
    %v3279 = vadd.f32 0.0, %v3278
    %3280 = vmatprep.mubr.f32.mxu0 %v3023
    %3281 = vmatmul.mubr.f32.gmra.mrb[0].mxu0 %v2993
    %v3282 = vpop.f32.mrb[0].mxu0
    %v3283 = vadd.f32 0.0, %v3282
    %v3284 = vpop.f32.mrb[0].mxu0
    %v3285 = vadd.f32 0.0, %v3284
    %3286 = vmatprep.mubr.f32.mxu0 %v3026
    %3287 = vmatmul.mubr.f32.gmra.mrb[0].mxu0 %v2995
    %v3288 = vpop.f32.mrb[0].mxu0
    %v3289 = vadd.f32 0.0, %v3288
    %v3290 = vpop.f32.mrb[0].mxu0
    %v3291 = vadd.f32 0.0, %v3290
    %3292 = vmatprep.mubr.f32.mxu0 %v3029
    %3293 = vmatmul.mubr.f32.gmra.mrb[0].mxu0 %v2997
    %v3294 = vpop.f32.mrb[0].mxu0
    %v3295 = vadd.f32 0.0, %v3294
    %v3296 = vpop.f32.mrb[0].mxu0
    %v3297 = vadd.f32 0.0, %v3296
    %3298 = vmatprep.mubr.f32.mxu0 %v3032
    %3299 = vmatmul.mubr.f32.gmra.mrb[0].mxu0 %v2999
    %v3300 = vpop.f32.mrb[0].mxu0
    %v3301 = vadd.f32 0.0, %v3300
    %v3302 = vpop.f32.mrb[0].mxu0
    %v3303 = vadd.f32 0.0, %v3302
    %3304 = vmatprep.mubr.f32.mxu0 %v3035
    %3305 = vmatmul.mubr.f32.gmra.mrb[0].mxu0 %v3001
    %v3306 = vpop.f32.mrb[0].mxu0
    %v3307 = vadd.f32 0.0, %v3306
    %v3308 = vpop.f32.mrb[0].mxu0
    %v3309 = vadd.f32 0.0, %v3308
    %3310 = vmatprep.mubr.f32.mxu0 %v3038
    %3311 = vmatmul.mubr.f32.gmra.mrb[0].mxu0 %v3003
    %v3312 = vpop.f32.mrb[0].mxu0
    %v3313 = vadd.f32 0.0, %v3312
    %v3314 = vpop.f32.mrb[0].mxu0
    %v3315 = vadd.f32 0.0, %v3314
    %3316 = vmatprep.mubr.f32.mxu0 %v3041
    %3317 = vmatmul.mubr.f32.gmra.mrb[0].mxu0 %v3005
    %v3318 = vpop.f32.mrb[0].mxu0
    %v3319 = vadd.f32 0.0, %v3318
    %v3320 = vpop.f32.mrb[0].mxu0
    %v3321 = vadd.f32 0.0, %v3320
    %3322 = vmatprep.mubr.f32.mxu0 %v3044
    %3323 = vmatmul.mubr.f32.gmra.mrb[0].mxu0 %v3007
    %v3324 = vpop.f32.mrb[0].mxu0
    %v3325 = vadd.f32 0.0, %v3324
    %v3326 = vpop.f32.mrb[0].mxu0
    %v3327 = vadd.f32 0.0, %v3326
    %3328 = vmatprep.mubr.f32.mxu0 %v3047
    %3329 = vmatmul.mubr.f32.gmra.mrb[0].mxu0 %v3009
    %v3330 = vpop.f32.mrb[0].mxu0
    %v3331 = vadd.f32 0.0, %v3330
    %v3332 = vpop.f32.mrb[0].mxu0
    %v3333 = vadd.f32 0.0, %v3332
    %3334 = vmatprep.mubr.f32.mxu0 %v3050
    %3335 = vmatmul.mubr.f32.gmra.mrb[0].mxu0 %v3011
    %v3336 = vpop.f32.mrb[0].mxu0
    %v3337 = vadd.f32 0.0, %v3336
    %v3338 = vpop.f32.mrb[0].mxu0
    %v3339 = vadd.f32 0.0, %v3338
    %3340 = vmatprep.mubr.f32.mxu0 %v3053
    %3341 = vmatmul.mubr.f32.gmra.mrb[0].mxu0 %v3013
    %v3342 = vpop.f32.mrb[0].mxu0
    %v3343 = vadd.f32 0.0, %v3342
    %v3344 = vpop.f32.mrb[0].mxu0
    %v3345 = vadd.f32 0.0, %v3344
    %3346 = vmatprep.mubr.f32.mxu0 %v3056
    %3347 = vmatmul.mubr.f32.gmra.mrb[0].mxu0 %v3015
    %v3348 = vpop.f32.mrb[0].mxu0
    %v3349 = vadd.f32 0.0, %v3348
    %v3350 = vpop.f32.mrb[0].mxu0
    %v3351 = vadd.f32 0.0, %v3350
    %3352 = vmatprep.mubr.f32.mxu0 %v3059
    %3353 = vmatmul.mubr.f32.gmra.mrb[0].mxu0 %v3017
    %v3354 = vpop.f32.mrb[0].mxu0
    %v3355 = vadd.f32 0.0, %v3354
    %v3356 = vpop.f32.mrb[0].mxu0
    %v3357 = vadd.f32 0.0, %v3356
    %3358 = vdwg.mxu0
    %v3359 = vld [vmem:[%s5] sm:$0xff]
    %v3360 = vld [vmem:[%s5 + $0x8] sm:$0xff]
    %v3361 = vld [vmem:[%s5 + $0x10] sm:$0xff]
    %v3362 = vld [vmem:[%s5 + $0x18] sm:$0xff]
    %v3363 = vld [vmem:[%s5 + $0x20] sm:$0xff]
    %v3364 = vld [vmem:[%s5 + $0x28] sm:$0xff]
    %v3365 = vld [vmem:[%s5 + $0x30] sm:$0xff]
    %v3366 = vld [vmem:[%s5 + $0x38] sm:$0xff]
    %v3367 = vld [vmem:[%s5 + $0x40] sm:$0xff]
    %v3368 = vld [vmem:[%s5 + $0x48] sm:$0xff]
    %v3369 = vld [vmem:[%s5 + $0x50] sm:$0xff]
    %v3370 = vld [vmem:[%s5 + $0x58] sm:$0xff]
    %v3371 = vld [vmem:[%s5 + $0x60] sm:$0xff]
    %v3372 = vld [vmem:[%s5 + $0x68] sm:$0xff]
    %v3373 = vld [vmem:[%s5 + $0x70] sm:$0xff]
    %v3374 = vld [vmem:[%s5 + $0x78] sm:$0xff]
    %v3375 = vld [vmem:[%s5 + $0x80] sm:$0xff]
    %v3376 = vld [vmem:[%s5 + $0x88] sm:$0xff]
    %v3377 = vld [vmem:[%s5 + $0x90] sm:$0xff]
    %v3378 = vld [vmem:[%s5 + $0x98] sm:$0xff]
    %v3379 = vld [vmem:[%s5 + $0xa0] sm:$0xff]
    %v3380 = vld [vmem:[%s5 + $0xa8] sm:$0xff]
    %v3381 = vld [vmem:[%s5 + $0xb0] sm:$0xff]
    %v3382 = vld [vmem:[%s5 + $0xb8] sm:$0xff]
    %v3383 = vld [vmem:[%s5 + $0xc0] sm:$0xff]
    %v3384 = vld [vmem:[%s5 + $0xc8] sm:$0xff]
    %v3385 = vld [vmem:[%s5 + $0xd0] sm:$0xff]
    %v3386 = vld [vmem:[%s5 + $0xd8] sm:$0xff]
    %v3387 = vld [vmem:[%s5 + $0xe0] sm:$0xff]
    %v3388 = vld [vmem:[%s5 + $0xe8] sm:$0xff]
    %v3389 = vld [vmem:[%s5 + $0xf0] sm:$0xff]
    %v3390 = vld [vmem:[%s5 + $0xf8] sm:$0xff]
    %v3391 = vld [vmem:[%s5 + $0x100] sm:$0xff]
    %v3392 = vld [vmem:[%s5 + $0x108] sm:$0xff]
    %v3393 = vld [vmem:[%s5 + $0x110] sm:$0xff]
    %v3394 = vld [vmem:[%s5 + $0x118] sm:$0xff]
    %v3395 = vld [vmem:[%s5 + $0x120] sm:$0xff]
    %v3396 = vld [vmem:[%s5 + $0x128] sm:$0xff]
    %v3397 = vld [vmem:[%s5 + $0x130] sm:$0xff]
    %v3398 = vld [vmem:[%s5 + $0x138] sm:$0xff]
    %v3399 = vld [vmem:[%s5 + $0x140] sm:$0xff]
    %v3400 = vld [vmem:[%s5 + $0x148] sm:$0xff]
    %v3401 = vld [vmem:[%s5 + $0x150] sm:$0xff]
    %v3402 = vld [vmem:[%s5 + $0x158] sm:$0xff]
    %v3403 = vld [vmem:[%s5 + $0x160] sm:$0xff]
    %v3404 = vld [vmem:[%s5 + $0x168] sm:$0xff]
    %v3405 = vld [vmem:[%s5 + $0x170] sm:$0xff]
    %v3406 = vld [vmem:[%s5 + $0x178] sm:$0xff]
    %v3407 = vld [vmem:[%s5 + $0x180] sm:$0xff]
    %v3408 = vld [vmem:[%s5 + $0x188] sm:$0xff]
    %v3409 = vld [vmem:[%s5 + $0x190] sm:$0xff]
    %v3410 = vld [vmem:[%s5 + $0x198] sm:$0xff]
    %v3411 = vld [vmem:[%s5 + $0x1a0] sm:$0xff]
    %v3412 = vld [vmem:[%s5 + $0x1a8] sm:$0xff]
    %v3413 = vld [vmem:[%s5 + $0x1b0] sm:$0xff]
    %v3414 = vld [vmem:[%s5 + $0x1b8] sm:$0xff]
    %v3415 = vld [vmem:[%s5 + $0x1c0] sm:$0xff]
    %v3416 = vld [vmem:[%s5 + $0x1c8] sm:$0xff]
    %v3417 = vld [vmem:[%s5 + $0x1d0] sm:$0xff]
    %v3418 = vld [vmem:[%s5 + $0x1d8] sm:$0xff]
    %v3419 = vld [vmem:[%s5 + $0x1e0] sm:$0xff]
    %v3420 = vld [vmem:[%s5 + $0x1e8] sm:$0xff]
    %v3421 = vld [vmem:[%s5 + $0x1f0] sm:$0xff]
    %v3422 = vld [vmem:[%s5 + $0x1f8] sm:$0xff]
    %v3423 = vld [vmem:[%s5 + $0x200] sm:$0xff]
    %v3424 = vld [vmem:[%s5 + $0x208] sm:$0xff]
    %v3425 = vld [vmem:[%s5 + $0x210] sm:$0xff]
    %v3426 = vld [vmem:[%s5 + $0x218] sm:$0xff]
    %v3427 = vld [vmem:[%s5 + $0x220] sm:$0xff]
    %v3428 = vld [vmem:[%s5 + $0x228] sm:$0xff]
    %v3429 = vld [vmem:[%s5 + $0x230] sm:$0xff]
    %v3430 = vld [vmem:[%s5 + $0x238] sm:$0xff]
    %v3431 = vld [vmem:[%s5 + $0x240] sm:$0xff]
    %v3432 = vld [vmem:[%s5 + $0x248] sm:$0xff]
    %v3433 = vld [vmem:[%s5 + $0x250] sm:$0xff]
    %v3434 = vld [vmem:[%s5 + $0x258] sm:$0xff]
    %v3435 = vld [vmem:[%s5 + $0x260] sm:$0xff]
    %v3436 = vld [vmem:[%s5 + $0x268] sm:$0xff]
    %v3437 = vld [vmem:[%s5 + $0x270] sm:$0xff]
    %v3438 = vld [vmem:[%s5 + $0x278] sm:$0xff]
    %v3439 = vld [vmem:[%s5 + $0x280] sm:$0xff]
    %v3440 = vld [vmem:[%s5 + $0x288] sm:$0xff]
    %v3441 = vld [vmem:[%s5 + $0x290] sm:$0xff]
    %v3442 = vld [vmem:[%s5 + $0x298] sm:$0xff]
    %v3443 = vld [vmem:[%s5 + $0x2a0] sm:$0xff]
    %v3444 = vld [vmem:[%s5 + $0x2a8] sm:$0xff]
    %v3445 = vld [vmem:[%s5 + $0x2b0] sm:$0xff]
    %v3446 = vld [vmem:[%s5 + $0x2b8] sm:$0xff]
    %v3447 = vld [vmem:[%s5 + $0x2c0] sm:$0xff]
    %v3448 = vld [vmem:[%s5 + $0x2c8] sm:$0xff]
    %v3449 = vld [vmem:[%s5 + $0x2d0] sm:$0xff]
    %v3450 = vld [vmem:[%s5 + $0x2d8] sm:$0xff]
    %v3451 = vld [vmem:[%s5 + $0x2e0] sm:$0xff]
    %v3452 = vld [vmem:[%s5 + $0x2e8] sm:$0xff]
    %v3453 = vld [vmem:[%s5 + $0x2f0] sm:$0xff]
    %v3454 = vld [vmem:[%s5 + $0x2f8] sm:$0xff]
    %v3455 = vld [vmem:[%s5 + $0x300] sm:$0xff]
    %v3456 = vld [vmem:[%s5 + $0x308] sm:$0xff]
    %v3457 = vld [vmem:[%s5 + $0x310] sm:$0xff]
    %v3458 = vld [vmem:[%s5 + $0x318] sm:$0xff]
    %v3459 = vld [vmem:[%s5 + $0x320] sm:$0xff]
    %v3460 = vld [vmem:[%s5 + $0x328] sm:$0xff]
    %v3461 = vld [vmem:[%s5 + $0x330] sm:$0xff]
    %v3462 = vld [vmem:[%s5 + $0x338] sm:$0xff]
    %v3463 = vld [vmem:[%s5 + $0x340] sm:$0xff]
    %v3464 = vld [vmem:[%s5 + $0x348] sm:$0xff]
    %v3465 = vld [vmem:[%s5 + $0x350] sm:$0xff]
    %v3466 = vld [vmem:[%s5 + $0x358] sm:$0xff]
    %v3467 = vld [vmem:[%s5 + $0x360] sm:$0xff]
    %v3468 = vld [vmem:[%s5 + $0x368] sm:$0xff]
    %v3469 = vld [vmem:[%s5 + $0x370] sm:$0xff]
    %v3470 = vld [vmem:[%s5 + $0x378] sm:$0xff]
    %vm3471 = vcmask 523264
    %v3473 = vsel %vm3471, %v3279, 0
    %v3476 = vsel %vm3471, %v3285, 0
    %v3479 = vsel %vm3471, %v3291, 0
    %v3482 = vsel %vm3471, %v3297, 0
    %v3485 = vsel %vm3471, %v3303, 0
    %v3488 = vsel %vm3471, %v3309, 0
    %v3491 = vsel %vm3471, %v3315, 0
    %v3494 = vsel %vm3471, %v3321, 0
    %v3497 = vsel %vm3471, %v3327, 0
    %v3500 = vsel %vm3471, %v3333, 0
    %v3503 = vsel %vm3471, %v3339, 0
    %v3506 = vsel %vm3471, %v3345, 0
    %v3509 = vsel %vm3471, %v3351, 0
    %v3512 = vsel %vm3471, %v3357, 0
    %3514 = vmatprep.subr.mxu0 %v3360
    %3515 = vmatpush1.msra.mxu0 %v3359
    %3516 = vmatprep.subr.mxu0 %v3362
    %3517 = vmatpush1.msra.mxu0 %v3361
    %3518 = vmatprep.subr.mxu0 %v3364
    %3519 = vmatpush1.msra.mxu0 %v3363
    %3520 = vmatprep.subr.mxu0 %v3366
    %3521 = vmatpush1.msra.mxu0 %v3365
    %3522 = vmatprep.subr.mxu0 %v3368
    %3523 = vmatpush1.msra.mxu0 %v3367
    %3524 = vmatprep.subr.mxu0 %v3370
    %3525 = vmatpush1.msra.mxu0 %v3369
    %3526 = vmatprep.subr.mxu0 %v3372
    %3527 = vmatpush1.msra.mxu0 %v3371
    %3528 = vmatprep.subr.mxu0 %v3374
    %3529 = vmatpush1.msra.mxu0 %v3373
    %3530 = vmatprep.subr.mxu0 %v3376
    %3531 = vmatpush1.msra.mxu0 %v3375
    %3532 = vmatprep.subr.mxu0 %v3378
    %3533 = vmatpush1.msra.mxu0 %v3377
    %3534 = vmatprep.subr.mxu0 %v3380
    %3535 = vmatpush1.msra.mxu0 %v3379
    %3536 = vmatprep.subr.mxu0 %v3382
    %3537 = vmatpush1.msra.mxu0 %v3381
    %3538 = vmatprep.subr.mxu0 %v3384
    %3539 = vmatpush1.msra.mxu0 %v3383
    %3540 = vmatprep.subr.mxu0 %v3386
    %3541 = vmatpush1.msra.mxu0 %v3385
    %3542 = vmatprep.subr.mxu0 %v3388
    %3543 = vmatpush1.msra.mxu0 %v3387
    %3544 = vmatprep.subr.mxu0 %v3390
    %3545 = vmatpush1.msra.mxu0 %v3389
    %3546 = vmatprep.subr.mxu0 %v3392
    %3547 = vmatpush1.msra.mxu0 %v3391
    %3548 = vmatprep.subr.mxu0 %v3394
    %3549 = vmatpush1.msra.mxu0 %v3393
    %3550 = vmatprep.subr.mxu0 %v3396
    %3551 = vmatpush1.msra.mxu0 %v3395
    %3552 = vmatprep.subr.mxu0 %v3398
    %3553 = vmatpush1.msra.mxu0 %v3397
    %3554 = vmatprep.subr.mxu0 %v3400
    %3555 = vmatpush1.msra.mxu0 %v3399
    %3556 = vmatprep.subr.mxu0 %v3402
    %3557 = vmatpush1.msra.mxu0 %v3401
    %3558 = vmatprep.subr.mxu0 %v3404
    %3559 = vmatpush1.msra.mxu0 %v3403
    %3560 = vmatprep.subr.mxu0 %v3406
    %3561 = vmatpush1.msra.mxu0 %v3405
    %3562 = vmatprep.subr.mxu0 %v3408
    %3563 = vmatpush1.msra.mxu0 %v3407
    %3564 = vmatprep.subr.mxu0 %v3410
    %3565 = vmatpush1.msra.mxu0 %v3409
    %3566 = vmatprep.subr.mxu0 %v3412
    %3567 = vmatpush1.msra.mxu0 %v3411
    %3568 = vmatprep.subr.mxu0 %v3414
    %3569 = vmatpush1.msra.mxu0 %v3413
    %3570 = vmatprep.subr.mxu0 %v3416
    %3571 = vmatpush1.msra.mxu0 %v3415
    %3572 = vmatprep.subr.mxu0 %v3418
    %3573 = vmatpush1.msra.mxu0 %v3417
    %3574 = vmatprep.subr.mxu0 %v3420
    %3575 = vmatpush1.msra.mxu0 %v3419
    %3576 = vmatprep.subr.mxu0 %v3422
    %3577 = vmatpush1.msra.mxu0 %v3421
    %3578 = vmatprep.mubr.f32.mxu0 %v3130
    %3579 = vmatmul.mubr.f32.gmra.mrb[0].mxu0 %v3128
    %v3580 = vpop.f32.mrb[0].mxu0
    %v3581 = vadd.f32 0.0, %v3580
    %v3582 = vpop.f32.mrb[0].mxu0
    %v3583 = vadd.f32 0.0, %v3582
    %3584 = vmatprep.mubr.f32.mxu0 %v3136
    %3585 = vmatmul.mubr.f32.gmra.mrb[0].mxu0 %v3134
    %v3586 = vpop.f32.mrb[0].mxu0
    %v3587 = vadd.f32 0.0, %v3586
    %v3588 = vpop.f32.mrb[0].mxu0
    %v3589 = vadd.f32 0.0, %v3588
    %3590 = vmatprep.mubr.f32.mxu0 %v3142
    %3591 = vmatmul.mubr.f32.gmra.mrb[0].mxu0 %v3140
    %v3592 = vpop.f32.mrb[0].mxu0
    %v3593 = vadd.f32 0.0, %v3592
    %v3594 = vpop.f32.mrb[0].mxu0
    %v3595 = vadd.f32 0.0, %v3594
    %3596 = vmatprep.mubr.f32.mxu0 %v3148
    %3597 = vmatmul.mubr.f32.gmra.mrb[0].mxu0 %v3146
    %v3598 = vpop.f32.mrb[0].mxu0
    %v3599 = vadd.f32 0.0, %v3598
    %v3600 = vpop.f32.mrb[0].mxu0
    %v3601 = vadd.f32 0.0, %v3600
    %3602 = vmatprep.mubr.f32.mxu0 %v3154
    %3603 = vmatmul.mubr.f32.gmra.mrb[0].mxu0 %v3152
    %v3604 = vpop.f32.mrb[0].mxu0
    %v3605 = vadd.f32 0.0, %v3604
    %v3606 = vpop.f32.mrb[0].mxu0
    %v3607 = vadd.f32 0.0, %v3606
    %3608 = vmatprep.mubr.f32.mxu0 %v3160
    %3609 = vmatmul.mubr.f32.gmra.mrb[0].mxu0 %v3158
    %v3610 = vpop.f32.mrb[0].mxu0
    %v3611 = vadd.f32 0.0, %v3610
    %v3612 = vpop.f32.mrb[0].mxu0
    %v3613 = vadd.f32 0.0, %v3612
    %3614 = vmatprep.mubr.f32.mxu0 %v3166
    %3615 = vmatmul.mubr.f32.gmra.mrb[0].mxu0 %v3164
    %v3616 = vpop.f32.mrb[0].mxu0
    %v3617 = vadd.f32 0.0, %v3616
    %v3618 = vpop.f32.mrb[0].mxu0
    %v3619 = vadd.f32 0.0, %v3618
    %3620 = vmatprep.mubr.f32.mxu0 %v3172
    %3621 = vmatmul.mubr.f32.gmra.mrb[0].mxu0 %v3170
    %v3622 = vpop.f32.mrb[0].mxu0
    %v3623 = vadd.f32 0.0, %v3622
    %v3624 = vpop.f32.mrb[0].mxu0
    %v3625 = vadd.f32 0.0, %v3624
    %3626 = vmatprep.mubr.f32.mxu0 %v3178
    %3627 = vmatmul.mubr.f32.gmra.mrb[0].mxu0 %v3176
    %v3628 = vpop.f32.mrb[0].mxu0
    %v3629 = vadd.f32 0.0, %v3628
    %v3630 = vpop.f32.mrb[0].mxu0
    %v3631 = vadd.f32 0.0, %v3630
    %3632 = vmatprep.mubr.f32.mxu0 %v3184
    %3633 = vmatmul.mubr.f32.gmra.mrb[0].mxu0 %v3182
    %v3634 = vpop.f32.mrb[0].mxu0
    %v3635 = vadd.f32 0.0, %v3634
    %v3636 = vpop.f32.mrb[0].mxu0
    %v3637 = vadd.f32 0.0, %v3636
    %3638 = vmatprep.mubr.f32.mxu0 %v3190
    %3639 = vmatmul.mubr.f32.gmra.mrb[0].mxu0 %v3188
    %v3640 = vpop.f32.mrb[0].mxu0
    %v3641 = vadd.f32 0.0, %v3640
    %v3642 = vpop.f32.mrb[0].mxu0
    %v3643 = vadd.f32 0.0, %v3642
    %3644 = vmatprep.mubr.f32.mxu0 %v3196
    %3645 = vmatmul.mubr.f32.gmra.mrb[0].mxu0 %v3194
    %v3646 = vpop.f32.mrb[0].mxu0
    %v3647 = vadd.f32 0.0, %v3646
    %v3648 = vpop.f32.mrb[0].mxu0
    %v3649 = vadd.f32 0.0, %v3648
    %3650 = vmatprep.mubr.f32.mxu0 %v3202
    %3651 = vmatmul.mubr.f32.gmra.mrb[0].mxu0 %v3200
    %v3652 = vpop.f32.mrb[0].mxu0
    %v3653 = vadd.f32 0.0, %v3652
    %v3654 = vpop.f32.mrb[0].mxu0
    %v3655 = vadd.f32 0.0, %v3654
    %3656 = vmatprep.mubr.f32.mxu0 %v3208
    %3657 = vmatmul.mubr.f32.gmra.mrb[0].mxu0 %v3206
    %v3658 = vpop.f32.mrb[0].mxu0
    %v3659 = vadd.f32 0.0, %v3658
    %v3660 = vpop.f32.mrb[0].mxu0
    %v3661 = vadd.f32 0.0, %v3660
    %3662 = vdwg.mxu0
    %3663 = vmatprep.subr.mxu0 %v3424
    %3664 = vmatpush1.msra.mxu0 %v3423
    %3665 = vmatprep.subr.mxu0 %v3426
    %3666 = vmatpush1.msra.mxu0 %v3425
    %3667 = vmatprep.subr.mxu0 %v3428
    %3668 = vmatpush1.msra.mxu0 %v3427
    %3669 = vmatprep.subr.mxu0 %v3430
    %3670 = vmatpush1.msra.mxu0 %v3429
    %3671 = vmatprep.subr.mxu0 %v3432
    %3672 = vmatpush1.msra.mxu0 %v3431
    %3673 = vmatprep.subr.mxu0 %v3434
    %3674 = vmatpush1.msra.mxu0 %v3433
    %3675 = vmatprep.subr.mxu0 %v3436
    %3676 = vmatpush1.msra.mxu0 %v3435
    %3677 = vmatprep.subr.mxu0 %v3438
    %3678 = vmatpush1.msra.mxu0 %v3437
    %3679 = vmatprep.subr.mxu0 %v3440
    %3680 = vmatpush1.msra.mxu0 %v3439
    %3681 = vmatprep.subr.mxu0 %v3442
    %3682 = vmatpush1.msra.mxu0 %v3441
    %3683 = vmatprep.subr.mxu0 %v3444
    %3684 = vmatpush1.msra.mxu0 %v3443
    %3685 = vmatprep.subr.mxu0 %v3446
    %3686 = vmatpush1.msra.mxu0 %v3445
    %3687 = vmatprep.subr.mxu0 %v3448
    %3688 = vmatpush1.msra.mxu0 %v3447
    %3689 = vmatprep.subr.mxu0 %v3450
    %3690 = vmatpush1.msra.mxu0 %v3449
    %3691 = vmatprep.subr.mxu0 %v3452
    %3692 = vmatpush1.msra.mxu0 %v3451
    %3693 = vmatprep.subr.mxu0 %v3454
    %3694 = vmatpush1.msra.mxu0 %v3453
    %3695 = vmatprep.subr.mxu0 %v3456
    %3696 = vmatpush1.msra.mxu0 %v3455
    %3697 = vmatprep.subr.mxu0 %v3458
    %3698 = vmatpush1.msra.mxu0 %v3457
    %3699 = vmatprep.subr.mxu0 %v3460
    %3700 = vmatpush1.msra.mxu0 %v3459
    %3701 = vmatprep.subr.mxu0 %v3462
    %3702 = vmatpush1.msra.mxu0 %v3461
    %3703 = vmatprep.subr.mxu0 %v3464
    %3704 = vmatpush1.msra.mxu0 %v3463
    %3705 = vmatprep.subr.mxu0 %v3466
    %3706 = vmatpush1.msra.mxu0 %v3465
    %3707 = vmatprep.subr.mxu0 %v3468
    %3708 = vmatpush1.msra.mxu0 %v3467
    %3709 = vmatprep.subr.mxu0 %v3470
    %3710 = vmatpush1.msra.mxu0 %v3469
    %3711 = vmatprep.subr.mxu0 0.0
    %3712 = vmatpush1.msra.mxu0 0.0
    %3713 = vmatprep.subr.mxu0 0.0
    %3714 = vmatpush1.msra.mxu0 0.0
    %3715 = vmatprep.subr.mxu0 0.0
    %3716 = vmatpush1.msra.mxu0 0.0
    %3717 = vmatprep.subr.mxu0 0.0
    %3718 = vmatpush1.msra.mxu0 0.0
    %3719 = vmatprep.subr.mxu0 0.0
    %3720 = vmatpush1.msra.mxu0 0.0
    %3721 = vmatprep.subr.mxu0 0.0
    %3722 = vmatpush1.msra.mxu0 0.0
    %3723 = vmatprep.subr.mxu0 0.0
    %3724 = vmatpush1.msra.mxu0 0.0
    %3725 = vmatprep.subr.mxu0 0.0
    %3726 = vmatpush1.msra.mxu0 0.0
    %3727 = vmatprep.mubr.f32.mxu0 %v3473
    %3728 = vmatmul.mubr.f32.gmra.mrb[0].mxu0 %v3277
    %v3729 = vpop.f32.mrb[0].mxu0
    %v3730 = vadd.f32 %v3581, %v3729
    %v3731 = vpop.f32.mrb[0].mxu0
    %v3732 = vadd.f32 %v3583, %v3731
    %3733 = vmatprep.mubr.f32.mxu0 %v3476
    %3734 = vmatmul.mubr.f32.gmra.mrb[0].mxu0 %v3283
    %v3735 = vpop.f32.mrb[0].mxu0
    %v3736 = vadd.f32 %v3587, %v3735
    %v3737 = vpop.f32.mrb[0].mxu0
    %v3738 = vadd.f32 %v3589, %v3737
    %3739 = vmatprep.mubr.f32.mxu0 %v3479
    %3740 = vmatmul.mubr.f32.gmra.mrb[0].mxu0 %v3289
    %v3741 = vpop.f32.mrb[0].mxu0
    %v3742 = vadd.f32 %v3593, %v3741
    %v3743 = vpop.f32.mrb[0].mxu0
    %v3744 = vadd.f32 %v3595, %v3743
    %3745 = vmatprep.mubr.f32.mxu0 %v3482
    %3746 = vmatmul.mubr.f32.gmra.mrb[0].mxu0 %v3295
    %v3747 = vpop.f32.mrb[0].mxu0
    %v3748 = vadd.f32 %v3599, %v3747
    %v3749 = vpop.f32.mrb[0].mxu0
    %v3750 = vadd.f32 %v3601, %v3749
    %3751 = vmatprep.mubr.f32.mxu0 %v3485
    %3752 = vmatmul.mubr.f32.gmra.mrb[0].mxu0 %v3301
    %v3753 = vpop.f32.mrb[0].mxu0
    %v3754 = vadd.f32 %v3605, %v3753
    %v3755 = vpop.f32.mrb[0].mxu0
    %v3756 = vadd.f32 %v3607, %v3755
    %3757 = vmatprep.mubr.f32.mxu0 %v3488
    %3758 = vmatmul.mubr.f32.gmra.mrb[0].mxu0 %v3307
    %v3759 = vpop.f32.mrb[0].mxu0
    %v3760 = vadd.f32 %v3611, %v3759
    %v3761 = vpop.f32.mrb[0].mxu0
    %v3762 = vadd.f32 %v3613, %v3761
    %3763 = vmatprep.mubr.f32.mxu0 %v3491
    %3764 = vmatmul.mubr.f32.gmra.mrb[0].mxu0 %v3313
    %v3765 = vpop.f32.mrb[0].mxu0
    %v3766 = vadd.f32 %v3617, %v3765
    %v3767 = vpop.f32.mrb[0].mxu0
    %v3768 = vadd.f32 %v3619, %v3767
    %3769 = vmatprep.mubr.f32.mxu0 %v3494
    %3770 = vmatmul.mubr.f32.gmra.mrb[0].mxu0 %v3319
    %v3771 = vpop.f32.mrb[0].mxu0
    %v3772 = vadd.f32 %v3623, %v3771
    %v3773 = vpop.f32.mrb[0].mxu0
    %v3774 = vadd.f32 %v3625, %v3773
    %3775 = vmatprep.mubr.f32.mxu0 %v3497
    %3776 = vmatmul.mubr.f32.gmra.mrb[0].mxu0 %v3325
    %v3777 = vpop.f32.mrb[0].mxu0
    %v3778 = vadd.f32 %v3629, %v3777
    %v3779 = vpop.f32.mrb[0].mxu0
    %v3780 = vadd.f32 %v3631, %v3779
    %3781 = vmatprep.mubr.f32.mxu0 %v3500
    %3782 = vmatmul.mubr.f32.gmra.mrb[0].mxu0 %v3331
    %v3783 = vpop.f32.mrb[0].mxu0
    %v3784 = vadd.f32 %v3635, %v3783
    %v3785 = vpop.f32.mrb[0].mxu0
    %v3786 = vadd.f32 %v3637, %v3785
    %3787 = vmatprep.mubr.f32.mxu0 %v3503
    %3788 = vmatmul.mubr.f32.gmra.mrb[0].mxu0 %v3337
    %v3789 = vpop.f32.mrb[0].mxu0
    %v3790 = vadd.f32 %v3641, %v3789
    %v3791 = vpop.f32.mrb[0].mxu0
    %v3792 = vadd.f32 %v3643, %v3791
    %3793 = vmatprep.mubr.f32.mxu0 %v3506
    %3794 = vmatmul.mubr.f32.gmra.mrb[0].mxu0 %v3343
    %v3795 = vpop.f32.mrb[0].mxu0
    %v3796 = vadd.f32 %v3647, %v3795
    %v3797 = vpop.f32.mrb[0].mxu0
    %v3798 = vadd.f32 %v3649, %v3797
    %3799 = vmatprep.mubr.f32.mxu0 %v3509
    %3800 = vmatmul.mubr.f32.gmra.mrb[0].mxu0 %v3349
    %v3801 = vpop.f32.mrb[0].mxu0
    %v3802 = vadd.f32 %v3653, %v3801
    %v3803 = vpop.f32.mrb[0].mxu0
    %v3804 = vadd.f32 %v3655, %v3803
    %3805 = vmatprep.mubr.f32.mxu0 %v3512
    %3806 = vmatmul.mubr.f32.gmra.mrb[0].mxu0 %v3355
    %v3807 = vpop.f32.mrb[0].mxu0
    %v3808 = vadd.f32 %v3659, %v3807
    %v3809 = vpop.f32.mrb[0].mxu0
    %v3810 = vadd.f32 %v3661, %v3809
    %3811 = vdwg.mxu0
    %v3812 = vld [vmem:[#allocation7] sm:$0xff]
    %v3813 = vld [vmem:[#allocation7 + $0x8] sm:$0xff]
    %v3814 = vld [vmem:[#allocation7 + $0x10] sm:$0xff]
    %v3815 = vld [vmem:[#allocation7 + $0x18] sm:$0xff]
    %v3816 = vld [vmem:[#allocation7 + $0x20] sm:$0xff]
    %v3817 = vld [vmem:[#allocation7 + $0x28] sm:$0xff]
    %v3818 = vld [vmem:[#allocation7 + $0x30] sm:$0xff]
    %v3819 = vld [vmem:[#allocation7 + $0x38] sm:$0xff]
    %v3820 = vld [vmem:[#allocation7 + $0x40] sm:$0xff]
    %v3821 = vld [vmem:[#allocation7 + $0x48] sm:$0xff]
    %v3822 = vld [vmem:[#allocation7 + $0x50] sm:$0xff]
    %v3823 = vld [vmem:[#allocation7 + $0x58] sm:$0xff]
    %v3824 = vld [vmem:[#allocation7 + $0x60] sm:$0xff]
    %v3825 = vld [vmem:[#allocation7 + $0x68] sm:$0xff]
    %vm3826 = vcmask 916480
    %v3828 = vsel %vm3826, %v3812, 0
    %v3831 = vsel %vm3826, %v3813, 0
    %v3834 = vsel %vm3826, %v3814, 0
    %v3837 = vsel %vm3826, %v3815, 0
    %v3840 = vsel %vm3826, %v3816, 0
    %v3843 = vsel %vm3826, %v3817, 0
    %v3846 = vsel %vm3826, %v3818, 0
    %v3849 = vsel %vm3826, %v3819, 0
    %v3852 = vsel %vm3826, %v3820, 0
    %v3855 = vsel %vm3826, %v3821, 0
    %v3858 = vsel %vm3826, %v3822, 0
    %v3861 = vsel %vm3826, %v3823, 0
    %v3864 = vsel %vm3826, %v3824, 0
    %v3867 = vsel %vm3826, %v3825, 0
    %3869 = vmatprep.subr.mxu0 %v3732
    %3870 = vmatpush1.msra.mxu0 %v3730
    %3871 = vmatprep.subr.mxu0 %v3738
    %3872 = vmatpush1.msra.mxu0 %v3736
    %3873 = vmatprep.subr.mxu0 %v3744
    %3874 = vmatpush1.msra.mxu0 %v3742
    %3875 = vmatprep.subr.mxu0 %v3750
    %3876 = vmatpush1.msra.mxu0 %v3748
    %3877 = vmatprep.subr.mxu0 %v3756
    %3878 = vmatpush1.msra.mxu0 %v3754
    %3879 = vmatprep.subr.mxu0 %v3762
    %3880 = vmatpush1.msra.mxu0 %v3760
    %3881 = vmatprep.subr.mxu0 %v3768
    %3882 = vmatpush1.msra.mxu0 %v3766
    %3883 = vmatprep.subr.mxu0 %v3774
    %3884 = vmatpush1.msra.mxu0 %v3772
    %3885 = vmatprep.subr.mxu0 %v3780
    %3886 = vmatpush1.msra.mxu0 %v3778
    %3887 = vmatprep.subr.mxu0 %v3786
    %3888 = vmatpush1.msra.mxu0 %v3784
    %3889 = vmatprep.subr.mxu0 %v3792
    %3890 = vmatpush1.msra.mxu0 %v3790
    %3891 = vmatprep.subr.mxu0 %v3798
    %3892 = vmatpush1.msra.mxu0 %v3796
    %3893 = vmatprep.subr.mxu0 %v3804
    %3894 = vmatpush1.msra.mxu0 %v3802
    %3895 = vmatprep.subr.mxu0 %v3810
    %3896 = vmatpush1.msra.mxu0 %v3808
    %3897 = vmatprep.subr.mxu0 0.0
    %3898 = vmatpush1.msra.mxu0 0.0
    %3899 = vmatprep.subr.mxu0 0.0
    %3900 = vmatpush1.msra.mxu0 0.0
    %3901 = vmatprep.subr.mxu0 0.0
    %3902 = vmatpush1.msra.mxu0 0.0
    %3903 = vmatprep.subr.mxu0 0.0
    %3904 = vmatpush1.msra.mxu0 0.0
    %3905 = vmatprep.subr.mxu0 0.0
    %3906 = vmatpush1.msra.mxu0 0.0
    %3907 = vmatprep.subr.mxu0 0.0
    %3908 = vmatpush1.msra.mxu0 0.0
    %3909 = vmatprep.subr.mxu0 0.0
    %3910 = vmatpush1.msra.mxu0 0.0
    %3911 = vmatprep.subr.mxu0 0.0
    %3912 = vmatpush1.msra.mxu0 0.0
    %3913 = vmatprep.subr.mxu0 0.0
    %3914 = vmatpush1.msra.mxu0 0.0
    %3915 = vmatprep.subr.mxu0 0.0
    %3916 = vmatpush1.msra.mxu0 0.0
    %3917 = vmatprep.subr.mxu0 0.0
    %3918 = vmatpush1.msra.mxu0 0.0
    %3919 = vmatprep.subr.mxu0 0.0
    %3920 = vmatpush1.msra.mxu0 0.0
    %3921 = vmatprep.subr.mxu0 0.0
    %3922 = vmatpush1.msra.mxu0 0.0
    %3923 = vmatprep.subr.mxu0 0.0
    %3924 = vmatpush1.msra.mxu0 0.0
    %3925 = vmatprep.subr.mxu0 0.0
    %3926 = vmatpush1.msra.mxu0 0.0
    %3927 = vmatprep.subr.mxu0 0.0
    %3928 = vmatpush1.msra.mxu0 0.0
    %3929 = vmatprep.subr.mxu0 0.0
    %3930 = vmatpush1.msra.mxu0 0.0
    %3931 = vmatprep.subr.mxu0 0.0
    %3932 = vmatpush1.msra.mxu0 0.0
    %3933 = vmatprep.mubr.f32.mxu0 0.0
    %3934 = vmatmul.mubr.f32.gmra.mrb[0].mxu0 %v3828
    %v3935 = vpop.f32.mrb[0].mxu0
    %v3936 = vadd.f32 0.0, %v3935
    %v3937 = vpop.f32.mrb[0].mxu0
    %v3938 = vadd.f32 0.0, %v3937
    %3939 = vmatprep.mubr.f32.mxu0 0.0
    %3940 = vmatmul.mubr.f32.gmra.mrb[0].mxu0 %v3831
    %v3941 = vpop.f32.mrb[0].mxu0
    %v3942 = vadd.f32 0.0, %v3941
    %v3943 = vpop.f32.mrb[0].mxu0
    %v3944 = vadd.f32 0.0, %v3943
    %3945 = vmatprep.mubr.f32.mxu0 0.0
    %3946 = vmatmul.mubr.f32.gmra.mrb[0].mxu0 %v3834
    %v3947 = vpop.f32.mrb[0].mxu0
    %v3948 = vadd.f32 0.0, %v3947
    %v3949 = vpop.f32.mrb[0].mxu0
    %v3950 = vadd.f32 0.0, %v3949
    %3951 = vmatprep.mubr.f32.mxu0 0.0
    %3952 = vmatmul.mubr.f32.gmra.mrb[0].mxu0 %v3837
    %v3953 = vpop.f32.mrb[0].mxu0
    %v3954 = vadd.f32 0.0, %v3953
    %v3955 = vpop.f32.mrb[0].mxu0
    %v3956 = vadd.f32 0.0, %v3955
    %3957 = vmatprep.mubr.f32.mxu0 0.0
    %3958 = vmatmul.mubr.f32.gmra.mrb[0].mxu0 %v3840
    %v3959 = vpop.f32.mrb[0].mxu0
    %v3960 = vadd.f32 0.0, %v3959
    %v3961 = vpop.f32.mrb[0].mxu0
    %v3962 = vadd.f32 0.0, %v3961
    %3963 = vmatprep.mubr.f32.mxu0 0.0
    %3964 = vmatmul.mubr.f32.gmra.mrb[0].mxu0 %v3843
    %v3965 = vpop.f32.mrb[0].mxu0
    %v3966 = vadd.f32 0.0, %v3965
    %v3967 = vpop.f32.mrb[0].mxu0
    %v3968 = vadd.f32 0.0, %v3967
    %3969 = vmatprep.mubr.f32.mxu0 0.0
    %3970 = vmatmul.mubr.f32.gmra.mrb[0].mxu0 %v3846
    %v3971 = vpop.f32.mrb[0].mxu0
    %v3972 = vadd.f32 0.0, %v3971
    %v3973 = vpop.f32.mrb[0].mxu0
    %v3974 = vadd.f32 0.0, %v3973
    %3975 = vmatprep.mubr.f32.mxu0 0.0
    %3976 = vmatmul.mubr.f32.gmra.mrb[0].mxu0 %v3849
    %v3977 = vpop.f32.mrb[0].mxu0
    %v3978 = vadd.f32 0.0, %v3977
    %v3979 = vpop.f32.mrb[0].mxu0
    %v3980 = vadd.f32 0.0, %v3979
    %3981 = vmatprep.mubr.f32.mxu0 0.0
    %3982 = vmatmul.mubr.f32.gmra.mrb[0].mxu0 %v3852
    %v3983 = vpop.f32.mrb[0].mxu0
    %v3984 = vadd.f32 0.0, %v3983
    %v3985 = vpop.f32.mrb[0].mxu0
    %v3986 = vadd.f32 0.0, %v3985
    %3987 = vmatprep.mubr.f32.mxu0 0.0
    %3988 = vmatmul.mubr.f32.gmra.mrb[0].mxu0 %v3855
    %v3989 = vpop.f32.mrb[0].mxu0
    %v3990 = vadd.f32 0.0, %v3989
    %v3991 = vpop.f32.mrb[0].mxu0
    %v3992 = vadd.f32 0.0, %v3991
    %3993 = vmatprep.mubr.f32.mxu0 0.0
    %3994 = vmatmul.mubr.f32.gmra.mrb[0].mxu0 %v3858
    %v3995 = vpop.f32.mrb[0].mxu0
    %v3996 = vadd.f32 0.0, %v3995
    %v3997 = vpop.f32.mrb[0].mxu0
    %v3998 = vadd.f32 0.0, %v3997
    %3999 = vmatprep.mubr.f32.mxu0 0.0
    %4000 = vmatmul.mubr.f32.gmra.mrb[0].mxu0 %v3861
    %v4001 = vpop.f32.mrb[0].mxu0
    %v4002 = vadd.f32 0.0, %v4001
    %v4003 = vpop.f32.mrb[0].mxu0
    %v4004 = vadd.f32 0.0, %v4003
    %4005 = vmatprep.mubr.f32.mxu0 0.0
    %4006 = vmatmul.mubr.f32.gmra.mrb[0].mxu0 %v3864
    %v4007 = vpop.f32.mrb[0].mxu0
    %v4008 = vadd.f32 0.0, %v4007
    %v4009 = vpop.f32.mrb[0].mxu0
    %v4010 = vadd.f32 0.0, %v4009
    %4011 = vmatprep.mubr.f32.mxu0 0.0
    %4012 = vmatmul.mubr.f32.gmra.mrb[0].mxu0 %v3867
    %v4013 = vpop.f32.mrb[0].mxu0
    %v4014 = vadd.f32 0.0, %v4013
    %v4015 = vpop.f32.mrb[0].mxu0
    %v4016 = vadd.f32 0.0, %v4015
    %4017 = vdwg.mxu0
    %v4018 = vpack.c.bf16 %v3942, %v3936
    %v4019 = vpack.c.bf16 %v3944, %v3938
    %v4020 = vpack.c.bf16 %v3954, %v3948
    %v4021 = vpack.c.bf16 %v3956, %v3950
    %v4022 = vpack.c.bf16 %v3966, %v3960
    %v4023 = vpack.c.bf16 %v3968, %v3962
    %v4024 = vpack.c.bf16 %v3978, %v3972
    %v4025 = vpack.c.bf16 %v3980, %v3974
    %v4026 = vpack.c.bf16 %v3990, %v3984
    %v4027 = vpack.c.bf16 %v3992, %v3986
    %v4028 = vpack.c.bf16 %v4002, %v3996
    %v4029 = vpack.c.bf16 %v4004, %v3998
    %v4030 = vpack.c.bf16 %v4014, %v4008
    %v4031 = vpack.c.bf16 %v4016, %v4010
    %v4032 = vld [vmem:[#allocation9] sm:$0xff]
    %v4033 = vld [vmem:[#allocation9 + $0x8] sm:$0xff]
    %v4034 = vld [vmem:[#allocation9 + $0x10] sm:$0xff]
    %v4035 = vld [vmem:[#allocation9 + $0x18] sm:$0xff]
    %v4036 = vld [vmem:[#allocation9 + $0x20] sm:$0xff]
    %v4037 = vld [vmem:[#allocation9 + $0x28] sm:$0xff]
    %v4038 = vld [vmem:[#allocation9 + $0x30] sm:$0xff]
    %v4039 = vld [vmem:[#allocation9 + $0x38] sm:$0xff]
    %v4040 = vld [vmem:[#allocation9 + $0x40] sm:$0xff]
    %v4041 = vld [vmem:[#allocation9 + $0x48] sm:$0xff]
    %v4042 = vld [vmem:[#allocation9 + $0x50] sm:$0xff]
    %v4043 = vld [vmem:[#allocation9 + $0x58] sm:$0xff]
    %v4044 = vld [vmem:[#allocation9 + $0x60] sm:$0xff]
    %v4045 = vld [vmem:[#allocation9 + $0x68] sm:$0xff]
    %v4046 = vld [vmem:[#allocation9 + $0x70] sm:$0xff]
    %v4047 = vld [vmem:[#allocation9 + $0x78] sm:$0xff]
    %v4048 = vld [vmem:[#allocation9 + $0x80] sm:$0xff]
    %v4049 = vld [vmem:[#allocation9 + $0x88] sm:$0xff]
    %v4050 = vld [vmem:[#allocation9 + $0x90] sm:$0xff]
    %v4051 = vld [vmem:[#allocation9 + $0x98] sm:$0xff]
    %v4052 = vld [vmem:[#allocation9 + $0xa0] sm:$0xff]
    %v4053 = vld [vmem:[#allocation9 + $0xa8] sm:$0xff]
    %v4054 = vld [vmem:[#allocation9 + $0xb0] sm:$0xff]
    %v4055 = vld [vmem:[#allocation9 + $0xb8] sm:$0xff]
    %v4056 = vld [vmem:[#allocation9 + $0xc0] sm:$0xff]
    %v4057 = vld [vmem:[#allocation9 + $0xc8] sm:$0xff]
    %v4058 = vld [vmem:[#allocation9 + $0xd0] sm:$0xff]
    %v4059 = vld [vmem:[#allocation9 + $0xd8] sm:$0xff]
    %v4060 = vld [vmem:[#allocation9 + $0xe0] sm:$0xff]
    %v4061 = vld [vmem:[#allocation9 + $0xe8] sm:$0xff]
    %v4062 = vld [vmem:[#allocation9 + $0xf0] sm:$0xff]
    %v4063 = vld [vmem:[#allocation9 + $0xf8] sm:$0xff]
    %v4064 = vld [vmem:[#allocation9 + $0x100] sm:$0xff]
    %v4065 = vld [vmem:[#allocation9 + $0x108] sm:$0xff]
    %v4066 = vld [vmem:[#allocation9 + $0x110] sm:$0xff]
    %v4067 = vld [vmem:[#allocation9 + $0x118] sm:$0xff]
    %v4068 = vld [vmem:[#allocation9 + $0x120] sm:$0xff]
    %v4069 = vld [vmem:[#allocation9 + $0x128] sm:$0xff]
    %v4070 = vld [vmem:[#allocation9 + $0x130] sm:$0xff]
    %v4071 = vld [vmem:[#allocation9 + $0x138] sm:$0xff]
    %v4072 = vld [vmem:[#allocation9 + $0x140] sm:$0xff]
    %v4073 = vld [vmem:[#allocation9 + $0x148] sm:$0xff]
    %v4074 = vld [vmem:[#allocation9 + $0x150] sm:$0xff]
    %v4075 = vld [vmem:[#allocation9 + $0x158] sm:$0xff]
    %v4076 = vld [vmem:[#allocation9 + $0x160] sm:$0xff]
    %v4077 = vld [vmem:[#allocation9 + $0x168] sm:$0xff]
    %v4078 = vld [vmem:[#allocation9 + $0x170] sm:$0xff]
    %v4079 = vld [vmem:[#allocation9 + $0x178] sm:$0xff]
    %v4080 = vld [vmem:[#allocation9 + $0x180] sm:$0xff]
    %v4081 = vld [vmem:[#allocation9 + $0x188] sm:$0xff]
    %v4082 = vld [vmem:[#allocation9 + $0x190] sm:$0xff]
    %v4083 = vld [vmem:[#allocation9 + $0x198] sm:$0xff]
    %v4084 = vld [vmem:[#allocation9 + $0x1a0] sm:$0xff]
    %v4085 = vld [vmem:[#allocation9 + $0x1a8] sm:$0xff]
    %v4086 = vld [vmem:[#allocation9 + $0x1b0] sm:$0xff]
    %v4087 = vld [vmem:[#allocation9 + $0x1b8] sm:$0xff]
    %s4088 = scalar_lea.vmem [#allocation7], 112
    %v4089 = vld [vmem:[%s4088] sm:$0xff]
    %v4090 = vld [vmem:[%s4088 + $0x8] sm:$0xff]
    %v4091 = vld [vmem:[%s4088 + $0x10] sm:$0xff]
    %v4092 = vld [vmem:[%s4088 + $0x18] sm:$0xff]
    %v4093 = vld [vmem:[%s4088 + $0x20] sm:$0xff]
    %v4094 = vld [vmem:[%s4088 + $0x28] sm:$0xff]
    %v4095 = vld [vmem:[%s4088 + $0x30] sm:$0xff]
    %v4096 = vld [vmem:[%s4088 + $0x38] sm:$0xff]
    %v4097 = vld [vmem:[%s4088 + $0x40] sm:$0xff]
    %v4098 = vld [vmem:[%s4088 + $0x48] sm:$0xff]
    %v4099 = vld [vmem:[%s4088 + $0x50] sm:$0xff]
    %v4100 = vld [vmem:[%s4088 + $0x58] sm:$0xff]
    %v4101 = vld [vmem:[%s4088 + $0x60] sm:$0xff]
    %v4102 = vld [vmem:[%s4088 + $0x68] sm:$0xff]
    %v4104 = vsel %vm3826, %v4089, 0
    %v4107 = vsel %vm3826, %v4090, 0
    %v4110 = vsel %vm3826, %v4091, 0
    %v4113 = vsel %vm3826, %v4092, 0
    %v4116 = vsel %vm3826, %v4093, 0
    %v4119 = vsel %vm3826, %v4094, 0
    %v4122 = vsel %vm3826, %v4095, 0
    %v4125 = vsel %vm3826, %v4096, 0
    %v4128 = vsel %vm3826, %v4097, 0
    %v4131 = vsel %vm3826, %v4098, 0
    %v4134 = vsel %vm3826, %v4099, 0
    %v4137 = vsel %vm3826, %v4100, 0
    %v4140 = vsel %vm3826, %v4101, 0
    %v4143 = vsel %vm3826, %v4102, 0
    %4145 = vmatprep.subr.mxu0 %v3732
    %4146 = vmatpush1.msra.mxu0 %v3730
    %4147 = vmatprep.subr.mxu0 %v3738
    %4148 = vmatpush1.msra.mxu0 %v3736
    %4149 = vmatprep.subr.mxu0 %v3744
    %4150 = vmatpush1.msra.mxu0 %v3742
    %4151 = vmatprep.subr.mxu0 %v3750
    %4152 = vmatpush1.msra.mxu0 %v3748
    %4153 = vmatprep.subr.mxu0 %v3756
    %4154 = vmatpush1.msra.mxu0 %v3754
    %4155 = vmatprep.subr.mxu0 %v3762
    %4156 = vmatpush1.msra.mxu0 %v3760
    %4157 = vmatprep.subr.mxu0 %v3768
    %4158 = vmatpush1.msra.mxu0 %v3766
    %4159 = vmatprep.subr.mxu0 %v3774
    %4160 = vmatpush1.msra.mxu0 %v3772
    %4161 = vmatprep.subr.mxu0 %v3780
    %4162 = vmatpush1.msra.mxu0 %v3778
    %4163 = vmatprep.subr.mxu0 %v3786
    %4164 = vmatpush1.msra.mxu0 %v3784
    %4165 = vmatprep.subr.mxu0 %v3792
    %4166 = vmatpush1.msra.mxu0 %v3790
    %4167 = vmatprep.subr.mxu0 %v3798
    %4168 = vmatpush1.msra.mxu0 %v3796
    %4169 = vmatprep.subr.mxu0 %v3804
    %4170 = vmatpush1.msra.mxu0 %v3802
    %4171 = vmatprep.subr.mxu0 %v3810
    %4172 = vmatpush1.msra.mxu0 %v3808
    %4173 = vmatprep.subr.mxu0 0.0
    %4174 = vmatpush1.msra.mxu0 0.0
    %4175 = vmatprep.subr.mxu0 0.0
    %4176 = vmatpush1.msra.mxu0 0.0
    %4177 = vmatprep.subr.mxu0 0.0
    %4178 = vmatpush1.msra.mxu0 0.0
    %4179 = vmatprep.subr.mxu0 0.0
    %4180 = vmatpush1.msra.mxu0 0.0
    %4181 = vmatprep.subr.mxu0 0.0
    %4182 = vmatpush1.msra.mxu0 0.0
    %4183 = vmatprep.subr.mxu0 0.0
    %4184 = vmatpush1.msra.mxu0 0.0
    %4185 = vmatprep.subr.mxu0 0.0
    %4186 = vmatpush1.msra.mxu0 0.0
    %4187 = vmatprep.subr.mxu0 0.0
    %4188 = vmatpush1.msra.mxu0 0.0
    %4189 = vmatprep.subr.mxu0 0.0
    %4190 = vmatpush1.msra.mxu0 0.0
    %4191 = vmatprep.subr.mxu0 0.0
    %4192 = vmatpush1.msra.mxu0 0.0
    %4193 = vmatprep.subr.mxu0 0.0
    %4194 = vmatpush1.msra.mxu0 0.0
    %4195 = vmatprep.subr.mxu0 0.0
    %4196 = vmatpush1.msra.mxu0 0.0
    %4197 = vmatprep.subr.mxu0 0.0
    %4198 = vmatpush1.msra.mxu0 0.0
    %4199 = vmatprep.subr.mxu0 0.0
    %4200 = vmatpush1.msra.mxu0 0.0
    %4201 = vmatprep.subr.mxu0 0.0
    %4202 = vmatpush1.msra.mxu0 0.0
    %4203 = vmatprep.subr.mxu0 0.0
    %4204 = vmatpush1.msra.mxu0 0.0
    %4205 = vmatprep.subr.mxu0 0.0
    %4206 = vmatpush1.msra.mxu0 0.0
    %4207 = vmatprep.subr.mxu0 0.0
    %4208 = vmatpush1.msra.mxu0 0.0
    %4209 = vmatprep.mubr.f32.mxu0 0.0
    %4210 = vmatmul.mubr.f32.gmra.mrb[0].mxu0 %v4104
    %v4211 = vpop.f32.mrb[0].mxu0
    %v4212 = vadd.f32 0.0, %v4211
    %v4213 = vpop.f32.mrb[0].mxu0
    %v4214 = vadd.f32 0.0, %v4213
    %4215 = vmatprep.mubr.f32.mxu0 0.0
    %4216 = vmatmul.mubr.f32.gmra.mrb[0].mxu0 %v4107
    %v4217 = vpop.f32.mrb[0].mxu0
    %v4218 = vadd.f32 0.0, %v4217
    %v4219 = vpop.f32.mrb[0].mxu0
    %v4220 = vadd.f32 0.0, %v4219
    %4221 = vmatprep.mubr.f32.mxu0 0.0
    %4222 = vmatmul.mubr.f32.gmra.mrb[0].mxu0 %v4110
    %v4223 = vpop.f32.mrb[0].mxu0
    %v4224 = vadd.f32 0.0, %v4223
    %v4225 = vpop.f32.mrb[0].mxu0
    %v4226 = vadd.f32 0.0, %v4225
    %4227 = vmatprep.mubr.f32.mxu0 0.0
    %4228 = vmatmul.mubr.f32.gmra.mrb[0].mxu0 %v4113
    %v4229 = vpop.f32.mrb[0].mxu0
    %v4230 = vadd.f32 0.0, %v4229
    %v4231 = vpop.f32.mrb[0].mxu0
    %v4232 = vadd.f32 0.0, %v4231
    %4233 = vmatprep.mubr.f32.mxu0 0.0
    %4234 = vmatmul.mubr.f32.gmra.mrb[0].mxu0 %v4116
    %v4235 = vpop.f32.mrb[0].mxu0
    %v4236 = vadd.f32 0.0, %v4235
    %v4237 = vpop.f32.mrb[0].mxu0
    %v4238 = vadd.f32 0.0, %v4237
    %4239 = vmatprep.mubr.f32.mxu0 0.0
    %4240 = vmatmul.mubr.f32.gmra.mrb[0].mxu0 %v4119
    %v4241 = vpop.f32.mrb[0].mxu0
    %v4242 = vadd.f32 0.0, %v4241
    %v4243 = vpop.f32.mrb[0].mxu0
    %v4244 = vadd.f32 0.0, %v4243
    %4245 = vmatprep.mubr.f32.mxu0 0.0
    %4246 = vmatmul.mubr.f32.gmra.mrb[0].mxu0 %v4122
    %v4247 = vpop.f32.mrb[0].mxu0
    %v4248 = vadd.f32 0.0, %v4247
    %v4249 = vpop.f32.mrb[0].mxu0
    %v4250 = vadd.f32 0.0, %v4249
    %4251 = vmatprep.mubr.f32.mxu0 0.0
    %4252 = vmatmul.mubr.f32.gmra.mrb[0].mxu0 %v4125
    %v4253 = vpop.f32.mrb[0].mxu0
    %v4254 = vadd.f32 0.0, %v4253
    %v4255 = vpop.f32.mrb[0].mxu0
    %v4256 = vadd.f32 0.0, %v4255
    %4257 = vmatprep.mubr.f32.mxu0 0.0
    %4258 = vmatmul.mubr.f32.gmra.mrb[0].mxu0 %v4128
    %v4259 = vpop.f32.mrb[0].mxu0
    %v4260 = vadd.f32 0.0, %v4259
    %v4261 = vpop.f32.mrb[0].mxu0
    %v4262 = vadd.f32 0.0, %v4261
    %4263 = vmatprep.mubr.f32.mxu0 0.0
    %4264 = vmatmul.mubr.f32.gmra.mrb[0].mxu0 %v4131
    %v4265 = vpop.f32.mrb[0].mxu0
    %v4266 = vadd.f32 0.0, %v4265
    %v4267 = vpop.f32.mrb[0].mxu0
    %v4268 = vadd.f32 0.0, %v4267
    %4269 = vmatprep.mubr.f32.mxu0 0.0
    %4270 = vmatmul.mubr.f32.gmra.mrb[0].mxu0 %v4134
    %v4271 = vpop.f32.mrb[0].mxu0
    %v4272 = vadd.f32 0.0, %v4271
    %v4273 = vpop.f32.mrb[0].mxu0
    %v4274 = vadd.f32 0.0, %v4273
    %4275 = vmatprep.mubr.f32.mxu0 0.0
    %4276 = vmatmul.mubr.f32.gmra.mrb[0].mxu0 %v4137
    %v4277 = vpop.f32.mrb[0].mxu0
    %v4278 = vadd.f32 0.0, %v4277
    %v4279 = vpop.f32.mrb[0].mxu0
    %v4280 = vadd.f32 0.0, %v4279
    %4281 = vmatprep.mubr.f32.mxu0 0.0
    %4282 = vmatmul.mubr.f32.gmra.mrb[0].mxu0 %v4140
    %v4283 = vpop.f32.mrb[0].mxu0
    %v4284 = vadd.f32 0.0, %v4283
    %v4285 = vpop.f32.mrb[0].mxu0
    %v4286 = vadd.f32 0.0, %v4285
    %4287 = vmatprep.mubr.f32.mxu0 0.0
    %4288 = vmatmul.mubr.f32.gmra.mrb[0].mxu0 %v4143
    %v4289 = vpop.f32.mrb[0].mxu0
    %v4290 = vadd.f32 0.0, %v4289
    %v4291 = vpop.f32.mrb[0].mxu0
    %v4292 = vadd.f32 0.0, %v4291
    %4293 = vdwg.mxu0
    %v4294 = vpack.c.bf16 %v4218, %v4212
    %v4295 = vpack.c.bf16 %v4220, %v4214
    %v4296 = vpack.c.bf16 %v4230, %v4224
    %v4297 = vpack.c.bf16 %v4232, %v4226
    %v4298 = vpack.c.bf16 %v4242, %v4236
    %v4299 = vpack.c.bf16 %v4244, %v4238
    %v4300 = vpack.c.bf16 %v4254, %v4248
    %v4301 = vpack.c.bf16 %v4256, %v4250
    %v4302 = vpack.c.bf16 %v4266, %v4260
    %v4303 = vpack.c.bf16 %v4268, %v4262
    %v4304 = vpack.c.bf16 %v4278, %v4272
    %v4305 = vpack.c.bf16 %v4280, %v4274
    %v4306 = vpack.c.bf16 %v4290, %v4284
    %v4307 = vpack.c.bf16 %v4292, %v4286
    %s4308 = scalar_lea.vmem [#allocation9], 448
    %v4309 = vld [vmem:[%s4308] sm:$0xff]
    %v4310 = vld [vmem:[%s4308 + $0x8] sm:$0xff]
    %v4311 = vld [vmem:[%s4308 + $0x10] sm:$0xff]
    %v4312 = vld [vmem:[%s4308 + $0x18] sm:$0xff]
    %v4313 = vld [vmem:[%s4308 + $0x20] sm:$0xff]
    %v4314 = vld [vmem:[%s4308 + $0x28] sm:$0xff]
    %v4315 = vld [vmem:[%s4308 + $0x30] sm:$0xff]
    %v4316 = vld [vmem:[%s4308 + $0x38] sm:$0xff]
    %v4317 = vld [vmem:[%s4308 + $0x40] sm:$0xff]
    %v4318 = vld [vmem:[%s4308 + $0x48] sm:$0xff]
    %v4319 = vld [vmem:[%s4308 + $0x50] sm:$0xff]
    %v4320 = vld [vmem:[%s4308 + $0x58] sm:$0xff]
    %v4321 = vld [vmem:[%s4308 + $0x60] sm:$0xff]
    %v4322 = vld [vmem:[%s4308 + $0x68] sm:$0xff]
    %v4323 = vld [vmem:[%s4308 + $0x70] sm:$0xff]
    %v4324 = vld [vmem:[%s4308 + $0x78] sm:$0xff]
    %v4325 = vld [vmem:[%s4308 + $0x80] sm:$0xff]
    %v4326 = vld [vmem:[%s4308 + $0x88] sm:$0xff]
    %v4327 = vld [vmem:[%s4308 + $0x90] sm:$0xff]
    %v4328 = vld [vmem:[%s4308 + $0x98] sm:$0xff]
    %v4329 = vld [vmem:[%s4308 + $0xa0] sm:$0xff]
    %v4330 = vld [vmem:[%s4308 + $0xa8] sm:$0xff]
    %v4331 = vld [vmem:[%s4308 + $0xb0] sm:$0xff]
    %v4332 = vld [vmem:[%s4308 + $0xb8] sm:$0xff]
    %v4333 = vld [vmem:[%s4308 + $0xc0] sm:$0xff]
    %v4334 = vld [vmem:[%s4308 + $0xc8] sm:$0xff]
    %v4335 = vld [vmem:[%s4308 + $0xd0] sm:$0xff]
    %v4336 = vld [vmem:[%s4308 + $0xd8] sm:$0xff]
    %v4337 = vld [vmem:[%s4308 + $0xe0] sm:$0xff]
    %v4338 = vld [vmem:[%s4308 + $0xe8] sm:$0xff]
    %v4339 = vld [vmem:[%s4308 + $0xf0] sm:$0xff]
    %v4340 = vld [vmem:[%s4308 + $0xf8] sm:$0xff]
    %v4341 = vld [vmem:[%s4308 + $0x100] sm:$0xff]
    %v4342 = vld [vmem:[%s4308 + $0x108] sm:$0xff]
    %v4343 = vld [vmem:[%s4308 + $0x110] sm:$0xff]
    %v4344 = vld [vmem:[%s4308 + $0x118] sm:$0xff]
    %v4345 = vld [vmem:[%s4308 + $0x120] sm:$0xff]
    %v4346 = vld [vmem:[%s4308 + $0x128] sm:$0xff]
    %v4347 = vld [vmem:[%s4308 + $0x130] sm:$0xff]
    %v4348 = vld [vmem:[%s4308 + $0x138] sm:$0xff]
    %v4349 = vld [vmem:[%s4308 + $0x140] sm:$0xff]
    %v4350 = vld [vmem:[%s4308 + $0x148] sm:$0xff]
    %v4351 = vld [vmem:[%s4308 + $0x150] sm:$0xff]
    %v4352 = vld [vmem:[%s4308 + $0x158] sm:$0xff]
    %v4353 = vld [vmem:[%s4308 + $0x160] sm:$0xff]
    %v4354 = vld [vmem:[%s4308 + $0x168] sm:$0xff]
    %v4355 = vld [vmem:[%s4308 + $0x170] sm:$0xff]
    %v4356 = vld [vmem:[%s4308 + $0x178] sm:$0xff]
    %v4357 = vld [vmem:[%s4308 + $0x180] sm:$0xff]
    %v4358 = vld [vmem:[%s4308 + $0x188] sm:$0xff]
    %v4359 = vld [vmem:[%s4308 + $0x190] sm:$0xff]
    %v4360 = vld [vmem:[%s4308 + $0x198] sm:$0xff]
    %v4361 = vld [vmem:[%s4308 + $0x1a0] sm:$0xff]
    %v4362 = vld [vmem:[%s4308 + $0x1a8] sm:$0xff]
    %v4363 = vld [vmem:[%s4308 + $0x1b0] sm:$0xff]
    %v4364 = vld [vmem:[%s4308 + $0x1b8] sm:$0xff]
    %v4421 = vunpack.c.l.b16 %v4309
    %v4422 = vunpack.c.h.b16 %v4309
    %v4423 = vunpack.c.l.b16 %v4310
    %v4424 = vunpack.c.h.b16 %v4310
    %v4425 = vunpack.c.l.b16 %v4311
    %v4426 = vunpack.c.h.b16 %v4311
    %v4427 = vunpack.c.l.b16 %v4312
    %v4428 = vunpack.c.h.b16 %v4312
    %v4429 = vunpack.c.l.b16 %v4313
    %v4430 = vunpack.c.h.b16 %v4313
    %v4431 = vunpack.c.l.b16 %v4314
    %v4432 = vunpack.c.h.b16 %v4314
    %v4433 = vunpack.c.l.b16 %v4315
    %v4434 = vunpack.c.h.b16 %v4315
    %v4435 = vunpack.c.l.b16 %v4316
    %v4436 = vunpack.c.h.b16 %v4316
    %v4437 = vunpack.c.l.b16 %v4317
    %v4438 = vunpack.c.h.b16 %v4317
    %v4439 = vunpack.c.l.b16 %v4318
    %v4440 = vunpack.c.h.b16 %v4318
    %v4441 = vunpack.c.l.b16 %v4319
    %v4442 = vunpack.c.h.b16 %v4319
    %v4443 = vunpack.c.l.b16 %v4320
    %v4444 = vunpack.c.h.b16 %v4320
    %v4445 = vunpack.c.l.b16 %v4321
    %v4446 = vunpack.c.h.b16 %v4321
    %v4447 = vunpack.c.l.b16 %v4322
    %v4448 = vunpack.c.h.b16 %v4322
    %v4449 = vunpack.c.l.b16 %v4323
    %v4450 = vunpack.c.h.b16 %v4323
    %v4451 = vunpack.c.l.b16 %v4324
    %v4452 = vunpack.c.h.b16 %v4324
    %v4453 = vunpack.c.l.b16 %v4325
    %v4454 = vunpack.c.h.b16 %v4325
    %v4455 = vunpack.c.l.b16 %v4326
    %v4456 = vunpack.c.h.b16 %v4326
    %v4457 = vunpack.c.l.b16 %v4327
    %v4458 = vunpack.c.h.b16 %v4327
    %v4459 = vunpack.c.l.b16 %v4328
    %v4460 = vunpack.c.h.b16 %v4328
    %v4461 = vunpack.c.l.b16 %v4329
    %v4462 = vunpack.c.h.b16 %v4329
    %v4463 = vunpack.c.l.b16 %v4330
    %v4464 = vunpack.c.h.b16 %v4330
    %v4465 = vunpack.c.l.b16 %v4331
    %v4466 = vunpack.c.h.b16 %v4331
    %v4467 = vunpack.c.l.b16 %v4332
    %v4468 = vunpack.c.h.b16 %v4332
    %v4469 = vunpack.c.l.b16 %v4333
    %v4470 = vunpack.c.h.b16 %v4333
    %v4471 = vunpack.c.l.b16 %v4334
    %v4472 = vunpack.c.h.b16 %v4334
    %v4473 = vunpack.c.l.b16 %v4335
    %v4474 = vunpack.c.h.b16 %v4335
    %v4475 = vunpack.c.l.b16 %v4336
    %v4476 = vunpack.c.h.b16 %v4336
    %v4477 = vunpack.c.l.b16 %v4337
    %v4478 = vunpack.c.h.b16 %v4337
    %v4479 = vunpack.c.l.b16 %v4338
    %v4480 = vunpack.c.h.b16 %v4338
    %v4481 = vunpack.c.l.b16 %v4339
    %v4482 = vunpack.c.h.b16 %v4339
    %v4483 = vunpack.c.l.b16 %v4340
    %v4484 = vunpack.c.h.b16 %v4340
    %v4485 = vunpack.c.l.b16 %v4341
    %v4486 = vunpack.c.h.b16 %v4341
    %v4487 = vunpack.c.l.b16 %v4342
    %v4488 = vunpack.c.h.b16 %v4342
    %v4489 = vunpack.c.l.b16 %v4343
    %v4490 = vunpack.c.h.b16 %v4343
    %v4491 = vunpack.c.l.b16 %v4344
    %v4492 = vunpack.c.h.b16 %v4344
    %v4493 = vunpack.c.l.b16 %v4345
    %v4494 = vunpack.c.h.b16 %v4345
    %v4495 = vunpack.c.l.b16 %v4346
    %v4496 = vunpack.c.h.b16 %v4346
    %v4497 = vunpack.c.l.b16 %v4347
    %v4498 = vunpack.c.h.b16 %v4347
    %v4499 = vunpack.c.l.b16 %v4348
    %v4500 = vunpack.c.h.b16 %v4348
    %v4501 = vunpack.c.l.b16 %v4349
    %v4502 = vunpack.c.h.b16 %v4349
    %v4503 = vunpack.c.l.b16 %v4350
    %v4504 = vunpack.c.h.b16 %v4350
    %v4505 = vunpack.c.l.b16 %v4351
    %v4506 = vunpack.c.h.b16 %v4351
    %v4507 = vunpack.c.l.b16 %v4352
    %v4508 = vunpack.c.h.b16 %v4352
    %v4509 = vunpack.c.l.b16 %v4353
    %v4510 = vunpack.c.h.b16 %v4353
    %v4511 = vunpack.c.l.b16 %v4354
    %v4512 = vunpack.c.h.b16 %v4354
    %v4513 = vunpack.c.l.b16 %v4355
    %v4514 = vunpack.c.h.b16 %v4355
    %v4515 = vunpack.c.l.b16 %v4356
    %v4516 = vunpack.c.h.b16 %v4356
    %v4517 = vunpack.c.l.b16 %v4357
    %v4518 = vunpack.c.h.b16 %v4357
    %v4519 = vunpack.c.l.b16 %v4358
    %v4520 = vunpack.c.h.b16 %v4358
    %v4521 = vunpack.c.l.b16 %v4359
    %v4522 = vunpack.c.h.b16 %v4359
    %v4523 = vunpack.c.l.b16 %v4360
    %v4524 = vunpack.c.h.b16 %v4360
    %v4525 = vunpack.c.l.b16 %v4361
    %v4526 = vunpack.c.h.b16 %v4361
    %v4527 = vunpack.c.l.b16 %v4362
    %v4528 = vunpack.c.h.b16 %v4362
    %v4529 = vunpack.c.l.b16 %v4363
    %v4530 = vunpack.c.h.b16 %v4363
    %v4531 = vunpack.c.l.b16 %v4364
    %v4532 = vunpack.c.h.b16 %v4364
    %v4533 = vpack.c.b16 %v4425, %v4421
    %v4534 = vpack.c.b16 %v4426, %v4422
    %v4535 = vpack.c.b16 %v4427, %v4423
    %v4536 = vpack.c.b16 %v4428, %v4424
    %v4537 = vpack.c.b16 %v4433, %v4429
    %v4538 = vpack.c.b16 %v4434, %v4430
    %v4539 = vpack.c.b16 %v4435, %v4431
    %v4540 = vpack.c.b16 %v4436, %v4432
    %v4541 = vpack.c.b16 %v4441, %v4437
    %v4542 = vpack.c.b16 %v4442, %v4438
    %v4543 = vpack.c.b16 %v4443, %v4439
    %v4544 = vpack.c.b16 %v4444, %v4440
    %v4545 = vpack.c.b16 %v4449, %v4445
    %v4546 = vpack.c.b16 %v4450, %v4446
    %v4547 = vpack.c.b16 %v4451, %v4447
    %v4548 = vpack.c.b16 %v4452, %v4448
    %v4549 = vpack.c.b16 %v4457, %v4453
    %v4550 = vpack.c.b16 %v4458, %v4454
    %v4551 = vpack.c.b16 %v4459, %v4455
    %v4552 = vpack.c.b16 %v4460, %v4456
    %v4553 = vpack.c.b16 %v4465, %v4461
    %v4554 = vpack.c.b16 %v4466, %v4462
    %v4555 = vpack.c.b16 %v4467, %v4463
    %v4556 = vpack.c.b16 %v4468, %v4464
    %v4557 = vpack.c.b16 %v4473, %v4469
    %v4558 = vpack.c.b16 %v4474, %v4470
    %v4559 = vpack.c.b16 %v4475, %v4471
    %v4560 = vpack.c.b16 %v4476, %v4472
    %v4561 = vpack.c.b16 %v4481, %v4477
    %v4562 = vpack.c.b16 %v4482, %v4478
    %v4563 = vpack.c.b16 %v4483, %v4479
    %v4564 = vpack.c.b16 %v4484, %v4480
    %v4565 = vpack.c.b16 %v4489, %v4485
    %v4566 = vpack.c.b16 %v4490, %v4486
    %v4567 = vpack.c.b16 %v4491, %v4487
    %v4568 = vpack.c.b16 %v4492, %v4488
    %v4569 = vpack.c.b16 %v4497, %v4493
    %v4570 = vpack.c.b16 %v4498, %v4494
    %v4571 = vpack.c.b16 %v4499, %v4495
    %v4572 = vpack.c.b16 %v4500, %v4496
    %v4573 = vpack.c.b16 %v4505, %v4501
    %v4574 = vpack.c.b16 %v4506, %v4502
    %v4575 = vpack.c.b16 %v4507, %v4503
    %v4576 = vpack.c.b16 %v4508, %v4504
    %v4577 = vpack.c.b16 %v4513, %v4509
    %v4578 = vpack.c.b16 %v4514, %v4510
    %v4579 = vpack.c.b16 %v4515, %v4511
    %v4580 = vpack.c.b16 %v4516, %v4512
    %v4581 = vpack.c.b16 %v4521, %v4517
    %v4582 = vpack.c.b16 %v4522, %v4518
    %v4583 = vpack.c.b16 %v4523, %v4519
    %v4584 = vpack.c.b16 %v4524, %v4520
    %v4585 = vpack.c.b16 %v4529, %v4525
    %v4586 = vpack.c.b16 %v4530, %v4526
    %v4587 = vpack.c.b16 %v4531, %v4527
    %v4588 = vpack.c.b16 %v4532, %v4528
    %v4646 = vsel %vm273, %v4295, 0
    %v4649 = vsel %vm273, %v4297, 0
    %v4652 = vsel %vm273, %v4299, 0
    %v4655 = vsel %vm273, %v4301, 0
    %v4658 = vsel %vm273, %v4303, 0
    %v4661 = vsel %vm273, %v4305, 0
    %v4664 = vsel %vm273, %v4307, 0
    %4666 = vmatprep.subr.bf16.mxu0 %v4534
    %4667 = vmatpush1.bf16.msra.mxu0 %v4533
    %4668 = vmatprep.subr.bf16.mxu0 %v4538
    %4669 = vmatpush1.bf16.msra.mxu0 %v4537
    %4670 = vmatprep.subr.bf16.mxu0 %v4542
    %4671 = vmatpush1.bf16.msra.mxu0 %v4541
    %4672 = vmatprep.subr.bf16.mxu0 %v4546
    %4673 = vmatpush1.bf16.msra.mxu0 %v4545
    %4674 = vmatprep.subr.bf16.mxu0 %v4550
    %4675 = vmatpush1.bf16.msra.mxu0 %v4549
    %4676 = vmatprep.subr.bf16.mxu0 %v4554
    %4677 = vmatpush1.bf16.msra.mxu0 %v4553
    %4678 = vmatprep.subr.bf16.mxu0 %v4558
    %4679 = vmatpush1.bf16.msra.mxu0 %v4557
    %4680 = vmatprep.subr.bf16.mxu0 %v4562
    %4681 = vmatpush1.bf16.msra.mxu0 %v4561
    %4682 = vmatprep.subr.bf16.mxu0 %v4566
    %4683 = vmatpush1.bf16.msra.mxu0 %v4565
    %4684 = vmatprep.subr.bf16.mxu0 %v4570
    %4685 = vmatpush1.bf16.msra.mxu0 %v4569
    %4686 = vmatprep.subr.bf16.mxu0 %v4574
    %4687 = vmatpush1.bf16.msra.mxu0 %v4573
    %4688 = vmatprep.subr.bf16.mxu0 %v4578
    %4689 = vmatpush1.bf16.msra.mxu0 %v4577
    %4690 = vmatprep.subr.bf16.mxu0 %v4582
    %4691 = vmatpush1.bf16.msra.mxu0 %v4581
    %4692 = vmatprep.subr.bf16.mxu0 %v4586
    %4693 = vmatpush1.bf16.msra.mxu0 %v4585
    %4694 = vmatprep.subr.bf16.mxu0 0
    %4695 = vmatpush1.bf16.msra.mxu0 0
    %4696 = vmatprep.subr.bf16.mxu0 0
    %4697 = vmatpush1.bf16.msra.mxu0 0
    %4698 = vmatprep.mubr.bf16.mxu0 %v4646
    %4699 = vmatmul.mubr.bf16.gmra.mrb[0].mxu0 %v4294
    %v4700 = vpop.f32.mrb[0].mxu0
    %v4701 = vadd.f32 0.0, %v4700
    %v4702 = vpop.f32.mrb[0].mxu0
    %v4703 = vadd.f32 0.0, %v4702
    %v4704 = vpop.f32.mrb[0].mxu0
    %v4705 = vadd.f32 0.0, %v4704
    %v4706 = vpop.f32.mrb[0].mxu0
    %v4707 = vadd.f32 0.0, %v4706
    %4708 = vmatprep.mubr.bf16.mxu0 %v4649
    %4709 = vmatmul.mubr.bf16.gmra.mrb[0].mxu0 %v4296
    %v4710 = vpop.f32.mrb[0].mxu0
    %v4711 = vadd.f32 0.0, %v4710
    %v4712 = vpop.f32.mrb[0].mxu0
    %v4713 = vadd.f32 0.0, %v4712
    %v4714 = vpop.f32.mrb[0].mxu0
    %v4715 = vadd.f32 0.0, %v4714
    %v4716 = vpop.f32.mrb[0].mxu0
    %v4717 = vadd.f32 0.0, %v4716
    %4718 = vmatprep.mubr.bf16.mxu0 %v4652
    %4719 = vmatmul.mubr.bf16.gmra.mrb[0].mxu0 %v4298
    %v4720 = vpop.f32.mrb[0].mxu0
    %v4721 = vadd.f32 0.0, %v4720
    %v4722 = vpop.f32.mrb[0].mxu0
    %v4723 = vadd.f32 0.0, %v4722
    %v4724 = vpop.f32.mrb[0].mxu0
    %v4725 = vadd.f32 0.0, %v4724
    %v4726 = vpop.f32.mrb[0].mxu0
    %v4727 = vadd.f32 0.0, %v4726
    %4728 = vmatprep.mubr.bf16.mxu0 %v4655
    %4729 = vmatmul.mubr.bf16.gmra.mrb[0].mxu0 %v4300
    %v4730 = vpop.f32.mrb[0].mxu0
    %v4731 = vadd.f32 0.0, %v4730
    %v4732 = vpop.f32.mrb[0].mxu0
    %v4733 = vadd.f32 0.0, %v4732
    %v4734 = vpop.f32.mrb[0].mxu0
    %v4735 = vadd.f32 0.0, %v4734
    %v4736 = vpop.f32.mrb[0].mxu0
    %v4737 = vadd.f32 0.0, %v4736
    %4738 = vmatprep.mubr.bf16.mxu0 %v4658
    %4739 = vmatmul.mubr.bf16.gmra.mrb[0].mxu0 %v4302
    %v4740 = vpop.f32.mrb[0].mxu0
    %v4741 = vadd.f32 0.0, %v4740
    %v4742 = vpop.f32.mrb[0].mxu0
    %v4743 = vadd.f32 0.0, %v4742
    %v4744 = vpop.f32.mrb[0].mxu0
    %v4745 = vadd.f32 0.0, %v4744
    %v4746 = vpop.f32.mrb[0].mxu0
    %v4747 = vadd.f32 0.0, %v4746
    %4748 = vmatprep.mubr.bf16.mxu0 %v4661
    %4749 = vmatmul.mubr.bf16.gmra.mrb[0].mxu0 %v4304
    %v4750 = vpop.f32.mrb[0].mxu0
    %v4751 = vadd.f32 0.0, %v4750
    %v4752 = vpop.f32.mrb[0].mxu0
    %v4753 = vadd.f32 0.0, %v4752
    %v4754 = vpop.f32.mrb[0].mxu0
    %v4755 = vadd.f32 0.0, %v4754
    %v4756 = vpop.f32.mrb[0].mxu0
    %v4757 = vadd.f32 0.0, %v4756
    %4758 = vmatprep.mubr.bf16.mxu0 %v4664
    %4759 = vmatmul.mubr.bf16.gmra.mrb[0].mxu0 %v4306
    %v4760 = vpop.f32.mrb[0].mxu0
    %v4761 = vadd.f32 0.0, %v4760
    %v4762 = vpop.f32.mrb[0].mxu0
    %v4763 = vadd.f32 0.0, %v4762
    %v4764 = vpop.f32.mrb[0].mxu0
    %v4765 = vadd.f32 0.0, %v4764
    %v4766 = vpop.f32.mrb[0].mxu0
    %v4767 = vadd.f32 0.0, %v4766
    %4768 = vdwg.mxu0
    %4769 = vmatprep.subr.bf16.mxu0 %v4536
    %4770 = vmatpush1.bf16.msra.mxu0 %v4535
    %4771 = vmatprep.subr.bf16.mxu0 %v4540
    %4772 = vmatpush1.bf16.msra.mxu0 %v4539
    %4773 = vmatprep.subr.bf16.mxu0 %v4544
    %4774 = vmatpush1.bf16.msra.mxu0 %v4543
    %4775 = vmatprep.subr.bf16.mxu0 %v4548
    %4776 = vmatpush1.bf16.msra.mxu0 %v4547
    %4777 = vmatprep.subr.bf16.mxu0 %v4552
    %4778 = vmatpush1.bf16.msra.mxu0 %v4551
    %4779 = vmatprep.subr.bf16.mxu0 %v4556
    %4780 = vmatpush1.bf16.msra.mxu0 %v4555
    %4781 = vmatprep.subr.bf16.mxu0 %v4560
    %4782 = vmatpush1.bf16.msra.mxu0 %v4559
    %4783 = vmatprep.subr.bf16.mxu0 %v4564
    %4784 = vmatpush1.bf16.msra.mxu0 %v4563
    %4785 = vmatprep.subr.bf16.mxu0 %v4568
    %4786 = vmatpush1.bf16.msra.mxu0 %v4567
    %4787 = vmatprep.subr.bf16.mxu0 %v4572
    %4788 = vmatpush1.bf16.msra.mxu0 %v4571
    %4789 = vmatprep.subr.bf16.mxu0 %v4576
    %4790 = vmatpush1.bf16.msra.mxu0 %v4575
    %4791 = vmatprep.subr.bf16.mxu0 %v4580
    %4792 = vmatpush1.bf16.msra.mxu0 %v4579
    %4793 = vmatprep.subr.bf16.mxu0 %v4584
    %4794 = vmatpush1.bf16.msra.mxu0 %v4583
    %4795 = vmatprep.subr.bf16.mxu0 %v4588
    %4796 = vmatpush1.bf16.msra.mxu0 %v4587
    %4797 = vmatprep.subr.bf16.mxu0 0
    %4798 = vmatpush1.bf16.msra.mxu0 0
    %4799 = vmatprep.subr.bf16.mxu0 0
    %4800 = vmatpush1.bf16.msra.mxu0 0
    %4801 = vmatprep.mubr.bf16.mxu0 %v4646
    %4802 = vmatmul.mubr.bf16.gmra.mrb[0].mxu0 %v4294
    %v4803 = vpop.f32.mrb[0].mxu0
    %v4804 = vadd.f32 0.0, %v4803
    %v4805 = vpop.f32.mrb[0].mxu0
    %v4806 = vadd.f32 0.0, %v4805
    %v4807 = vpop.f32.mrb[0].mxu0
    %v4808 = vadd.f32 0.0, %v4807
    %v4809 = vpop.f32.mrb[0].mxu0
    %v4810 = vadd.f32 0.0, %v4809
    %4811 = vmatprep.mubr.bf16.mxu0 %v4649
    %4812 = vmatmul.mubr.bf16.gmra.mrb[0].mxu0 %v4296
    %v4813 = vpop.f32.mrb[0].mxu0
    %v4814 = vadd.f32 0.0, %v4813
    %v4815 = vpop.f32.mrb[0].mxu0
    %v4816 = vadd.f32 0.0, %v4815
    %v4817 = vpop.f32.mrb[0].mxu0
    %v4818 = vadd.f32 0.0, %v4817
    %v4819 = vpop.f32.mrb[0].mxu0
    %v4820 = vadd.f32 0.0, %v4819
    %4821 = vmatprep.mubr.bf16.mxu0 %v4652
    %4822 = vmatmul.mubr.bf16.gmra.mrb[0].mxu0 %v4298
    %v4823 = vpop.f32.mrb[0].mxu0
    %v4824 = vadd.f32 0.0, %v4823
    %v4825 = vpop.f32.mrb[0].mxu0
    %v4826 = vadd.f32 0.0, %v4825
    %v4827 = vpop.f32.mrb[0].mxu0
    %v4828 = vadd.f32 0.0, %v4827
    %v4829 = vpop.f32.mrb[0].mxu0
    %v4830 = vadd.f32 0.0, %v4829
    %4831 = vmatprep.mubr.bf16.mxu0 %v4655
    %4832 = vmatmul.mubr.bf16.gmra.mrb[0].mxu0 %v4300
    %v4833 = vpop.f32.mrb[0].mxu0
    %v4834 = vadd.f32 0.0, %v4833
    %v4835 = vpop.f32.mrb[0].mxu0
    %v4836 = vadd.f32 0.0, %v4835
    %v4837 = vpop.f32.mrb[0].mxu0
    %v4838 = vadd.f32 0.0, %v4837
    %v4839 = vpop.f32.mrb[0].mxu0
    %v4840 = vadd.f32 0.0, %v4839
    %4841 = vmatprep.mubr.bf16.mxu0 %v4658
    %4842 = vmatmul.mubr.bf16.gmra.mrb[0].mxu0 %v4302
    %v4843 = vpop.f32.mrb[0].mxu0
    %v4844 = vadd.f32 0.0, %v4843
    %v4845 = vpop.f32.mrb[0].mxu0
    %v4846 = vadd.f32 0.0, %v4845
    %v4847 = vpop.f32.mrb[0].mxu0
    %v4848 = vadd.f32 0.0, %v4847
    %v4849 = vpop.f32.mrb[0].mxu0
    %v4850 = vadd.f32 0.0, %v4849
    %4851 = vmatprep.mubr.bf16.mxu0 %v4661
    %4852 = vmatmul.mubr.bf16.gmra.mrb[0].mxu0 %v4304
    %v4853 = vpop.f32.mrb[0].mxu0
    %v4854 = vadd.f32 0.0, %v4853
    %v4855 = vpop.f32.mrb[0].mxu0
    %v4856 = vadd.f32 0.0, %v4855
    %v4857 = vpop.f32.mrb[0].mxu0
    %v4858 = vadd.f32 0.0, %v4857
    %v4859 = vpop.f32.mrb[0].mxu0
    %v4860 = vadd.f32 0.0, %v4859
    %4861 = vmatprep.mubr.bf16.mxu0 %v4664
    %4862 = vmatmul.mubr.bf16.gmra.mrb[0].mxu0 %v4306
    %v4863 = vpop.f32.mrb[0].mxu0
    %v4864 = vadd.f32 0.0, %v4863
    %v4865 = vpop.f32.mrb[0].mxu0
    %v4866 = vadd.f32 0.0, %v4865
    %v4867 = vpop.f32.mrb[0].mxu0
    %v4868 = vadd.f32 0.0, %v4867
    %v4869 = vpop.f32.mrb[0].mxu0
    %v4870 = vadd.f32 0.0, %v4869
    %4871 = vdwg.mxu0
    %v4928 = vunpack.c.l.b16 %v4032
    %v4929 = vunpack.c.h.b16 %v4032
    %v4930 = vunpack.c.l.b16 %v4033
    %v4931 = vunpack.c.h.b16 %v4033
    %v4932 = vunpack.c.l.b16 %v4034
    %v4933 = vunpack.c.h.b16 %v4034
    %v4934 = vunpack.c.l.b16 %v4035
    %v4935 = vunpack.c.h.b16 %v4035
    %v4936 = vunpack.c.l.b16 %v4036
    %v4937 = vunpack.c.h.b16 %v4036
    %v4938 = vunpack.c.l.b16 %v4037
    %v4939 = vunpack.c.h.b16 %v4037
    %v4940 = vunpack.c.l.b16 %v4038
    %v4941 = vunpack.c.h.b16 %v4038
    %v4942 = vunpack.c.l.b16 %v4039
    %v4943 = vunpack.c.h.b16 %v4039
    %v4944 = vunpack.c.l.b16 %v4040
    %v4945 = vunpack.c.h.b16 %v4040
    %v4946 = vunpack.c.l.b16 %v4041
    %v4947 = vunpack.c.h.b16 %v4041
    %v4948 = vunpack.c.l.b16 %v4042
    %v4949 = vunpack.c.h.b16 %v4042
    %v4950 = vunpack.c.l.b16 %v4043
    %v4951 = vunpack.c.h.b16 %v4043
    %v4952 = vunpack.c.l.b16 %v4044
    %v4953 = vunpack.c.h.b16 %v4044
    %v4954 = vunpack.c.l.b16 %v4045
    %v4955 = vunpack.c.h.b16 %v4045
    %v4956 = vunpack.c.l.b16 %v4046
    %v4957 = vunpack.c.h.b16 %v4046
    %v4958 = vunpack.c.l.b16 %v4047
    %v4959 = vunpack.c.h.b16 %v4047
    %v4960 = vunpack.c.l.b16 %v4048
    %v4961 = vunpack.c.h.b16 %v4048
    %v4962 = vunpack.c.l.b16 %v4049
    %v4963 = vunpack.c.h.b16 %v4049
    %v4964 = vunpack.c.l.b16 %v4050
    %v4965 = vunpack.c.h.b16 %v4050
    %v4966 = vunpack.c.l.b16 %v4051
    %v4967 = vunpack.c.h.b16 %v4051
    %v4968 = vunpack.c.l.b16 %v4052
    %v4969 = vunpack.c.h.b16 %v4052
    %v4970 = vunpack.c.l.b16 %v4053
    %v4971 = vunpack.c.h.b16 %v4053
    %v4972 = vunpack.c.l.b16 %v4054
    %v4973 = vunpack.c.h.b16 %v4054
    %v4974 = vunpack.c.l.b16 %v4055
    %v4975 = vunpack.c.h.b16 %v4055
    %v4976 = vunpack.c.l.b16 %v4056
    %v4977 = vunpack.c.h.b16 %v4056
    %v4978 = vunpack.c.l.b16 %v4057
    %v4979 = vunpack.c.h.b16 %v4057
    %v4980 = vunpack.c.l.b16 %v4058
    %v4981 = vunpack.c.h.b16 %v4058
    %v4982 = vunpack.c.l.b16 %v4059
    %v4983 = vunpack.c.h.b16 %v4059
    %v4984 = vunpack.c.l.b16 %v4060
    %v4985 = vunpack.c.h.b16 %v4060
    %v4986 = vunpack.c.l.b16 %v4061
    %v4987 = vunpack.c.h.b16 %v4061
    %v4988 = vunpack.c.l.b16 %v4062
    %v4989 = vunpack.c.h.b16 %v4062
    %v4990 = vunpack.c.l.b16 %v4063
    %v4991 = vunpack.c.h.b16 %v4063
    %v4992 = vunpack.c.l.b16 %v4064
    %v4993 = vunpack.c.h.b16 %v4064
    %v4994 = vunpack.c.l.b16 %v4065
    %v4995 = vunpack.c.h.b16 %v4065
    %v4996 = vunpack.c.l.b16 %v4066
    %v4997 = vunpack.c.h.b16 %v4066
    %v4998 = vunpack.c.l.b16 %v4067
    %v4999 = vunpack.c.h.b16 %v4067
    %v5000 = vunpack.c.l.b16 %v4068
    %v5001 = vunpack.c.h.b16 %v4068
    %v5002 = vunpack.c.l.b16 %v4069
    %v5003 = vunpack.c.h.b16 %v4069
    %v5004 = vunpack.c.l.b16 %v4070
    %v5005 = vunpack.c.h.b16 %v4070
    %v5006 = vunpack.c.l.b16 %v4071
    %v5007 = vunpack.c.h.b16 %v4071
    %v5008 = vunpack.c.l.b16 %v4072
    %v5009 = vunpack.c.h.b16 %v4072
    %v5010 = vunpack.c.l.b16 %v4073
    %v5011 = vunpack.c.h.b16 %v4073
    %v5012 = vunpack.c.l.b16 %v4074
    %v5013 = vunpack.c.h.b16 %v4074
    %v5014 = vunpack.c.l.b16 %v4075
    %v5015 = vunpack.c.h.b16 %v4075
    %v5016 = vunpack.c.l.b16 %v4076
    %v5017 = vunpack.c.h.b16 %v4076
    %v5018 = vunpack.c.l.b16 %v4077
    %v5019 = vunpack.c.h.b16 %v4077
    %v5020 = vunpack.c.l.b16 %v4078
    %v5021 = vunpack.c.h.b16 %v4078
    %v5022 = vunpack.c.l.b16 %v4079
    %v5023 = vunpack.c.h.b16 %v4079
    %v5024 = vunpack.c.l.b16 %v4080
    %v5025 = vunpack.c.h.b16 %v4080
    %v5026 = vunpack.c.l.b16 %v4081
    %v5027 = vunpack.c.h.b16 %v4081
    %v5028 = vunpack.c.l.b16 %v4082
    %v5029 = vunpack.c.h.b16 %v4082
    %v5030 = vunpack.c.l.b16 %v4083
    %v5031 = vunpack.c.h.b16 %v4083
    %v5032 = vunpack.c.l.b16 %v4084
    %v5033 = vunpack.c.h.b16 %v4084
    %v5034 = vunpack.c.l.b16 %v4085
    %v5035 = vunpack.c.h.b16 %v4085
    %v5036 = vunpack.c.l.b16 %v4086
    %v5037 = vunpack.c.h.b16 %v4086
    %v5038 = vunpack.c.l.b16 %v4087
    %v5039 = vunpack.c.h.b16 %v4087
    %v5040 = vpack.c.b16 %v4932, %v4928
    %v5041 = vpack.c.b16 %v4933, %v4929
    %v5042 = vpack.c.b16 %v4934, %v4930
    %v5043 = vpack.c.b16 %v4935, %v4931
    %v5044 = vpack.c.b16 %v4940, %v4936
    %v5045 = vpack.c.b16 %v4941, %v4937
    %v5046 = vpack.c.b16 %v4942, %v4938
    %v5047 = vpack.c.b16 %v4943, %v4939
    %v5048 = vpack.c.b16 %v4948, %v4944
    %v5049 = vpack.c.b16 %v4949, %v4945
    %v5050 = vpack.c.b16 %v4950, %v4946
    %v5051 = vpack.c.b16 %v4951, %v4947
    %v5052 = vpack.c.b16 %v4956, %v4952
    %v5053 = vpack.c.b16 %v4957, %v4953
    %v5054 = vpack.c.b16 %v4958, %v4954
    %v5055 = vpack.c.b16 %v4959, %v4955
    %v5056 = vpack.c.b16 %v4964, %v4960
    %v5057 = vpack.c.b16 %v4965, %v4961
    %v5058 = vpack.c.b16 %v4966, %v4962
    %v5059 = vpack.c.b16 %v4967, %v4963
    %v5060 = vpack.c.b16 %v4972, %v4968
    %v5061 = vpack.c.b16 %v4973, %v4969
    %v5062 = vpack.c.b16 %v4974, %v4970
    %v5063 = vpack.c.b16 %v4975, %v4971
    %v5064 = vpack.c.b16 %v4980, %v4976
    %v5065 = vpack.c.b16 %v4981, %v4977
    %v5066 = vpack.c.b16 %v4982, %v4978
    %v5067 = vpack.c.b16 %v4983, %v4979
    %v5068 = vpack.c.b16 %v4988, %v4984
    %v5069 = vpack.c.b16 %v4989, %v4985
    %v5070 = vpack.c.b16 %v4990, %v4986
    %v5071 = vpack.c.b16 %v4991, %v4987
    %v5072 = vpack.c.b16 %v4996, %v4992
    %v5073 = vpack.c.b16 %v4997, %v4993
    %v5074 = vpack.c.b16 %v4998, %v4994
    %v5075 = vpack.c.b16 %v4999, %v4995
    %v5076 = vpack.c.b16 %v5004, %v5000
    %v5077 = vpack.c.b16 %v5005, %v5001
    %v5078 = vpack.c.b16 %v5006, %v5002
    %v5079 = vpack.c.b16 %v5007, %v5003
    %v5080 = vpack.c.b16 %v5012, %v5008
    %v5081 = vpack.c.b16 %v5013, %v5009
    %v5082 = vpack.c.b16 %v5014, %v5010
    %v5083 = vpack.c.b16 %v5015, %v5011
    %v5084 = vpack.c.b16 %v5020, %v5016
    %v5085 = vpack.c.b16 %v5021, %v5017
    %v5086 = vpack.c.b16 %v5022, %v5018
    %v5087 = vpack.c.b16 %v5023, %v5019
    %v5088 = vpack.c.b16 %v5028, %v5024
    %v5089 = vpack.c.b16 %v5029, %v5025
    %v5090 = vpack.c.b16 %v5030, %v5026
    %v5091 = vpack.c.b16 %v5031, %v5027
    %v5092 = vpack.c.b16 %v5036, %v5032
    %v5093 = vpack.c.b16 %v5037, %v5033
    %v5094 = vpack.c.b16 %v5038, %v5034
    %v5095 = vpack.c.b16 %v5039, %v5035
    %v5153 = vsel %vm273, %v4019, 0
    %v5156 = vsel %vm273, %v4021, 0
    %v5159 = vsel %vm273, %v4023, 0
    %v5162 = vsel %vm273, %v4025, 0
    %v5165 = vsel %vm273, %v4027, 0
    %v5168 = vsel %vm273, %v4029, 0
    %v5171 = vsel %vm273, %v4031, 0
    %5173 = vmatprep.subr.bf16.mxu0 %v5041
    %5174 = vmatpush1.bf16.msra.mxu0 %v5040
    %5175 = vmatprep.subr.bf16.mxu0 %v5045
    %5176 = vmatpush1.bf16.msra.mxu0 %v5044
    %5177 = vmatprep.subr.bf16.mxu0 %v5049
    %5178 = vmatpush1.bf16.msra.mxu0 %v5048
    %5179 = vmatprep.subr.bf16.mxu0 %v5053
    %5180 = vmatpush1.bf16.msra.mxu0 %v5052
    %5181 = vmatprep.subr.bf16.mxu0 %v5057
    %5182 = vmatpush1.bf16.msra.mxu0 %v5056
    %5183 = vmatprep.subr.bf16.mxu0 %v5061
    %5184 = vmatpush1.bf16.msra.mxu0 %v5060
    %5185 = vmatprep.subr.bf16.mxu0 %v5065
    %5186 = vmatpush1.bf16.msra.mxu0 %v5064
    %5187 = vmatprep.subr.bf16.mxu0 %v5069
    %5188 = vmatpush1.bf16.msra.mxu0 %v5068
    %5189 = vmatprep.subr.bf16.mxu0 %v5073
    %5190 = vmatpush1.bf16.msra.mxu0 %v5072
    %5191 = vmatprep.subr.bf16.mxu0 %v5077
    %5192 = vmatpush1.bf16.msra.mxu0 %v5076
    %5193 = vmatprep.subr.bf16.mxu0 %v5081
    %5194 = vmatpush1.bf16.msra.mxu0 %v5080
    %5195 = vmatprep.subr.bf16.mxu0 %v5085
    %5196 = vmatpush1.bf16.msra.mxu0 %v5084
    %5197 = vmatprep.subr.bf16.mxu0 %v5089
    %5198 = vmatpush1.bf16.msra.mxu0 %v5088
    %5199 = vmatprep.subr.bf16.mxu0 %v5093
    %5200 = vmatpush1.bf16.msra.mxu0 %v5092
    %5201 = vmatprep.subr.bf16.mxu0 0
    %5202 = vmatpush1.bf16.msra.mxu0 0
    %5203 = vmatprep.subr.bf16.mxu0 0
    %5204 = vmatpush1.bf16.msra.mxu0 0
    %5205 = vmatprep.mubr.bf16.mxu0 %v5153
    %5206 = vmatmul.mubr.bf16.gmra.mrb[0].mxu0 %v4018
    %v5207 = vpop.f32.mrb[0].mxu0
    %v5208 = vadd.f32 %v4701, %v5207
    %v5209 = vpop.f32.mrb[0].mxu0
    %v5210 = vadd.f32 %v4703, %v5209
    %v5211 = vpop.f32.mrb[0].mxu0
    %v5212 = vadd.f32 %v4705, %v5211
    %v5213 = vpop.f32.mrb[0].mxu0
    %v5214 = vadd.f32 %v4707, %v5213
    %5215 = vmatprep.mubr.bf16.mxu0 %v5156
    %5216 = vmatmul.mubr.bf16.gmra.mrb[0].mxu0 %v4020
    %v5217 = vpop.f32.mrb[0].mxu0
    %v5218 = vadd.f32 %v4711, %v5217
    %v5219 = vpop.f32.mrb[0].mxu0
    %v5220 = vadd.f32 %v4713, %v5219
    %v5221 = vpop.f32.mrb[0].mxu0
    %v5222 = vadd.f32 %v4715, %v5221
    %v5223 = vpop.f32.mrb[0].mxu0
    %v5224 = vadd.f32 %v4717, %v5223
    %5225 = vmatprep.mubr.bf16.mxu0 %v5159
    %5226 = vmatmul.mubr.bf16.gmra.mrb[0].mxu0 %v4022
    %v5227 = vpop.f32.mrb[0].mxu0
    %v5228 = vadd.f32 %v4721, %v5227
    %v5229 = vpop.f32.mrb[0].mxu0
    %v5230 = vadd.f32 %v4723, %v5229
    %v5231 = vpop.f32.mrb[0].mxu0
    %v5232 = vadd.f32 %v4725, %v5231
    %v5233 = vpop.f32.mrb[0].mxu0
    %v5234 = vadd.f32 %v4727, %v5233
    %5235 = vmatprep.mubr.bf16.mxu0 %v5162
    %5236 = vmatmul.mubr.bf16.gmra.mrb[0].mxu0 %v4024
    %v5237 = vpop.f32.mrb[0].mxu0
    %v5238 = vadd.f32 %v4731, %v5237
    %v5239 = vpop.f32.mrb[0].mxu0
    %v5240 = vadd.f32 %v4733, %v5239
    %v5241 = vpop.f32.mrb[0].mxu0
    %v5242 = vadd.f32 %v4735, %v5241
    %v5243 = vpop.f32.mrb[0].mxu0
    %v5244 = vadd.f32 %v4737, %v5243
    %5245 = vmatprep.mubr.bf16.mxu0 %v5165
    %5246 = vmatmul.mubr.bf16.gmra.mrb[0].mxu0 %v4026
    %v5247 = vpop.f32.mrb[0].mxu0
    %v5248 = vadd.f32 %v4741, %v5247
    %v5249 = vpop.f32.mrb[0].mxu0
    %v5250 = vadd.f32 %v4743, %v5249
    %v5251 = vpop.f32.mrb[0].mxu0
    %v5252 = vadd.f32 %v4745, %v5251
    %v5253 = vpop.f32.mrb[0].mxu0
    %v5254 = vadd.f32 %v4747, %v5253
    %5255 = vmatprep.mubr.bf16.mxu0 %v5168
    %5256 = vmatmul.mubr.bf16.gmra.mrb[0].mxu0 %v4028
    %v5257 = vpop.f32.mrb[0].mxu0
    %v5258 = vadd.f32 %v4751, %v5257
    %v5259 = vpop.f32.mrb[0].mxu0
    %v5260 = vadd.f32 %v4753, %v5259
    %v5261 = vpop.f32.mrb[0].mxu0
    %v5262 = vadd.f32 %v4755, %v5261
    %v5263 = vpop.f32.mrb[0].mxu0
    %v5264 = vadd.f32 %v4757, %v5263
    %5265 = vmatprep.mubr.bf16.mxu0 %v5171
    %5266 = vmatmul.mubr.bf16.gmra.mrb[0].mxu0 %v4030
    %v5267 = vpop.f32.mrb[0].mxu0
    %v5268 = vadd.f32 %v4761, %v5267
    %v5269 = vpop.f32.mrb[0].mxu0
    %v5270 = vadd.f32 %v4763, %v5269
    %v5271 = vpop.f32.mrb[0].mxu0
    %v5272 = vadd.f32 %v4765, %v5271
    %v5273 = vpop.f32.mrb[0].mxu0
    %v5274 = vadd.f32 %v4767, %v5273
    %5275 = vdwg.mxu0
    %5276 = vmatprep.subr.bf16.mxu0 %v5043
    %5277 = vmatpush1.bf16.msra.mxu0 %v5042
    %5278 = vmatprep.subr.bf16.mxu0 %v5047
    %5279 = vmatpush1.bf16.msra.mxu0 %v5046
    %5280 = vmatprep.subr.bf16.mxu0 %v5051
    %5281 = vmatpush1.bf16.msra.mxu0 %v5050
    %5282 = vmatprep.subr.bf16.mxu0 %v5055
    %5283 = vmatpush1.bf16.msra.mxu0 %v5054
    %5284 = vmatprep.subr.bf16.mxu0 %v5059
    %5285 = vmatpush1.bf16.msra.mxu0 %v5058
    %5286 = vmatprep.subr.bf16.mxu0 %v5063
    %5287 = vmatpush1.bf16.msra.mxu0 %v5062
    %5288 = vmatprep.subr.bf16.mxu0 %v5067
    %5289 = vmatpush1.bf16.msra.mxu0 %v5066
    %5290 = vmatprep.subr.bf16.mxu0 %v5071
    %5291 = vmatpush1.bf16.msra.mxu0 %v5070
    %5292 = vmatprep.subr.bf16.mxu0 %v5075
    %5293 = vmatpush1.bf16.msra.mxu0 %v5074
    %5294 = vmatprep.subr.bf16.mxu0 %v5079
    %5295 = vmatpush1.bf16.msra.mxu0 %v5078
    %5296 = vmatprep.subr.bf16.mxu0 %v5083
    %5297 = vmatpush1.bf16.msra.mxu0 %v5082
    %5298 = vmatprep.subr.bf16.mxu0 %v5087
    %5299 = vmatpush1.bf16.msra.mxu0 %v5086
    %5300 = vmatprep.subr.bf16.mxu0 %v5091
    %5301 = vmatpush1.bf16.msra.mxu0 %v5090
    %5302 = vmatprep.subr.bf16.mxu0 %v5095
    %5303 = vmatpush1.bf16.msra.mxu0 %v5094
    %5304 = vmatprep.subr.bf16.mxu0 0
    %5305 = vmatpush1.bf16.msra.mxu0 0
    %5306 = vmatprep.subr.bf16.mxu0 0
    %5307 = vmatpush1.bf16.msra.mxu0 0
    %5308 = vmatprep.mubr.bf16.mxu0 %v5153
    %5309 = vmatmul.mubr.bf16.gmra.mrb[0].mxu0 %v4018
    %v5310 = vpop.f32.mrb[0].mxu0
    %v5311 = vadd.f32 %v4804, %v5310
    %v5312 = vpop.f32.mrb[0].mxu0
    %v5313 = vadd.f32 %v4806, %v5312
    %v5314 = vpop.f32.mrb[0].mxu0
    %v5315 = vadd.f32 %v4808, %v5314
    %v5316 = vpop.f32.mrb[0].mxu0
    %v5317 = vadd.f32 %v4810, %v5316
    %5318 = vmatprep.mubr.bf16.mxu0 %v5156
    %5319 = vmatmul.mubr.bf16.gmra.mrb[0].mxu0 %v4020
    %v5320 = vpop.f32.mrb[0].mxu0
    %v5321 = vadd.f32 %v4814, %v5320
    %v5322 = vpop.f32.mrb[0].mxu0
    %v5323 = vadd.f32 %v4816, %v5322
    %v5324 = vpop.f32.mrb[0].mxu0
    %v5325 = vadd.f32 %v4818, %v5324
    %v5326 = vpop.f32.mrb[0].mxu0
    %v5327 = vadd.f32 %v4820, %v5326
    %5328 = vmatprep.mubr.bf16.mxu0 %v5159
    %5329 = vmatmul.mubr.bf16.gmra.mrb[0].mxu0 %v4022
    %v5330 = vpop.f32.mrb[0].mxu0
    %v5331 = vadd.f32 %v4824, %v5330
    %v5332 = vpop.f32.mrb[0].mxu0
    %v5333 = vadd.f32 %v4826, %v5332
    %v5334 = vpop.f32.mrb[0].mxu0
    %v5335 = vadd.f32 %v4828, %v5334
    %v5336 = vpop.f32.mrb[0].mxu0
    %v5337 = vadd.f32 %v4830, %v5336
    %5338 = vmatprep.mubr.bf16.mxu0 %v5162
    %5339 = vmatmul.mubr.bf16.gmra.mrb[0].mxu0 %v4024
    %v5340 = vpop.f32.mrb[0].mxu0
    %v5341 = vadd.f32 %v4834, %v5340
    %v5342 = vpop.f32.mrb[0].mxu0
    %v5343 = vadd.f32 %v4836, %v5342
    %v5344 = vpop.f32.mrb[0].mxu0
    %v5345 = vadd.f32 %v4838, %v5344
    %v5346 = vpop.f32.mrb[0].mxu0
    %v5347 = vadd.f32 %v4840, %v5346
    %5348 = vmatprep.mubr.bf16.mxu0 %v5165
    %5349 = vmatmul.mubr.bf16.gmra.mrb[0].mxu0 %v4026
    %v5350 = vpop.f32.mrb[0].mxu0
    %v5351 = vadd.f32 %v4844, %v5350
    %v5352 = vpop.f32.mrb[0].mxu0
    %v5353 = vadd.f32 %v4846, %v5352
    %v5354 = vpop.f32.mrb[0].mxu0
    %v5355 = vadd.f32 %v4848, %v5354
    %v5356 = vpop.f32.mrb[0].mxu0
    %v5357 = vadd.f32 %v4850, %v5356
    %5358 = vmatprep.mubr.bf16.mxu0 %v5168
    %5359 = vmatmul.mubr.bf16.gmra.mrb[0].mxu0 %v4028
    %v5360 = vpop.f32.mrb[0].mxu0
    %v5361 = vadd.f32 %v4854, %v5360
    %v5362 = vpop.f32.mrb[0].mxu0
    %v5363 = vadd.f32 %v4856, %v5362
    %v5364 = vpop.f32.mrb[0].mxu0
    %v5365 = vadd.f32 %v4858, %v5364
    %v5366 = vpop.f32.mrb[0].mxu0
    %v5367 = vadd.f32 %v4860, %v5366
    %5368 = vmatprep.mubr.bf16.mxu0 %v5171
    %5369 = vmatmul.mubr.bf16.gmra.mrb[0].mxu0 %v4030
    %v5370 = vpop.f32.mrb[0].mxu0
    %v5371 = vadd.f32 %v4864, %v5370
    %v5372 = vpop.f32.mrb[0].mxu0
    %v5373 = vadd.f32 %v4866, %v5372
    %v5374 = vpop.f32.mrb[0].mxu0
    %v5375 = vadd.f32 %v4868, %v5374
    %v5376 = vpop.f32.mrb[0].mxu0
    %v5377 = vadd.f32 %v4870, %v5376
    %5378 = vdwg.mxu0
    %s5379 = scalar_lea.vmem [#allocation7], 224
    %v5380 = vld [vmem:[%s5379] sm:$0xff]
    %v5381 = vld [vmem:[%s5379 + $0x8] sm:$0xff]
    %v5382 = vld [vmem:[%s5379 + $0x10] sm:$0xff]
    %v5383 = vld [vmem:[%s5379 + $0x18] sm:$0xff]
    %v5384 = vld [vmem:[%s5379 + $0x20] sm:$0xff]
    %v5385 = vld [vmem:[%s5379 + $0x28] sm:$0xff]
    %v5386 = vld [vmem:[%s5379 + $0x30] sm:$0xff]
    %v5387 = vld [vmem:[%s5379 + $0x38] sm:$0xff]
    %v5388 = vld [vmem:[%s5379 + $0x40] sm:$0xff]
    %v5389 = vld [vmem:[%s5379 + $0x48] sm:$0xff]
    %v5390 = vld [vmem:[%s5379 + $0x50] sm:$0xff]
    %v5391 = vld [vmem:[%s5379 + $0x58] sm:$0xff]
    %v5392 = vld [vmem:[%s5379 + $0x60] sm:$0xff]
    %v5393 = vld [vmem:[%s5379 + $0x68] sm:$0xff]
    %v5395 = vsel %vm3826, %v5380, 0
    %v5398 = vsel %vm3826, %v5381, 0
    %v5401 = vsel %vm3826, %v5382, 0
    %v5404 = vsel %vm3826, %v5383, 0
    %v5407 = vsel %vm3826, %v5384, 0
    %v5410 = vsel %vm3826, %v5385, 0
    %v5413 = vsel %vm3826, %v5386, 0
    %v5416 = vsel %vm3826, %v5387, 0
    %v5419 = vsel %vm3826, %v5388, 0
    %v5422 = vsel %vm3826, %v5389, 0
    %v5425 = vsel %vm3826, %v5390, 0
    %v5428 = vsel %vm3826, %v5391, 0
    %v5431 = vsel %vm3826, %v5392, 0
    %v5434 = vsel %vm3826, %v5393, 0
    %5436 = vmatprep.subr.mxu0 %v3732
    %5437 = vmatpush1.msra.mxu0 %v3730
    %5438 = vmatprep.subr.mxu0 %v3738
    %5439 = vmatpush1.msra.mxu0 %v3736
    %5440 = vmatprep.subr.mxu0 %v3744
    %5441 = vmatpush1.msra.mxu0 %v3742
    %5442 = vmatprep.subr.mxu0 %v3750
    %5443 = vmatpush1.msra.mxu0 %v3748
    %5444 = vmatprep.subr.mxu0 %v3756
    %5445 = vmatpush1.msra.mxu0 %v3754
    %5446 = vmatprep.subr.mxu0 %v3762
    %5447 = vmatpush1.msra.mxu0 %v3760
    %5448 = vmatprep.subr.mxu0 %v3768
    %5449 = vmatpush1.msra.mxu0 %v3766
    %5450 = vmatprep.subr.mxu0 %v3774
    %5451 = vmatpush1.msra.mxu0 %v3772
    %5452 = vmatprep.subr.mxu0 %v3780
    %5453 = vmatpush1.msra.mxu0 %v3778
    %5454 = vmatprep.subr.mxu0 %v3786
    %5455 = vmatpush1.msra.mxu0 %v3784
    %5456 = vmatprep.subr.mxu0 %v3792
    %5457 = vmatpush1.msra.mxu0 %v3790
    %5458 = vmatprep.subr.mxu0 %v3798
    %5459 = vmatpush1.msra.mxu0 %v3796
    %5460 = vmatprep.subr.mxu0 %v3804
    %5461 = vmatpush1.msra.mxu0 %v3802
    %5462 = vmatprep.subr.mxu0 %v3810
    %5463 = vmatpush1.msra.mxu0 %v3808
    %5464 = vmatprep.subr.mxu0 0.0
    %5465 = vmatpush1.msra.mxu0 0.0
    %5466 = vmatprep.subr.mxu0 0.0
    %5467 = vmatpush1.msra.mxu0 0.0
    %5468 = vmatprep.subr.mxu0 0.0
    %5469 = vmatpush1.msra.mxu0 0.0
    %5470 = vmatprep.subr.mxu0 0.0
    %5471 = vmatpush1.msra.mxu0 0.0
    %5472 = vmatprep.subr.mxu0 0.0
    %5473 = vmatpush1.msra.mxu0 0.0
    %5474 = vmatprep.subr.mxu0 0.0
    %5475 = vmatpush1.msra.mxu0 0.0
    %5476 = vmatprep.subr.mxu0 0.0
    %5477 = vmatpush1.msra.mxu0 0.0
    %5478 = vmatprep.subr.mxu0 0.0
    %5479 = vmatpush1.msra.mxu0 0.0
    %5480 = vmatprep.subr.mxu0 0.0
    %5481 = vmatpush1.msra.mxu0 0.0
    %5482 = vmatprep.subr.mxu0 0.0
    %5483 = vmatpush1.msra.mxu0 0.0
    %5484 = vmatprep.subr.mxu0 0.0
    %5485 = vmatpush1.msra.mxu0 0.0
    %5486 = vmatprep.subr.mxu0 0.0
    %5487 = vmatpush1.msra.mxu0 0.0
    %5488 = vmatprep.subr.mxu0 0.0
    %5489 = vmatpush1.msra.mxu0 0.0
    %5490 = vmatprep.subr.mxu0 0.0
    %5491 = vmatpush1.msra.mxu0 0.0
    %5492 = vmatprep.subr.mxu0 0.0
    %5493 = vmatpush1.msra.mxu0 0.0
    %5494 = vmatprep.subr.mxu0 0.0
    %5495 = vmatpush1.msra.mxu0 0.0
    %5496 = vmatprep.subr.mxu0 0.0
    %5497 = vmatpush1.msra.mxu0 0.0
    %5498 = vmatprep.subr.mxu0 0.0
    %5499 = vmatpush1.msra.mxu0 0.0
    %5500 = vmatprep.mubr.f32.mxu0 0.0
    %5501 = vmatmul.mubr.f32.gmra.mrb[0].mxu0 %v5395
    %v5502 = vpop.f32.mrb[0].mxu0
    %v5503 = vadd.f32 0.0, %v5502
    %v5504 = vpop.f32.mrb[0].mxu0
    %v5505 = vadd.f32 0.0, %v5504
    %5506 = vmatprep.mubr.f32.mxu0 0.0
    %5507 = vmatmul.mubr.f32.gmra.mrb[0].mxu0 %v5398
    %v5508 = vpop.f32.mrb[0].mxu0
    %v5509 = vadd.f32 0.0, %v5508
    %v5510 = vpop.f32.mrb[0].mxu0
    %v5511 = vadd.f32 0.0, %v5510
    %5512 = vmatprep.mubr.f32.mxu0 0.0
    %5513 = vmatmul.mubr.f32.gmra.mrb[0].mxu0 %v5401
    %v5514 = vpop.f32.mrb[0].mxu0
    %v5515 = vadd.f32 0.0, %v5514
    %v5516 = vpop.f32.mrb[0].mxu0
    %v5517 = vadd.f32 0.0, %v5516
    %5518 = vmatprep.mubr.f32.mxu0 0.0
    %5519 = vmatmul.mubr.f32.gmra.mrb[0].mxu0 %v5404
    %v5520 = vpop.f32.mrb[0].mxu0
    %v5521 = vadd.f32 0.0, %v5520
    %v5522 = vpop.f32.mrb[0].mxu0
    %v5523 = vadd.f32 0.0, %v5522
    %5524 = vmatprep.mubr.f32.mxu0 0.0
    %5525 = vmatmul.mubr.f32.gmra.mrb[0].mxu0 %v5407
    %v5526 = vpop.f32.mrb[0].mxu0
    %v5527 = vadd.f32 0.0, %v5526
    %v5528 = vpop.f32.mrb[0].mxu0
    %v5529 = vadd.f32 0.0, %v5528
    %5530 = vmatprep.mubr.f32.mxu0 0.0
    %5531 = vmatmul.mubr.f32.gmra.mrb[0].mxu0 %v5410
    %v5532 = vpop.f32.mrb[0].mxu0
    %v5533 = vadd.f32 0.0, %v5532
    %v5534 = vpop.f32.mrb[0].mxu0
    %v5535 = vadd.f32 0.0, %v5534
    %5536 = vmatprep.mubr.f32.mxu0 0.0
    %5537 = vmatmul.mubr.f32.gmra.mrb[0].mxu0 %v5413
    %v5538 = vpop.f32.mrb[0].mxu0
    %v5539 = vadd.f32 0.0, %v5538
    %v5540 = vpop.f32.mrb[0].mxu0
    %v5541 = vadd.f32 0.0, %v5540
    %5542 = vmatprep.mubr.f32.mxu0 0.0
    %5543 = vmatmul.mubr.f32.gmra.mrb[0].mxu0 %v5416
    %v5544 = vpop.f32.mrb[0].mxu0
    %v5545 = vadd.f32 0.0, %v5544
    %v5546 = vpop.f32.mrb[0].mxu0
    %v5547 = vadd.f32 0.0, %v5546
    %5548 = vmatprep.mubr.f32.mxu0 0.0
    %5549 = vmatmul.mubr.f32.gmra.mrb[0].mxu0 %v5419
    %v5550 = vpop.f32.mrb[0].mxu0
    %v5551 = vadd.f32 0.0, %v5550
    %v5552 = vpop.f32.mrb[0].mxu0
    %v5553 = vadd.f32 0.0, %v5552
    %5554 = vmatprep.mubr.f32.mxu0 0.0
    %5555 = vmatmul.mubr.f32.gmra.mrb[0].mxu0 %v5422
    %v5556 = vpop.f32.mrb[0].mxu0
    %v5557 = vadd.f32 0.0, %v5556
    %v5558 = vpop.f32.mrb[0].mxu0
    %v5559 = vadd.f32 0.0, %v5558
    %5560 = vmatprep.mubr.f32.mxu0 0.0
    %5561 = vmatmul.mubr.f32.gmra.mrb[0].mxu0 %v5425
    %v5562 = vpop.f32.mrb[0].mxu0
    %v5563 = vadd.f32 0.0, %v5562
    %v5564 = vpop.f32.mrb[0].mxu0
    %v5565 = vadd.f32 0.0, %v5564
    %5566 = vmatprep.mubr.f32.mxu0 0.0
    %5567 = vmatmul.mubr.f32.gmra.mrb[0].mxu0 %v5428
    %v5568 = vpop.f32.mrb[0].mxu0
    %v5569 = vadd.f32 0.0, %v5568
    %v5570 = vpop.f32.mrb[0].mxu0
    %v5571 = vadd.f32 0.0, %v5570
    %5572 = vmatprep.mubr.f32.mxu0 0.0
    %5573 = vmatmul.mubr.f32.gmra.mrb[0].mxu0 %v5431
    %v5574 = vpop.f32.mrb[0].mxu0
    %v5575 = vadd.f32 0.0, %v5574
    %v5576 = vpop.f32.mrb[0].mxu0
    %v5577 = vadd.f32 0.0, %v5576
    %5578 = vmatprep.mubr.f32.mxu0 0.0
    %5579 = vmatmul.mubr.f32.gmra.mrb[0].mxu0 %v5434
    %v5580 = vpop.f32.mrb[0].mxu0
    %v5581 = vadd.f32 0.0, %v5580
    %v5582 = vpop.f32.mrb[0].mxu0
    %v5583 = vadd.f32 0.0, %v5582
    %5584 = vdwg.mxu0
    %v5585 = vpack.c.bf16 %v5509, %v5503
    %v5586 = vpack.c.bf16 %v5511, %v5505
    %v5587 = vpack.c.bf16 %v5521, %v5515
    %v5588 = vpack.c.bf16 %v5523, %v5517
    %v5589 = vpack.c.bf16 %v5533, %v5527
    %v5590 = vpack.c.bf16 %v5535, %v5529
    %v5591 = vpack.c.bf16 %v5545, %v5539
    %v5592 = vpack.c.bf16 %v5547, %v5541
    %v5593 = vpack.c.bf16 %v5557, %v5551
    %v5594 = vpack.c.bf16 %v5559, %v5553
    %v5595 = vpack.c.bf16 %v5569, %v5563
    %v5596 = vpack.c.bf16 %v5571, %v5565
    %v5597 = vpack.c.bf16 %v5581, %v5575
    %v5598 = vpack.c.bf16 %v5583, %v5577
    %s5599 = scalar_lea.vmem [#allocation9], 896
    %v5600 = vld [vmem:[%s5599] sm:$0xff]
    %v5601 = vld [vmem:[%s5599 + $0x8] sm:$0xff]
    %v5602 = vld [vmem:[%s5599 + $0x10] sm:$0xff]
    %v5603 = vld [vmem:[%s5599 + $0x18] sm:$0xff]
    %v5604 = vld [vmem:[%s5599 + $0x20] sm:$0xff]
    %v5605 = vld [vmem:[%s5599 + $0x28] sm:$0xff]
    %v5606 = vld [vmem:[%s5599 + $0x30] sm:$0xff]
    %v5607 = vld [vmem:[%s5599 + $0x38] sm:$0xff]
    %v5608 = vld [vmem:[%s5599 + $0x40] sm:$0xff]
    %v5609 = vld [vmem:[%s5599 + $0x48] sm:$0xff]
    %v5610 = vld [vmem:[%s5599 + $0x50] sm:$0xff]
    %v5611 = vld [vmem:[%s5599 + $0x58] sm:$0xff]
    %v5612 = vld [vmem:[%s5599 + $0x60] sm:$0xff]
    %v5613 = vld [vmem:[%s5599 + $0x68] sm:$0xff]
    %v5614 = vld [vmem:[%s5599 + $0x70] sm:$0xff]
    %v5615 = vld [vmem:[%s5599 + $0x78] sm:$0xff]
    %v5616 = vld [vmem:[%s5599 + $0x80] sm:$0xff]
    %v5617 = vld [vmem:[%s5599 + $0x88] sm:$0xff]
    %v5618 = vld [vmem:[%s5599 + $0x90] sm:$0xff]
    %v5619 = vld [vmem:[%s5599 + $0x98] sm:$0xff]
    %v5620 = vld [vmem:[%s5599 + $0xa0] sm:$0xff]
    %v5621 = vld [vmem:[%s5599 + $0xa8] sm:$0xff]
    %v5622 = vld [vmem:[%s5599 + $0xb0] sm:$0xff]
    %v5623 = vld [vmem:[%s5599 + $0xb8] sm:$0xff]
    %v5624 = vld [vmem:[%s5599 + $0xc0] sm:$0xff]
    %v5625 = vld [vmem:[%s5599 + $0xc8] sm:$0xff]
    %v5626 = vld [vmem:[%s5599 + $0xd0] sm:$0xff]
    %v5627 = vld [vmem:[%s5599 + $0xd8] sm:$0xff]
    %v5628 = vld [vmem:[%s5599 + $0xe0] sm:$0xff]
    %v5629 = vld [vmem:[%s5599 + $0xe8] sm:$0xff]
    %v5630 = vld [vmem:[%s5599 + $0xf0] sm:$0xff]
    %v5631 = vld [vmem:[%s5599 + $0xf8] sm:$0xff]
    %v5632 = vld [vmem:[%s5599 + $0x100] sm:$0xff]
    %v5633 = vld [vmem:[%s5599 + $0x108] sm:$0xff]
    %v5634 = vld [vmem:[%s5599 + $0x110] sm:$0xff]
    %v5635 = vld [vmem:[%s5599 + $0x118] sm:$0xff]
    %v5636 = vld [vmem:[%s5599 + $0x120] sm:$0xff]
    %v5637 = vld [vmem:[%s5599 + $0x128] sm:$0xff]
    %v5638 = vld [vmem:[%s5599 + $0x130] sm:$0xff]
    %v5639 = vld [vmem:[%s5599 + $0x138] sm:$0xff]
    %v5640 = vld [vmem:[%s5599 + $0x140] sm:$0xff]
    %v5641 = vld [vmem:[%s5599 + $0x148] sm:$0xff]
    %v5642 = vld [vmem:[%s5599 + $0x150] sm:$0xff]
    %v5643 = vld [vmem:[%s5599 + $0x158] sm:$0xff]
    %v5644 = vld [vmem:[%s5599 + $0x160] sm:$0xff]
    %v5645 = vld [vmem:[%s5599 + $0x168] sm:$0xff]
    %v5646 = vld [vmem:[%s5599 + $0x170] sm:$0xff]
    %v5647 = vld [vmem:[%s5599 + $0x178] sm:$0xff]
    %v5648 = vld [vmem:[%s5599 + $0x180] sm:$0xff]
    %v5649 = vld [vmem:[%s5599 + $0x188] sm:$0xff]
    %v5650 = vld [vmem:[%s5599 + $0x190] sm:$0xff]
    %v5651 = vld [vmem:[%s5599 + $0x198] sm:$0xff]
    %v5652 = vld [vmem:[%s5599 + $0x1a0] sm:$0xff]
    %v5653 = vld [vmem:[%s5599 + $0x1a8] sm:$0xff]
    %v5654 = vld [vmem:[%s5599 + $0x1b0] sm:$0xff]
    %v5655 = vld [vmem:[%s5599 + $0x1b8] sm:$0xff]
    %v5712 = vunpack.c.l.b16 %v5600
    %v5713 = vunpack.c.h.b16 %v5600
    %v5714 = vunpack.c.l.b16 %v5601
    %v5715 = vunpack.c.h.b16 %v5601
    %v5716 = vunpack.c.l.b16 %v5602
    %v5717 = vunpack.c.h.b16 %v5602
    %v5718 = vunpack.c.l.b16 %v5603
    %v5719 = vunpack.c.h.b16 %v5603
    %v5720 = vunpack.c.l.b16 %v5604
    %v5721 = vunpack.c.h.b16 %v5604
    %v5722 = vunpack.c.l.b16 %v5605
    %v5723 = vunpack.c.h.b16 %v5605
    %v5724 = vunpack.c.l.b16 %v5606
    %v5725 = vunpack.c.h.b16 %v5606
    %v5726 = vunpack.c.l.b16 %v5607
    %v5727 = vunpack.c.h.b16 %v5607
    %v5728 = vunpack.c.l.b16 %v5608
    %v5729 = vunpack.c.h.b16 %v5608
    %v5730 = vunpack.c.l.b16 %v5609
    %v5731 = vunpack.c.h.b16 %v5609
    %v5732 = vunpack.c.l.b16 %v5610
    %v5733 = vunpack.c.h.b16 %v5610
    %v5734 = vunpack.c.l.b16 %v5611
    %v5735 = vunpack.c.h.b16 %v5611
    %v5736 = vunpack.c.l.b16 %v5612
    %v5737 = vunpack.c.h.b16 %v5612
    %v5738 = vunpack.c.l.b16 %v5613
    %v5739 = vunpack.c.h.b16 %v5613
    %v5740 = vunpack.c.l.b16 %v5614
    %v5741 = vunpack.c.h.b16 %v5614
    %v5742 = vunpack.c.l.b16 %v5615
    %v5743 = vunpack.c.h.b16 %v5615
    %v5744 = vunpack.c.l.b16 %v5616
    %v5745 = vunpack.c.h.b16 %v5616
    %v5746 = vunpack.c.l.b16 %v5617
    %v5747 = vunpack.c.h.b16 %v5617
    %v5748 = vunpack.c.l.b16 %v5618
    %v5749 = vunpack.c.h.b16 %v5618
    %v5750 = vunpack.c.l.b16 %v5619
    %v5751 = vunpack.c.h.b16 %v5619
    %v5752 = vunpack.c.l.b16 %v5620
    %v5753 = vunpack.c.h.b16 %v5620
    %v5754 = vunpack.c.l.b16 %v5621
    %v5755 = vunpack.c.h.b16 %v5621
    %v5756 = vunpack.c.l.b16 %v5622
    %v5757 = vunpack.c.h.b16 %v5622
    %v5758 = vunpack.c.l.b16 %v5623
    %v5759 = vunpack.c.h.b16 %v5623
    %v5760 = vunpack.c.l.b16 %v5624
    %v5761 = vunpack.c.h.b16 %v5624
    %v5762 = vunpack.c.l.b16 %v5625
    %v5763 = vunpack.c.h.b16 %v5625
    %v5764 = vunpack.c.l.b16 %v5626
    %v5765 = vunpack.c.h.b16 %v5626
    %v5766 = vunpack.c.l.b16 %v5627
    %v5767 = vunpack.c.h.b16 %v5627
    %v5768 = vunpack.c.l.b16 %v5628
    %v5769 = vunpack.c.h.b16 %v5628
    %v5770 = vunpack.c.l.b16 %v5629
    %v5771 = vunpack.c.h.b16 %v5629
    %v5772 = vunpack.c.l.b16 %v5630
    %v5773 = vunpack.c.h.b16 %v5630
    %v5774 = vunpack.c.l.b16 %v5631
    %v5775 = vunpack.c.h.b16 %v5631
    %v5776 = vunpack.c.l.b16 %v5632
    %v5777 = vunpack.c.h.b16 %v5632
    %v5778 = vunpack.c.l.b16 %v5633
    %v5779 = vunpack.c.h.b16 %v5633
    %v5780 = vunpack.c.l.b16 %v5634
    %v5781 = vunpack.c.h.b16 %v5634
    %v5782 = vunpack.c.l.b16 %v5635
    %v5783 = vunpack.c.h.b16 %v5635
    %v5784 = vunpack.c.l.b16 %v5636
    %v5785 = vunpack.c.h.b16 %v5636
    %v5786 = vunpack.c.l.b16 %v5637
    %v5787 = vunpack.c.h.b16 %v5637
    %v5788 = vunpack.c.l.b16 %v5638
    %v5789 = vunpack.c.h.b16 %v5638
    %v5790 = vunpack.c.l.b16 %v5639
    %v5791 = vunpack.c.h.b16 %v5639
    %v5792 = vunpack.c.l.b16 %v5640
    %v5793 = vunpack.c.h.b16 %v5640
    %v5794 = vunpack.c.l.b16 %v5641
    %v5795 = vunpack.c.h.b16 %v5641
    %v5796 = vunpack.c.l.b16 %v5642
    %v5797 = vunpack.c.h.b16 %v5642
    %v5798 = vunpack.c.l.b16 %v5643
    %v5799 = vunpack.c.h.b16 %v5643
    %v5800 = vunpack.c.l.b16 %v5644
    %v5801 = vunpack.c.h.b16 %v5644
    %v5802 = vunpack.c.l.b16 %v5645
    %v5803 = vunpack.c.h.b16 %v5645
    %v5804 = vunpack.c.l.b16 %v5646
    %v5805 = vunpack.c.h.b16 %v5646
    %v5806 = vunpack.c.l.b16 %v5647
    %v5807 = vunpack.c.h.b16 %v5647
    %v5808 = vunpack.c.l.b16 %v5648
    %v5809 = vunpack.c.h.b16 %v5648
    %v5810 = vunpack.c.l.b16 %v5649
    %v5811 = vunpack.c.h.b16 %v5649
    %v5812 = vunpack.c.l.b16 %v5650
    %v5813 = vunpack.c.h.b16 %v5650
    %v5814 = vunpack.c.l.b16 %v5651
    %v5815 = vunpack.c.h.b16 %v5651
    %v5816 = vunpack.c.l.b16 %v5652
    %v5817 = vunpack.c.h.b16 %v5652
    %v5818 = vunpack.c.l.b16 %v5653
    %v5819 = vunpack.c.h.b16 %v5653
    %v5820 = vunpack.c.l.b16 %v5654
    %v5821 = vunpack.c.h.b16 %v5654
    %v5822 = vunpack.c.l.b16 %v5655
    %v5823 = vunpack.c.h.b16 %v5655
    %v5824 = vpack.c.b16 %v5716, %v5712
    %v5825 = vpack.c.b16 %v5717, %v5713
    %v5826 = vpack.c.b16 %v5718, %v5714
    %v5827 = vpack.c.b16 %v5719, %v5715
    %v5828 = vpack.c.b16 %v5724, %v5720
    %v5829 = vpack.c.b16 %v5725, %v5721
    %v5830 = vpack.c.b16 %v5726, %v5722
    %v5831 = vpack.c.b16 %v5727, %v5723
    %v5832 = vpack.c.b16 %v5732, %v5728
    %v5833 = vpack.c.b16 %v5733, %v5729
    %v5834 = vpack.c.b16 %v5734, %v5730
    %v5835 = vpack.c.b16 %v5735, %v5731
    %v5836 = vpack.c.b16 %v5740, %v5736
    %v5837 = vpack.c.b16 %v5741, %v5737
    %v5838 = vpack.c.b16 %v5742, %v5738
    %v5839 = vpack.c.b16 %v5743, %v5739
    %v5840 = vpack.c.b16 %v5748, %v5744
    %v5841 = vpack.c.b16 %v5749, %v5745
    %v5842 = vpack.c.b16 %v5750, %v5746
    %v5843 = vpack.c.b16 %v5751, %v5747
    %v5844 = vpack.c.b16 %v5756, %v5752
    %v5845 = vpack.c.b16 %v5757, %v5753
    %v5846 = vpack.c.b16 %v5758, %v5754
    %v5847 = vpack.c.b16 %v5759, %v5755
    %v5848 = vpack.c.b16 %v5764, %v5760
    %v5849 = vpack.c.b16 %v5765, %v5761
    %v5850 = vpack.c.b16 %v5766, %v5762
    %v5851 = vpack.c.b16 %v5767, %v5763
    %v5852 = vpack.c.b16 %v5772, %v5768
    %v5853 = vpack.c.b16 %v5773, %v5769
    %v5854 = vpack.c.b16 %v5774, %v5770
    %v5855 = vpack.c.b16 %v5775, %v5771
    %v5856 = vpack.c.b16 %v5780, %v5776
    %v5857 = vpack.c.b16 %v5781, %v5777
    %v5858 = vpack.c.b16 %v5782, %v5778
    %v5859 = vpack.c.b16 %v5783, %v5779
    %v5860 = vpack.c.b16 %v5788, %v5784
    %v5861 = vpack.c.b16 %v5789, %v5785
    %v5862 = vpack.c.b16 %v5790, %v5786
    %v5863 = vpack.c.b16 %v5791, %v5787
    %v5864 = vpack.c.b16 %v5796, %v5792
    %v5865 = vpack.c.b16 %v5797, %v5793
    %v5866 = vpack.c.b16 %v5798, %v5794
    %v5867 = vpack.c.b16 %v5799, %v5795
    %v5868 = vpack.c.b16 %v5804, %v5800
    %v5869 = vpack.c.b16 %v5805, %v5801
    %v5870 = vpack.c.b16 %v5806, %v5802
    %v5871 = vpack.c.b16 %v5807, %v5803
    %v5872 = vpack.c.b16 %v5812, %v5808
    %v5873 = vpack.c.b16 %v5813, %v5809
    %v5874 = vpack.c.b16 %v5814, %v5810
    %v5875 = vpack.c.b16 %v5815, %v5811
    %v5876 = vpack.c.b16 %v5820, %v5816
    %v5877 = vpack.c.b16 %v5821, %v5817
    %v5878 = vpack.c.b16 %v5822, %v5818
    %v5879 = vpack.c.b16 %v5823, %v5819
    %v5937 = vsel %vm273, %v5586, 0
    %v5940 = vsel %vm273, %v5588, 0
    %v5943 = vsel %vm273, %v5590, 0
    %v5946 = vsel %vm273, %v5592, 0
    %v5949 = vsel %vm273, %v5594, 0
    %v5952 = vsel %vm273, %v5596, 0
    %v5955 = vsel %vm273, %v5598, 0
    %5957 = vmatprep.subr.bf16.mxu0 %v5825
    %5958 = vmatpush1.bf16.msra.mxu0 %v5824
    %5959 = vmatprep.subr.bf16.mxu0 %v5829
    %5960 = vmatpush1.bf16.msra.mxu0 %v5828
    %5961 = vmatprep.subr.bf16.mxu0 %v5833
    %5962 = vmatpush1.bf16.msra.mxu0 %v5832
    %5963 = vmatprep.subr.bf16.mxu0 %v5837
    %5964 = vmatpush1.bf16.msra.mxu0 %v5836
    %5965 = vmatprep.subr.bf16.mxu0 %v5841
    %5966 = vmatpush1.bf16.msra.mxu0 %v5840
    %5967 = vmatprep.subr.bf16.mxu0 %v5845
    %5968 = vmatpush1.bf16.msra.mxu0 %v5844
    %5969 = vmatprep.subr.bf16.mxu0 %v5849
    %5970 = vmatpush1.bf16.msra.mxu0 %v5848
    %5971 = vmatprep.subr.bf16.mxu0 %v5853
    %5972 = vmatpush1.bf16.msra.mxu0 %v5852
    %5973 = vmatprep.subr.bf16.mxu0 %v5857
    %5974 = vmatpush1.bf16.msra.mxu0 %v5856
    %5975 = vmatprep.subr.bf16.mxu0 %v5861
    %5976 = vmatpush1.bf16.msra.mxu0 %v5860
    %5977 = vmatprep.subr.bf16.mxu0 %v5865
    %5978 = vmatpush1.bf16.msra.mxu0 %v5864
    %5979 = vmatprep.subr.bf16.mxu0 %v5869
    %5980 = vmatpush1.bf16.msra.mxu0 %v5868
    %5981 = vmatprep.subr.bf16.mxu0 %v5873
    %5982 = vmatpush1.bf16.msra.mxu0 %v5872
    %5983 = vmatprep.subr.bf16.mxu0 %v5877
    %5984 = vmatpush1.bf16.msra.mxu0 %v5876
    %5985 = vmatprep.subr.bf16.mxu0 0
    %5986 = vmatpush1.bf16.msra.mxu0 0
    %5987 = vmatprep.subr.bf16.mxu0 0
    %5988 = vmatpush1.bf16.msra.mxu0 0
    %5989 = vmatprep.mubr.bf16.mxu0 %v5937
    %5990 = vmatmul.mubr.bf16.gmra.mrb[0].mxu0 %v5585
    %v5991 = vpop.f32.mrb[0].mxu0
    %v5992 = vadd.f32 0.0, %v5991
    %v5993 = vpop.f32.mrb[0].mxu0
    %v5994 = vadd.f32 0.0, %v5993
    %v5995 = vpop.f32.mrb[0].mxu0
    %v5996 = vadd.f32 0.0, %v5995
    %v5997 = vpop.f32.mrb[0].mxu0
    %v5998 = vadd.f32 0.0, %v5997
    %5999 = vmatprep.mubr.bf16.mxu0 %v5940
    %6000 = vmatmul.mubr.bf16.gmra.mrb[0].mxu0 %v5587
    %v6001 = vpop.f32.mrb[0].mxu0
    %v6002 = vadd.f32 0.0, %v6001
    %v6003 = vpop.f32.mrb[0].mxu0
    %v6004 = vadd.f32 0.0, %v6003
    %v6005 = vpop.f32.mrb[0].mxu0
    %v6006 = vadd.f32 0.0, %v6005
    %v6007 = vpop.f32.mrb[0].mxu0
    %v6008 = vadd.f32 0.0, %v6007
    %6009 = vmatprep.mubr.bf16.mxu0 %v5943
    %6010 = vmatmul.mubr.bf16.gmra.mrb[0].mxu0 %v5589
    %v6011 = vpop.f32.mrb[0].mxu0
    %v6012 = vadd.f32 0.0, %v6011
    %v6013 = vpop.f32.mrb[0].mxu0
    %v6014 = vadd.f32 0.0, %v6013
    %v6015 = vpop.f32.mrb[0].mxu0
    %v6016 = vadd.f32 0.0, %v6015
    %v6017 = vpop.f32.mrb[0].mxu0
    %v6018 = vadd.f32 0.0, %v6017
    %6019 = vmatprep.mubr.bf16.mxu0 %v5946
    %6020 = vmatmul.mubr.bf16.gmra.mrb[0].mxu0 %v5591
    %v6021 = vpop.f32.mrb[0].mxu0
    %v6022 = vadd.f32 0.0, %v6021
    %v6023 = vpop.f32.mrb[0].mxu0
    %v6024 = vadd.f32 0.0, %v6023
    %v6025 = vpop.f32.mrb[0].mxu0
    %v6026 = vadd.f32 0.0, %v6025
    %v6027 = vpop.f32.mrb[0].mxu0
    %v6028 = vadd.f32 0.0, %v6027
    %6029 = vmatprep.mubr.bf16.mxu0 %v5949
    %6030 = vmatmul.mubr.bf16.gmra.mrb[0].mxu0 %v5593
    %v6031 = vpop.f32.mrb[0].mxu0
    %v6032 = vadd.f32 0.0, %v6031
    %v6033 = vpop.f32.mrb[0].mxu0
    %v6034 = vadd.f32 0.0, %v6033
    %v6035 = vpop.f32.mrb[0].mxu0
    %v6036 = vadd.f32 0.0, %v6035
    %v6037 = vpop.f32.mrb[0].mxu0
    %v6038 = vadd.f32 0.0, %v6037
    %6039 = vmatprep.mubr.bf16.mxu0 %v5952
    %6040 = vmatmul.mubr.bf16.gmra.mrb[0].mxu0 %v5595
    %v6041 = vpop.f32.mrb[0].mxu0
    %v6042 = vadd.f32 0.0, %v6041
    %v6043 = vpop.f32.mrb[0].mxu0
    %v6044 = vadd.f32 0.0, %v6043
    %v6045 = vpop.f32.mrb[0].mxu0
    %v6046 = vadd.f32 0.0, %v6045
    %v6047 = vpop.f32.mrb[0].mxu0
    %v6048 = vadd.f32 0.0, %v6047
    %6049 = vmatprep.mubr.bf16.mxu0 %v5955
    %6050 = vmatmul.mubr.bf16.gmra.mrb[0].mxu0 %v5597
    %v6051 = vpop.f32.mrb[0].mxu0
    %v6052 = vadd.f32 0.0, %v6051
    %v6053 = vpop.f32.mrb[0].mxu0
    %v6054 = vadd.f32 0.0, %v6053
    %v6055 = vpop.f32.mrb[0].mxu0
    %v6056 = vadd.f32 0.0, %v6055
    %v6057 = vpop.f32.mrb[0].mxu0
    %v6058 = vadd.f32 0.0, %v6057
    %6059 = vdwg.mxu0
    %6060 = vmatprep.subr.bf16.mxu0 %v5827
    %6061 = vmatpush1.bf16.msra.mxu0 %v5826
    %6062 = vmatprep.subr.bf16.mxu0 %v5831
    %6063 = vmatpush1.bf16.msra.mxu0 %v5830
    %6064 = vmatprep.subr.bf16.mxu0 %v5835
    %6065 = vmatpush1.bf16.msra.mxu0 %v5834
    %6066 = vmatprep.subr.bf16.mxu0 %v5839
    %6067 = vmatpush1.bf16.msra.mxu0 %v5838
    %6068 = vmatprep.subr.bf16.mxu0 %v5843
    %6069 = vmatpush1.bf16.msra.mxu0 %v5842
    %6070 = vmatprep.subr.bf16.mxu0 %v5847
    %6071 = vmatpush1.bf16.msra.mxu0 %v5846
    %6072 = vmatprep.subr.bf16.mxu0 %v5851
    %6073 = vmatpush1.bf16.msra.mxu0 %v5850
    %6074 = vmatprep.subr.bf16.mxu0 %v5855
    %6075 = vmatpush1.bf16.msra.mxu0 %v5854
    %6076 = vmatprep.subr.bf16.mxu0 %v5859
    %6077 = vmatpush1.bf16.msra.mxu0 %v5858
    %6078 = vmatprep.subr.bf16.mxu0 %v5863
    %6079 = vmatpush1.bf16.msra.mxu0 %v5862
    %6080 = vmatprep.subr.bf16.mxu0 %v5867
    %6081 = vmatpush1.bf16.msra.mxu0 %v5866
    %6082 = vmatprep.subr.bf16.mxu0 %v5871
    %6083 = vmatpush1.bf16.msra.mxu0 %v5870
    %6084 = vmatprep.subr.bf16.mxu0 %v5875
    %6085 = vmatpush1.bf16.msra.mxu0 %v5874
    %6086 = vmatprep.subr.bf16.mxu0 %v5879
    %6087 = vmatpush1.bf16.msra.mxu0 %v5878
    %6088 = vmatprep.subr.bf16.mxu0 0
    %6089 = vmatpush1.bf16.msra.mxu0 0
    %6090 = vmatprep.subr.bf16.mxu0 0
    %6091 = vmatpush1.bf16.msra.mxu0 0
    %6092 = vmatprep.mubr.bf16.mxu0 %v5937
    %6093 = vmatmul.mubr.bf16.gmra.mrb[0].mxu0 %v5585
    %v6094 = vpop.f32.mrb[0].mxu0
    %v6095 = vadd.f32 0.0, %v6094
    %v6096 = vpop.f32.mrb[0].mxu0
    %v6097 = vadd.f32 0.0, %v6096
    %v6098 = vpop.f32.mrb[0].mxu0
    %v6099 = vadd.f32 0.0, %v6098
    %v6100 = vpop.f32.mrb[0].mxu0
    %v6101 = vadd.f32 0.0, %v6100
    %6102 = vmatprep.mubr.bf16.mxu0 %v5940
    %6103 = vmatmul.mubr.bf16.gmra.mrb[0].mxu0 %v5587
    %v6104 = vpop.f32.mrb[0].mxu0
    %v6105 = vadd.f32 0.0, %v6104
    %v6106 = vpop.f32.mrb[0].mxu0
    %v6107 = vadd.f32 0.0, %v6106
    %v6108 = vpop.f32.mrb[0].mxu0
    %v6109 = vadd.f32 0.0, %v6108
    %v6110 = vpop.f32.mrb[0].mxu0
    %v6111 = vadd.f32 0.0, %v6110
    %6112 = vmatprep.mubr.bf16.mxu0 %v5943
    %6113 = vmatmul.mubr.bf16.gmra.mrb[0].mxu0 %v5589
    %v6114 = vpop.f32.mrb[0].mxu0
    %v6115 = vadd.f32 0.0, %v6114
    %v6116 = vpop.f32.mrb[0].mxu0
    %v6117 = vadd.f32 0.0, %v6116
    %v6118 = vpop.f32.mrb[0].mxu0
    %v6119 = vadd.f32 0.0, %v6118
    %v6120 = vpop.f32.mrb[0].mxu0
    %v6121 = vadd.f32 0.0, %v6120
    %6122 = vmatprep.mubr.bf16.mxu0 %v5946
    %6123 = vmatmul.mubr.bf16.gmra.mrb[0].mxu0 %v5591
    %v6124 = vpop.f32.mrb[0].mxu0
    %v6125 = vadd.f32 0.0, %v6124
    %v6126 = vpop.f32.mrb[0].mxu0
    %v6127 = vadd.f32 0.0, %v6126
    %v6128 = vpop.f32.mrb[0].mxu0
    %v6129 = vadd.f32 0.0, %v6128
    %v6130 = vpop.f32.mrb[0].mxu0
    %v6131 = vadd.f32 0.0, %v6130
    %6132 = vmatprep.mubr.bf16.mxu0 %v5949
    %6133 = vmatmul.mubr.bf16.gmra.mrb[0].mxu0 %v5593
    %v6134 = vpop.f32.mrb[0].mxu0
    %v6135 = vadd.f32 0.0, %v6134
    %v6136 = vpop.f32.mrb[0].mxu0
    %v6137 = vadd.f32 0.0, %v6136
    %v6138 = vpop.f32.mrb[0].mxu0
    %v6139 = vadd.f32 0.0, %v6138
    %v6140 = vpop.f32.mrb[0].mxu0
    %v6141 = vadd.f32 0.0, %v6140
    %6142 = vmatprep.mubr.bf16.mxu0 %v5952
    %6143 = vmatmul.mubr.bf16.gmra.mrb[0].mxu0 %v5595
    %v6144 = vpop.f32.mrb[0].mxu0
    %v6145 = vadd.f32 0.0, %v6144
    %v6146 = vpop.f32.mrb[0].mxu0
    %v6147 = vadd.f32 0.0, %v6146
    %v6148 = vpop.f32.mrb[0].mxu0
    %v6149 = vadd.f32 0.0, %v6148
    %v6150 = vpop.f32.mrb[0].mxu0
    %v6151 = vadd.f32 0.0, %v6150
    %6152 = vmatprep.mubr.bf16.mxu0 %v5955
    %6153 = vmatmul.mubr.bf16.gmra.mrb[0].mxu0 %v5597
    %v6154 = vpop.f32.mrb[0].mxu0
    %v6155 = vadd.f32 0.0, %v6154
    %v6156 = vpop.f32.mrb[0].mxu0
    %v6157 = vadd.f32 0.0, %v6156
    %v6158 = vpop.f32.mrb[0].mxu0
    %v6159 = vadd.f32 0.0, %v6158
    %v6160 = vpop.f32.mrb[0].mxu0
    %v6161 = vadd.f32 0.0, %v6160
    %6162 = vdwg.mxu0
    %v6163 = vadd.f32 %v5208, %v5992
    %v6164 = vadd.f32 %v5210, %v5994
    %v6165 = vadd.f32 %v5311, %v6095
    %v6166 = vadd.f32 %v5313, %v6097
    %v6167 = vadd.f32 %v5212, %v5996
    %v6168 = vadd.f32 %v5214, %v5998
    %v6169 = vadd.f32 %v5315, %v6099
    %v6170 = vadd.f32 %v5317, %v6101
    %v6171 = vadd.f32 %v5218, %v6002
    %v6172 = vadd.f32 %v5220, %v6004
    %v6173 = vadd.f32 %v5321, %v6105
    %v6174 = vadd.f32 %v5323, %v6107
    %v6175 = vadd.f32 %v5222, %v6006
    %v6176 = vadd.f32 %v5224, %v6008
    %v6177 = vadd.f32 %v5325, %v6109
    %v6178 = vadd.f32 %v5327, %v6111
    %v6179 = vadd.f32 %v5228, %v6012
    %v6180 = vadd.f32 %v5230, %v6014
    %v6181 = vadd.f32 %v5331, %v6115
    %v6182 = vadd.f32 %v5333, %v6117
    %v6183 = vadd.f32 %v5232, %v6016
    %v6184 = vadd.f32 %v5234, %v6018
    %v6185 = vadd.f32 %v5335, %v6119
    %v6186 = vadd.f32 %v5337, %v6121
    %v6187 = vadd.f32 %v5238, %v6022
    %v6188 = vadd.f32 %v5240, %v6024
    %v6189 = vadd.f32 %v5341, %v6125
    %v6190 = vadd.f32 %v5343, %v6127
    %v6191 = vadd.f32 %v5242, %v6026
    %v6192 = vadd.f32 %v5244, %v6028
    %v6193 = vadd.f32 %v5345, %v6129
    %v6194 = vadd.f32 %v5347, %v6131
    %v6195 = vadd.f32 %v5248, %v6032
    %v6196 = vadd.f32 %v5250, %v6034
    %v6197 = vadd.f32 %v5351, %v6135
    %v6198 = vadd.f32 %v5353, %v6137
    %v6199 = vadd.f32 %v5252, %v6036
    %v6200 = vadd.f32 %v5254, %v6038
    %v6201 = vadd.f32 %v5355, %v6139
    %v6202 = vadd.f32 %v5357, %v6141
    %v6203 = vadd.f32 %v5258, %v6042
    %v6204 = vadd.f32 %v5260, %v6044
    %v6205 = vadd.f32 %v5361, %v6145
    %v6206 = vadd.f32 %v5363, %v6147
    %v6207 = vadd.f32 %v5262, %v6046
    %v6208 = vadd.f32 %v5264, %v6048
    %v6209 = vadd.f32 %v5365, %v6149
    %v6210 = vadd.f32 %v5367, %v6151
    %v6211 = vadd.f32 %v5268, %v6052
    %v6212 = vadd.f32 %v5270, %v6054
    %v6213 = vadd.f32 %v5371, %v6155
    %v6214 = vadd.f32 %v5373, %v6157
    %v6215 = vadd.f32 %v5272, %v6056
    %v6216 = vadd.f32 %v5274, %v6058
    %v6217 = vadd.f32 %v5375, %v6159
    %v6218 = vadd.f32 %v5377, %v6161
    %v6219 = vld [vmem:[#allocation10] sm:$0xf]
    %v6221 = vlaneseq
    %v6222 = vshrl.u32 %v6221, 7
    %v6223 = vsub.s32 0, %v6222
    %v6224 = vrot.slane %v6219, %v6223
    %v6225 = vlaneseq
    %v6226 = vshrl.u32 %v6225, 7
    %v6227 = vsub.s32 1, %v6226
    %v6228 = vrot.slane %v6219, %v6227
    %v6229 = vlaneseq
    %v6230 = vshrl.u32 %v6229, 7
    %v6231 = vsub.s32 2, %v6230
    %v6232 = vrot.slane %v6219, %v6231
    %v6233 = vlaneseq
    %v6234 = vshrl.u32 %v6233, 7
    %v6235 = vsub.s32 3, %v6234
    %v6236 = vrot.slane %v6219, %v6235
    %v6241 = vadd.f32 %v6163, %v6224
    %v6242 = vadd.f32 %v6164, %v6228
    %v6243 = vadd.f32 %v6165, %v6232
    %v6244 = vadd.f32 %v6166, %v6236
    %v6245 = vadd.f32 %v6167, %v6224
    %v6246 = vadd.f32 %v6168, %v6228
    %v6247 = vadd.f32 %v6169, %v6232
    %v6248 = vadd.f32 %v6170, %v6236
    %v6249 = vadd.f32 %v6171, %v6224
    %v6250 = vadd.f32 %v6172, %v6228
    %v6251 = vadd.f32 %v6173, %v6232
    %v6252 = vadd.f32 %v6174, %v6236
    %v6253 = vadd.f32 %v6175, %v6224
    %v6254 = vadd.f32 %v6176, %v6228
    %v6255 = vadd.f32 %v6177, %v6232
    %v6256 = vadd.f32 %v6178, %v6236
    %v6257 = vadd.f32 %v6179, %v6224
    %v6258 = vadd.f32 %v6180, %v6228
    %v6259 = vadd.f32 %v6181, %v6232
    %v6260 = vadd.f32 %v6182, %v6236
    %v6261 = vadd.f32 %v6183, %v6224
    %v6262 = vadd.f32 %v6184, %v6228
    %v6263 = vadd.f32 %v6185, %v6232
    %v6264 = vadd.f32 %v6186, %v6236
    %v6265 = vadd.f32 %v6187, %v6224
    %v6266 = vadd.f32 %v6188, %v6228
    %v6267 = vadd.f32 %v6189, %v6232
    %v6268 = vadd.f32 %v6190, %v6236
    %v6269 = vadd.f32 %v6191, %v6224
    %v6270 = vadd.f32 %v6192, %v6228
    %v6271 = vadd.f32 %v6193, %v6232
    %v6272 = vadd.f32 %v6194, %v6236
    %v6273 = vadd.f32 %v6195, %v6224
    %v6274 = vadd.f32 %v6196, %v6228
    %v6275 = vadd.f32 %v6197, %v6232
    %v6276 = vadd.f32 %v6198, %v6236
    %v6277 = vadd.f32 %v6199, %v6224
    %v6278 = vadd.f32 %v6200, %v6228
    %v6279 = vadd.f32 %v6201, %v6232
    %v6280 = vadd.f32 %v6202, %v6236
    %v6281 = vadd.f32 %v6203, %v6224
    %v6282 = vadd.f32 %v6204, %v6228
    %v6283 = vadd.f32 %v6205, %v6232
    %v6284 = vadd.f32 %v6206, %v6236
    %v6285 = vadd.f32 %v6207, %v6224
    %v6286 = vadd.f32 %v6208, %v6228
    %v6287 = vadd.f32 %v6209, %v6232
    %v6288 = vadd.f32 %v6210, %v6236
    %v6289 = vadd.f32 %v6211, %v6224
    %v6290 = vadd.f32 %v6212, %v6228
    %v6291 = vadd.f32 %v6213, %v6232
    %v6292 = vadd.f32 %v6214, %v6236
    %v6293 = vadd.f32 %v6215, %v6224
    %v6294 = vadd.f32 %v6216, %v6228
    %v6295 = vadd.f32 %v6217, %v6232
    %v6296 = vadd.f32 %v6218, %v6236
    %v6297 = vmax.f32 %v6241, 0.0
    %v6298 = vmax.f32 %v6242, 0.0
    %v6299 = vmax.f32 %v6243, 0.0
    %v6300 = vmax.f32 %v6244, 0.0
    %v6301 = vmax.f32 %v6245, 0.0
    %v6302 = vmax.f32 %v6246, 0.0
    %v6303 = vmax.f32 %v6247, 0.0
    %v6304 = vmax.f32 %v6248, 0.0
    %v6305 = vmax.f32 %v6249, 0.0
    %v6306 = vmax.f32 %v6250, 0.0
    %v6307 = vmax.f32 %v6251, 0.0
    %v6308 = vmax.f32 %v6252, 0.0
    %v6309 = vmax.f32 %v6253, 0.0
    %v6310 = vmax.f32 %v6254, 0.0
    %v6311 = vmax.f32 %v6255, 0.0
    %v6312 = vmax.f32 %v6256, 0.0
    %v6313 = vmax.f32 %v6257, 0.0
    %v6314 = vmax.f32 %v6258, 0.0
    %v6315 = vmax.f32 %v6259, 0.0
    %v6316 = vmax.f32 %v6260, 0.0
    %v6317 = vmax.f32 %v6261, 0.0
    %v6318 = vmax.f32 %v6262, 0.0
    %v6319 = vmax.f32 %v6263, 0.0
    %v6320 = vmax.f32 %v6264, 0.0
    %v6321 = vmax.f32 %v6265, 0.0
    %v6322 = vmax.f32 %v6266, 0.0
    %v6323 = vmax.f32 %v6267, 0.0
    %v6324 = vmax.f32 %v6268, 0.0
    %v6325 = vmax.f32 %v6269, 0.0
    %v6326 = vmax.f32 %v6270, 0.0
    %v6327 = vmax.f32 %v6271, 0.0
    %v6328 = vmax.f32 %v6272, 0.0
    %v6329 = vmax.f32 %v6273, 0.0
    %v6330 = vmax.f32 %v6274, 0.0
    %v6331 = vmax.f32 %v6275, 0.0
    %v6332 = vmax.f32 %v6276, 0.0
    %v6333 = vmax.f32 %v6277, 0.0
    %v6334 = vmax.f32 %v6278, 0.0
    %v6335 = vmax.f32 %v6279, 0.0
    %v6336 = vmax.f32 %v6280, 0.0
    %v6337 = vmax.f32 %v6281, 0.0
    %v6338 = vmax.f32 %v6282, 0.0
    %v6339 = vmax.f32 %v6283, 0.0
    %v6340 = vmax.f32 %v6284, 0.0
    %v6341 = vmax.f32 %v6285, 0.0
    %v6342 = vmax.f32 %v6286, 0.0
    %v6343 = vmax.f32 %v6287, 0.0
    %v6344 = vmax.f32 %v6288, 0.0
    %v6345 = vmax.f32 %v6289, 0.0
    %v6346 = vmax.f32 %v6290, 0.0
    %v6347 = vmax.f32 %v6291, 0.0
    %v6348 = vmax.f32 %v6292, 0.0
    %v6349 = vmax.f32 %v6293, 0.0
    %v6350 = vmax.f32 %v6294, 0.0
    %v6351 = vmax.f32 %v6295, 0.0
    %v6352 = vmax.f32 %v6296, 0.0
    %v6353 = vld [vmem:[%s9] sm:$0xff]
    %v6354 = vld [vmem:[%s9 + $0x8] sm:$0xff]
    %v6355 = vld [vmem:[%s9 + $0x10] sm:$0xff]
    %v6356 = vld [vmem:[%s9 + $0x18] sm:$0xff]
    %v6357 = vld [vmem:[%s9 + $0x20] sm:$0xff]
    %v6358 = vld [vmem:[%s9 + $0x28] sm:$0xff]
    %v6359 = vld [vmem:[%s9 + $0x30] sm:$0xff]
    %v6361 = vsel %vm3826, %v6353, 0
    %v6364 = vsel %vm3826, %v6354, 0
    %v6367 = vsel %vm3826, %v6355, 0
    %v6370 = vsel %vm3826, %v6356, 0
    %v6373 = vsel %vm3826, %v6357, 0
    %v6376 = vsel %vm3826, %v6358, 0
    %v6379 = vsel %vm3826, %v6359, 0
    %6381 = vmatprep.subr.mxu0 %v6298
    %6382 = vmatpush1.msra.mxu0 %v6297
    %6383 = vmatprep.subr.mxu0 %v6302
    %6384 = vmatpush1.msra.mxu0 %v6301
    %6385 = vmatprep.subr.mxu0 %v6306
    %6386 = vmatpush1.msra.mxu0 %v6305
    %6387 = vmatprep.subr.mxu0 %v6310
    %6388 = vmatpush1.msra.mxu0 %v6309
    %6389 = vmatprep.subr.mxu0 %v6314
    %6390 = vmatpush1.msra.mxu0 %v6313
    %6391 = vmatprep.subr.mxu0 %v6318
    %6392 = vmatpush1.msra.mxu0 %v6317
    %6393 = vmatprep.subr.mxu0 %v6322
    %6394 = vmatpush1.msra.mxu0 %v6321
    %6395 = vmatprep.subr.mxu0 %v6326
    %6396 = vmatpush1.msra.mxu0 %v6325
    %6397 = vmatprep.subr.mxu0 %v6330
    %6398 = vmatpush1.msra.mxu0 %v6329
    %6399 = vmatprep.subr.mxu0 %v6334
    %6400 = vmatpush1.msra.mxu0 %v6333
    %6401 = vmatprep.subr.mxu0 %v6338
    %6402 = vmatpush1.msra.mxu0 %v6337
    %6403 = vmatprep.subr.mxu0 %v6342
    %6404 = vmatpush1.msra.mxu0 %v6341
    %6405 = vmatprep.subr.mxu0 %v6346
    %6406 = vmatpush1.msra.mxu0 %v6345
    %6407 = vmatprep.subr.mxu0 %v6350
    %6408 = vmatpush1.msra.mxu0 %v6349
    %6409 = vmatprep.subr.mxu0 0.0
    %6410 = vmatpush1.msra.mxu0 0.0
    %6411 = vmatprep.subr.mxu0 0.0
    %6412 = vmatpush1.msra.mxu0 0.0
    %6413 = vmatprep.subr.mxu0 0.0
    %6414 = vmatpush1.msra.mxu0 0.0
    %6415 = vmatprep.subr.mxu0 0.0
    %6416 = vmatpush1.msra.mxu0 0.0
    %6417 = vmatprep.subr.mxu0 0.0
    %6418 = vmatpush1.msra.mxu0 0.0
    %6419 = vmatprep.subr.mxu0 0.0
    %6420 = vmatpush1.msra.mxu0 0.0
    %6421 = vmatprep.subr.mxu0 0.0
    %6422 = vmatpush1.msra.mxu0 0.0
    %6423 = vmatprep.subr.mxu0 0.0
    %6424 = vmatpush1.msra.mxu0 0.0
    %6425 = vmatprep.subr.mxu0 0.0
    %6426 = vmatpush1.msra.mxu0 0.0
    %6427 = vmatprep.subr.mxu0 0.0
    %6428 = vmatpush1.msra.mxu0 0.0
    %6429 = vmatprep.subr.mxu0 0.0
    %6430 = vmatpush1.msra.mxu0 0.0
    %6431 = vmatprep.subr.mxu0 0.0
    %6432 = vmatpush1.msra.mxu0 0.0
    %6433 = vmatprep.subr.mxu0 0.0
    %6434 = vmatpush1.msra.mxu0 0.0
    %6435 = vmatprep.subr.mxu0 0.0
    %6436 = vmatpush1.msra.mxu0 0.0
    %6437 = vmatprep.subr.mxu0 0.0
    %6438 = vmatpush1.msra.mxu0 0.0
    %6439 = vmatprep.subr.mxu0 0.0
    %6440 = vmatpush1.msra.mxu0 0.0
    %6441 = vmatprep.subr.mxu0 0.0
    %6442 = vmatpush1.msra.mxu0 0.0
    %6443 = vmatprep.subr.mxu0 0.0
    %6444 = vmatpush1.msra.mxu0 0.0
    %6445 = vmatprep.mubr.f32.mxu0 0.0
    %6446 = vmatmul.mubr.f32.gmra.mrb[0].mxu0 %v6361
    %v6447 = vpop.f32.mrb[0].mxu0
    %v6448 = vadd.f32 0.0, %v6447
    %v6449 = vpop.f32.mrb[0].mxu0
    %v6450 = vadd.f32 0.0, %v6449
    %6451 = vmatprep.mubr.f32.mxu0 0.0
    %6452 = vmatmul.mubr.f32.gmra.mrb[0].mxu0 %v6364
    %v6453 = vpop.f32.mrb[0].mxu0
    %v6454 = vadd.f32 0.0, %v6453
    %v6455 = vpop.f32.mrb[0].mxu0
    %v6456 = vadd.f32 0.0, %v6455
    %6457 = vmatprep.mubr.f32.mxu0 0.0
    %6458 = vmatmul.mubr.f32.gmra.mrb[0].mxu0 %v6367
    %v6459 = vpop.f32.mrb[0].mxu0
    %v6460 = vadd.f32 0.0, %v6459
    %v6461 = vpop.f32.mrb[0].mxu0
    %v6462 = vadd.f32 0.0, %v6461
    %6463 = vmatprep.mubr.f32.mxu0 0.0
    %6464 = vmatmul.mubr.f32.gmra.mrb[0].mxu0 %v6370
    %v6465 = vpop.f32.mrb[0].mxu0
    %v6466 = vadd.f32 0.0, %v6465
    %v6467 = vpop.f32.mrb[0].mxu0
    %v6468 = vadd.f32 0.0, %v6467
    %6469 = vmatprep.mubr.f32.mxu0 0.0
    %6470 = vmatmul.mubr.f32.gmra.mrb[0].mxu0 %v6373
    %v6471 = vpop.f32.mrb[0].mxu0
    %v6472 = vadd.f32 0.0, %v6471
    %v6473 = vpop.f32.mrb[0].mxu0
    %v6474 = vadd.f32 0.0, %v6473
    %6475 = vmatprep.mubr.f32.mxu0 0.0
    %6476 = vmatmul.mubr.f32.gmra.mrb[0].mxu0 %v6376
    %v6477 = vpop.f32.mrb[0].mxu0
    %v6478 = vadd.f32 0.0, %v6477
    %v6479 = vpop.f32.mrb[0].mxu0
    %v6480 = vadd.f32 0.0, %v6479
    %6481 = vmatprep.mubr.f32.mxu0 0.0
    %6482 = vmatmul.mubr.f32.gmra.mrb[0].mxu0 %v6379
    %v6483 = vpop.f32.mrb[0].mxu0
    %v6484 = vadd.f32 0.0, %v6483
    %v6485 = vpop.f32.mrb[0].mxu0
    %v6486 = vadd.f32 0.0, %v6485
    %6487 = vdwg.mxu0
    %6488 = vmatprep.subr.mxu0 %v6300
    %6489 = vmatpush1.msra.mxu0 %v6299
    %6490 = vmatprep.subr.mxu0 %v6304
    %6491 = vmatpush1.msra.mxu0 %v6303
    %6492 = vmatprep.subr.mxu0 %v6308
    %6493 = vmatpush1.msra.mxu0 %v6307
    %6494 = vmatprep.subr.mxu0 %v6312
    %6495 = vmatpush1.msra.mxu0 %v6311
    %6496 = vmatprep.subr.mxu0 %v6316
    %6497 = vmatpush1.msra.mxu0 %v6315
    %6498 = vmatprep.subr.mxu0 %v6320
    %6499 = vmatpush1.msra.mxu0 %v6319
    %6500 = vmatprep.subr.mxu0 %v6324
    %6501 = vmatpush1.msra.mxu0 %v6323
    %6502 = vmatprep.subr.mxu0 %v6328
    %6503 = vmatpush1.msra.mxu0 %v6327
    %6504 = vmatprep.subr.mxu0 %v6332
    %6505 = vmatpush1.msra.mxu0 %v6331
    %6506 = vmatprep.subr.mxu0 %v6336
    %6507 = vmatpush1.msra.mxu0 %v6335
    %6508 = vmatprep.subr.mxu0 %v6340
    %6509 = vmatpush1.msra.mxu0 %v6339
    %6510 = vmatprep.subr.mxu0 %v6344
    %6511 = vmatpush1.msra.mxu0 %v6343
    %6512 = vmatprep.subr.mxu0 %v6348
    %6513 = vmatpush1.msra.mxu0 %v6347
    %6514 = vmatprep.subr.mxu0 %v6352
    %6515 = vmatpush1.msra.mxu0 %v6351
    %6516 = vmatprep.subr.mxu0 0.0
    %6517 = vmatpush1.msra.mxu0 0.0
    %6518 = vmatprep.subr.mxu0 0.0
    %6519 = vmatpush1.msra.mxu0 0.0
    %6520 = vmatprep.subr.mxu0 0.0
    %6521 = vmatpush1.msra.mxu0 0.0
    %6522 = vmatprep.subr.mxu0 0.0
    %6523 = vmatpush1.msra.mxu0 0.0
    %6524 = vmatprep.subr.mxu0 0.0
    %6525 = vmatpush1.msra.mxu0 0.0
    %6526 = vmatprep.subr.mxu0 0.0
    %6527 = vmatpush1.msra.mxu0 0.0
    %6528 = vmatprep.subr.mxu0 0.0
    %6529 = vmatpush1.msra.mxu0 0.0
    %6530 = vmatprep.subr.mxu0 0.0
    %6531 = vmatpush1.msra.mxu0 0.0
    %6532 = vmatprep.subr.mxu0 0.0
    %6533 = vmatpush1.msra.mxu0 0.0
    %6534 = vmatprep.subr.mxu0 0.0
    %6535 = vmatpush1.msra.mxu0 0.0
    %6536 = vmatprep.subr.mxu0 0.0
    %6537 = vmatpush1.msra.mxu0 0.0
    %6538 = vmatprep.subr.mxu0 0.0
    %6539 = vmatpush1.msra.mxu0 0.0
    %6540 = vmatprep.subr.mxu0 0.0
    %6541 = vmatpush1.msra.mxu0 0.0
    %6542 = vmatprep.subr.mxu0 0.0
    %6543 = vmatpush1.msra.mxu0 0.0
    %6544 = vmatprep.subr.mxu0 0.0
    %6545 = vmatpush1.msra.mxu0 0.0
    %6546 = vmatprep.subr.mxu0 0.0
    %6547 = vmatpush1.msra.mxu0 0.0
    %6548 = vmatprep.subr.mxu0 0.0
    %6549 = vmatpush1.msra.mxu0 0.0
    %6550 = vmatprep.subr.mxu0 0.0
    %6551 = vmatpush1.msra.mxu0 0.0
    %6552 = vmatprep.mubr.f32.mxu0 0.0
    %6553 = vmatmul.mubr.f32.gmra.mrb[0].mxu0 %v6361
    %v6554 = vpop.f32.mrb[0].mxu0
    %v6555 = vadd.f32 0.0, %v6554
    %v6556 = vpop.f32.mrb[0].mxu0
    %v6557 = vadd.f32 0.0, %v6556
    %6558 = vmatprep.mubr.f32.mxu0 0.0
    %6559 = vmatmul.mubr.f32.gmra.mrb[0].mxu0 %v6364
    %v6560 = vpop.f32.mrb[0].mxu0
    %v6561 = vadd.f32 0.0, %v6560
    %v6562 = vpop.f32.mrb[0].mxu0
    %v6563 = vadd.f32 0.0, %v6562
    %6564 = vmatprep.mubr.f32.mxu0 0.0
    %6565 = vmatmul.mubr.f32.gmra.mrb[0].mxu0 %v6367
    %v6566 = vpop.f32.mrb[0].mxu0
    %v6567 = vadd.f32 0.0, %v6566
    %v6568 = vpop.f32.mrb[0].mxu0
    %v6569 = vadd.f32 0.0, %v6568
    %6570 = vmatprep.mubr.f32.mxu0 0.0
    %6571 = vmatmul.mubr.f32.gmra.mrb[0].mxu0 %v6370
    %v6572 = vpop.f32.mrb[0].mxu0
    %v6573 = vadd.f32 0.0, %v6572
    %v6574 = vpop.f32.mrb[0].mxu0
    %v6575 = vadd.f32 0.0, %v6574
    %6576 = vmatprep.mubr.f32.mxu0 0.0
    %6577 = vmatmul.mubr.f32.gmra.mrb[0].mxu0 %v6373
    %v6578 = vpop.f32.mrb[0].mxu0
    %v6579 = vadd.f32 0.0, %v6578
    %v6580 = vpop.f32.mrb[0].mxu0
    %v6581 = vadd.f32 0.0, %v6580
    %6582 = vmatprep.mubr.f32.mxu0 0.0
    %6583 = vmatmul.mubr.f32.gmra.mrb[0].mxu0 %v6376
    %v6584 = vpop.f32.mrb[0].mxu0
    %v6585 = vadd.f32 0.0, %v6584
    %v6586 = vpop.f32.mrb[0].mxu0
    %v6587 = vadd.f32 0.0, %v6586
    %6588 = vmatprep.mubr.f32.mxu0 0.0
    %6589 = vmatmul.mubr.f32.gmra.mrb[0].mxu0 %v6379
    %v6590 = vpop.f32.mrb[0].mxu0
    %v6591 = vadd.f32 0.0, %v6590
    %v6592 = vpop.f32.mrb[0].mxu0
    %v6593 = vadd.f32 0.0, %v6592
    %6594 = vdwg.mxu0
    %s6595 = scalar_lea.vmem %s9, 56
    %v6596 = vld [vmem:[%s6595] sm:$0xff]
    %v6597 = vld [vmem:[%s6595 + $0x8] sm:$0xff]
    %v6598 = vld [vmem:[%s6595 + $0x10] sm:$0xff]
    %v6599 = vld [vmem:[%s6595 + $0x18] sm:$0xff]
    %v6600 = vld [vmem:[%s6595 + $0x20] sm:$0xff]
    %v6601 = vld [vmem:[%s6595 + $0x28] sm:$0xff]
    %v6602 = vld [vmem:[%s6595 + $0x30] sm:$0xff]
    %v6604 = vsel %vm3826, %v6596, 0
    %v6607 = vsel %vm3826, %v6597, 0
    %v6610 = vsel %vm3826, %v6598, 0
    %v6613 = vsel %vm3826, %v6599, 0
    %v6616 = vsel %vm3826, %v6600, 0
    %v6619 = vsel %vm3826, %v6601, 0
    %v6622 = vsel %vm3826, %v6602, 0
    %6624 = vmatprep.subr.mxu0 %v6298
    %6625 = vmatpush1.msra.mxu0 %v6297
    %6626 = vmatprep.subr.mxu0 %v6302
    %6627 = vmatpush1.msra.mxu0 %v6301
    %6628 = vmatprep.subr.mxu0 %v6306
    %6629 = vmatpush1.msra.mxu0 %v6305
    %6630 = vmatprep.subr.mxu0 %v6310
    %6631 = vmatpush1.msra.mxu0 %v6309
    %6632 = vmatprep.subr.mxu0 %v6314
    %6633 = vmatpush1.msra.mxu0 %v6313
    %6634 = vmatprep.subr.mxu0 %v6318
    %6635 = vmatpush1.msra.mxu0 %v6317
    %6636 = vmatprep.subr.mxu0 %v6322
    %6637 = vmatpush1.msra.mxu0 %v6321
    %6638 = vmatprep.subr.mxu0 %v6326
    %6639 = vmatpush1.msra.mxu0 %v6325
    %6640 = vmatprep.subr.mxu0 %v6330
    %6641 = vmatpush1.msra.mxu0 %v6329
    %6642 = vmatprep.subr.mxu0 %v6334
    %6643 = vmatpush1.msra.mxu0 %v6333
    %6644 = vmatprep.subr.mxu0 %v6338
    %6645 = vmatpush1.msra.mxu0 %v6337
    %6646 = vmatprep.subr.mxu0 %v6342
    %6647 = vmatpush1.msra.mxu0 %v6341
    %6648 = vmatprep.subr.mxu0 %v6346
    %6649 = vmatpush1.msra.mxu0 %v6345
    %6650 = vmatprep.subr.mxu0 %v6350
    %6651 = vmatpush1.msra.mxu0 %v6349
    %6652 = vmatprep.subr.mxu0 0.0
    %6653 = vmatpush1.msra.mxu0 0.0
    %6654 = vmatprep.subr.mxu0 0.0
    %6655 = vmatpush1.msra.mxu0 0.0
    %6656 = vmatprep.subr.mxu0 0.0
    %6657 = vmatpush1.msra.mxu0 0.0
    %6658 = vmatprep.subr.mxu0 0.0
    %6659 = vmatpush1.msra.mxu0 0.0
    %6660 = vmatprep.subr.mxu0 0.0
    %6661 = vmatpush1.msra.mxu0 0.0
    %6662 = vmatprep.subr.mxu0 0.0
    %6663 = vmatpush1.msra.mxu0 0.0
    %6664 = vmatprep.subr.mxu0 0.0
    %6665 = vmatpush1.msra.mxu0 0.0
    %6666 = vmatprep.subr.mxu0 0.0
    %6667 = vmatpush1.msra.mxu0 0.0
    %6668 = vmatprep.subr.mxu0 0.0
    %6669 = vmatpush1.msra.mxu0 0.0
    %6670 = vmatprep.subr.mxu0 0.0
    %6671 = vmatpush1.msra.mxu0 0.0
    %6672 = vmatprep.subr.mxu0 0.0
    %6673 = vmatpush1.msra.mxu0 0.0
    %6674 = vmatprep.subr.mxu0 0.0
    %6675 = vmatpush1.msra.mxu0 0.0
    %6676 = vmatprep.subr.mxu0 0.0
    %6677 = vmatpush1.msra.mxu0 0.0
    %6678 = vmatprep.subr.mxu0 0.0
    %6679 = vmatpush1.msra.mxu0 0.0
    %6680 = vmatprep.subr.mxu0 0.0
    %6681 = vmatpush1.msra.mxu0 0.0
    %6682 = vmatprep.subr.mxu0 0.0
    %6683 = vmatpush1.msra.mxu0 0.0
    %6684 = vmatprep.subr.mxu0 0.0
    %6685 = vmatpush1.msra.mxu0 0.0
    %6686 = vmatprep.subr.mxu0 0.0
    %6687 = vmatpush1.msra.mxu0 0.0
    %6688 = vmatprep.mubr.f32.mxu0 0.0
    %6689 = vmatmul.mubr.f32.gmra.mrb[0].mxu0 %v6604
    %v6690 = vpop.f32.mrb[0].mxu0
    %v6691 = vadd.f32 0.0, %v6690
    %v6692 = vpop.f32.mrb[0].mxu0
    %v6693 = vadd.f32 0.0, %v6692
    %6694 = vmatprep.mubr.f32.mxu0 0.0
    %6695 = vmatmul.mubr.f32.gmra.mrb[0].mxu0 %v6607
    %v6696 = vpop.f32.mrb[0].mxu0
    %v6697 = vadd.f32 0.0, %v6696
    %v6698 = vpop.f32.mrb[0].mxu0
    %v6699 = vadd.f32 0.0, %v6698
    %6700 = vmatprep.mubr.f32.mxu0 0.0
    %6701 = vmatmul.mubr.f32.gmra.mrb[0].mxu0 %v6610
    %v6702 = vpop.f32.mrb[0].mxu0
    %v6703 = vadd.f32 0.0, %v6702
    %v6704 = vpop.f32.mrb[0].mxu0
    %v6705 = vadd.f32 0.0, %v6704
    %6706 = vmatprep.mubr.f32.mxu0 0.0
    %6707 = vmatmul.mubr.f32.gmra.mrb[0].mxu0 %v6613
    %v6708 = vpop.f32.mrb[0].mxu0
    %v6709 = vadd.f32 0.0, %v6708
    %v6710 = vpop.f32.mrb[0].mxu0
    %v6711 = vadd.f32 0.0, %v6710
    %6712 = vmatprep.mubr.f32.mxu0 0.0
    %6713 = vmatmul.mubr.f32.gmra.mrb[0].mxu0 %v6616
    %v6714 = vpop.f32.mrb[0].mxu0
    %v6715 = vadd.f32 0.0, %v6714
    %v6716 = vpop.f32.mrb[0].mxu0
    %v6717 = vadd.f32 0.0, %v6716
    %6718 = vmatprep.mubr.f32.mxu0 0.0
    %6719 = vmatmul.mubr.f32.gmra.mrb[0].mxu0 %v6619
    %v6720 = vpop.f32.mrb[0].mxu0
    %v6721 = vadd.f32 0.0, %v6720
    %v6722 = vpop.f32.mrb[0].mxu0
    %v6723 = vadd.f32 0.0, %v6722
    %6724 = vmatprep.mubr.f32.mxu0 0.0
    %6725 = vmatmul.mubr.f32.gmra.mrb[0].mxu0 %v6622
    %v6726 = vpop.f32.mrb[0].mxu0
    %v6727 = vadd.f32 0.0, %v6726
    %v6728 = vpop.f32.mrb[0].mxu0
    %v6729 = vadd.f32 0.0, %v6728
    %6730 = vdwg.mxu0
    %6731 = vmatprep.subr.mxu0 %v6300
    %6732 = vmatpush1.msra.mxu0 %v6299
    %6733 = vmatprep.subr.mxu0 %v6304
    %6734 = vmatpush1.msra.mxu0 %v6303
    %6735 = vmatprep.subr.mxu0 %v6308
    %6736 = vmatpush1.msra.mxu0 %v6307
    %6737 = vmatprep.subr.mxu0 %v6312
    %6738 = vmatpush1.msra.mxu0 %v6311
    %6739 = vmatprep.subr.mxu0 %v6316
    %6740 = vmatpush1.msra.mxu0 %v6315
    %6741 = vmatprep.subr.mxu0 %v6320
    %6742 = vmatpush1.msra.mxu0 %v6319
    %6743 = vmatprep.subr.mxu0 %v6324
    %6744 = vmatpush1.msra.mxu0 %v6323
    %6745 = vmatprep.subr.mxu0 %v6328
    %6746 = vmatpush1.msra.mxu0 %v6327
    %6747 = vmatprep.subr.mxu0 %v6332
    %6748 = vmatpush1.msra.mxu0 %v6331
    %6749 = vmatprep.subr.mxu0 %v6336
    %6750 = vmatpush1.msra.mxu0 %v6335
    %6751 = vmatprep.subr.mxu0 %v6340
    %6752 = vmatpush1.msra.mxu0 %v6339
    %6753 = vmatprep.subr.mxu0 %v6344
    %6754 = vmatpush1.msra.mxu0 %v6343
    %6755 = vmatprep.subr.mxu0 %v6348
    %6756 = vmatpush1.msra.mxu0 %v6347
    %6757 = vmatprep.subr.mxu0 %v6352
    %6758 = vmatpush1.msra.mxu0 %v6351
    %6759 = vmatprep.subr.mxu0 0.0
    %6760 = vmatpush1.msra.mxu0 0.0
    %6761 = vmatprep.subr.mxu0 0.0
    %6762 = vmatpush1.msra.mxu0 0.0
    %6763 = vmatprep.subr.mxu0 0.0
    %6764 = vmatpush1.msra.mxu0 0.0
    %6765 = vmatprep.subr.mxu0 0.0
    %6766 = vmatpush1.msra.mxu0 0.0
    %6767 = vmatprep.subr.mxu0 0.0
    %6768 = vmatpush1.msra.mxu0 0.0
    %6769 = vmatprep.subr.mxu0 0.0
    %6770 = vmatpush1.msra.mxu0 0.0
    %6771 = vmatprep.subr.mxu0 0.0
    %6772 = vmatpush1.msra.mxu0 0.0
    %6773 = vmatprep.subr.mxu0 0.0
    %6774 = vmatpush1.msra.mxu0 0.0
    %6775 = vmatprep.subr.mxu0 0.0
    %6776 = vmatpush1.msra.mxu0 0.0
    %6777 = vmatprep.subr.mxu0 0.0
    %6778 = vmatpush1.msra.mxu0 0.0
    %6779 = vmatprep.subr.mxu0 0.0
    %6780 = vmatpush1.msra.mxu0 0.0
    %6781 = vmatprep.subr.mxu0 0.0
    %6782 = vmatpush1.msra.mxu0 0.0
    %6783 = vmatprep.subr.mxu0 0.0
    %6784 = vmatpush1.msra.mxu0 0.0
    %6785 = vmatprep.subr.mxu0 0.0
    %6786 = vmatpush1.msra.mxu0 0.0
    %6787 = vmatprep.subr.mxu0 0.0
    %6788 = vmatpush1.msra.mxu0 0.0
    %6789 = vmatprep.subr.mxu0 0.0
    %6790 = vmatpush1.msra.mxu0 0.0
    %6791 = vmatprep.subr.mxu0 0.0
    %6792 = vmatpush1.msra.mxu0 0.0
    %6793 = vmatprep.subr.mxu0 0.0
    %6794 = vmatpush1.msra.mxu0 0.0
    %6795 = vmatprep.mubr.f32.mxu0 0.0
    %6796 = vmatmul.mubr.f32.gmra.mrb[0].mxu0 %v6604
    %v6797 = vpop.f32.mrb[0].mxu0
    %v6798 = vadd.f32 0.0, %v6797
    %v6799 = vpop.f32.mrb[0].mxu0
    %v6800 = vadd.f32 0.0, %v6799
    %6801 = vmatprep.mubr.f32.mxu0 0.0
    %6802 = vmatmul.mubr.f32.gmra.mrb[0].mxu0 %v6607
    %v6803 = vpop.f32.mrb[0].mxu0
    %v6804 = vadd.f32 0.0, %v6803
    %v6805 = vpop.f32.mrb[0].mxu0
    %v6806 = vadd.f32 0.0, %v6805
    %6807 = vmatprep.mubr.f32.mxu0 0.0
    %6808 = vmatmul.mubr.f32.gmra.mrb[0].mxu0 %v6610
    %v6809 = vpop.f32.mrb[0].mxu0
    %v6810 = vadd.f32 0.0, %v6809
    %v6811 = vpop.f32.mrb[0].mxu0
    %v6812 = vadd.f32 0.0, %v6811
    %6813 = vmatprep.mubr.f32.mxu0 0.0
    %6814 = vmatmul.mubr.f32.gmra.mrb[0].mxu0 %v6613
    %v6815 = vpop.f32.mrb[0].mxu0
    %v6816 = vadd.f32 0.0, %v6815
    %v6817 = vpop.f32.mrb[0].mxu0
    %v6818 = vadd.f32 0.0, %v6817
    %6819 = vmatprep.mubr.f32.mxu0 0.0
    %6820 = vmatmul.mubr.f32.gmra.mrb[0].mxu0 %v6616
    %v6821 = vpop.f32.mrb[0].mxu0
    %v6822 = vadd.f32 0.0, %v6821
    %v6823 = vpop.f32.mrb[0].mxu0
    %v6824 = vadd.f32 0.0, %v6823
    %6825 = vmatprep.mubr.f32.mxu0 0.0
    %6826 = vmatmul.mubr.f32.gmra.mrb[0].mxu0 %v6619
    %v6827 = vpop.f32.mrb[0].mxu0
    %v6828 = vadd.f32 0.0, %v6827
    %v6829 = vpop.f32.mrb[0].mxu0
    %v6830 = vadd.f32 0.0, %v6829
    %6831 = vmatprep.mubr.f32.mxu0 0.0
    %6832 = vmatmul.mubr.f32.gmra.mrb[0].mxu0 %v6622
    %v6833 = vpop.f32.mrb[0].mxu0
    %v6834 = vadd.f32 0.0, %v6833
    %v6835 = vpop.f32.mrb[0].mxu0
    %v6836 = vadd.f32 0.0, %v6835
    %6837 = vdwg.mxu0
    %v6838 = vmax.f32 %v6448, %v6691
    %v6839 = vmax.f32 %v6450, %v6693
    %v6840 = vmax.f32 %v6555, %v6798
    %v6841 = vmax.f32 %v6557, %v6800
    %v6842 = vmax.f32 %v6454, %v6697
    %v6843 = vmax.f32 %v6456, %v6699
    %v6844 = vmax.f32 %v6561, %v6804
    %v6845 = vmax.f32 %v6563, %v6806
    %v6846 = vmax.f32 %v6460, %v6703
    %v6847 = vmax.f32 %v6462, %v6705
    %v6848 = vmax.f32 %v6567, %v6810
    %v6849 = vmax.f32 %v6569, %v6812
    %v6850 = vmax.f32 %v6466, %v6709
    %v6851 = vmax.f32 %v6468, %v6711
    %v6852 = vmax.f32 %v6573, %v6816
    %v6853 = vmax.f32 %v6575, %v6818
    %v6854 = vmax.f32 %v6472, %v6715
    %v6855 = vmax.f32 %v6474, %v6717
    %v6856 = vmax.f32 %v6579, %v6822
    %v6857 = vmax.f32 %v6581, %v6824
    %v6858 = vmax.f32 %v6478, %v6721
    %v6859 = vmax.f32 %v6480, %v6723
    %v6860 = vmax.f32 %v6585, %v6828
    %v6861 = vmax.f32 %v6587, %v6830
    %v6862 = vmax.f32 %v6484, %v6727
    %v6863 = vmax.f32 %v6486, %v6729
    %v6864 = vmax.f32 %v6591, %v6834
    %v6865 = vmax.f32 %v6593, %v6836
    %v6866 = vld [vmem:[#allocation12] sm:$0xff]
    %v6867 = vld [vmem:[#allocation12 + $0x8] sm:$0xff]
    %v6868 = vld [vmem:[#allocation12 + $0x10] sm:$0xff]
    %v6869 = vld [vmem:[#allocation12 + $0x18] sm:$0xff]
    %v6870 = vld [vmem:[#allocation12 + $0x20] sm:$0xff]
    %v6871 = vld [vmem:[#allocation12 + $0x28] sm:$0xff]
    %v6872 = vld [vmem:[#allocation12 + $0x30] sm:$0xff]
    %v6873 = vld [vmem:[#allocation12 + $0x38] sm:$0xff]
    %v6874 = vld [vmem:[#allocation12 + $0x40] sm:$0xff]
    %v6875 = vld [vmem:[#allocation12 + $0x48] sm:$0xff]
    %v6876 = vld [vmem:[#allocation12 + $0x50] sm:$0xff]
    %v6877 = vld [vmem:[#allocation12 + $0x58] sm:$0xff]
    %v6878 = vld [vmem:[#allocation12 + $0x60] sm:$0xff]
    %v6879 = vld [vmem:[#allocation12 + $0x68] sm:$0xff]
    %v6880 = vld [vmem:[#allocation12 + $0x70] sm:$0xff]
    %v6881 = vld [vmem:[#allocation12 + $0x78] sm:$0xff]
    %v6882 = vld [vmem:[#allocation12 + $0x80] sm:$0xff]
    %v6883 = vld [vmem:[#allocation12 + $0x88] sm:$0xff]
    %v6884 = vld [vmem:[#allocation12 + $0x90] sm:$0xff]
    %v6885 = vld [vmem:[#allocation12 + $0x98] sm:$0xff]
    %v6886 = vld [vmem:[#allocation12 + $0xa0] sm:$0xff]
    %v6887 = vld [vmem:[#allocation12 + $0xa8] sm:$0xff]
    %v6888 = vld [vmem:[#allocation12 + $0xb0] sm:$0xff]
    %v6889 = vld [vmem:[#allocation12 + $0xb8] sm:$0xff]
    %v6890 = vld [vmem:[#allocation12 + $0xc0] sm:$0xff]
    %v6891 = vld [vmem:[#allocation12 + $0xc8] sm:$0xff]
    %v6892 = vld [vmem:[#allocation12 + $0xd0] sm:$0xff]
    %v6893 = vld [vmem:[#allocation12 + $0xd8] sm:$0xff]
    %v6894 = vld [vmem:[#allocation12 + $0xe0] sm:$0xff]
    %v6895 = vld [vmem:[#allocation12 + $0xe8] sm:$0xff]
    %v6896 = vld [vmem:[#allocation12 + $0xf0] sm:$0xff]
    %v6897 = vld [vmem:[#allocation12 + $0xf8] sm:$0xff]
    %v6898 = vld [vmem:[#allocation12 + $0x100] sm:$0xff]
    %v6899 = vld [vmem:[#allocation12 + $0x108] sm:$0xff]
    %v6900 = vld [vmem:[#allocation12 + $0x110] sm:$0xff]
    %v6901 = vld [vmem:[#allocation12 + $0x118] sm:$0xff]
    %v6902 = vld [vmem:[#allocation12 + $0x120] sm:$0xff]
    %v6903 = vld [vmem:[#allocation12 + $0x128] sm:$0xff]
    %v6904 = vld [vmem:[#allocation12 + $0x130] sm:$0xff]
    %v6905 = vld [vmem:[#allocation12 + $0x138] sm:$0xff]
    %v6906 = vld [vmem:[#allocation12 + $0x140] sm:$0xff]
    %v6907 = vld [vmem:[#allocation12 + $0x148] sm:$0xff]
    %v6908 = vld [vmem:[#allocation12 + $0x150] sm:$0xff]
    %v6909 = vld [vmem:[#allocation12 + $0x158] sm:$0xff]
    %v6910 = vld [vmem:[#allocation12 + $0x160] sm:$0xff]
    %v6911 = vld [vmem:[#allocation12 + $0x168] sm:$0xff]
    %v6912 = vld [vmem:[#allocation12 + $0x170] sm:$0xff]
    %v6913 = vld [vmem:[#allocation12 + $0x178] sm:$0xff]
    %v6914 = vld [vmem:[#allocation12 + $0x180] sm:$0xff]
    %v6915 = vld [vmem:[#allocation12 + $0x188] sm:$0xff]
    %v6916 = vld [vmem:[#allocation12 + $0x190] sm:$0xff]
    %v6917 = vld [vmem:[#allocation12 + $0x198] sm:$0xff]
    %v6918 = vld [vmem:[#allocation12 + $0x1a0] sm:$0xff]
    %v6919 = vld [vmem:[#allocation12 + $0x1a8] sm:$0xff]
    %v6920 = vld [vmem:[#allocation12 + $0x1b0] sm:$0xff]
    %v6921 = vld [vmem:[#allocation12 + $0x1b8] sm:$0xff]
    %v6922 = vld [vmem:[#allocation12 + $0x1c0] sm:$0xff]
    %v6923 = vld [vmem:[#allocation12 + $0x1c8] sm:$0xff]
    %v6924 = vld [vmem:[#allocation12 + $0x1d0] sm:$0xff]
    %v6925 = vld [vmem:[#allocation12 + $0x1d8] sm:$0xff]
    %v6926 = vld [vmem:[#allocation12 + $0x1e0] sm:$0xff]
    %v6927 = vld [vmem:[#allocation12 + $0x1e8] sm:$0xff]
    %v6928 = vld [vmem:[#allocation12 + $0x1f0] sm:$0xff]
    %v6929 = vld [vmem:[#allocation12 + $0x1f8] sm:$0xff]
    %v6930 = vld [vmem:[#allocation12 + $0x200] sm:$0xff]
    %v6931 = vld [vmem:[#allocation12 + $0x208] sm:$0xff]
    %v6932 = vld [vmem:[#allocation12 + $0x210] sm:$0xff]
    %v6933 = vld [vmem:[#allocation12 + $0x218] sm:$0xff]
    %v6934 = vld [vmem:[#allocation12 + $0x220] sm:$0xff]
    %v6935 = vld [vmem:[#allocation12 + $0x228] sm:$0xff]
    %v6936 = vld [vmem:[#allocation12 + $0x230] sm:$0xff]
    %v6937 = vld [vmem:[#allocation12 + $0x238] sm:$0xff]
    %v6938 = vld [vmem:[#allocation12 + $0x240] sm:$0xff]
    %v6939 = vld [vmem:[#allocation12 + $0x248] sm:$0xff]
    %v6940 = vld [vmem:[#allocation12 + $0x250] sm:$0xff]
    %v6941 = vld [vmem:[#allocation12 + $0x258] sm:$0xff]
    %v6942 = vld [vmem:[#allocation12 + $0x260] sm:$0xff]
    %v6943 = vld [vmem:[#allocation12 + $0x268] sm:$0xff]
    %v6944 = vld [vmem:[#allocation12 + $0x270] sm:$0xff]
    %v6945 = vld [vmem:[#allocation12 + $0x278] sm:$0xff]
    %v6946 = vld [vmem:[#allocation12 + $0x280] sm:$0xff]
    %v6947 = vld [vmem:[#allocation12 + $0x288] sm:$0xff]
    %v6948 = vld [vmem:[#allocation12 + $0x290] sm:$0xff]
    %v6949 = vld [vmem:[#allocation12 + $0x298] sm:$0xff]
    %v6950 = vld [vmem:[#allocation12 + $0x2a0] sm:$0xff]
    %v6951 = vld [vmem:[#allocation12 + $0x2a8] sm:$0xff]
    %v6952 = vld [vmem:[#allocation12 + $0x2b0] sm:$0xff]
    %v6953 = vld [vmem:[#allocation12 + $0x2b8] sm:$0xff]
    %v6954 = vld [vmem:[#allocation12 + $0x2c0] sm:$0xff]
    %v6955 = vld [vmem:[#allocation12 + $0x2c8] sm:$0xff]
    %v6956 = vld [vmem:[#allocation12 + $0x2d0] sm:$0xff]
    %v6957 = vld [vmem:[#allocation12 + $0x2d8] sm:$0xff]
    %v6958 = vld [vmem:[#allocation12 + $0x2e0] sm:$0xff]
    %v6959 = vld [vmem:[#allocation12 + $0x2e8] sm:$0xff]
    %v6960 = vld [vmem:[#allocation12 + $0x2f0] sm:$0xff]
    %v6961 = vld [vmem:[#allocation12 + $0x2f8] sm:$0xff]
    %v6962 = vld [vmem:[#allocation12 + $0x300] sm:$0xff]
    %v6963 = vld [vmem:[#allocation12 + $0x308] sm:$0xff]
    %v6964 = vld [vmem:[#allocation12 + $0x310] sm:$0xff]
    %v6965 = vld [vmem:[#allocation12 + $0x318] sm:$0xff]
    %v6966 = vld [vmem:[#allocation12 + $0x320] sm:$0xff]
    %v6967 = vld [vmem:[#allocation12 + $0x328] sm:$0xff]
    %v6968 = vld [vmem:[#allocation12 + $0x330] sm:$0xff]
    %v6969 = vld [vmem:[#allocation12 + $0x338] sm:$0xff]
    %v6970 = vld [vmem:[#allocation12 + $0x340] sm:$0xff]
    %v6971 = vld [vmem:[#allocation12 + $0x348] sm:$0xff]
    %v6972 = vld [vmem:[#allocation12 + $0x350] sm:$0xff]
    %v6973 = vld [vmem:[#allocation12 + $0x358] sm:$0xff]
    %v6974 = vld [vmem:[#allocation12 + $0x360] sm:$0xff]
    %v6975 = vld [vmem:[#allocation12 + $0x368] sm:$0xff]
    %v6976 = vld [vmem:[#allocation12 + $0x370] sm:$0xff]
    %v6977 = vld [vmem:[#allocation12 + $0x378] sm:$0xff]
    %v6979 = vsel %vm3471, %v6841, 0
    %v6982 = vsel %vm3471, %v6845, 0
    %v6985 = vsel %vm3471, %v6849, 0
    %v6988 = vsel %vm3471, %v6853, 0
    %v6991 = vsel %vm3471, %v6857, 0
    %v6994 = vsel %vm3471, %v6861, 0
    %v6997 = vsel %vm3471, %v6865, 0
    %6999 = vmatprep.subr.mxu0 %v6867
    %7000 = vmatpush1.msra.mxu0 %v6866
    %7001 = vmatprep.subr.mxu0 %v6869
    %7002 = vmatpush1.msra.mxu0 %v6868
    %7003 = vmatprep.subr.mxu0 %v6871
    %7004 = vmatpush1.msra.mxu0 %v6870
    %7005 = vmatprep.subr.mxu0 %v6873
    %7006 = vmatpush1.msra.mxu0 %v6872
    %7007 = vmatprep.subr.mxu0 %v6875
    %7008 = vmatpush1.msra.mxu0 %v6874
    %7009 = vmatprep.subr.mxu0 %v6877
    %7010 = vmatpush1.msra.mxu0 %v6876
    %7011 = vmatprep.subr.mxu0 %v6879
    %7012 = vmatpush1.msra.mxu0 %v6878
    %7013 = vmatprep.subr.mxu0 %v6881
    %7014 = vmatpush1.msra.mxu0 %v6880
    %7015 = vmatprep.subr.mxu0 %v6883
    %7016 = vmatpush1.msra.mxu0 %v6882
    %7017 = vmatprep.subr.mxu0 %v6885
    %7018 = vmatpush1.msra.mxu0 %v6884
    %7019 = vmatprep.subr.mxu0 %v6887
    %7020 = vmatpush1.msra.mxu0 %v6886
    %7021 = vmatprep.subr.mxu0 %v6889
    %7022 = vmatpush1.msra.mxu0 %v6888
    %7023 = vmatprep.subr.mxu0 %v6891
    %7024 = vmatpush1.msra.mxu0 %v6890
    %7025 = vmatprep.subr.mxu0 %v6893
    %7026 = vmatpush1.msra.mxu0 %v6892
    %7027 = vmatprep.subr.mxu0 %v6895
    %7028 = vmatpush1.msra.mxu0 %v6894
    %7029 = vmatprep.subr.mxu0 %v6897
    %7030 = vmatpush1.msra.mxu0 %v6896
    %7031 = vmatprep.subr.mxu0 %v6899
    %7032 = vmatpush1.msra.mxu0 %v6898
    %7033 = vmatprep.subr.mxu0 %v6901
    %7034 = vmatpush1.msra.mxu0 %v6900
    %7035 = vmatprep.subr.mxu0 %v6903
    %7036 = vmatpush1.msra.mxu0 %v6902
    %7037 = vmatprep.subr.mxu0 %v6905
    %7038 = vmatpush1.msra.mxu0 %v6904
    %7039 = vmatprep.subr.mxu0 %v6907
    %7040 = vmatpush1.msra.mxu0 %v6906
    %7041 = vmatprep.subr.mxu0 %v6909
    %7042 = vmatpush1.msra.mxu0 %v6908
    %7043 = vmatprep.subr.mxu0 %v6911
    %7044 = vmatpush1.msra.mxu0 %v6910
    %7045 = vmatprep.subr.mxu0 %v6913
    %7046 = vmatpush1.msra.mxu0 %v6912
    %7047 = vmatprep.subr.mxu0 %v6915
    %7048 = vmatpush1.msra.mxu0 %v6914
    %7049 = vmatprep.subr.mxu0 %v6917
    %7050 = vmatpush1.msra.mxu0 %v6916
    %7051 = vmatprep.subr.mxu0 %v6919
    %7052 = vmatpush1.msra.mxu0 %v6918
    %7053 = vmatprep.subr.mxu0 %v6921
    %7054 = vmatpush1.msra.mxu0 %v6920
    %7055 = vmatprep.subr.mxu0 %v6923
    %7056 = vmatpush1.msra.mxu0 %v6922
    %7057 = vmatprep.subr.mxu0 %v6925
    %7058 = vmatpush1.msra.mxu0 %v6924
    %7059 = vmatprep.subr.mxu0 %v6927
    %7060 = vmatpush1.msra.mxu0 %v6926
    %7061 = vmatprep.subr.mxu0 %v6929
    %7062 = vmatpush1.msra.mxu0 %v6928
    %7063 = vmatprep.mubr.f32.mxu0 %v6839
    %7064 = vmatmul.mubr.f32.gmra.mrb[0].mxu0 %v6838
    %v7065 = vpop.f32.mrb[0].mxu0
    %v7066 = vadd.f32 0.0, %v7065
    %v7067 = vpop.f32.mrb[0].mxu0
    %v7068 = vadd.f32 0.0, %v7067
    %7069 = vmatprep.mubr.f32.mxu0 %v6843
    %7070 = vmatmul.mubr.f32.gmra.mrb[0].mxu0 %v6842
    %v7071 = vpop.f32.mrb[0].mxu0
    %v7072 = vadd.f32 0.0, %v7071
    %v7073 = vpop.f32.mrb[0].mxu0
    %v7074 = vadd.f32 0.0, %v7073
    %7075 = vmatprep.mubr.f32.mxu0 %v6847
    %7076 = vmatmul.mubr.f32.gmra.mrb[0].mxu0 %v6846
    %v7077 = vpop.f32.mrb[0].mxu0
    %v7078 = vadd.f32 0.0, %v7077
    %v7079 = vpop.f32.mrb[0].mxu0
    %v7080 = vadd.f32 0.0, %v7079
    %7081 = vmatprep.mubr.f32.mxu0 %v6851
    %7082 = vmatmul.mubr.f32.gmra.mrb[0].mxu0 %v6850
    %v7083 = vpop.f32.mrb[0].mxu0
    %v7084 = vadd.f32 0.0, %v7083
    %v7085 = vpop.f32.mrb[0].mxu0
    %v7086 = vadd.f32 0.0, %v7085
    %7087 = vmatprep.mubr.f32.mxu0 %v6855
    %7088 = vmatmul.mubr.f32.gmra.mrb[0].mxu0 %v6854
    %v7089 = vpop.f32.mrb[0].mxu0
    %v7090 = vadd.f32 0.0, %v7089
    %v7091 = vpop.f32.mrb[0].mxu0
    %v7092 = vadd.f32 0.0, %v7091
    %7093 = vmatprep.mubr.f32.mxu0 %v6859
    %7094 = vmatmul.mubr.f32.gmra.mrb[0].mxu0 %v6858
    %v7095 = vpop.f32.mrb[0].mxu0
    %v7096 = vadd.f32 0.0, %v7095
    %v7097 = vpop.f32.mrb[0].mxu0
    %v7098 = vadd.f32 0.0, %v7097
    %7099 = vmatprep.mubr.f32.mxu0 %v6863
    %7100 = vmatmul.mubr.f32.gmra.mrb[0].mxu0 %v6862
    %v7101 = vpop.f32.mrb[0].mxu0
    %v7102 = vadd.f32 0.0, %v7101
    %v7103 = vpop.f32.mrb[0].mxu0
    %v7104 = vadd.f32 0.0, %v7103
    %7105 = vdwg.mxu0
    %7106 = vmatprep.subr.mxu0 %v6931
    %7107 = vmatpush1.msra.mxu0 %v6930
    %7108 = vmatprep.subr.mxu0 %v6933
    %7109 = vmatpush1.msra.mxu0 %v6932
    %7110 = vmatprep.subr.mxu0 %v6935
    %7111 = vmatpush1.msra.mxu0 %v6934
    %7112 = vmatprep.subr.mxu0 %v6937
    %7113 = vmatpush1.msra.mxu0 %v6936
    %7114 = vmatprep.subr.mxu0 %v6939
    %7115 = vmatpush1.msra.mxu0 %v6938
    %7116 = vmatprep.subr.mxu0 %v6941
    %7117 = vmatpush1.msra.mxu0 %v6940
    %7118 = vmatprep.subr.mxu0 %v6943
    %7119 = vmatpush1.msra.mxu0 %v6942
    %7120 = vmatprep.subr.mxu0 %v6945
    %7121 = vmatpush1.msra.mxu0 %v6944
    %7122 = vmatprep.subr.mxu0 %v6947
    %7123 = vmatpush1.msra.mxu0 %v6946
    %7124 = vmatprep.subr.mxu0 %v6949
    %7125 = vmatpush1.msra.mxu0 %v6948
    %7126 = vmatprep.subr.mxu0 %v6951
    %7127 = vmatpush1.msra.mxu0 %v6950
    %7128 = vmatprep.subr.mxu0 %v6953
    %7129 = vmatpush1.msra.mxu0 %v6952
    %7130 = vmatprep.subr.mxu0 %v6955
    %7131 = vmatpush1.msra.mxu0 %v6954
    %7132 = vmatprep.subr.mxu0 %v6957
    %7133 = vmatpush1.msra.mxu0 %v6956
    %7134 = vmatprep.subr.mxu0 %v6959
    %7135 = vmatpush1.msra.mxu0 %v6958
    %7136 = vmatprep.subr.mxu0 %v6961
    %7137 = vmatpush1.msra.mxu0 %v6960
    %7138 = vmatprep.subr.mxu0 %v6963
    %7139 = vmatpush1.msra.mxu0 %v6962
    %7140 = vmatprep.subr.mxu0 %v6965
    %7141 = vmatpush1.msra.mxu0 %v6964
    %7142 = vmatprep.subr.mxu0 %v6967
    %7143 = vmatpush1.msra.mxu0 %v6966
    %7144 = vmatprep.subr.mxu0 %v6969
    %7145 = vmatpush1.msra.mxu0 %v6968
    %7146 = vmatprep.subr.mxu0 %v6971
    %7147 = vmatpush1.msra.mxu0 %v6970
    %7148 = vmatprep.subr.mxu0 %v6973
    %7149 = vmatpush1.msra.mxu0 %v6972
    %7150 = vmatprep.subr.mxu0 %v6975
    %7151 = vmatpush1.msra.mxu0 %v6974
    %7152 = vmatprep.subr.mxu0 %v6977
    %7153 = vmatpush1.msra.mxu0 %v6976
    %7154 = vmatprep.subr.mxu0 0.0
    %7155 = vmatpush1.msra.mxu0 0.0
    %7156 = vmatprep.subr.mxu0 0.0
    %7157 = vmatpush1.msra.mxu0 0.0
    %7158 = vmatprep.subr.mxu0 0.0
    %7159 = vmatpush1.msra.mxu0 0.0
    %7160 = vmatprep.subr.mxu0 0.0
    %7161 = vmatpush1.msra.mxu0 0.0
    %7162 = vmatprep.subr.mxu0 0.0
    %7163 = vmatpush1.msra.mxu0 0.0
    %7164 = vmatprep.subr.mxu0 0.0
    %7165 = vmatpush1.msra.mxu0 0.0
    %7166 = vmatprep.subr.mxu0 0.0
    %7167 = vmatpush1.msra.mxu0 0.0
    %7168 = vmatprep.subr.mxu0 0.0
    %7169 = vmatpush1.msra.mxu0 0.0
    %7170 = vmatprep.mubr.f32.mxu0 %v6979
    %7171 = vmatmul.mubr.f32.gmra.mrb[0].mxu0 %v6840
    %v7172 = vpop.f32.mrb[0].mxu0
    %v7173 = vadd.f32 %v7066, %v7172
    %v7174 = vpop.f32.mrb[0].mxu0
    %v7175 = vadd.f32 %v7068, %v7174
    %7176 = vmatprep.mubr.f32.mxu0 %v6982
    %7177 = vmatmul.mubr.f32.gmra.mrb[0].mxu0 %v6844
    %v7178 = vpop.f32.mrb[0].mxu0
    %v7179 = vadd.f32 %v7072, %v7178
    %v7180 = vpop.f32.mrb[0].mxu0
    %v7181 = vadd.f32 %v7074, %v7180
    %7182 = vmatprep.mubr.f32.mxu0 %v6985
    %7183 = vmatmul.mubr.f32.gmra.mrb[0].mxu0 %v6848
    %v7184 = vpop.f32.mrb[0].mxu0
    %v7185 = vadd.f32 %v7078, %v7184
    %v7186 = vpop.f32.mrb[0].mxu0
    %v7187 = vadd.f32 %v7080, %v7186
    %7188 = vmatprep.mubr.f32.mxu0 %v6988
    %7189 = vmatmul.mubr.f32.gmra.mrb[0].mxu0 %v6852
    %v7190 = vpop.f32.mrb[0].mxu0
    %v7191 = vadd.f32 %v7084, %v7190
    %v7192 = vpop.f32.mrb[0].mxu0
    %v7193 = vadd.f32 %v7086, %v7192
    %7194 = vmatprep.mubr.f32.mxu0 %v6991
    %7195 = vmatmul.mubr.f32.gmra.mrb[0].mxu0 %v6856
    %v7196 = vpop.f32.mrb[0].mxu0
    %v7197 = vadd.f32 %v7090, %v7196
    %v7198 = vpop.f32.mrb[0].mxu0
    %v7199 = vadd.f32 %v7092, %v7198
    %7200 = vmatprep.mubr.f32.mxu0 %v6994
    %7201 = vmatmul.mubr.f32.gmra.mrb[0].mxu0 %v6860
    %v7202 = vpop.f32.mrb[0].mxu0
    %v7203 = vadd.f32 %v7096, %v7202
    %v7204 = vpop.f32.mrb[0].mxu0
    %v7205 = vadd.f32 %v7098, %v7204
    %7206 = vmatprep.mubr.f32.mxu0 %v6997
    %7207 = vmatmul.mubr.f32.gmra.mrb[0].mxu0 %v6864
    %v7208 = vpop.f32.mrb[0].mxu0
    %v7209 = vadd.f32 %v7102, %v7208
    %v7210 = vpop.f32.mrb[0].mxu0
    %v7211 = vadd.f32 %v7104, %v7210
    %7212 = vdwg.mxu0
    %s7213 = scalar_lea.vmem [#allocation12], 896
    %v7214 = vld [vmem:[%s7213] sm:$0xff]
    %v7215 = vld [vmem:[%s7213 + $0x8] sm:$0xff]
    %v7216 = vld [vmem:[%s7213 + $0x10] sm:$0xff]
    %v7217 = vld [vmem:[%s7213 + $0x18] sm:$0xff]
    %v7218 = vld [vmem:[%s7213 + $0x20] sm:$0xff]
    %v7219 = vld [vmem:[%s7213 + $0x28] sm:$0xff]
    %v7220 = vld [vmem:[%s7213 + $0x30] sm:$0xff]
    %v7221 = vld [vmem:[%s7213 + $0x38] sm:$0xff]
    %v7222 = vld [vmem:[%s7213 + $0x40] sm:$0xff]
    %v7223 = vld [vmem:[%s7213 + $0x48] sm:$0xff]
    %v7224 = vld [vmem:[%s7213 + $0x50] sm:$0xff]
    %v7225 = vld [vmem:[%s7213 + $0x58] sm:$0xff]
    %v7226 = vld [vmem:[%s7213 + $0x60] sm:$0xff]
    %v7227 = vld [vmem:[%s7213 + $0x68] sm:$0xff]
    %v7228 = vld [vmem:[%s7213 + $0x70] sm:$0xff]
    %v7229 = vld [vmem:[%s7213 + $0x78] sm:$0xff]
    %v7230 = vld [vmem:[%s7213 + $0x80] sm:$0xff]
    %v7231 = vld [vmem:[%s7213 + $0x88] sm:$0xff]
    %v7232 = vld [vmem:[%s7213 + $0x90] sm:$0xff]
    %v7233 = vld [vmem:[%s7213 + $0x98] sm:$0xff]
    %v7234 = vld [vmem:[%s7213 + $0xa0] sm:$0xff]
    %v7235 = vld [vmem:[%s7213 + $0xa8] sm:$0xff]
    %v7236 = vld [vmem:[%s7213 + $0xb0] sm:$0xff]
    %v7237 = vld [vmem:[%s7213 + $0xb8] sm:$0xff]
    %v7238 = vld [vmem:[%s7213 + $0xc0] sm:$0xff]
    %v7239 = vld [vmem:[%s7213 + $0xc8] sm:$0xff]
    %v7240 = vld [vmem:[%s7213 + $0xd0] sm:$0xff]
    %v7241 = vld [vmem:[%s7213 + $0xd8] sm:$0xff]
    %v7242 = vld [vmem:[%s7213 + $0xe0] sm:$0xff]
    %v7243 = vld [vmem:[%s7213 + $0xe8] sm:$0xff]
    %v7244 = vld [vmem:[%s7213 + $0xf0] sm:$0xff]
    %v7245 = vld [vmem:[%s7213 + $0xf8] sm:$0xff]
    %v7246 = vld [vmem:[%s7213 + $0x100] sm:$0xff]
    %v7247 = vld [vmem:[%s7213 + $0x108] sm:$0xff]
    %v7248 = vld [vmem:[%s7213 + $0x110] sm:$0xff]
    %v7249 = vld [vmem:[%s7213 + $0x118] sm:$0xff]
    %v7250 = vld [vmem:[%s7213 + $0x120] sm:$0xff]
    %v7251 = vld [vmem:[%s7213 + $0x128] sm:$0xff]
    %v7252 = vld [vmem:[%s7213 + $0x130] sm:$0xff]
    %v7253 = vld [vmem:[%s7213 + $0x138] sm:$0xff]
    %v7254 = vld [vmem:[%s7213 + $0x140] sm:$0xff]
    %v7255 = vld [vmem:[%s7213 + $0x148] sm:$0xff]
    %v7256 = vld [vmem:[%s7213 + $0x150] sm:$0xff]
    %v7257 = vld [vmem:[%s7213 + $0x158] sm:$0xff]
    %v7258 = vld [vmem:[%s7213 + $0x160] sm:$0xff]
    %v7259 = vld [vmem:[%s7213 + $0x168] sm:$0xff]
    %v7260 = vld [vmem:[%s7213 + $0x170] sm:$0xff]
    %v7261 = vld [vmem:[%s7213 + $0x178] sm:$0xff]
    %v7262 = vld [vmem:[%s7213 + $0x180] sm:$0xff]
    %v7263 = vld [vmem:[%s7213 + $0x188] sm:$0xff]
    %v7264 = vld [vmem:[%s7213 + $0x190] sm:$0xff]
    %v7265 = vld [vmem:[%s7213 + $0x198] sm:$0xff]
    %v7266 = vld [vmem:[%s7213 + $0x1a0] sm:$0xff]
    %v7267 = vld [vmem:[%s7213 + $0x1a8] sm:$0xff]
    %v7268 = vld [vmem:[%s7213 + $0x1b0] sm:$0xff]
    %v7269 = vld [vmem:[%s7213 + $0x1b8] sm:$0xff]
    %v7270 = vld [vmem:[%s7213 + $0x1c0] sm:$0xff]
    %v7271 = vld [vmem:[%s7213 + $0x1c8] sm:$0xff]
    %v7272 = vld [vmem:[%s7213 + $0x1d0] sm:$0xff]
    %v7273 = vld [vmem:[%s7213 + $0x1d8] sm:$0xff]
    %v7274 = vld [vmem:[%s7213 + $0x1e0] sm:$0xff]
    %v7275 = vld [vmem:[%s7213 + $0x1e8] sm:$0xff]
    %v7276 = vld [vmem:[%s7213 + $0x1f0] sm:$0xff]
    %v7277 = vld [vmem:[%s7213 + $0x1f8] sm:$0xff]
    %v7278 = vld [vmem:[%s7213 + $0x200] sm:$0xff]
    %v7279 = vld [vmem:[%s7213 + $0x208] sm:$0xff]
    %v7280 = vld [vmem:[%s7213 + $0x210] sm:$0xff]
    %v7281 = vld [vmem:[%s7213 + $0x218] sm:$0xff]
    %v7282 = vld [vmem:[%s7213 + $0x220] sm:$0xff]
    %v7283 = vld [vmem:[%s7213 + $0x228] sm:$0xff]
    %v7284 = vld [vmem:[%s7213 + $0x230] sm:$0xff]
    %v7285 = vld [vmem:[%s7213 + $0x238] sm:$0xff]
    %v7286 = vld [vmem:[%s7213 + $0x240] sm:$0xff]
    %v7287 = vld [vmem:[%s7213 + $0x248] sm:$0xff]
    %v7288 = vld [vmem:[%s7213 + $0x250] sm:$0xff]
    %v7289 = vld [vmem:[%s7213 + $0x258] sm:$0xff]
    %v7290 = vld [vmem:[%s7213 + $0x260] sm:$0xff]
    %v7291 = vld [vmem:[%s7213 + $0x268] sm:$0xff]
    %v7292 = vld [vmem:[%s7213 + $0x270] sm:$0xff]
    %v7293 = vld [vmem:[%s7213 + $0x278] sm:$0xff]
    %v7294 = vld [vmem:[%s7213 + $0x280] sm:$0xff]
    %v7295 = vld [vmem:[%s7213 + $0x288] sm:$0xff]
    %v7296 = vld [vmem:[%s7213 + $0x290] sm:$0xff]
    %v7297 = vld [vmem:[%s7213 + $0x298] sm:$0xff]
    %v7298 = vld [vmem:[%s7213 + $0x2a0] sm:$0xff]
    %v7299 = vld [vmem:[%s7213 + $0x2a8] sm:$0xff]
    %v7300 = vld [vmem:[%s7213 + $0x2b0] sm:$0xff]
    %v7301 = vld [vmem:[%s7213 + $0x2b8] sm:$0xff]
    %v7302 = vld [vmem:[%s7213 + $0x2c0] sm:$0xff]
    %v7303 = vld [vmem:[%s7213 + $0x2c8] sm:$0xff]
    %v7304 = vld [vmem:[%s7213 + $0x2d0] sm:$0xff]
    %v7305 = vld [vmem:[%s7213 + $0x2d8] sm:$0xff]
    %v7306 = vld [vmem:[%s7213 + $0x2e0] sm:$0xff]
    %v7307 = vld [vmem:[%s7213 + $0x2e8] sm:$0xff]
    %v7308 = vld [vmem:[%s7213 + $0x2f0] sm:$0xff]
    %v7309 = vld [vmem:[%s7213 + $0x2f8] sm:$0xff]
    %v7310 = vld [vmem:[%s7213 + $0x300] sm:$0xff]
    %v7311 = vld [vmem:[%s7213 + $0x308] sm:$0xff]
    %v7312 = vld [vmem:[%s7213 + $0x310] sm:$0xff]
    %v7313 = vld [vmem:[%s7213 + $0x318] sm:$0xff]
    %v7314 = vld [vmem:[%s7213 + $0x320] sm:$0xff]
    %v7315 = vld [vmem:[%s7213 + $0x328] sm:$0xff]
    %v7316 = vld [vmem:[%s7213 + $0x330] sm:$0xff]
    %v7317 = vld [vmem:[%s7213 + $0x338] sm:$0xff]
    %v7318 = vld [vmem:[%s7213 + $0x340] sm:$0xff]
    %v7319 = vld [vmem:[%s7213 + $0x348] sm:$0xff]
    %v7320 = vld [vmem:[%s7213 + $0x350] sm:$0xff]
    %v7321 = vld [vmem:[%s7213 + $0x358] sm:$0xff]
    %v7322 = vld [vmem:[%s7213 + $0x360] sm:$0xff]
    %v7323 = vld [vmem:[%s7213 + $0x368] sm:$0xff]
    %v7324 = vld [vmem:[%s7213 + $0x370] sm:$0xff]
    %v7325 = vld [vmem:[%s7213 + $0x378] sm:$0xff]
    %7326 = vmatprep.subr.mxu0 %v7215
    %7327 = vmatpush1.msra.mxu0 %v7214
    %7328 = vmatprep.subr.mxu0 %v7217
    %7329 = vmatpush1.msra.mxu0 %v7216
    %7330 = vmatprep.subr.mxu0 %v7219
    %7331 = vmatpush1.msra.mxu0 %v7218
    %7332 = vmatprep.subr.mxu0 %v7221
    %7333 = vmatpush1.msra.mxu0 %v7220
    %7334 = vmatprep.subr.mxu0 %v7223
    %7335 = vmatpush1.msra.mxu0 %v7222
    %7336 = vmatprep.subr.mxu0 %v7225
    %7337 = vmatpush1.msra.mxu0 %v7224
    %7338 = vmatprep.subr.mxu0 %v7227
    %7339 = vmatpush1.msra.mxu0 %v7226
    %7340 = vmatprep.subr.mxu0 %v7229
    %7341 = vmatpush1.msra.mxu0 %v7228
    %7342 = vmatprep.subr.mxu0 %v7231
    %7343 = vmatpush1.msra.mxu0 %v7230
    %7344 = vmatprep.subr.mxu0 %v7233
    %7345 = vmatpush1.msra.mxu0 %v7232
    %7346 = vmatprep.subr.mxu0 %v7235
    %7347 = vmatpush1.msra.mxu0 %v7234
    %7348 = vmatprep.subr.mxu0 %v7237
    %7349 = vmatpush1.msra.mxu0 %v7236
    %7350 = vmatprep.subr.mxu0 %v7239
    %7351 = vmatpush1.msra.mxu0 %v7238
    %7352 = vmatprep.subr.mxu0 %v7241
    %7353 = vmatpush1.msra.mxu0 %v7240
    %7354 = vmatprep.subr.mxu0 %v7243
    %7355 = vmatpush1.msra.mxu0 %v7242
    %7356 = vmatprep.subr.mxu0 %v7245
    %7357 = vmatpush1.msra.mxu0 %v7244
    %7358 = vmatprep.subr.mxu0 %v7247
    %7359 = vmatpush1.msra.mxu0 %v7246
    %7360 = vmatprep.subr.mxu0 %v7249
    %7361 = vmatpush1.msra.mxu0 %v7248
    %7362 = vmatprep.subr.mxu0 %v7251
    %7363 = vmatpush1.msra.mxu0 %v7250
    %7364 = vmatprep.subr.mxu0 %v7253
    %7365 = vmatpush1.msra.mxu0 %v7252
    %7366 = vmatprep.subr.mxu0 %v7255
    %7367 = vmatpush1.msra.mxu0 %v7254
    %7368 = vmatprep.subr.mxu0 %v7257
    %7369 = vmatpush1.msra.mxu0 %v7256
    %7370 = vmatprep.subr.mxu0 %v7259
    %7371 = vmatpush1.msra.mxu0 %v7258
    %7372 = vmatprep.subr.mxu0 %v7261
    %7373 = vmatpush1.msra.mxu0 %v7260
    %7374 = vmatprep.subr.mxu0 %v7263
    %7375 = vmatpush1.msra.mxu0 %v7262
    %7376 = vmatprep.subr.mxu0 %v7265
    %7377 = vmatpush1.msra.mxu0 %v7264
    %7378 = vmatprep.subr.mxu0 %v7267
    %7379 = vmatpush1.msra.mxu0 %v7266
    %7380 = vmatprep.subr.mxu0 %v7269
    %7381 = vmatpush1.msra.mxu0 %v7268
    %7382 = vmatprep.subr.mxu0 %v7271
    %7383 = vmatpush1.msra.mxu0 %v7270
    %7384 = vmatprep.subr.mxu0 %v7273
    %7385 = vmatpush1.msra.mxu0 %v7272
    %7386 = vmatprep.subr.mxu0 %v7275
    %7387 = vmatpush1.msra.mxu0 %v7274
    %7388 = vmatprep.subr.mxu0 %v7277
    %7389 = vmatpush1.msra.mxu0 %v7276
    %7390 = vmatprep.mubr.f32.mxu0 %v6839
    %7391 = vmatmul.mubr.f32.gmra.mrb[0].mxu0 %v6838
    %v7392 = vpop.f32.mrb[0].mxu0
    %v7393 = vadd.f32 0.0, %v7392
    %v7394 = vpop.f32.mrb[0].mxu0
    %v7395 = vadd.f32 0.0, %v7394
    %7396 = vmatprep.mubr.f32.mxu0 %v6843
    %7397 = vmatmul.mubr.f32.gmra.mrb[0].mxu0 %v6842
    %v7398 = vpop.f32.mrb[0].mxu0
    %v7399 = vadd.f32 0.0, %v7398
    %v7400 = vpop.f32.mrb[0].mxu0
    %v7401 = vadd.f32 0.0, %v7400
    %7402 = vmatprep.mubr.f32.mxu0 %v6847
    %7403 = vmatmul.mubr.f32.gmra.mrb[0].mxu0 %v6846
    %v7404 = vpop.f32.mrb[0].mxu0
    %v7405 = vadd.f32 0.0, %v7404
    %v7406 = vpop.f32.mrb[0].mxu0
    %v7407 = vadd.f32 0.0, %v7406
    %7408 = vmatprep.mubr.f32.mxu0 %v6851
    %7409 = vmatmul.mubr.f32.gmra.mrb[0].mxu0 %v6850
    %v7410 = vpop.f32.mrb[0].mxu0
    %v7411 = vadd.f32 0.0, %v7410
    %v7412 = vpop.f32.mrb[0].mxu0
    %v7413 = vadd.f32 0.0, %v7412
    %7414 = vmatprep.mubr.f32.mxu0 %v6855
    %7415 = vmatmul.mubr.f32.gmra.mrb[0].mxu0 %v6854
    %v7416 = vpop.f32.mrb[0].mxu0
    %v7417 = vadd.f32 0.0, %v7416
    %v7418 = vpop.f32.mrb[0].mxu0
    %v7419 = vadd.f32 0.0, %v7418
    %7420 = vmatprep.mubr.f32.mxu0 %v6859
    %7421 = vmatmul.mubr.f32.gmra.mrb[0].mxu0 %v6858
    %v7422 = vpop.f32.mrb[0].mxu0
    %v7423 = vadd.f32 0.0, %v7422
    %v7424 = vpop.f32.mrb[0].mxu0
    %v7425 = vadd.f32 0.0, %v7424
    %7426 = vmatprep.mubr.f32.mxu0 %v6863
    %7427 = vmatmul.mubr.f32.gmra.mrb[0].mxu0 %v6862
    %v7428 = vpop.f32.mrb[0].mxu0
    %v7429 = vadd.f32 0.0, %v7428
    %v7430 = vpop.f32.mrb[0].mxu0
    %v7431 = vadd.f32 0.0, %v7430
    %7432 = vdwg.mxu0
    %7433 = vmatprep.subr.mxu0 %v7279
    %7434 = vmatpush1.msra.mxu0 %v7278
    %7435 = vmatprep.subr.mxu0 %v7281
    %7436 = vmatpush1.msra.mxu0 %v7280
    %7437 = vmatprep.subr.mxu0 %v7283
    %7438 = vmatpush1.msra.mxu0 %v7282
    %7439 = vmatprep.subr.mxu0 %v7285
    %7440 = vmatpush1.msra.mxu0 %v7284
    %7441 = vmatprep.subr.mxu0 %v7287
    %7442 = vmatpush1.msra.mxu0 %v7286
    %7443 = vmatprep.subr.mxu0 %v7289
    %7444 = vmatpush1.msra.mxu0 %v7288
    %7445 = vmatprep.subr.mxu0 %v7291
    %7446 = vmatpush1.msra.mxu0 %v7290
    %7447 = vmatprep.subr.mxu0 %v7293
    %7448 = vmatpush1.msra.mxu0 %v7292
    %7449 = vmatprep.subr.mxu0 %v7295
    %7450 = vmatpush1.msra.mxu0 %v7294
    %7451 = vmatprep.subr.mxu0 %v7297
    %7452 = vmatpush1.msra.mxu0 %v7296
    %7453 = vmatprep.subr.mxu0 %v7299
    %7454 = vmatpush1.msra.mxu0 %v7298
    %7455 = vmatprep.subr.mxu0 %v7301
    %7456 = vmatpush1.msra.mxu0 %v7300
    %7457 = vmatprep.subr.mxu0 %v7303
    %7458 = vmatpush1.msra.mxu0 %v7302
    %7459 = vmatprep.subr.mxu0 %v7305
    %7460 = vmatpush1.msra.mxu0 %v7304
    %7461 = vmatprep.subr.mxu0 %v7307
    %7462 = vmatpush1.msra.mxu0 %v7306
    %7463 = vmatprep.subr.mxu0 %v7309
    %7464 = vmatpush1.msra.mxu0 %v7308
    %7465 = vmatprep.subr.mxu0 %v7311
    %7466 = vmatpush1.msra.mxu0 %v7310
    %7467 = vmatprep.subr.mxu0 %v7313
    %7468 = vmatpush1.msra.mxu0 %v7312
    %7469 = vmatprep.subr.mxu0 %v7315
    %7470 = vmatpush1.msra.mxu0 %v7314
    %7471 = vmatprep.subr.mxu0 %v7317
    %7472 = vmatpush1.msra.mxu0 %v7316
    %7473 = vmatprep.subr.mxu0 %v7319
    %7474 = vmatpush1.msra.mxu0 %v7318
    %7475 = vmatprep.subr.mxu0 %v7321
    %7476 = vmatpush1.msra.mxu0 %v7320
    %7477 = vmatprep.subr.mxu0 %v7323
    %7478 = vmatpush1.msra.mxu0 %v7322
    %7479 = vmatprep.subr.mxu0 %v7325
    %7480 = vmatpush1.msra.mxu0 %v7324
    %7481 = vmatprep.subr.mxu0 0.0
    %7482 = vmatpush1.msra.mxu0 0.0
    %7483 = vmatprep.subr.mxu0 0.0
    %7484 = vmatpush1.msra.mxu0 0.0
    %7485 = vmatprep.subr.mxu0 0.0
    %7486 = vmatpush1.msra.mxu0 0.0
    %7487 = vmatprep.subr.mxu0 0.0
    %7488 = vmatpush1.msra.mxu0 0.0
    %7489 = vmatprep.subr.mxu0 0.0
    %7490 = vmatpush1.msra.mxu0 0.0
    %7491 = vmatprep.subr.mxu0 0.0
    %7492 = vmatpush1.msra.mxu0 0.0
    %7493 = vmatprep.subr.mxu0 0.0
    %7494 = vmatpush1.msra.mxu0 0.0
    %7495 = vmatprep.subr.mxu0 0.0
    %7496 = vmatpush1.msra.mxu0 0.0
    %7497 = vmatprep.mubr.f32.mxu0 %v6979
    %7498 = vmatmul.mubr.f32.gmra.mrb[0].mxu0 %v6840
    %v7499 = vpop.f32.mrb[0].mxu0
    %v7500 = vadd.f32 %v7393, %v7499
    %v7501 = vpop.f32.mrb[0].mxu0
    %v7502 = vadd.f32 %v7395, %v7501
    %7503 = vmatprep.mubr.f32.mxu0 %v6982
    %7504 = vmatmul.mubr.f32.gmra.mrb[0].mxu0 %v6844
    %v7505 = vpop.f32.mrb[0].mxu0
    %v7506 = vadd.f32 %v7399, %v7505
    %v7507 = vpop.f32.mrb[0].mxu0
    %v7508 = vadd.f32 %v7401, %v7507
    %7509 = vmatprep.mubr.f32.mxu0 %v6985
    %7510 = vmatmul.mubr.f32.gmra.mrb[0].mxu0 %v6848
    %v7511 = vpop.f32.mrb[0].mxu0
    %v7512 = vadd.f32 %v7405, %v7511
    %v7513 = vpop.f32.mrb[0].mxu0
    %v7514 = vadd.f32 %v7407, %v7513
    %7515 = vmatprep.mubr.f32.mxu0 %v6988
    %7516 = vmatmul.mubr.f32.gmra.mrb[0].mxu0 %v6852
    %v7517 = vpop.f32.mrb[0].mxu0
    %v7518 = vadd.f32 %v7411, %v7517
    %v7519 = vpop.f32.mrb[0].mxu0
    %v7520 = vadd.f32 %v7413, %v7519
    %7521 = vmatprep.mubr.f32.mxu0 %v6991
    %7522 = vmatmul.mubr.f32.gmra.mrb[0].mxu0 %v6856
    %v7523 = vpop.f32.mrb[0].mxu0
    %v7524 = vadd.f32 %v7417, %v7523
    %v7525 = vpop.f32.mrb[0].mxu0
    %v7526 = vadd.f32 %v7419, %v7525
    %7527 = vmatprep.mubr.f32.mxu0 %v6994
    %7528 = vmatmul.mubr.f32.gmra.mrb[0].mxu0 %v6860
    %v7529 = vpop.f32.mrb[0].mxu0
    %v7530 = vadd.f32 %v7423, %v7529
    %v7531 = vpop.f32.mrb[0].mxu0
    %v7532 = vadd.f32 %v7425, %v7531
    %7533 = vmatprep.mubr.f32.mxu0 %v6997
    %7534 = vmatmul.mubr.f32.gmra.mrb[0].mxu0 %v6864
    %v7535 = vpop.f32.mrb[0].mxu0
    %v7536 = vadd.f32 %v7429, %v7535
    %v7537 = vpop.f32.mrb[0].mxu0
    %v7538 = vadd.f32 %v7431, %v7537
    %7539 = vdwg.mxu0
    %v7540 = vmax.f32 %v7173, %v7500
    %v7541 = vmax.f32 %v7175, %v7502
    %v7542 = vmax.f32 %v7179, %v7506
    %v7543 = vmax.f32 %v7181, %v7508
    %v7544 = vmax.f32 %v7185, %v7512
    %v7545 = vmax.f32 %v7187, %v7514
    %v7546 = vmax.f32 %v7191, %v7518
    %v7547 = vmax.f32 %v7193, %v7520
    %v7548 = vmax.f32 %v7197, %v7524
    %v7549 = vmax.f32 %v7199, %v7526
    %v7550 = vmax.f32 %v7203, %v7530
    %v7551 = vmax.f32 %v7205, %v7532
    %v7552 = vmax.f32 %v7209, %v7536
    %v7553 = vmax.f32 %v7211, %v7538
    %v7554 = vpack.c.bf16 %v7542, %v7540
    %v7555 = vpack.c.bf16 %v7543, %v7541
    %v7556 = vpack.c.bf16 %v7546, %v7544
    %v7557 = vpack.c.bf16 %v7547, %v7545
    %v7558 = vpack.c.bf16 %v7550, %v7548
    %v7559 = vpack.c.bf16 %v7551, %v7549
    %v7560 = vpack.c.bf16 %v7552, %v7552
    %v7561 = vpack.c.bf16 %v7553, %v7553
    %v7562 = vld [vmem:[#allocation13] sm:$0xf]
    %v7563 = vld [vmem:[#allocation13 + $0x4] sm:$0xf]
    %v7564 = vld [vmem:[#allocation13 + $0x8] sm:$0xf]
    %v7565 = vld [vmem:[#allocation13 + $0xc] sm:$0xf]
    %v7566 = vld [vmem:[#allocation13 + $0x10] sm:$0xf]
    %v7567 = vld [vmem:[#allocation13 + $0x14] sm:$0xf]
    %v7568 = vld [vmem:[#allocation13 + $0x18] sm:$0xf]
    %v7569 = vld [vmem:[#allocation13 + $0x1c] sm:$0xf]
    %v7570 = vld [vmem:[#allocation13 + $0x20] sm:$0xf]
    %v7571 = vld [vmem:[#allocation13 + $0x24] sm:$0xf]
    %v7572 = vld [vmem:[#allocation13 + $0x28] sm:$0xf]
    %v7573 = vld [vmem:[#allocation13 + $0x2c] sm:$0xf]
    %v7574 = vld [vmem:[#allocation13 + $0x30] sm:$0xf]
    %v7575 = vld [vmem:[#allocation13 + $0x34] sm:$0xf]
    %v7576 = vld [vmem:[#allocation13 + $0x38] sm:$0xf]
    %v7577 = vld [vmem:[#allocation13 + $0x3c] sm:$0xf]
    %v7578 = vld [vmem:[#allocation13 + $0x40] sm:$0xf]
    %v7579 = vld [vmem:[#allocation13 + $0x44] sm:$0xf]
    %v7580 = vld [vmem:[#allocation13 + $0x48] sm:$0xf]
    %v7581 = vld [vmem:[#allocation13 + $0x4c] sm:$0xf]
    %v7582 = vld [vmem:[#allocation13 + $0x50] sm:$0xf]
    %v7583 = vld [vmem:[#allocation13 + $0x54] sm:$0xf]
    %v7584 = vld [vmem:[#allocation13 + $0x58] sm:$0xf]
    %v7585 = vld [vmem:[#allocation13 + $0x5c] sm:$0xf]
    %v7586 = vld [vmem:[#allocation13 + $0x60] sm:$0xf]
    %v7587 = vld [vmem:[#allocation13 + $0x64] sm:$0xf]
    %v7588 = vld [vmem:[#allocation13 + $0x68] sm:$0xf]
    %v7589 = vld [vmem:[#allocation13 + $0x6c] sm:$0xf]
    %s7590 = scalar_lea.vmem [#allocation13], 112
    %v7591 = vld [vmem:[%s7590] sm:$0xf]
    %v7592 = vld [vmem:[%s7590 + $0x4] sm:$0xf]
    %v7593 = vld [vmem:[%s7590 + $0x8] sm:$0xf]
    %v7594 = vld [vmem:[%s7590 + $0xc] sm:$0xf]
    %v7595 = vld [vmem:[%s7590 + $0x10] sm:$0xf]
    %v7596 = vld [vmem:[%s7590 + $0x14] sm:$0xf]
    %v7597 = vld [vmem:[%s7590 + $0x18] sm:$0xf]
    %v7598 = vld [vmem:[%s7590 + $0x1c] sm:$0xf]
    %v7599 = vld [vmem:[%s7590 + $0x20] sm:$0xf]
    %v7600 = vld [vmem:[%s7590 + $0x24] sm:$0xf]
    %v7601 = vld [vmem:[%s7590 + $0x28] sm:$0xf]
    %v7602 = vld [vmem:[%s7590 + $0x2c] sm:$0xf]
    %v7603 = vld [vmem:[%s7590 + $0x30] sm:$0xf]
    %v7604 = vld [vmem:[%s7590 + $0x34] sm:$0xf]
    %v7605 = vld [vmem:[%s7590 + $0x38] sm:$0xf]
    %v7606 = vld [vmem:[%s7590 + $0x3c] sm:$0xf]
    %v7607 = vld [vmem:[%s7590 + $0x40] sm:$0xf]
    %v7608 = vld [vmem:[%s7590 + $0x44] sm:$0xf]
    %v7609 = vld [vmem:[%s7590 + $0x48] sm:$0xf]
    %v7610 = vld [vmem:[%s7590 + $0x4c] sm:$0xf]
    %v7611 = vld [vmem:[%s7590 + $0x50] sm:$0xf]
    %v7612 = vld [vmem:[%s7590 + $0x54] sm:$0xf]
    %v7613 = vld [vmem:[%s7590 + $0x58] sm:$0xf]
    %v7614 = vld [vmem:[%s7590 + $0x5c] sm:$0xf]
    %v7615 = vld [vmem:[%s7590 + $0x60] sm:$0xf]
    %v7616 = vld [vmem:[%s7590 + $0x64] sm:$0xf]
    %v7617 = vld [vmem:[%s7590 + $0x68] sm:$0xf]
    %v7618 = vld [vmem:[%s7590 + $0x6c] sm:$0xf]
    %v7621 = vrot.slane %v7554, 4
    %v7622 = vrot.slane %v7555, 4
    %v7652 = vunpack.c.l.b16 %v7591
    %v7653 = vunpack.c.l.b16 %v7592
    %v7654 = vunpack.c.l.b16 %v7593
    %v7655 = vunpack.c.l.b16 %v7594
    %v7656 = vunpack.c.l.b16 %v7595
    %v7657 = vunpack.c.l.b16 %v7596
    %v7658 = vunpack.c.l.b16 %v7597
    %v7659 = vunpack.c.l.b16 %v7598
    %v7660 = vunpack.c.l.b16 %v7599
    %v7661 = vunpack.c.l.b16 %v7600
    %v7662 = vunpack.c.l.b16 %v7601
    %v7663 = vunpack.c.l.b16 %v7602
    %v7664 = vunpack.c.l.b16 %v7603
    %v7665 = vunpack.c.l.b16 %v7604
    %v7666 = vunpack.c.l.b16 %v7605
    %v7667 = vunpack.c.l.b16 %v7606
    %v7668 = vunpack.c.l.b16 %v7607
    %v7669 = vunpack.c.l.b16 %v7608
    %v7670 = vunpack.c.l.b16 %v7609
    %v7671 = vunpack.c.l.b16 %v7610
    %v7672 = vunpack.c.l.b16 %v7611
    %v7673 = vunpack.c.l.b16 %v7612
    %v7674 = vunpack.c.l.b16 %v7613
    %v7675 = vunpack.c.l.b16 %v7614
    %v7676 = vunpack.c.l.b16 %v7615
    %v7677 = vunpack.c.l.b16 %v7616
    %v7678 = vunpack.c.l.b16 %v7617
    %v7679 = vunpack.c.l.b16 %v7618
    %v7680 = vpack.c.b16 %v7653, %v7652
    %v7681 = vpack.c.b16 %v7655, %v7654
    %v7682 = vpack.c.b16 %v7657, %v7656
    %v7683 = vpack.c.b16 %v7659, %v7658
    %v7684 = vpack.c.b16 %v7661, %v7660
    %v7685 = vpack.c.b16 %v7663, %v7662
    %v7686 = vpack.c.b16 %v7665, %v7664
    %v7687 = vpack.c.b16 %v7667, %v7666
    %v7688 = vpack.c.b16 %v7669, %v7668
    %v7689 = vpack.c.b16 %v7671, %v7670
    %v7690 = vpack.c.b16 %v7673, %v7672
    %v7691 = vpack.c.b16 %v7675, %v7674
    %v7692 = vpack.c.b16 %v7677, %v7676
    %v7693 = vpack.c.b16 %v7679, %v7678
    %v7709 = vsel %vm273, %v7622, 0
    %7711 = vmatprep.subr.bf16.mxu0 0
    %7712 = vmatpush1.bf16.msra.mxu0 %v7680
    %7713 = vmatprep.subr.bf16.mxu0 0
    %7714 = vmatpush1.bf16.msra.mxu0 %v7681
    %7715 = vmatprep.subr.bf16.mxu0 0
    %7716 = vmatpush1.bf16.msra.mxu0 %v7682
    %7717 = vmatprep.subr.bf16.mxu0 0
    %7718 = vmatpush1.bf16.msra.mxu0 %v7683
    %7719 = vmatprep.subr.bf16.mxu0 0
    %7720 = vmatpush1.bf16.msra.mxu0 %v7684
    %7721 = vmatprep.subr.bf16.mxu0 0
    %7722 = vmatpush1.bf16.msra.mxu0 %v7685
    %7723 = vmatprep.subr.bf16.mxu0 0
    %7724 = vmatpush1.bf16.msra.mxu0 %v7686
    %7725 = vmatprep.subr.bf16.mxu0 0
    %7726 = vmatpush1.bf16.msra.mxu0 %v7687
    %7727 = vmatprep.subr.bf16.mxu0 0
    %7728 = vmatpush1.bf16.msra.mxu0 %v7688
    %7729 = vmatprep.subr.bf16.mxu0 0
    %7730 = vmatpush1.bf16.msra.mxu0 %v7689
    %7731 = vmatprep.subr.bf16.mxu0 0
    %7732 = vmatpush1.bf16.msra.mxu0 %v7690
    %7733 = vmatprep.subr.bf16.mxu0 0
    %7734 = vmatpush1.bf16.msra.mxu0 %v7691
    %7735 = vmatprep.subr.bf16.mxu0 0
    %7736 = vmatpush1.bf16.msra.mxu0 %v7692
    %7737 = vmatprep.subr.bf16.mxu0 0
    %7738 = vmatpush1.bf16.msra.mxu0 %v7693
    %7739 = vmatprep.subr.bf16.mxu0 0
    %7740 = vmatpush1.bf16.msra.mxu0 0
    %7741 = vmatprep.subr.bf16.mxu0 0
    %7742 = vmatpush1.bf16.msra.mxu0 0
    %7743 = vmatprep.mubr.bf16.mxu0 %v7709
    %7744 = vmatmul.mubr.bf16.gmra.mrb[0].mxu0 %v7621
    %v7745 = vpop.f32.mrb[0].mxu0
    %v7746 = vadd.f32 0.0, %v7745
    %v7747 = vpop.f32.mrb[0].mxu0
    %v7748 = vpop.f32.mrb[0].mxu0
    %v7749 = vpop.f32.mrb[0].mxu0
    %7750 = vdwg.mxu0
    %v7779 = vunpack.c.l.b16 %v7562
    %v7780 = vunpack.c.l.b16 %v7563
    %v7781 = vunpack.c.l.b16 %v7564
    %v7782 = vunpack.c.l.b16 %v7565
    %v7783 = vunpack.c.l.b16 %v7566
    %v7784 = vunpack.c.l.b16 %v7567
    %v7785 = vunpack.c.l.b16 %v7568
    %v7786 = vunpack.c.l.b16 %v7569
    %v7787 = vunpack.c.l.b16 %v7570
    %v7788 = vunpack.c.l.b16 %v7571
    %v7789 = vunpack.c.l.b16 %v7572
    %v7790 = vunpack.c.l.b16 %v7573
    %v7791 = vunpack.c.l.b16 %v7574
    %v7792 = vunpack.c.l.b16 %v7575
    %v7793 = vunpack.c.l.b16 %v7576
    %v7794 = vunpack.c.l.b16 %v7577
    %v7795 = vunpack.c.l.b16 %v7578
    %v7796 = vunpack.c.l.b16 %v7579
    %v7797 = vunpack.c.l.b16 %v7580
    %v7798 = vunpack.c.l.b16 %v7581
    %v7799 = vunpack.c.l.b16 %v7582
    %v7800 = vunpack.c.l.b16 %v7583
    %v7801 = vunpack.c.l.b16 %v7584
    %v7802 = vunpack.c.l.b16 %v7585
    %v7803 = vunpack.c.l.b16 %v7586
    %v7804 = vunpack.c.l.b16 %v7587
    %v7805 = vunpack.c.l.b16 %v7588
    %v7806 = vunpack.c.l.b16 %v7589
    %v7807 = vpack.c.b16 %v7780, %v7779
    %v7808 = vpack.c.b16 %v7782, %v7781
    %v7809 = vpack.c.b16 %v7784, %v7783
    %v7810 = vpack.c.b16 %v7786, %v7785
    %v7811 = vpack.c.b16 %v7788, %v7787
    %v7812 = vpack.c.b16 %v7790, %v7789
    %v7813 = vpack.c.b16 %v7792, %v7791
    %v7814 = vpack.c.b16 %v7794, %v7793
    %v7815 = vpack.c.b16 %v7796, %v7795
    %v7816 = vpack.c.b16 %v7798, %v7797
    %v7817 = vpack.c.b16 %v7800, %v7799
    %v7818 = vpack.c.b16 %v7802, %v7801
    %v7819 = vpack.c.b16 %v7804, %v7803
    %v7820 = vpack.c.b16 %v7806, %v7805
    %v7836 = vsel %vm273, %v7555, 0
    %7838 = vmatprep.subr.bf16.mxu0 0
    %7839 = vmatpush1.bf16.msra.mxu0 %v7807
    %7840 = vmatprep.subr.bf16.mxu0 0
    %7841 = vmatpush1.bf16.msra.mxu0 %v7808
    %7842 = vmatprep.subr.bf16.mxu0 0
    %7843 = vmatpush1.bf16.msra.mxu0 %v7809
    %7844 = vmatprep.subr.bf16.mxu0 0
    %7845 = vmatpush1.bf16.msra.mxu0 %v7810
    %7846 = vmatprep.subr.bf16.mxu0 0
    %7847 = vmatpush1.bf16.msra.mxu0 %v7811
    %7848 = vmatprep.subr.bf16.mxu0 0
    %7849 = vmatpush1.bf16.msra.mxu0 %v7812
    %7850 = vmatprep.subr.bf16.mxu0 0
    %7851 = vmatpush1.bf16.msra.mxu0 %v7813
    %7852 = vmatprep.subr.bf16.mxu0 0
    %7853 = vmatpush1.bf16.msra.mxu0 %v7814
    %7854 = vmatprep.subr.bf16.mxu0 0
    %7855 = vmatpush1.bf16.msra.mxu0 %v7815
    %7856 = vmatprep.subr.bf16.mxu0 0
    %7857 = vmatpush1.bf16.msra.mxu0 %v7816
    %7858 = vmatprep.subr.bf16.mxu0 0
    %7859 = vmatpush1.bf16.msra.mxu0 %v7817
    %7860 = vmatprep.subr.bf16.mxu0 0
    %7861 = vmatpush1.bf16.msra.mxu0 %v7818
    %7862 = vmatprep.subr.bf16.mxu0 0
    %7863 = vmatpush1.bf16.msra.mxu0 %v7819
    %7864 = vmatprep.subr.bf16.mxu0 0
    %7865 = vmatpush1.bf16.msra.mxu0 %v7820
    %7866 = vmatprep.subr.bf16.mxu0 0
    %7867 = vmatpush1.bf16.msra.mxu0 0
    %7868 = vmatprep.subr.bf16.mxu0 0
    %7869 = vmatpush1.bf16.msra.mxu0 0
    %7870 = vmatprep.mubr.bf16.mxu0 %v7836
    %7871 = vmatmul.mubr.bf16.gmra.mrb[0].mxu0 %v7554
    %v7872 = vpop.f32.mrb[0].mxu0
    %v7873 = vadd.f32 %v7746, %v7872
    %v7874 = vpop.f32.mrb[0].mxu0
    %v7875 = vpop.f32.mrb[0].mxu0
    %v7876 = vpop.f32.mrb[0].mxu0
    %7877 = vdwg.mxu0
    %s7878 = scalar_lea.vmem [#allocation13], 224
    %v7879 = vld [vmem:[%s7878] sm:$0xf]
    %v7880 = vld [vmem:[%s7878 + $0x4] sm:$0xf]
    %v7881 = vld [vmem:[%s7878 + $0x8] sm:$0xf]
    %v7882 = vld [vmem:[%s7878 + $0xc] sm:$0xf]
    %v7883 = vld [vmem:[%s7878 + $0x10] sm:$0xf]
    %v7884 = vld [vmem:[%s7878 + $0x14] sm:$0xf]
    %v7885 = vld [vmem:[%s7878 + $0x18] sm:$0xf]
    %v7886 = vld [vmem:[%s7878 + $0x1c] sm:$0xf]
    %v7887 = vld [vmem:[%s7878 + $0x20] sm:$0xf]
    %v7888 = vld [vmem:[%s7878 + $0x24] sm:$0xf]
    %v7889 = vld [vmem:[%s7878 + $0x28] sm:$0xf]
    %v7890 = vld [vmem:[%s7878 + $0x2c] sm:$0xf]
    %v7891 = vld [vmem:[%s7878 + $0x30] sm:$0xf]
    %v7892 = vld [vmem:[%s7878 + $0x34] sm:$0xf]
    %v7893 = vld [vmem:[%s7878 + $0x38] sm:$0xf]
    %v7894 = vld [vmem:[%s7878 + $0x3c] sm:$0xf]
    %v7895 = vld [vmem:[%s7878 + $0x40] sm:$0xf]
    %v7896 = vld [vmem:[%s7878 + $0x44] sm:$0xf]
    %v7897 = vld [vmem:[%s7878 + $0x48] sm:$0xf]
    %v7898 = vld [vmem:[%s7878 + $0x4c] sm:$0xf]
    %v7899 = vld [vmem:[%s7878 + $0x50] sm:$0xf]
    %v7900 = vld [vmem:[%s7878 + $0x54] sm:$0xf]
    %v7901 = vld [vmem:[%s7878 + $0x58] sm:$0xf]
    %v7902 = vld [vmem:[%s7878 + $0x5c] sm:$0xf]
    %v7903 = vld [vmem:[%s7878 + $0x60] sm:$0xf]
    %v7904 = vld [vmem:[%s7878 + $0x64] sm:$0xf]
    %v7905 = vld [vmem:[%s7878 + $0x68] sm:$0xf]
    %v7906 = vld [vmem:[%s7878 + $0x6c] sm:$0xf]
    %v7935 = vunpack.c.l.b16 %v7879
    %v7936 = vunpack.c.l.b16 %v7880
    %v7937 = vunpack.c.l.b16 %v7881
    %v7938 = vunpack.c.l.b16 %v7882
    %v7939 = vunpack.c.l.b16 %v7883
    %v7940 = vunpack.c.l.b16 %v7884
    %v7941 = vunpack.c.l.b16 %v7885
    %v7942 = vunpack.c.l.b16 %v7886
    %v7943 = vunpack.c.l.b16 %v7887
    %v7944 = vunpack.c.l.b16 %v7888
    %v7945 = vunpack.c.l.b16 %v7889
    %v7946 = vunpack.c.l.b16 %v7890
    %v7947 = vunpack.c.l.b16 %v7891
    %v7948 = vunpack.c.l.b16 %v7892
    %v7949 = vunpack.c.l.b16 %v7893
    %v7950 = vunpack.c.l.b16 %v7894
    %v7951 = vunpack.c.l.b16 %v7895
    %v7952 = vunpack.c.l.b16 %v7896
    %v7953 = vunpack.c.l.b16 %v7897
    %v7954 = vunpack.c.l.b16 %v7898
    %v7955 = vunpack.c.l.b16 %v7899
    %v7956 = vunpack.c.l.b16 %v7900
    %v7957 = vunpack.c.l.b16 %v7901
    %v7958 = vunpack.c.l.b16 %v7902
    %v7959 = vunpack.c.l.b16 %v7903
    %v7960 = vunpack.c.l.b16 %v7904
    %v7961 = vunpack.c.l.b16 %v7905
    %v7962 = vunpack.c.l.b16 %v7906
    %v7963 = vpack.c.b16 %v7936, %v7935
    %v7964 = vpack.c.b16 %v7938, %v7937
    %v7965 = vpack.c.b16 %v7940, %v7939
    %v7966 = vpack.c.b16 %v7942, %v7941
    %v7967 = vpack.c.b16 %v7944, %v7943
    %v7968 = vpack.c.b16 %v7946, %v7945
    %v7969 = vpack.c.b16 %v7948, %v7947
    %v7970 = vpack.c.b16 %v7950, %v7949
    %v7971 = vpack.c.b16 %v7952, %v7951
    %v7972 = vpack.c.b16 %v7954, %v7953
    %v7973 = vpack.c.b16 %v7956, %v7955
    %v7974 = vpack.c.b16 %v7958, %v7957
    %v7975 = vpack.c.b16 %v7960, %v7959
    %v7976 = vpack.c.b16 %v7962, %v7961
    %v7992 = vsel %vm273, %v7557, 0
    %7994 = vmatprep.subr.bf16.mxu0 0
    %7995 = vmatpush1.bf16.msra.mxu0 %v7963
    %7996 = vmatprep.subr.bf16.mxu0 0
    %7997 = vmatpush1.bf16.msra.mxu0 %v7964
    %7998 = vmatprep.subr.bf16.mxu0 0
    %7999 = vmatpush1.bf16.msra.mxu0 %v7965
    %8000 = vmatprep.subr.bf16.mxu0 0
    %8001 = vmatpush1.bf16.msra.mxu0 %v7966
    %8002 = vmatprep.subr.bf16.mxu0 0
    %8003 = vmatpush1.bf16.msra.mxu0 %v7967
    %8004 = vmatprep.subr.bf16.mxu0 0
    %8005 = vmatpush1.bf16.msra.mxu0 %v7968
    %8006 = vmatprep.subr.bf16.mxu0 0
    %8007 = vmatpush1.bf16.msra.mxu0 %v7969
    %8008 = vmatprep.subr.bf16.mxu0 0
    %8009 = vmatpush1.bf16.msra.mxu0 %v7970
    %8010 = vmatprep.subr.bf16.mxu0 0
    %8011 = vmatpush1.bf16.msra.mxu0 %v7971
    %8012 = vmatprep.subr.bf16.mxu0 0
    %8013 = vmatpush1.bf16.msra.mxu0 %v7972
    %8014 = vmatprep.subr.bf16.mxu0 0
    %8015 = vmatpush1.bf16.msra.mxu0 %v7973
    %8016 = vmatprep.subr.bf16.mxu0 0
    %8017 = vmatpush1.bf16.msra.mxu0 %v7974
    %8018 = vmatprep.subr.bf16.mxu0 0
    %8019 = vmatpush1.bf16.msra.mxu0 %v7975
    %8020 = vmatprep.subr.bf16.mxu0 0
    %8021 = vmatpush1.bf16.msra.mxu0 %v7976
    %8022 = vmatprep.subr.bf16.mxu0 0
    %8023 = vmatpush1.bf16.msra.mxu0 0
    %8024 = vmatprep.subr.bf16.mxu0 0
    %8025 = vmatpush1.bf16.msra.mxu0 0
    %8026 = vmatprep.mubr.bf16.mxu0 %v7992
    %8027 = vmatmul.mubr.bf16.gmra.mrb[0].mxu0 %v7556
    %v8028 = vpop.f32.mrb[0].mxu0
    %v8029 = vadd.f32 0.0, %v8028
    %v8030 = vpop.f32.mrb[0].mxu0
    %v8031 = vpop.f32.mrb[0].mxu0
    %v8032 = vpop.f32.mrb[0].mxu0
    %8033 = vdwg.mxu0
    %v8034 = vadd.f32 %v7873, %v8029
    %s8035 = scalar_lea.vmem [#allocation13], 336
    %v8036 = vld [vmem:[%s8035] sm:$0xf]
    %v8037 = vld [vmem:[%s8035 + $0x4] sm:$0xf]
    %v8038 = vld [vmem:[%s8035 + $0x8] sm:$0xf]
    %v8039 = vld [vmem:[%s8035 + $0xc] sm:$0xf]
    %v8040 = vld [vmem:[%s8035 + $0x10] sm:$0xf]
    %v8041 = vld [vmem:[%s8035 + $0x14] sm:$0xf]
    %v8042 = vld [vmem:[%s8035 + $0x18] sm:$0xf]
    %v8043 = vld [vmem:[%s8035 + $0x1c] sm:$0xf]
    %v8044 = vld [vmem:[%s8035 + $0x20] sm:$0xf]
    %v8045 = vld [vmem:[%s8035 + $0x24] sm:$0xf]
    %v8046 = vld [vmem:[%s8035 + $0x28] sm:$0xf]
    %v8047 = vld [vmem:[%s8035 + $0x2c] sm:$0xf]
    %v8048 = vld [vmem:[%s8035 + $0x30] sm:$0xf]
    %v8049 = vld [vmem:[%s8035 + $0x34] sm:$0xf]
    %v8050 = vld [vmem:[%s8035 + $0x38] sm:$0xf]
    %v8051 = vld [vmem:[%s8035 + $0x3c] sm:$0xf]
    %v8052 = vld [vmem:[%s8035 + $0x40] sm:$0xf]
    %v8053 = vld [vmem:[%s8035 + $0x44] sm:$0xf]
    %v8054 = vld [vmem:[%s8035 + $0x48] sm:$0xf]
    %v8055 = vld [vmem:[%s8035 + $0x4c] sm:$0xf]
    %v8056 = vld [vmem:[%s8035 + $0x50] sm:$0xf]
    %v8057 = vld [vmem:[%s8035 + $0x54] sm:$0xf]
    %v8058 = vld [vmem:[%s8035 + $0x58] sm:$0xf]
    %v8059 = vld [vmem:[%s8035 + $0x5c] sm:$0xf]
    %v8060 = vld [vmem:[%s8035 + $0x60] sm:$0xf]
    %v8061 = vld [vmem:[%s8035 + $0x64] sm:$0xf]
    %v8062 = vld [vmem:[%s8035 + $0x68] sm:$0xf]
    %v8063 = vld [vmem:[%s8035 + $0x6c] sm:$0xf]
    %v8066 = vrot.slane %v7556, 4
    %v8067 = vrot.slane %v7557, 4
    %v8097 = vunpack.c.l.b16 %v8036
    %v8098 = vunpack.c.l.b16 %v8037
    %v8099 = vunpack.c.l.b16 %v8038
    %v8100 = vunpack.c.l.b16 %v8039
    %v8101 = vunpack.c.l.b16 %v8040
    %v8102 = vunpack.c.l.b16 %v8041
    %v8103 = vunpack.c.l.b16 %v8042
    %v8104 = vunpack.c.l.b16 %v8043
    %v8105 = vunpack.c.l.b16 %v8044
    %v8106 = vunpack.c.l.b16 %v8045
    %v8107 = vunpack.c.l.b16 %v8046
    %v8108 = vunpack.c.l.b16 %v8047
    %v8109 = vunpack.c.l.b16 %v8048
    %v8110 = vunpack.c.l.b16 %v8049
    %v8111 = vunpack.c.l.b16 %v8050
    %v8112 = vunpack.c.l.b16 %v8051
    %v8113 = vunpack.c.l.b16 %v8052
    %v8114 = vunpack.c.l.b16 %v8053
    %v8115 = vunpack.c.l.b16 %v8054
    %v8116 = vunpack.c.l.b16 %v8055
    %v8117 = vunpack.c.l.b16 %v8056
    %v8118 = vunpack.c.l.b16 %v8057
    %v8119 = vunpack.c.l.b16 %v8058
    %v8120 = vunpack.c.l.b16 %v8059
    %v8121 = vunpack.c.l.b16 %v8060
    %v8122 = vunpack.c.l.b16 %v8061
    %v8123 = vunpack.c.l.b16 %v8062
    %v8124 = vunpack.c.l.b16 %v8063
    %v8125 = vpack.c.b16 %v8098, %v8097
    %v8126 = vpack.c.b16 %v8100, %v8099
    %v8127 = vpack.c.b16 %v8102, %v8101
    %v8128 = vpack.c.b16 %v8104, %v8103
    %v8129 = vpack.c.b16 %v8106, %v8105
    %v8130 = vpack.c.b16 %v8108, %v8107
    %v8131 = vpack.c.b16 %v8110, %v8109
    %v8132 = vpack.c.b16 %v8112, %v8111
    %v8133 = vpack.c.b16 %v8114, %v8113
    %v8134 = vpack.c.b16 %v8116, %v8115
    %v8135 = vpack.c.b16 %v8118, %v8117
    %v8136 = vpack.c.b16 %v8120, %v8119
    %v8137 = vpack.c.b16 %v8122, %v8121
    %v8138 = vpack.c.b16 %v8124, %v8123
    %v8154 = vsel %vm273, %v8067, 0
    %8156 = vmatprep.subr.bf16.mxu0 0
    %8157 = vmatpush1.bf16.msra.mxu0 %v8125
    %8158 = vmatprep.subr.bf16.mxu0 0
    %8159 = vmatpush1.bf16.msra.mxu0 %v8126
    %8160 = vmatprep.subr.bf16.mxu0 0
    %8161 = vmatpush1.bf16.msra.mxu0 %v8127
    %8162 = vmatprep.subr.bf16.mxu0 0
    %8163 = vmatpush1.bf16.msra.mxu0 %v8128
    %8164 = vmatprep.subr.bf16.mxu0 0
    %8165 = vmatpush1.bf16.msra.mxu0 %v8129
    %8166 = vmatprep.subr.bf16.mxu0 0
    %8167 = vmatpush1.bf16.msra.mxu0 %v8130
    %8168 = vmatprep.subr.bf16.mxu0 0
    %8169 = vmatpush1.bf16.msra.mxu0 %v8131
    %8170 = vmatprep.subr.bf16.mxu0 0
    %8171 = vmatpush1.bf16.msra.mxu0 %v8132
    %8172 = vmatprep.subr.bf16.mxu0 0
    %8173 = vmatpush1.bf16.msra.mxu0 %v8133
    %8174 = vmatprep.subr.bf16.mxu0 0
    %8175 = vmatpush1.bf16.msra.mxu0 %v8134
    %8176 = vmatprep.subr.bf16.mxu0 0
    %8177 = vmatpush1.bf16.msra.mxu0 %v8135
    %8178 = vmatprep.subr.bf16.mxu0 0
    %8179 = vmatpush1.bf16.msra.mxu0 %v8136
    %8180 = vmatprep.subr.bf16.mxu0 0
    %8181 = vmatpush1.bf16.msra.mxu0 %v8137
    %8182 = vmatprep.subr.bf16.mxu0 0
    %8183 = vmatpush1.bf16.msra.mxu0 %v8138
    %8184 = vmatprep.subr.bf16.mxu0 0
    %8185 = vmatpush1.bf16.msra.mxu0 0
    %8186 = vmatprep.subr.bf16.mxu0 0
    %8187 = vmatpush1.bf16.msra.mxu0 0
    %8188 = vmatprep.mubr.bf16.mxu0 %v8154
    %8189 = vmatmul.mubr.bf16.gmra.mrb[0].mxu0 %v8066
    %v8190 = vpop.f32.mrb[0].mxu0
    %v8191 = vadd.f32 0.0, %v8190
    %v8192 = vpop.f32.mrb[0].mxu0
    %v8193 = vpop.f32.mrb[0].mxu0
    %v8194 = vpop.f32.mrb[0].mxu0
    %8195 = vdwg.mxu0
    %v8196 = vadd.f32 %v8034, %v8191
    %s8197 = scalar_lea.vmem [#allocation13], 448
    %v8198 = vld [vmem:[%s8197] sm:$0xf]
    %v8199 = vld [vmem:[%s8197 + $0x4] sm:$0xf]
    %v8200 = vld [vmem:[%s8197 + $0x8] sm:$0xf]
    %v8201 = vld [vmem:[%s8197 + $0xc] sm:$0xf]
    %v8202 = vld [vmem:[%s8197 + $0x10] sm:$0xf]
    %v8203 = vld [vmem:[%s8197 + $0x14] sm:$0xf]
    %v8204 = vld [vmem:[%s8197 + $0x18] sm:$0xf]
    %v8205 = vld [vmem:[%s8197 + $0x1c] sm:$0xf]
    %v8206 = vld [vmem:[%s8197 + $0x20] sm:$0xf]
    %v8207 = vld [vmem:[%s8197 + $0x24] sm:$0xf]
    %v8208 = vld [vmem:[%s8197 + $0x28] sm:$0xf]
    %v8209 = vld [vmem:[%s8197 + $0x2c] sm:$0xf]
    %v8210 = vld [vmem:[%s8197 + $0x30] sm:$0xf]
    %v8211 = vld [vmem:[%s8197 + $0x34] sm:$0xf]
    %v8212 = vld [vmem:[%s8197 + $0x38] sm:$0xf]
    %v8213 = vld [vmem:[%s8197 + $0x3c] sm:$0xf]
    %v8214 = vld [vmem:[%s8197 + $0x40] sm:$0xf]
    %v8215 = vld [vmem:[%s8197 + $0x44] sm:$0xf]
    %v8216 = vld [vmem:[%s8197 + $0x48] sm:$0xf]
    %v8217 = vld [vmem:[%s8197 + $0x4c] sm:$0xf]
    %v8218 = vld [vmem:[%s8197 + $0x50] sm:$0xf]
    %v8219 = vld [vmem:[%s8197 + $0x54] sm:$0xf]
    %v8220 = vld [vmem:[%s8197 + $0x58] sm:$0xf]
    %v8221 = vld [vmem:[%s8197 + $0x5c] sm:$0xf]
    %v8222 = vld [vmem:[%s8197 + $0x60] sm:$0xf]
    %v8223 = vld [vmem:[%s8197 + $0x64] sm:$0xf]
    %v8224 = vld [vmem:[%s8197 + $0x68] sm:$0xf]
    %v8225 = vld [vmem:[%s8197 + $0x6c] sm:$0xf]
    %v8254 = vunpack.c.l.b16 %v8198
    %v8255 = vunpack.c.l.b16 %v8199
    %v8256 = vunpack.c.l.b16 %v8200
    %v8257 = vunpack.c.l.b16 %v8201
    %v8258 = vunpack.c.l.b16 %v8202
    %v8259 = vunpack.c.l.b16 %v8203
    %v8260 = vunpack.c.l.b16 %v8204
    %v8261 = vunpack.c.l.b16 %v8205
    %v8262 = vunpack.c.l.b16 %v8206
    %v8263 = vunpack.c.l.b16 %v8207
    %v8264 = vunpack.c.l.b16 %v8208
    %v8265 = vunpack.c.l.b16 %v8209
    %v8266 = vunpack.c.l.b16 %v8210
    %v8267 = vunpack.c.l.b16 %v8211
    %v8268 = vunpack.c.l.b16 %v8212
    %v8269 = vunpack.c.l.b16 %v8213
    %v8270 = vunpack.c.l.b16 %v8214
    %v8271 = vunpack.c.l.b16 %v8215
    %v8272 = vunpack.c.l.b16 %v8216
    %v8273 = vunpack.c.l.b16 %v8217
    %v8274 = vunpack.c.l.b16 %v8218
    %v8275 = vunpack.c.l.b16 %v8219
    %v8276 = vunpack.c.l.b16 %v8220
    %v8277 = vunpack.c.l.b16 %v8221
    %v8278 = vunpack.c.l.b16 %v8222
    %v8279 = vunpack.c.l.b16 %v8223
    %v8280 = vunpack.c.l.b16 %v8224
    %v8281 = vunpack.c.l.b16 %v8225
    %v8282 = vpack.c.b16 %v8255, %v8254
    %v8283 = vpack.c.b16 %v8257, %v8256
    %v8284 = vpack.c.b16 %v8259, %v8258
    %v8285 = vpack.c.b16 %v8261, %v8260
    %v8286 = vpack.c.b16 %v8263, %v8262
    %v8287 = vpack.c.b16 %v8265, %v8264
    %v8288 = vpack.c.b16 %v8267, %v8266
    %v8289 = vpack.c.b16 %v8269, %v8268
    %v8290 = vpack.c.b16 %v8271, %v8270
    %v8291 = vpack.c.b16 %v8273, %v8272
    %v8292 = vpack.c.b16 %v8275, %v8274
    %v8293 = vpack.c.b16 %v8277, %v8276
    %v8294 = vpack.c.b16 %v8279, %v8278
    %v8295 = vpack.c.b16 %v8281, %v8280
    %v8311 = vsel %vm273, %v7559, 0
    %8313 = vmatprep.subr.bf16.mxu0 0
    %8314 = vmatpush1.bf16.msra.mxu0 %v8282
    %8315 = vmatprep.subr.bf16.mxu0 0
    %8316 = vmatpush1.bf16.msra.mxu0 %v8283
    %8317 = vmatprep.subr.bf16.mxu0 0
    %8318 = vmatpush1.bf16.msra.mxu0 %v8284
    %8319 = vmatprep.subr.bf16.mxu0 0
    %8320 = vmatpush1.bf16.msra.mxu0 %v8285
    %8321 = vmatprep.subr.bf16.mxu0 0
    %8322 = vmatpush1.bf16.msra.mxu0 %v8286
    %8323 = vmatprep.subr.bf16.mxu0 0
    %8324 = vmatpush1.bf16.msra.mxu0 %v8287
    %8325 = vmatprep.subr.bf16.mxu0 0
    %8326 = vmatpush1.bf16.msra.mxu0 %v8288
    %8327 = vmatprep.subr.bf16.mxu0 0
    %8328 = vmatpush1.bf16.msra.mxu0 %v8289
    %8329 = vmatprep.subr.bf16.mxu0 0
    %8330 = vmatpush1.bf16.msra.mxu0 %v8290
    %8331 = vmatprep.subr.bf16.mxu0 0
    %8332 = vmatpush1.bf16.msra.mxu0 %v8291
    %8333 = vmatprep.subr.bf16.mxu0 0
    %8334 = vmatpush1.bf16.msra.mxu0 %v8292
    %8335 = vmatprep.subr.bf16.mxu0 0
    %8336 = vmatpush1.bf16.msra.mxu0 %v8293
    %8337 = vmatprep.subr.bf16.mxu0 0
    %8338 = vmatpush1.bf16.msra.mxu0 %v8294
    %8339 = vmatprep.subr.bf16.mxu0 0
    %8340 = vmatpush1.bf16.msra.mxu0 %v8295
    %8341 = vmatprep.subr.bf16.mxu0 0
    %8342 = vmatpush1.bf16.msra.mxu0 0
    %8343 = vmatprep.subr.bf16.mxu0 0
    %8344 = vmatpush1.bf16.msra.mxu0 0
    %8345 = vmatprep.mubr.bf16.mxu0 %v8311
    %8346 = vmatmul.mubr.bf16.gmra.mrb[0].mxu0 %v7558
    %v8347 = vpop.f32.mrb[0].mxu0
    %v8348 = vadd.f32 0.0, %v8347
    %v8349 = vpop.f32.mrb[0].mxu0
    %v8350 = vpop.f32.mrb[0].mxu0
    %v8351 = vpop.f32.mrb[0].mxu0
    %8352 = vdwg.mxu0
    %v8353 = vadd.f32 %v8196, %v8348
    %s8354 = scalar_lea.vmem [#allocation13], 560
    %v8355 = vld [vmem:[%s8354] sm:$0xf]
    %v8356 = vld [vmem:[%s8354 + $0x4] sm:$0xf]
    %v8357 = vld [vmem:[%s8354 + $0x8] sm:$0xf]
    %v8358 = vld [vmem:[%s8354 + $0xc] sm:$0xf]
    %v8359 = vld [vmem:[%s8354 + $0x10] sm:$0xf]
    %v8360 = vld [vmem:[%s8354 + $0x14] sm:$0xf]
    %v8361 = vld [vmem:[%s8354 + $0x18] sm:$0xf]
    %v8362 = vld [vmem:[%s8354 + $0x1c] sm:$0xf]
    %v8363 = vld [vmem:[%s8354 + $0x20] sm:$0xf]
    %v8364 = vld [vmem:[%s8354 + $0x24] sm:$0xf]
    %v8365 = vld [vmem:[%s8354 + $0x28] sm:$0xf]
    %v8366 = vld [vmem:[%s8354 + $0x2c] sm:$0xf]
    %v8367 = vld [vmem:[%s8354 + $0x30] sm:$0xf]
    %v8368 = vld [vmem:[%s8354 + $0x34] sm:$0xf]
    %v8369 = vld [vmem:[%s8354 + $0x38] sm:$0xf]
    %v8370 = vld [vmem:[%s8354 + $0x3c] sm:$0xf]
    %v8371 = vld [vmem:[%s8354 + $0x40] sm:$0xf]
    %v8372 = vld [vmem:[%s8354 + $0x44] sm:$0xf]
    %v8373 = vld [vmem:[%s8354 + $0x48] sm:$0xf]
    %v8374 = vld [vmem:[%s8354 + $0x4c] sm:$0xf]
    %v8375 = vld [vmem:[%s8354 + $0x50] sm:$0xf]
    %v8376 = vld [vmem:[%s8354 + $0x54] sm:$0xf]
    %v8377 = vld [vmem:[%s8354 + $0x58] sm:$0xf]
    %v8378 = vld [vmem:[%s8354 + $0x5c] sm:$0xf]
    %v8379 = vld [vmem:[%s8354 + $0x60] sm:$0xf]
    %v8380 = vld [vmem:[%s8354 + $0x64] sm:$0xf]
    %v8381 = vld [vmem:[%s8354 + $0x68] sm:$0xf]
    %v8382 = vld [vmem:[%s8354 + $0x6c] sm:$0xf]
    %v8385 = vrot.slane %v7558, 4
    %v8386 = vrot.slane %v7559, 4
    %v8416 = vunpack.c.l.b16 %v8355
    %v8417 = vunpack.c.l.b16 %v8356
    %v8418 = vunpack.c.l.b16 %v8357
    %v8419 = vunpack.c.l.b16 %v8358
    %v8420 = vunpack.c.l.b16 %v8359
    %v8421 = vunpack.c.l.b16 %v8360
    %v8422 = vunpack.c.l.b16 %v8361
    %v8423 = vunpack.c.l.b16 %v8362
    %v8424 = vunpack.c.l.b16 %v8363
    %v8425 = vunpack.c.l.b16 %v8364
    %v8426 = vunpack.c.l.b16 %v8365
    %v8427 = vunpack.c.l.b16 %v8366
    %v8428 = vunpack.c.l.b16 %v8367
    %v8429 = vunpack.c.l.b16 %v8368
    %v8430 = vunpack.c.l.b16 %v8369
    %v8431 = vunpack.c.l.b16 %v8370
    %v8432 = vunpack.c.l.b16 %v8371
    %v8433 = vunpack.c.l.b16 %v8372
    %v8434 = vunpack.c.l.b16 %v8373
    %v8435 = vunpack.c.l.b16 %v8374
    %v8436 = vunpack.c.l.b16 %v8375
    %v8437 = vunpack.c.l.b16 %v8376
    %v8438 = vunpack.c.l.b16 %v8377
    %v8439 = vunpack.c.l.b16 %v8378
    %v8440 = vunpack.c.l.b16 %v8379
    %v8441 = vunpack.c.l.b16 %v8380
    %v8442 = vunpack.c.l.b16 %v8381
    %v8443 = vunpack.c.l.b16 %v8382
    %v8444 = vpack.c.b16 %v8417, %v8416
    %v8445 = vpack.c.b16 %v8419, %v8418
    %v8446 = vpack.c.b16 %v8421, %v8420
    %v8447 = vpack.c.b16 %v8423, %v8422
    %v8448 = vpack.c.b16 %v8425, %v8424
    %v8449 = vpack.c.b16 %v8427, %v8426
    %v8450 = vpack.c.b16 %v8429, %v8428
    %v8451 = vpack.c.b16 %v8431, %v8430
    %v8452 = vpack.c.b16 %v8433, %v8432
    %v8453 = vpack.c.b16 %v8435, %v8434
    %v8454 = vpack.c.b16 %v8437, %v8436
    %v8455 = vpack.c.b16 %v8439, %v8438
    %v8456 = vpack.c.b16 %v8441, %v8440
    %v8457 = vpack.c.b16 %v8443, %v8442
    %v8473 = vsel %vm273, %v8386, 0
    %8475 = vmatprep.subr.bf16.mxu0 0
    %8476 = vmatpush1.bf16.msra.mxu0 %v8444
    %8477 = vmatprep.subr.bf16.mxu0 0
    %8478 = vmatpush1.bf16.msra.mxu0 %v8445
    %8479 = vmatprep.subr.bf16.mxu0 0
    %8480 = vmatpush1.bf16.msra.mxu0 %v8446
    %8481 = vmatprep.subr.bf16.mxu0 0
    %8482 = vmatpush1.bf16.msra.mxu0 %v8447
    %8483 = vmatprep.subr.bf16.mxu0 0
    %8484 = vmatpush1.bf16.msra.mxu0 %v8448
    %8485 = vmatprep.subr.bf16.mxu0 0
    %8486 = vmatpush1.bf16.msra.mxu0 %v8449
    %8487 = vmatprep.subr.bf16.mxu0 0
    %8488 = vmatpush1.bf16.msra.mxu0 %v8450
    %8489 = vmatprep.subr.bf16.mxu0 0
    %8490 = vmatpush1.bf16.msra.mxu0 %v8451
    %8491 = vmatprep.subr.bf16.mxu0 0
    %8492 = vmatpush1.bf16.msra.mxu0 %v8452
    %8493 = vmatprep.subr.bf16.mxu0 0
    %8494 = vmatpush1.bf16.msra.mxu0 %v8453
    %8495 = vmatprep.subr.bf16.mxu0 0
    %8496 = vmatpush1.bf16.msra.mxu0 %v8454
    %8497 = vmatprep.subr.bf16.mxu0 0
    %8498 = vmatpush1.bf16.msra.mxu0 %v8455
    %8499 = vmatprep.subr.bf16.mxu0 0
    %8500 = vmatpush1.bf16.msra.mxu0 %v8456
    %8501 = vmatprep.subr.bf16.mxu0 0
    %8502 = vmatpush1.bf16.msra.mxu0 %v8457
    %8503 = vmatprep.subr.bf16.mxu0 0
    %8504 = vmatpush1.bf16.msra.mxu0 0
    %8505 = vmatprep.subr.bf16.mxu0 0
    %8506 = vmatpush1.bf16.msra.mxu0 0
    %8507 = vmatprep.mubr.bf16.mxu0 %v8473
    %8508 = vmatmul.mubr.bf16.gmra.mrb[0].mxu0 %v8385
    %v8509 = vpop.f32.mrb[0].mxu0
    %v8510 = vadd.f32 0.0, %v8509
    %v8511 = vpop.f32.mrb[0].mxu0
    %v8512 = vpop.f32.mrb[0].mxu0
    %v8513 = vpop.f32.mrb[0].mxu0
    %8514 = vdwg.mxu0
    %v8515 = vadd.f32 %v8353, %v8510
    %s8516 = scalar_lea.vmem [#allocation13], 672
    %v8517 = vld [vmem:[%s8516] sm:$0xf]
    %v8518 = vld [vmem:[%s8516 + $0x4] sm:$0xf]
    %v8519 = vld [vmem:[%s8516 + $0x8] sm:$0xf]
    %v8520 = vld [vmem:[%s8516 + $0xc] sm:$0xf]
    %v8521 = vld [vmem:[%s8516 + $0x10] sm:$0xf]
    %v8522 = vld [vmem:[%s8516 + $0x14] sm:$0xf]
    %v8523 = vld [vmem:[%s8516 + $0x18] sm:$0xf]
    %v8524 = vld [vmem:[%s8516 + $0x1c] sm:$0xf]
    %v8525 = vld [vmem:[%s8516 + $0x20] sm:$0xf]
    %v8526 = vld [vmem:[%s8516 + $0x24] sm:$0xf]
    %v8527 = vld [vmem:[%s8516 + $0x28] sm:$0xf]
    %v8528 = vld [vmem:[%s8516 + $0x2c] sm:$0xf]
    %v8529 = vld [vmem:[%s8516 + $0x30] sm:$0xf]
    %v8530 = vld [vmem:[%s8516 + $0x34] sm:$0xf]
    %v8531 = vld [vmem:[%s8516 + $0x38] sm:$0xf]
    %v8532 = vld [vmem:[%s8516 + $0x3c] sm:$0xf]
    %v8533 = vld [vmem:[%s8516 + $0x40] sm:$0xf]
    %v8534 = vld [vmem:[%s8516 + $0x44] sm:$0xf]
    %v8535 = vld [vmem:[%s8516 + $0x48] sm:$0xf]
    %v8536 = vld [vmem:[%s8516 + $0x4c] sm:$0xf]
    %v8537 = vld [vmem:[%s8516 + $0x50] sm:$0xf]
    %v8538 = vld [vmem:[%s8516 + $0x54] sm:$0xf]
    %v8539 = vld [vmem:[%s8516 + $0x58] sm:$0xf]
    %v8540 = vld [vmem:[%s8516 + $0x5c] sm:$0xf]
    %v8541 = vld [vmem:[%s8516 + $0x60] sm:$0xf]
    %v8542 = vld [vmem:[%s8516 + $0x64] sm:$0xf]
    %v8543 = vld [vmem:[%s8516 + $0x68] sm:$0xf]
    %v8544 = vld [vmem:[%s8516 + $0x6c] sm:$0xf]
    %v8573 = vunpack.c.l.b16 %v8517
    %v8574 = vunpack.c.l.b16 %v8518
    %v8575 = vunpack.c.l.b16 %v8519
    %v8576 = vunpack.c.l.b16 %v8520
    %v8577 = vunpack.c.l.b16 %v8521
    %v8578 = vunpack.c.l.b16 %v8522
    %v8579 = vunpack.c.l.b16 %v8523
    %v8580 = vunpack.c.l.b16 %v8524
    %v8581 = vunpack.c.l.b16 %v8525
    %v8582 = vunpack.c.l.b16 %v8526
    %v8583 = vunpack.c.l.b16 %v8527
    %v8584 = vunpack.c.l.b16 %v8528
    %v8585 = vunpack.c.l.b16 %v8529
    %v8586 = vunpack.c.l.b16 %v8530
    %v8587 = vunpack.c.l.b16 %v8531
    %v8588 = vunpack.c.l.b16 %v8532
    %v8589 = vunpack.c.l.b16 %v8533
    %v8590 = vunpack.c.l.b16 %v8534
    %v8591 = vunpack.c.l.b16 %v8535
    %v8592 = vunpack.c.l.b16 %v8536
    %v8593 = vunpack.c.l.b16 %v8537
    %v8594 = vunpack.c.l.b16 %v8538
    %v8595 = vunpack.c.l.b16 %v8539
    %v8596 = vunpack.c.l.b16 %v8540
    %v8597 = vunpack.c.l.b16 %v8541
    %v8598 = vunpack.c.l.b16 %v8542
    %v8599 = vunpack.c.l.b16 %v8543
    %v8600 = vunpack.c.l.b16 %v8544
    %v8601 = vpack.c.b16 %v8574, %v8573
    %v8602 = vpack.c.b16 %v8576, %v8575
    %v8603 = vpack.c.b16 %v8578, %v8577
    %v8604 = vpack.c.b16 %v8580, %v8579
    %v8605 = vpack.c.b16 %v8582, %v8581
    %v8606 = vpack.c.b16 %v8584, %v8583
    %v8607 = vpack.c.b16 %v8586, %v8585
    %v8608 = vpack.c.b16 %v8588, %v8587
    %v8609 = vpack.c.b16 %v8590, %v8589
    %v8610 = vpack.c.b16 %v8592, %v8591
    %v8611 = vpack.c.b16 %v8594, %v8593
    %v8612 = vpack.c.b16 %v8596, %v8595
    %v8613 = vpack.c.b16 %v8598, %v8597
    %v8614 = vpack.c.b16 %v8600, %v8599
    %v8630 = vsel %vm273, %v7561, 0
    %8632 = vmatprep.subr.bf16.mxu0 0
    %8633 = vmatpush1.bf16.msra.mxu0 %v8601
    %8634 = vmatprep.subr.bf16.mxu0 0
    %8635 = vmatpush1.bf16.msra.mxu0 %v8602
    %8636 = vmatprep.subr.bf16.mxu0 0
    %8637 = vmatpush1.bf16.msra.mxu0 %v8603
    %8638 = vmatprep.subr.bf16.mxu0 0
    %8639 = vmatpush1.bf16.msra.mxu0 %v8604
    %8640 = vmatprep.subr.bf16.mxu0 0
    %8641 = vmatpush1.bf16.msra.mxu0 %v8605
    %8642 = vmatprep.subr.bf16.mxu0 0
    %8643 = vmatpush1.bf16.msra.mxu0 %v8606
    %8644 = vmatprep.subr.bf16.mxu0 0
    %8645 = vmatpush1.bf16.msra.mxu0 %v8607
    %8646 = vmatprep.subr.bf16.mxu0 0
    %8647 = vmatpush1.bf16.msra.mxu0 %v8608
    %8648 = vmatprep.subr.bf16.mxu0 0
    %8649 = vmatpush1.bf16.msra.mxu0 %v8609
    %8650 = vmatprep.subr.bf16.mxu0 0
    %8651 = vmatpush1.bf16.msra.mxu0 %v8610
    %8652 = vmatprep.subr.bf16.mxu0 0
    %8653 = vmatpush1.bf16.msra.mxu0 %v8611
    %8654 = vmatprep.subr.bf16.mxu0 0
    %8655 = vmatpush1.bf16.msra.mxu0 %v8612
    %8656 = vmatprep.subr.bf16.mxu0 0
    %8657 = vmatpush1.bf16.msra.mxu0 %v8613
    %8658 = vmatprep.subr.bf16.mxu0 0
    %8659 = vmatpush1.bf16.msra.mxu0 %v8614
    %8660 = vmatprep.subr.bf16.mxu0 0
    %8661 = vmatpush1.bf16.msra.mxu0 0
    %8662 = vmatprep.subr.bf16.mxu0 0
    %8663 = vmatpush1.bf16.msra.mxu0 0
    %8664 = vmatprep.mubr.bf16.mxu0 %v8630
    %8665 = vmatmul.mubr.bf16.gmra.mrb[0].mxu0 %v7560
    %v8666 = vpop.f32.mrb[0].mxu0
    %v8667 = vadd.f32 0.0, %v8666
    %v8668 = vpop.f32.mrb[0].mxu0
    %v8669 = vpop.f32.mrb[0].mxu0
    %v8670 = vpop.f32.mrb[0].mxu0
    %8671 = vdwg.mxu0
    %v8672 = vadd.f32 %v8515, %v8667
    %v8673 = vld [vmem:[%s12] sm:$0x1]
    %v8675 = vlaneseq
    %v8676 = vshrl.u32 %v8675, 7
    %v8677 = vsub.s32 0, %v8676
    %v8678 = vrot.slane %v8673, %v8677
    %v8680 = vadd.f32 %v8672, %v8678
    %v8681 = vmax.f32 %v8680, 0.0
    %v8682 = vpack.c.bf16 %v8681, %v8681
    %v8683 = vld [vmem:[#allocation15] sm:$0xf]
    %v8684 = vld [vmem:[#allocation15 + $0x4] sm:$0xf]
    %v8685 = vld [vmem:[#allocation15 + $0x8] sm:$0xf]
    %v8686 = vld [vmem:[#allocation15 + $0xc] sm:$0xf]
    %v8687 = vld [vmem:[#allocation15 + $0x10] sm:$0xf]
    %v8688 = vld [vmem:[#allocation15 + $0x14] sm:$0xf]
    %v8689 = vld [vmem:[#allocation15 + $0x18] sm:$0xf]
    %v8690 = vld [vmem:[#allocation15 + $0x1c] sm:$0xf]
    %v8691 = vld [vmem:[#allocation15 + $0x20] sm:$0xf]
    %v8692 = vld [vmem:[#allocation15 + $0x24] sm:$0xf]
    %v8693 = vld [vmem:[#allocation15 + $0x28] sm:$0xf]
    %v8694 = vld [vmem:[#allocation15 + $0x2c] sm:$0xf]
    %v8695 = vld [vmem:[#allocation15 + $0x30] sm:$0xf]
    %v8696 = vld [vmem:[#allocation15 + $0x34] sm:$0xf]
    %v8697 = vld [vmem:[#allocation15 + $0x38] sm:$0xf]
    %v8698 = vld [vmem:[#allocation15 + $0x3c] sm:$0xf]
    %v8699 = vld [vmem:[%s14] sm:$0x1]
    %v8701 = vlaneseq
    %v8702 = vshrl.u32 %v8701, 7
    %v8703 = vsub.s32 0, %v8702
    %v8704 = vrot.slane %v8699, %v8703
    %v8722 = vunpack.c.l.b16 %v8683
    %v8723 = vunpack.c.l.b16 %v8684
    %v8724 = vunpack.c.l.b16 %v8685
    %v8725 = vunpack.c.l.b16 %v8686
    %v8726 = vunpack.c.l.b16 %v8687
    %v8727 = vunpack.c.l.b16 %v8688
    %v8728 = vunpack.c.l.b16 %v8689
    %v8729 = vunpack.c.l.b16 %v8690
    %v8730 = vunpack.c.l.b16 %v8691
    %v8731 = vunpack.c.l.b16 %v8692
    %v8732 = vunpack.c.l.b16 %v8693
    %v8733 = vunpack.c.l.b16 %v8694
    %v8734 = vunpack.c.l.b16 %v8695
    %v8735 = vunpack.c.l.b16 %v8696
    %v8736 = vunpack.c.l.b16 %v8697
    %v8737 = vunpack.c.l.b16 %v8698
    %v8738 = vpack.c.b16 %v8723, %v8722
    %v8739 = vpack.c.b16 %v8725, %v8724
    %v8740 = vpack.c.b16 %v8727, %v8726
    %v8741 = vpack.c.b16 %v8729, %v8728
    %v8742 = vpack.c.b16 %v8731, %v8730
    %v8743 = vpack.c.b16 %v8733, %v8732
    %v8744 = vpack.c.b16 %v8735, %v8734
    %v8745 = vpack.c.b16 %v8737, %v8736
    %8754 = vmatprep.subr.bf16.mxu0 0
    %8755 = vmatpush1.bf16.msra.mxu0 %v8738
    %8756 = vmatprep.subr.bf16.mxu0 0
    %8757 = vmatpush1.bf16.msra.mxu0 %v8739
    %8758 = vmatprep.subr.bf16.mxu0 0
    %8759 = vmatpush1.bf16.msra.mxu0 %v8740
    %8760 = vmatprep.subr.bf16.mxu0 0
    %8761 = vmatpush1.bf16.msra.mxu0 %v8741
    %8762 = vmatprep.subr.bf16.mxu0 0
    %8763 = vmatpush1.bf16.msra.mxu0 %v8742
    %8764 = vmatprep.subr.bf16.mxu0 0
    %8765 = vmatpush1.bf16.msra.mxu0 %v8743
    %8766 = vmatprep.subr.bf16.mxu0 0
    %8767 = vmatpush1.bf16.msra.mxu0 %v8744
    %8768 = vmatprep.subr.bf16.mxu0 0
    %8769 = vmatpush1.bf16.msra.mxu0 %v8745
    %8770 = vmatprep.subr.bf16.mxu0 0
    %8771 = vmatpush1.bf16.msra.mxu0 0
    %8772 = vmatprep.subr.bf16.mxu0 0
    %8773 = vmatpush1.bf16.msra.mxu0 0
    %8774 = vmatprep.subr.bf16.mxu0 0
    %8775 = vmatpush1.bf16.msra.mxu0 0
    %8776 = vmatprep.subr.bf16.mxu0 0
    %8777 = vmatpush1.bf16.msra.mxu0 0
    %8778 = vmatprep.subr.bf16.mxu0 0
    %8779 = vmatpush1.bf16.msra.mxu0 0
    %8780 = vmatprep.subr.bf16.mxu0 0
    %8781 = vmatpush1.bf16.msra.mxu0 0
    %8782 = vmatprep.subr.bf16.mxu0 0
    %8783 = vmatpush1.bf16.msra.mxu0 0
    %8784 = vmatprep.subr.bf16.mxu0 0
    %8785 = vmatpush1.bf16.msra.mxu0 0
    %8786 = vmatprep.mubr.bf16.mxu0 0
    %8787 = vmatmul.mubr.bf16.gmra.mrb[0].mxu0 %v8682
    %v8788 = vpop.f32.mrb[0].mxu0
    %v8789 = vadd.f32 %v8704, %v8788
    %v8790 = vpop.f32.mrb[0].mxu0
    %v8791 = vpop.f32.mrb[0].mxu0
    %v8792 = vpop.f32.mrb[0].mxu0
    %8793 = vdwg.mxu0
    %v8794 = vmax.f32 %v8789, 0.0
    %v8795 = vpack.c.bf16 %v8794, %v8794
    %v8796 = vld [vmem:[%s15] sm:$0xf]
    %v8797 = vld [vmem:[%s15 + $0x4] sm:$0xf]
    %v8798 = vld [vmem:[%s15 + $0x8] sm:$0xf]
    %v8799 = vld [vmem:[%s15 + $0xc] sm:$0xf]
    %v8800 = vld [vmem:[%s15 + $0x10] sm:$0xf]
    %v8801 = vld [vmem:[%s15 + $0x14] sm:$0xf]
    %v8802 = vld [vmem:[%s15 + $0x18] sm:$0xf]
    %v8803 = vld [vmem:[%s15 + $0x1c] sm:$0xf]
    %v8804 = vld [vmem:[%s15 + $0x20] sm:$0xf]
    %v8805 = vld [vmem:[%s15 + $0x24] sm:$0xf]
    %v8806 = vld [vmem:[%s15 + $0x28] sm:$0xf]
    %v8807 = vld [vmem:[%s15 + $0x2c] sm:$0xf]
    %v8808 = vld [vmem:[%s15 + $0x30] sm:$0xf]
    %v8809 = vld [vmem:[%s15 + $0x34] sm:$0xf]
    %v8810 = vld [vmem:[%s15 + $0x38] sm:$0xf]
    %v8811 = vld [vmem:[%s15 + $0x3c] sm:$0xf]
    %v8812 = vld [vmem:[#allocation16] sm:$0x1]
    %v8814 = vlaneseq
    %v8815 = vshrl.u32 %v8814, 7
    %v8816 = vsub.s32 0, %v8815
    %v8817 = vrot.slane %v8812, %v8816
    %v8835 = vunpack.c.l.b16 %v8796
    %v8836 = vunpack.c.l.b16 %v8797
    %v8837 = vunpack.c.l.b16 %v8798
    %v8838 = vunpack.c.l.b16 %v8799
    %v8839 = vunpack.c.l.b16 %v8800
    %v8840 = vunpack.c.l.b16 %v8801
    %v8841 = vunpack.c.l.b16 %v8802
    %v8842 = vunpack.c.l.b16 %v8803
    %v8843 = vunpack.c.l.b16 %v8804
    %v8844 = vunpack.c.l.b16 %v8805
    %v8845 = vunpack.c.l.b16 %v8806
    %v8846 = vunpack.c.l.b16 %v8807
    %v8847 = vunpack.c.l.b16 %v8808
    %v8848 = vunpack.c.l.b16 %v8809
    %v8849 = vunpack.c.l.b16 %v8810
    %v8850 = vunpack.c.l.b16 %v8811
    %v8851 = vpack.c.b16 %v8836, %v8835
    %v8852 = vpack.c.b16 %v8838, %v8837
    %v8853 = vpack.c.b16 %v8840, %v8839
    %v8854 = vpack.c.b16 %v8842, %v8841
    %v8855 = vpack.c.b16 %v8844, %v8843
    %v8856 = vpack.c.b16 %v8846, %v8845
    %v8857 = vpack.c.b16 %v8848, %v8847
    %v8858 = vpack.c.b16 %v8850, %v8849
    %8867 = vmatprep.subr.bf16.mxu0 0
    %8868 = vmatpush1.bf16.msra.mxu0 %v8851
    %8869 = vmatprep.subr.bf16.mxu0 0
    %8870 = vmatpush1.bf16.msra.mxu0 %v8852
    %8871 = vmatprep.subr.bf16.mxu0 0
    %8872 = vmatpush1.bf16.msra.mxu0 %v8853
    %8873 = vmatprep.subr.bf16.mxu0 0
    %8874 = vmatpush1.bf16.msra.mxu0 %v8854
    %8875 = vmatprep.subr.bf16.mxu0 0
    %8876 = vmatpush1.bf16.msra.mxu0 %v8855
    %8877 = vmatprep.subr.bf16.mxu0 0
    %8878 = vmatpush1.bf16.msra.mxu0 %v8856
    %8879 = vmatprep.subr.bf16.mxu0 0
    %8880 = vmatpush1.bf16.msra.mxu0 %v8857
    %8881 = vmatprep.subr.bf16.mxu0 0
    %8882 = vmatpush1.bf16.msra.mxu0 %v8858
    %8883 = vmatprep.subr.bf16.mxu0 0
    %8884 = vmatpush1.bf16.msra.mxu0 0
    %8885 = vmatprep.subr.bf16.mxu0 0
    %8886 = vmatpush1.bf16.msra.mxu0 0
    %8887 = vmatprep.subr.bf16.mxu0 0
    %8888 = vmatpush1.bf16.msra.mxu0 0
    %8889 = vmatprep.subr.bf16.mxu0 0
    %8890 = vmatpush1.bf16.msra.mxu0 0
    %8891 = vmatprep.subr.bf16.mxu0 0
    %8892 = vmatpush1.bf16.msra.mxu0 0
    %8893 = vmatprep.subr.bf16.mxu0 0
    %8894 = vmatpush1.bf16.msra.mxu0 0
    %8895 = vmatprep.subr.bf16.mxu0 0
    %8896 = vmatpush1.bf16.msra.mxu0 0
    %8897 = vmatprep.subr.bf16.mxu0 0
    %8898 = vmatpush1.bf16.msra.mxu0 0
    %8899 = vmatprep.mubr.bf16.mxu0 0
    %8900 = vmatmul.mubr.bf16.gmra.mrb[0].mxu0 %v8795
    %v8901 = vpop.f32.mrb[0].mxu0
    %v8902 = vadd.f32 %v8817, %v8901
    %v8903 = vpop.f32.mrb[0].mxu0
    %v8904 = vpop.f32.mrb[0].mxu0
    %v8905 = vpop.f32.mrb[0].mxu0
    %8906 = vdwg.mxu0
    %8907 = vst [vmem:[%s17] sm:$0xff] %v8902
    // Predicated region
    $region110: #{convnet_forward.1} parent=1 // pred_check
      _
    $region111: #{convnet_forward.1} parent=1 // pred_check_branch
      %8909 = sbr.rel (0) target = $region113
    $region112: #{convnet_forward.1} parent=1 // pred_region
      _
    $region113: #{convnet_forward.1} parent=1 // pred_fallthru
      _
    // Predicated region
    $region114: #{convnet_forward.1} parent=1 // pred_check
      _
    $region115: #{convnet_forward.1} parent=1 // pred_check_branch
      %8911 = sbr.rel (0) target = $region117
    $region116: #{convnet_forward.1} parent=1 // pred_region
      _
    $region117: #{convnet_forward.1} parent=1 // pred_fallthru
      _
    %8912 = vsyncpa [#allocation3], 1
    %8913 = vsyncpa [#allocation5], 1
    %8914 = vsyncpa [#allocation8], 1
    %8915 = vsyncpa [#allocation11], 1
    %8916 = vsyncpa [#allocation14], 1
    %8917 = vsyncpa [#allocation17], 1

</llo_original>
